<compile_context>
chip_gen: v5e
topology: v5e:2x2
jax: 0.10.0
libtpu: 0.0.40
codegen_flags: <defaults>
</compile_context>

<pallas_src>
import functools

import numpy as np
import jax
import jax.numpy as jnp
from jax.experimental import pallas as pl
from jax.experimental.pallas import tpu as pltpu


# ----------------------------------------------------------------------------
# Fused RRDB kernel (one batch element per grid step)
# ----------------------------------------------------------------------------
def _rrdb_kernel(x_ref, mask_ref, *refs, C, G, W):
    """refs = 30 param refs (w_1_1, b_1_1, ..., w_3_5, b_3_5), o_ref, patches.

    x_ref   : (1, C, HW)     input, channel-major, HW lane-dense
    mask_ref: (9, HW)        per-tap boundary masks (1.0 inside, 0.0 outside)
    w_{j,i} : (cout, 9*Cmax) zero-padded im2col weights
    b_{j,i} : (cout, 1)
    o_ref   : (1, C, HW)
    patches : (9*Cmax, HW)   persistent im2col scratch (f32)
    """
    param_refs = refs[:30]
    o_ref = refs[30]
    patches = refs[31]

    HW = x_ref.shape[2]
    Cmax = patches.shape[0] // 9

    # tap t = ky*3 + kx needs input pixel p + s, s = (ky-1)*W + (kx-1)
    taps = [(ky * 3 + kx, (ky - 1) * W + (kx - 1))
            for ky in range(3) for kx in range(3)]

    def write_taps(v, c_off):
        # v: (nc, HW) new feature channels -> write their 9 shifted + masked
        # copies into the im2col buffer at channel offset c_off.
        nc = v.shape[0]
        for t, s in taps:
            if s == 0:
                shifted = v                              # center tap: as-is
            else:
                # out[p] = v[(p + s) mod HW]; roll semantics out[i] = in[i-shift]
                shifted = pltpu.roll(v, (-s) % HW, axis=1)
                shifted = shifted * mask_ref[t:t + 1, :]  # zero-pad boundary
            patches[pl.ds(t * Cmax + c_off, nc), :] = shifted

    def conv(w_ref, b_ref):
        # single MXU matmul: (cout, 9*Cmax) @ (9*Cmax, HW) -> (cout, HW)
        return jnp.dot(w_ref[...], patches[...],
                       preferred_element_type=jnp.float32) + b_ref[...]

    # Zero once per grid step: not-yet-written channel rows (paired with the
    # zero-padded weight columns) must never contribute NaN/Inf garbage from
    # uninitialized VMEM.  Cost is negligible next to the 15 matmuls.
    patches[...] = jnp.zeros_like(patches)

    x0 = x_ref[0].astype(jnp.float32)                    # (C, HW) RRDB identity
    blk = x0                                             # current dense-block input
    k = 0
    for _ in range(3):                                   # 3 residual dense blocks
        write_taps(blk, 0)
        for i in range(4):                               # conv1..conv4 + LeakyReLU
            w_ref, b_ref = param_refs[k], param_refs[k + 1]
            k += 2
            a = conv(w_ref, b_ref)
            a = jnp.maximum(a, 0.2 * a)                  # LeakyReLU(0.2)
            write_taps(a, C + i * G)
        w_ref, b_ref = param_refs[k], param_refs[k + 1]
        k += 2
        a5 = conv(w_ref, b_ref)                          # conv5 (identity act.)
        blk = a5 * 0.2 + blk                             # dense-block residual

    out = blk * 0.2 + x0                                 # RRDB residual
    o_ref[0] = out.astype(o_ref.dtype)


# ----------------------------------------------------------------------------
# Wrapper
# ----------------------------------------------------------------------------
def _build_tap_masks(H, W):
    """(9, H*W) f32 masks: 1.0 where the 3x3 tap reads inside the image."""
    HW = H * W
    m = np.zeros((9, HW), np.float32)
    for ky in range(3):
        for kx in range(3):
            hh = np.arange(H)[:, None] + (ky - 1)
            ww = np.arange(W)[None, :] + (kx - 1)
            valid = ((hh >= 0) & (hh < H)) & ((ww >= 0) & (ww < W))
            m[ky * 3 + kx] = valid.astype(np.float32).reshape(HW)
    return jnp.asarray(m)


def _prep_conv_params(w_hwio, b, Cmax):
    """HWIO (3,3,cin,cout) -> (cout, 9*Cmax) with zero-padded input channels.

    Row order is tap-major / channel-minor, matching the im2col patch buffer.
    """
    kh, kw, cin, cout = w_hwio.shape
    wp = jnp.pad(w_hwio, ((0, 0), (0, 0), (0, Cmax - cin), (0, 0)))
    wmat = wp.reshape(kh * kw * Cmax, cout).T.astype(jnp.float32)
    bmat = b.reshape(cout, 1).astype(jnp.float32)
    return wmat, bmat


def rrdb_forward(x, params):
    """_ResidualResidualDenseBlock forward.  x: NCHW (B, C, H, W)."""
    B, C, H, W = x.shape
    G = params["rdb1"]["w1"].shape[-1]
    Cmax = C + 4 * G
    HW = H * W

    x2 = x.reshape(B, C, HW)
    masks = _build_tap_masks(H, W)

    flat_params = []
    for blk in ("rdb1", "rdb2", "rdb3"):
        p = params[blk]
        for i in range(1, 6):
            wmat, bmat = _prep_conv_params(p[f"w{i}"], p[f"b{i}"], Cmax)
            flat_params += [wmat, bmat]

    in_specs = [pl.BlockSpec((1, C, HW), lambda b: (b, 0, 0)),
                pl.BlockSpec((9, HW), lambda b: (0, 0))]
    # Constant index_map -> params are DMA'd once and stay resident in VMEM.
    in_specs += [pl.BlockSpec(a.shape, lambda b: (0, 0)) for a in flat_params]

    kernel = functools.partial(_rrdb_kernel, C=C, G=G, W=W)

    # TODO(synk): for realistic ESRGAN spatial sizes (H,W >= 128) add an H-tile
    # grid axis with a 1-row halo so the (9*Cmax, H*W) patch scratch fits
    # v7x's 64 MiB VMEM; unnecessary at these shapes.  bf16 MXU operands
    # (v6e/v7x) are a further option; f32 kept here for exact numerics.
    out = pl.pallas_call(
        kernel,
        out_shape=jax.ShapeDtypeStruct((B, C, HW), x.dtype),
        grid_spec=pltpu.PrefetchScalarGridSpec(
            num_scalar_prefetch=0,
            grid=(B,),
            in_specs=in_specs,
            out_specs=pl.BlockSpec((1, C, HW), lambda b: (b, 0, 0)),
            scratch_shapes=[pltpu.VMEM((9 * Cmax, HW), jnp.float32)],
        ),
        compiler_params=pltpu.CompilerParams(
            dimension_semantics=("parallel",)),
    )(x2, masks, *flat_params)
    return out.reshape(B, C, H, W)


# ----------------------------------------------------------------------------
# Deterministic parameter init (mimics PyTorch Conv2d default U(-1/sqrt(fan_in)))
# ----------------------------------------------------------------------------
def _init_conv(key, cin, cout):
    kw, kb = jax.random.split(key)
    fan_in = cin * 9
    bound = 1.0 / float(np.sqrt(fan_in))
    w = jax.random.uniform(kw, (3, 3, cin, cout), jnp.float32, -bound, bound)
    b = jax.random.uniform(kb, (cout,), jnp.float32, -bound, bound)
    return w, b


def init_rrdb_params(key, channels, growth):
    params = {}
    for name in ("rdb1", "rdb2", "rdb3"):
        p = {}
        for i in range(1, 6):
            key, sub = jax.random.split(key)
            cin = channels + growth * (i - 1)
            cout = growth if i < 5 else channels
            w, b = _init_conv(sub, cin, cout)
            p[f"w{i}"], p[f"b{i}"] = w, b
        params[name] = p
    return params


# ----------------------------------------------------------------------------
# Pure-JAX reference (NCHW) for correctness check
# ----------------------------------------------------------------------------
def _conv_ref(x, w, b):
    y = jax.lax.conv_general_dilated(
        x, w, window_strides=(1, 1), padding=((1, 1), (1, 1)),
        dimension_numbers=("NCHW", "HWIO", "NCHW"),
        precision=jax.lax.Precision.HIGHEST)
    return y + b.reshape(1, -1, 1, 1)


def _rdb_ref(x, p):
    lrelu = lambda v: jnp.where(v >= 0, v, 0.2 * v)
    o1 = lrelu(_conv_ref(x, p["w1"], p["b1"]))
    o2 = lrelu(_conv_ref(jnp.concatenate([x, o1], 1), p["w2"], p["b2"]))
    o3 = lrelu(_conv_ref(jnp.concatenate([x, o1, o2], 1), p["w3"], p["b3"]))
    o4 = lrelu(_conv_ref(jnp.concatenate([x, o1, o2, o3], 1), p["w4"], p["b4"]))
    o5 = _conv_ref(jnp.concatenate([x, o1, o2, o3, o4], 1), p["w5"], p["b5"])
    return o5 * 0.2 + x


def _rrdb_ref(x, params):
    y = _rdb_ref(x, params["rdb1"])
    y = _rdb_ref(y, params["rdb2"])
    y = _rdb_ref(y, params["rdb3"])
    return y * 0.2 + x


# ----------------------------------------------------------------------------
if __name__ == "__main__":
    B, H, W = 2, 16, 16
    channels, growth = 8, 8

    key = jax.random.PRNGKey(0)
    k_params, k_x = jax.random.split(key)
    params = init_rrdb_params(k_params, channels, growth)
    x = jax.random.normal(k_x, (B, channels, H, W), jnp.float32)   # NCHW

    out = jax.jit(rrdb_forward)(x, params)
    out = jax.block_until_ready(out)

    ref = _rrdb_ref(x, params)
    assert out.shape == (B, channels, H, W)
    max_err = jnp.max(jnp.abs(out - ref))
    assert jnp.allclose(out, ref, rtol=1e-4, atol=2e-4), \
        f"max abs err {max_err}"

    print("KERNEL_OK")
</pallas_src>

<mosaic_0001>
module attributes {stable_mosaic.version = 11 : i64} {
  func.func @_rrdb_kernel(%arg0: i32, %arg1: memref<1x8x256xf32, #tpu.memory_space<vmem>>, %arg2: memref<9x256xf32, #tpu.memory_space<vmem>>, %arg3: memref<8x360xf32, #tpu.memory_space<vmem>>, %arg4: memref<8x1xf32, #tpu.memory_space<vmem>>, %arg5: memref<8x360xf32, #tpu.memory_space<vmem>>, %arg6: memref<8x1xf32, #tpu.memory_space<vmem>>, %arg7: memref<8x360xf32, #tpu.memory_space<vmem>>, %arg8: memref<8x1xf32, #tpu.memory_space<vmem>>, %arg9: memref<8x360xf32, #tpu.memory_space<vmem>>, %arg10: memref<8x1xf32, #tpu.memory_space<vmem>>, %arg11: memref<8x360xf32, #tpu.memory_space<vmem>>, %arg12: memref<8x1xf32, #tpu.memory_space<vmem>>, %arg13: memref<8x360xf32, #tpu.memory_space<vmem>>, %arg14: memref<8x1xf32, #tpu.memory_space<vmem>>, %arg15: memref<8x360xf32, #tpu.memory_space<vmem>>, %arg16: memref<8x1xf32, #tpu.memory_space<vmem>>, %arg17: memref<8x360xf32, #tpu.memory_space<vmem>>, %arg18: memref<8x1xf32, #tpu.memory_space<vmem>>, %arg19: memref<8x360xf32, #tpu.memory_space<vmem>>, %arg20: memref<8x1xf32, #tpu.memory_space<vmem>>, %arg21: memref<8x360xf32, #tpu.memory_space<vmem>>, %arg22: memref<8x1xf32, #tpu.memory_space<vmem>>, %arg23: memref<8x360xf32, #tpu.memory_space<vmem>>, %arg24: memref<8x1xf32, #tpu.memory_space<vmem>>, %arg25: memref<8x360xf32, #tpu.memory_space<vmem>>, %arg26: memref<8x1xf32, #tpu.memory_space<vmem>>, %arg27: memref<8x360xf32, #tpu.memory_space<vmem>>, %arg28: memref<8x1xf32, #tpu.memory_space<vmem>>, %arg29: memref<8x360xf32, #tpu.memory_space<vmem>>, %arg30: memref<8x1xf32, #tpu.memory_space<vmem>>, %arg31: memref<8x360xf32, #tpu.memory_space<vmem>>, %arg32: memref<8x1xf32, #tpu.memory_space<vmem>>, %arg33: memref<1x8x256xf32, #tpu.memory_space<vmem>>, %arg34: memref<360x256xf32, #tpu.memory_space<vmem>>) attributes {dimension_semantics = [#tpu.dimension_semantics<parallel>], iteration_bounds = array<i64: 2>, scalar_prefetch = 0 : i64, scratch_operands = 1 : i64, tpu.core_type = #tpu.core_type<tc>, window_params = [{transform_indices = @transform_0, window_bounds = array<i64: 1, 8, 256>}, {pipeline_mode = #tpu.pipeline_mode<synchronous>, transform_indices = @transform_1, window_bounds = array<i64: 9, 256>}, {pipeline_mode = #tpu.pipeline_mode<synchronous>, transform_indices = @transform_2, window_bounds = array<i64: 8, 360>}, {pipeline_mode = #tpu.pipeline_mode<synchronous>, transform_indices = @transform_3, window_bounds = array<i64: 8, 1>}, {pipeline_mode = #tpu.pipeline_mode<synchronous>, transform_indices = @transform_4, window_bounds = array<i64: 8, 360>}, {pipeline_mode = #tpu.pipeline_mode<synchronous>, transform_indices = @transform_5, window_bounds = array<i64: 8, 1>}, {pipeline_mode = #tpu.pipeline_mode<synchronous>, transform_indices = @transform_6, window_bounds = array<i64: 8, 360>}, {pipeline_mode = #tpu.pipeline_mode<synchronous>, transform_indices = @transform_7, window_bounds = array<i64: 8, 1>}, {pipeline_mode = #tpu.pipeline_mode<synchronous>, transform_indices = @transform_8, window_bounds = array<i64: 8, 360>}, {pipeline_mode = #tpu.pipeline_mode<synchronous>, transform_indices = @transform_9, window_bounds = array<i64: 8, 1>}, {pipeline_mode = #tpu.pipeline_mode<synchronous>, transform_indices = @transform_10, window_bounds = array<i64: 8, 360>}, {pipeline_mode = #tpu.pipeline_mode<synchronous>, transform_indices = @transform_11, window_bounds = array<i64: 8, 1>}, {pipeline_mode = #tpu.pipeline_mode<synchronous>, transform_indices = @transform_12, window_bounds = array<i64: 8, 360>}, {pipeline_mode = #tpu.pipeline_mode<synchronous>, transform_indices = @transform_13, window_bounds = array<i64: 8, 1>}, {pipeline_mode = #tpu.pipeline_mode<synchronous>, transform_indices = @transform_14, window_bounds = array<i64: 8, 360>}, {pipeline_mode = #tpu.pipeline_mode<synchronous>, transform_indices = @transform_15, window_bounds = array<i64: 8, 1>}, {pipeline_mode = #tpu.pipeline_mode<synchronous>, transform_indices = @transform_16, window_bounds = array<i64: 8, 360>}, {pipeline_mode = #tpu.pipeline_mode<synchronous>, transform_indices = @transform_17, window_bounds = array<i64: 8, 1>}, {pipeline_mode = #tpu.pipeline_mode<synchronous>, transform_indices = @transform_18, window_bounds = array<i64: 8, 360>}, {pipeline_mode = #tpu.pipeline_mode<synchronous>, transform_indices = @transform_19, window_bounds = array<i64: 8, 1>}, {pipeline_mode = #tpu.pipeline_mode<synchronous>, transform_indices = @transform_20, window_bounds = array<i64: 8, 360>}, {pipeline_mode = #tpu.pipeline_mode<synchronous>, transform_indices = @transform_21, window_bounds = array<i64: 8, 1>}, {pipeline_mode = #tpu.pipeline_mode<synchronous>, transform_indices = @transform_22, window_bounds = array<i64: 8, 360>}, {pipeline_mode = #tpu.pipeline_mode<synchronous>, transform_indices = @transform_23, window_bounds = array<i64: 8, 1>}, {pipeline_mode = #tpu.pipeline_mode<synchronous>, transform_indices = @transform_24, window_bounds = array<i64: 8, 360>}, {pipeline_mode = #tpu.pipeline_mode<synchronous>, transform_indices = @transform_25, window_bounds = array<i64: 8, 1>}, {pipeline_mode = #tpu.pipeline_mode<synchronous>, transform_indices = @transform_26, window_bounds = array<i64: 8, 360>}, {pipeline_mode = #tpu.pipeline_mode<synchronous>, transform_indices = @transform_27, window_bounds = array<i64: 8, 1>}, {pipeline_mode = #tpu.pipeline_mode<synchronous>, transform_indices = @transform_28, window_bounds = array<i64: 8, 360>}, {pipeline_mode = #tpu.pipeline_mode<synchronous>, transform_indices = @transform_29, window_bounds = array<i64: 8, 1>}, {pipeline_mode = #tpu.pipeline_mode<synchronous>, transform_indices = @transform_30, window_bounds = array<i64: 8, 360>}, {pipeline_mode = #tpu.pipeline_mode<synchronous>, transform_indices = @transform_31, window_bounds = array<i64: 8, 1>}, {transform_indices = @transform_32, window_bounds = array<i64: 1, 8, 256>}]} {
    %cst = arith.constant 0.000000e+00 : f32
    %0 = vector.broadcast %cst : f32 to vector<360x256xf32>
    %c0 = arith.constant 0 : index
    %c0_0 = arith.constant 0 : index
    %1 = vector.load %arg34[%c0, %c0_0] : memref<360x256xf32, #tpu.memory_space<vmem>>, vector<360x256xf32>
    tpu.vector_store %arg34[%c0, %c0_0], %0 {strides = array<i32>} : memref<360x256xf32, #tpu.memory_space<vmem>>, vector<360x256xf32>,
    %c0_1 = arith.constant 0 : index
    %c0_2 = arith.constant 0 : index
    %c0_3 = arith.constant 0 : index
    %2 = vector.load %arg1[%c0_1, %c0_2, %c0_3] : memref<1x8x256xf32, #tpu.memory_space<vmem>>, vector<1x8x256xf32>
    %3 = vector.shape_cast %2 : vector<1x8x256xf32> to vector<8x256xf32>
    %c17_i32 = arith.constant 17 : i32
    %4 = tpu.dynamic_rotate %3 by %c17_i32 dim 1 : vector<8x256xf32>, i32 -> vector<8x256xf32>
    %c0_4 = arith.constant 0 : index
    %c0_5 = arith.constant 0 : index
    %5 = vector.load %arg2[%c0_4, %c0_5] : memref<9x256xf32, #tpu.memory_space<vmem>>, vector<1x256xf32>
    %6 = vector.broadcast %5 : vector<1x256xf32> to vector<8x256xf32>
    %7 = arith.mulf %4, %6 : vector<8x256xf32>
    %c0_6 = arith.constant 0 : index
    %c0_7 = arith.constant 0 : index
    %8 = vector.load %arg34[%c0_6, %c0_7] : memref<360x256xf32, #tpu.memory_space<vmem>>, vector<8x256xf32>
    tpu.vector_store %arg34[%c0_6, %c0_7], %7 {strides = array<i32>} : memref<360x256xf32, #tpu.memory_space<vmem>>, vector<8x256xf32>,
    %c16_i32 = arith.constant 16 : i32
    %9 = tpu.dynamic_rotate %3 by %c16_i32 dim 1 : vector<8x256xf32>, i32 -> vector<8x256xf32>
    %c1 = arith.constant 1 : index
    %c0_8 = arith.constant 0 : index
    %10 = vector.load %arg2[%c1, %c0_8] : memref<9x256xf32, #tpu.memory_space<vmem>>, vector<1x256xf32>
    %11 = vector.broadcast %10 : vector<1x256xf32> to vector<8x256xf32>
    %12 = arith.mulf %9, %11 : vector<8x256xf32>
    %c40 = arith.constant 40 : index
    %c0_9 = arith.constant 0 : index
    %13 = vector.load %arg34[%c40, %c0_9] : memref<360x256xf32, #tpu.memory_space<vmem>>, vector<8x256xf32>
    tpu.vector_store %arg34[%c40, %c0_9], %12 {strides = array<i32>} : memref<360x256xf32, #tpu.memory_space<vmem>>, vector<8x256xf32>,
    %c15_i32 = arith.constant 15 : i32
    %14 = tpu.dynamic_rotate %3 by %c15_i32 dim 1 : vector<8x256xf32>, i32 -> vector<8x256xf32>
    %c2 = arith.constant 2 : index
    %c0_10 = arith.constant 0 : index
    %15 = vector.load %arg2[%c2, %c0_10] : memref<9x256xf32, #tpu.memory_space<vmem>>, vector<1x256xf32>
    %16 = vector.broadcast %15 : vector<1x256xf32> to vector<8x256xf32>
    %17 = arith.mulf %14, %16 : vector<8x256xf32>
    %c80 = arith.constant 80 : index
    %c0_11 = arith.constant 0 : index
    %18 = vector.load %arg34[%c80, %c0_11] : memref<360x256xf32, #tpu.memory_space<vmem>>, vector<8x256xf32>
    tpu.vector_store %arg34[%c80, %c0_11], %17 {strides = array<i32>} : memref<360x256xf32, #tpu.memory_space<vmem>>, vector<8x256xf32>,
    %c1_i32 = arith.constant 1 : i32
    %19 = tpu.dynamic_rotate %3 by %c1_i32 dim 1 : vector<8x256xf32>, i32 -> vector<8x256xf32>
    %c3 = arith.constant 3 : index
    %c0_12 = arith.constant 0 : index
    %20 = vector.load %arg2[%c3, %c0_12] : memref<9x256xf32, #tpu.memory_space<vmem>>, vector<1x256xf32>
    %21 = vector.broadcast %20 : vector<1x256xf32> to vector<8x256xf32>
    %22 = arith.mulf %19, %21 : vector<8x256xf32>
    %c120 = arith.constant 120 : index
    %c0_13 = arith.constant 0 : index
    %23 = vector.load %arg34[%c120, %c0_13] : memref<360x256xf32, #tpu.memory_space<vmem>>, vector<8x256xf32>
    tpu.vector_store %arg34[%c120, %c0_13], %22 {strides = array<i32>} : memref<360x256xf32, #tpu.memory_space<vmem>>, vector<8x256xf32>,
    %c160 = arith.constant 160 : index
    %c0_14 = arith.constant 0 : index
    %24 = vector.load %arg34[%c160, %c0_14] : memref<360x256xf32, #tpu.memory_space<vmem>>, vector<8x256xf32>
    tpu.vector_store %arg34[%c160, %c0_14], %3 {strides = array<i32>} : memref<360x256xf32, #tpu.memory_space<vmem>>, vector<8x256xf32>,
    %c255_i32 = arith.constant 255 : i32
    %25 = tpu.dynamic_rotate %3 by %c255_i32 dim 1 : vector<8x256xf32>, i32 -> vector<8x256xf32>
    %c5 = arith.constant 5 : index
    %c0_15 = arith.constant 0 : index
    %26 = vector.load %arg2[%c5, %c0_15] : memref<9x256xf32, #tpu.memory_space<vmem>>, vector<1x256xf32>
    %27 = vector.broadcast %26 : vector<1x256xf32> to vector<8x256xf32>
    %28 = arith.mulf %25, %27 : vector<8x256xf32>
    %c200 = arith.constant 200 : index
    %c0_16 = arith.constant 0 : index
    %29 = vector.load %arg34[%c200, %c0_16] : memref<360x256xf32, #tpu.memory_space<vmem>>, vector<8x256xf32>
    tpu.vector_store %arg34[%c200, %c0_16], %28 {strides = array<i32>} : memref<360x256xf32, #tpu.memory_space<vmem>>, vector<8x256xf32>,
    %c241_i32 = arith.constant 241 : i32
    %30 = tpu.dynamic_rotate %3 by %c241_i32 dim 1 : vector<8x256xf32>, i32 -> vector<8x256xf32>
    %c6 = arith.constant 6 : index
    %c0_17 = arith.constant 0 : index
    %31 = vector.load %arg2[%c6, %c0_17] : memref<9x256xf32, #tpu.memory_space<vmem>>, vector<1x256xf32>
    %32 = vector.broadcast %31 : vector<1x256xf32> to vector<8x256xf32>
    %33 = arith.mulf %30, %32 : vector<8x256xf32>
    %c240 = arith.constant 240 : index
    %c0_18 = arith.constant 0 : index
    %34 = vector.load %arg34[%c240, %c0_18] : memref<360x256xf32, #tpu.memory_space<vmem>>, vector<8x256xf32>
    tpu.vector_store %arg34[%c240, %c0_18], %33 {strides = array<i32>} : memref<360x256xf32, #tpu.memory_space<vmem>>, vector<8x256xf32>,
    %c240_i32 = arith.constant 240 : i32
    %35 = tpu.dynamic_rotate %3 by %c240_i32 dim 1 : vector<8x256xf32>, i32 -> vector<8x256xf32>
    %c7 = arith.constant 7 : index
    %c0_19 = arith.constant 0 : index
    %36 = vector.load %arg2[%c7, %c0_19] : memref<9x256xf32, #tpu.memory_space<vmem>>, vector<1x256xf32>
    %37 = vector.broadcast %36 : vector<1x256xf32> to vector<8x256xf32>
    %38 = arith.mulf %35, %37 : vector<8x256xf32>
    %c280 = arith.constant 280 : index
    %c0_20 = arith.constant 0 : index
    %39 = vector.load %arg34[%c280, %c0_20] : memref<360x256xf32, #tpu.memory_space<vmem>>, vector<8x256xf32>
    tpu.vector_store %arg34[%c280, %c0_20], %38 {strides = array<i32>} : memref<360x256xf32, #tpu.memory_space<vmem>>, vector<8x256xf32>,
    %c239_i32 = arith.constant 239 : i32
    %40 = tpu.dynamic_rotate %3 by %c239_i32 dim 1 : vector<8x256xf32>, i32 -> vector<8x256xf32>
    %c8 = arith.constant 8 : index
    %c0_21 = arith.constant 0 : index
    %41 = vector.load %arg2[%c8, %c0_21] : memref<9x256xf32, #tpu.memory_space<vmem>>, vector<1x256xf32>
    %42 = vector.broadcast %41 : vector<1x256xf32> to vector<8x256xf32>
    %43 = arith.mulf %40, %42 : vector<8x256xf32>
    %c320 = arith.constant 320 : index
    %c0_22 = arith.constant 0 : index
    %44 = vector.load %arg34[%c320, %c0_22] : memref<360x256xf32, #tpu.memory_space<vmem>>, vector<8x256xf32>
    tpu.vector_store %arg34[%c320, %c0_22], %43 {strides = array<i32>} : memref<360x256xf32, #tpu.memory_space<vmem>>, vector<8x256xf32>,
    %c0_23 = arith.constant 0 : index
    %c0_24 = arith.constant 0 : index
    %45 = vector.load %arg3[%c0_23, %c0_24] : memref<8x360xf32, #tpu.memory_space<vmem>>, vector<8x360xf32>
    %c0_25 = arith.constant 0 : index
    %c0_26 = arith.constant 0 : index
    %46 = vector.load %arg34[%c0_25, %c0_26] : memref<360x256xf32, #tpu.memory_space<vmem>>, vector<360x256xf32>
    %cst_27 = arith.constant dense<0.000000e+00> : vector<8x256xf32>
    %47 = tpu.matmul %45, %46, %cst_27 {dimension_numbers = #tpu.dot_dimension_numbers<[1], [0], [0], [1], [0, 0, 1, 1], [], []>} : vector<8x360xf32>, vector<360x256xf32>, vector<8x256xf32> -> vector<8x256xf32>
    %c0_28 = arith.constant 0 : index
    %c0_29 = arith.constant 0 : index
    %48 = vector.load %arg4[%c0_28, %c0_29] : memref<8x1xf32, #tpu.memory_space<vmem>>, vector<8x1xf32>
    %49 = vector.broadcast %48 : vector<8x1xf32> to vector<8x256xf32>
    %50 = arith.addf %47, %49 : vector<8x256xf32>
    %cst_30 = arith.constant 2.000000e-01 : f32
    %51 = vector.broadcast %cst_30 : f32 to vector<8x256xf32>
    %52 = arith.mulf %51, %50 : vector<8x256xf32>
    %53 = arith.maximumf %50, %52 : vector<8x256xf32>
    %c17_i32_31 = arith.constant 17 : i32
    %54 = tpu.dynamic_rotate %53 by %c17_i32_31 dim 1 : vector<8x256xf32>, i32 -> vector<8x256xf32>
    %c0_32 = arith.constant 0 : index
    %c0_33 = arith.constant 0 : index
    %55 = vector.load %arg2[%c0_32, %c0_33] : memref<9x256xf32, #tpu.memory_space<vmem>>, vector<1x256xf32>
    %56 = vector.broadcast %55 : vector<1x256xf32> to vector<8x256xf32>
    %57 = arith.mulf %54, %56 : vector<8x256xf32>
    %c8_34 = arith.constant 8 : index
    %c0_35 = arith.constant 0 : index
    %58 = vector.load %arg34[%c8_34, %c0_35] : memref<360x256xf32, #tpu.memory_space<vmem>>, vector<8x256xf32>
    tpu.vector_store %arg34[%c8_34, %c0_35], %57 {strides = array<i32>} : memref<360x256xf32, #tpu.memory_space<vmem>>, vector<8x256xf32>,
    %c16_i32_36 = arith.constant 16 : i32
    %59 = tpu.dynamic_rotate %53 by %c16_i32_36 dim 1 : vector<8x256xf32>, i32 -> vector<8x256xf32>
    %c1_37 = arith.constant 1 : index
    %c0_38 = arith.constant 0 : index
    %60 = vector.load %arg2[%c1_37, %c0_38] : memref<9x256xf32, #tpu.memory_space<vmem>>, vector<1x256xf32>
    %61 = vector.broadcast %60 : vector<1x256xf32> to vector<8x256xf32>
    %62 = arith.mulf %59, %61 : vector<8x256xf32>
    %c48 = arith.constant 48 : index
    %c0_39 = arith.constant 0 : index
    %63 = vector.load %arg34[%c48, %c0_39] : memref<360x256xf32, #tpu.memory_space<vmem>>, vector<8x256xf32>
    tpu.vector_store %arg34[%c48, %c0_39], %62 {strides = array<i32>} : memref<360x256xf32, #tpu.memory_space<vmem>>, vector<8x256xf32>,
    %c15_i32_40 = arith.constant 15 : i32
    %64 = tpu.dynamic_rotate %53 by %c15_i32_40 dim 1 : vector<8x256xf32>, i32 -> vector<8x256xf32>
    %c2_41 = arith.constant 2 : index
    %c0_42 = arith.constant 0 : index
    %65 = vector.load %arg2[%c2_41, %c0_42] : memref<9x256xf32, #tpu.memory_space<vmem>>, vector<1x256xf32>
    %66 = vector.broadcast %65 : vector<1x256xf32> to vector<8x256xf32>
    %67 = arith.mulf %64, %66 : vector<8x256xf32>
    %c88 = arith.constant 88 : index
    %c0_43 = arith.constant 0 : index
    %68 = vector.load %arg34[%c88, %c0_43] : memref<360x256xf32, #tpu.memory_space<vmem>>, vector<8x256xf32>
    tpu.vector_store %arg34[%c88, %c0_43], %67 {strides = array<i32>} : memref<360x256xf32, #tpu.memory_space<vmem>>, vector<8x256xf32>,
    %c1_i32_44 = arith.constant 1 : i32
    %69 = tpu.dynamic_rotate %53 by %c1_i32_44 dim 1 : vector<8x256xf32>, i32 -> vector<8x256xf32>
    %c3_45 = arith.constant 3 : index
    %c0_46 = arith.constant 0 : index
    %70 = vector.load %arg2[%c3_45, %c0_46] : memref<9x256xf32, #tpu.memory_space<vmem>>, vector<1x256xf32>
    %71 = vector.broadcast %70 : vector<1x256xf32> to vector<8x256xf32>
    %72 = arith.mulf %69, %71 : vector<8x256xf32>
    %c128 = arith.constant 128 : index
    %c0_47 = arith.constant 0 : index
    %73 = vector.load %arg34[%c128, %c0_47] : memref<360x256xf32, #tpu.memory_space<vmem>>, vector<8x256xf32>
    tpu.vector_store %arg34[%c128, %c0_47], %72 {strides = array<i32>} : memref<360x256xf32, #tpu.memory_space<vmem>>, vector<8x256xf32>,
    %c168 = arith.constant 168 : index
    %c0_48 = arith.constant 0 : index
    %74 = vector.load %arg34[%c168, %c0_48] : memref<360x256xf32, #tpu.memory_space<vmem>>, vector<8x256xf32>
    tpu.vector_store %arg34[%c168, %c0_48], %53 {strides = array<i32>} : memref<360x256xf32, #tpu.memory_space<vmem>>, vector<8x256xf32>,
    %c255_i32_49 = arith.constant 255 : i32
    %75 = tpu.dynamic_rotate %53 by %c255_i32_49 dim 1 : vector<8x256xf32>, i32 -> vector<8x256xf32>
    %c5_50 = arith.constant 5 : index
    %c0_51 = arith.constant 0 : index
    %76 = vector.load %arg2[%c5_50, %c0_51] : memref<9x256xf32, #tpu.memory_space<vmem>>, vector<1x256xf32>
    %77 = vector.broadcast %76 : vector<1x256xf32> to vector<8x256xf32>
    %78 = arith.mulf %75, %77 : vector<8x256xf32>
    %c208 = arith.constant 208 : index
    %c0_52 = arith.constant 0 : index
    %79 = vector.load %arg34[%c208, %c0_52] : memref<360x256xf32, #tpu.memory_space<vmem>>, vector<8x256xf32>
    tpu.vector_store %arg34[%c208, %c0_52], %78 {strides = array<i32>} : memref<360x256xf32, #tpu.memory_space<vmem>>, vector<8x256xf32>,
    %c241_i32_53 = arith.constant 241 : i32
    %80 = tpu.dynamic_rotate %53 by %c241_i32_53 dim 1 : vector<8x256xf32>, i32 -> vector<8x256xf32>
    %c6_54 = arith.constant 6 : index
    %c0_55 = arith.constant 0 : index
    %81 = vector.load %arg2[%c6_54, %c0_55] : memref<9x256xf32, #tpu.memory_space<vmem>>, vector<1x256xf32>
    %82 = vector.broadcast %81 : vector<1x256xf32> to vector<8x256xf32>
    %83 = arith.mulf %80, %82 : vector<8x256xf32>
    %c248 = arith.constant 248 : index
    %c0_56 = arith.constant 0 : index
    %84 = vector.load %arg34[%c248, %c0_56] : memref<360x256xf32, #tpu.memory_space<vmem>>, vector<8x256xf32>
    tpu.vector_store %arg34[%c248, %c0_56], %83 {strides = array<i32>} : memref<360x256xf32, #tpu.memory_space<vmem>>, vector<8x256xf32>,
    %c240_i32_57 = arith.constant 240 : i32
    %85 = tpu.dynamic_rotate %53 by %c240_i32_57 dim 1 : vector<8x256xf32>, i32 -> vector<8x256xf32>
    %c7_58 = arith.constant 7 : index
    %c0_59 = arith.constant 0 : index
    %86 = vector.load %arg2[%c7_58, %c0_59] : memref<9x256xf32, #tpu.memory_space<vmem>>, vector<1x256xf32>
    %87 = vector.broadcast %86 : vector<1x256xf32> to vector<8x256xf32>
    %88 = arith.mulf %85, %87 : vector<8x256xf32>
    %c288 = arith.constant 288 : index
    %c0_60 = arith.constant 0 : index
    %89 = vector.load %arg34[%c288, %c0_60] : memref<360x256xf32, #tpu.memory_space<vmem>>, vector<8x256xf32>
    tpu.vector_store %arg34[%c288, %c0_60], %88 {strides = array<i32>} : memref<360x256xf32, #tpu.memory_space<vmem>>, vector<8x256xf32>,
    %c239_i32_61 = arith.constant 239 : i32
    %90 = tpu.dynamic_rotate %53 by %c239_i32_61 dim 1 : vector<8x256xf32>, i32 -> vector<8x256xf32>
    %c8_62 = arith.constant 8 : index
    %c0_63 = arith.constant 0 : index
    %91 = vector.load %arg2[%c8_62, %c0_63] : memref<9x256xf32, #tpu.memory_space<vmem>>, vector<1x256xf32>
    %92 = vector.broadcast %91 : vector<1x256xf32> to vector<8x256xf32>
    %93 = arith.mulf %90, %92 : vector<8x256xf32>
    %c328 = arith.constant 328 : index
    %c0_64 = arith.constant 0 : index
    %94 = vector.load %arg34[%c328, %c0_64] : memref<360x256xf32, #tpu.memory_space<vmem>>, vector<8x256xf32>
    tpu.vector_store %arg34[%c328, %c0_64], %93 {strides = array<i32>} : memref<360x256xf32, #tpu.memory_space<vmem>>, vector<8x256xf32>,
    %c0_65 = arith.constant 0 : index
    %c0_66 = arith.constant 0 : index
    %95 = vector.load %arg5[%c0_65, %c0_66] : memref<8x360xf32, #tpu.memory_space<vmem>>, vector<8x360xf32>
    %c0_67 = arith.constant 0 : index
    %c0_68 = arith.constant 0 : index
    %96 = vector.load %arg34[%c0_67, %c0_68] : memref<360x256xf32, #tpu.memory_space<vmem>>, vector<360x256xf32>
    %cst_69 = arith.constant dense<0.000000e+00> : vector<8x256xf32>
    %97 = tpu.matmul %95, %96, %cst_69 {dimension_numbers = #tpu.dot_dimension_numbers<[1], [0], [0], [1], [0, 0, 1, 1], [], []>} : vector<8x360xf32>, vector<360x256xf32>, vector<8x256xf32> -> vector<8x256xf32>
    %c0_70 = arith.constant 0 : index
    %c0_71 = arith.constant 0 : index
    %98 = vector.load %arg6[%c0_70, %c0_71] : memref<8x1xf32, #tpu.memory_space<vmem>>, vector<8x1xf32>
    %99 = vector.broadcast %98 : vector<8x1xf32> to vector<8x256xf32>
    %100 = arith.addf %97, %99 : vector<8x256xf32>
    %cst_72 = arith.constant 2.000000e-01 : f32
    %101 = vector.broadcast %cst_72 : f32 to vector<8x256xf32>
    %102 = arith.mulf %101, %100 : vector<8x256xf32>
    %103 = arith.maximumf %100, %102 : vector<8x256xf32>
    %c17_i32_73 = arith.constant 17 : i32
    %104 = tpu.dynamic_rotate %103 by %c17_i32_73 dim 1 : vector<8x256xf32>, i32 -> vector<8x256xf32>
    %c0_74 = arith.constant 0 : index
    %c0_75 = arith.constant 0 : index
    %105 = vector.load %arg2[%c0_74, %c0_75] : memref<9x256xf32, #tpu.memory_space<vmem>>, vector<1x256xf32>
    %106 = vector.broadcast %105 : vector<1x256xf32> to vector<8x256xf32>
    %107 = arith.mulf %104, %106 : vector<8x256xf32>
    %c16 = arith.constant 16 : index
    %c0_76 = arith.constant 0 : index
    %108 = vector.load %arg34[%c16, %c0_76] : memref<360x256xf32, #tpu.memory_space<vmem>>, vector<8x256xf32>
    tpu.vector_store %arg34[%c16, %c0_76], %107 {strides = array<i32>} : memref<360x256xf32, #tpu.memory_space<vmem>>, vector<8x256xf32>,
    %c16_i32_77 = arith.constant 16 : i32
    %109 = tpu.dynamic_rotate %103 by %c16_i32_77 dim 1 : vector<8x256xf32>, i32 -> vector<8x256xf32>
    %c1_78 = arith.constant 1 : index
    %c0_79 = arith.constant 0 : index
    %110 = vector.load %arg2[%c1_78, %c0_79] : memref<9x256xf32, #tpu.memory_space<vmem>>, vector<1x256xf32>
    %111 = vector.broadcast %110 : vector<1x256xf32> to vector<8x256xf32>
    %112 = arith.mulf %109, %111 : vector<8x256xf32>
    %c56 = arith.constant 56 : index
    %c0_80 = arith.constant 0 : index
    %113 = vector.load %arg34[%c56, %c0_80] : memref<360x256xf32, #tpu.memory_space<vmem>>, vector<8x256xf32>
    tpu.vector_store %arg34[%c56, %c0_80], %112 {strides = array<i32>} : memref<360x256xf32, #tpu.memory_space<vmem>>, vector<8x256xf32>,
    %c15_i32_81 = arith.constant 15 : i32
    %114 = tpu.dynamic_rotate %103 by %c15_i32_81 dim 1 : vector<8x256xf32>, i32 -> vector<8x256xf32>
    %c2_82 = arith.constant 2 : index
    %c0_83 = arith.constant 0 : index
    %115 = vector.load %arg2[%c2_82, %c0_83] : memref<9x256xf32, #tpu.memory_space<vmem>>, vector<1x256xf32>
    %116 = vector.broadcast %115 : vector<1x256xf32> to vector<8x256xf32>
    %117 = arith.mulf %114, %116 : vector<8x256xf32>
    %c96 = arith.constant 96 : index
    %c0_84 = arith.constant 0 : index
    %118 = vector.load %arg34[%c96, %c0_84] : memref<360x256xf32, #tpu.memory_space<vmem>>, vector<8x256xf32>
    tpu.vector_store %arg34[%c96, %c0_84], %117 {strides = array<i32>} : memref<360x256xf32, #tpu.memory_space<vmem>>, vector<8x256xf32>,
    %c1_i32_85 = arith.constant 1 : i32
    %119 = tpu.dynamic_rotate %103 by %c1_i32_85 dim 1 : vector<8x256xf32>, i32 -> vector<8x256xf32>
    %c3_86 = arith.constant 3 : index
    %c0_87 = arith.constant 0 : index
    %120 = vector.load %arg2[%c3_86, %c0_87] : memref<9x256xf32, #tpu.memory_space<vmem>>, vector<1x256xf32>
    %121 = vector.broadcast %120 : vector<1x256xf32> to vector<8x256xf32>
    %122 = arith.mulf %119, %121 : vector<8x256xf32>
    %c136 = arith.constant 136 : index
    %c0_88 = arith.constant 0 : index
    %123 = vector.load %arg34[%c136, %c0_88] : memref<360x256xf32, #tpu.memory_space<vmem>>, vector<8x256xf32>
    tpu.vector_store %arg34[%c136, %c0_88], %122 {strides = array<i32>} : memref<360x256xf32, #tpu.memory_space<vmem>>, vector<8x256xf32>,
    %c176 = arith.constant 176 : index
    %c0_89 = arith.constant 0 : index
    %124 = vector.load %arg34[%c176, %c0_89] : memref<360x256xf32, #tpu.memory_space<vmem>>, vector<8x256xf32>
    tpu.vector_store %arg34[%c176, %c0_89], %103 {strides = array<i32>} : memref<360x256xf32, #tpu.memory_space<vmem>>, vector<8x256xf32>,
    %c255_i32_90 = arith.constant 255 : i32
    %125 = tpu.dynamic_rotate %103 by %c255_i32_90 dim 1 : vector<8x256xf32>, i32 -> vector<8x256xf32>
    %c5_91 = arith.constant 5 : index
    %c0_92 = arith.constant 0 : index
    %126 = vector.load %arg2[%c5_91, %c0_92] : memref<9x256xf32, #tpu.memory_space<vmem>>, vector<1x256xf32>
    %127 = vector.broadcast %126 : vector<1x256xf32> to vector<8x256xf32>
    %128 = arith.mulf %125, %127 : vector<8x256xf32>
    %c216 = arith.constant 216 : index
    %c0_93 = arith.constant 0 : index
    %129 = vector.load %arg34[%c216, %c0_93] : memref<360x256xf32, #tpu.memory_space<vmem>>, vector<8x256xf32>
    tpu.vector_store %arg34[%c216, %c0_93], %128 {strides = array<i32>} : memref<360x256xf32, #tpu.memory_space<vmem>>, vector<8x256xf32>,
    %c241_i32_94 = arith.constant 241 : i32
    %130 = tpu.dynamic_rotate %103 by %c241_i32_94 dim 1 : vector<8x256xf32>, i32 -> vector<8x256xf32>
    %c6_95 = arith.constant 6 : index
    %c0_96 = arith.constant 0 : index
    %131 = vector.load %arg2[%c6_95, %c0_96] : memref<9x256xf32, #tpu.memory_space<vmem>>, vector<1x256xf32>
    %132 = vector.broadcast %131 : vector<1x256xf32> to vector<8x256xf32>
    %133 = arith.mulf %130, %132 : vector<8x256xf32>
    %c256 = arith.constant 256 : index
    %c0_97 = arith.constant 0 : index
    %134 = vector.load %arg34[%c256, %c0_97] : memref<360x256xf32, #tpu.memory_space<vmem>>, vector<8x256xf32>
    tpu.vector_store %arg34[%c256, %c0_97], %133 {strides = array<i32>} : memref<360x256xf32, #tpu.memory_space<vmem>>, vector<8x256xf32>,
    %c240_i32_98 = arith.constant 240 : i32
    %135 = tpu.dynamic_rotate %103 by %c240_i32_98 dim 1 : vector<8x256xf32>, i32 -> vector<8x256xf32>
    %c7_99 = arith.constant 7 : index
    %c0_100 = arith.constant 0 : index
    %136 = vector.load %arg2[%c7_99, %c0_100] : memref<9x256xf32, #tpu.memory_space<vmem>>, vector<1x256xf32>
    %137 = vector.broadcast %136 : vector<1x256xf32> to vector<8x256xf32>
    %138 = arith.mulf %135, %137 : vector<8x256xf32>
    %c296 = arith.constant 296 : index
    %c0_101 = arith.constant 0 : index
    %139 = vector.load %arg34[%c296, %c0_101] : memref<360x256xf32, #tpu.memory_space<vmem>>, vector<8x256xf32>
    tpu.vector_store %arg34[%c296, %c0_101], %138 {strides = array<i32>} : memref<360x256xf32, #tpu.memory_space<vmem>>, vector<8x256xf32>,
    %c239_i32_102 = arith.constant 239 : i32
    %140 = tpu.dynamic_rotate %103 by %c239_i32_102 dim 1 : vector<8x256xf32>, i32 -> vector<8x256xf32>
    %c8_103 = arith.constant 8 : index
    %c0_104 = arith.constant 0 : index
    %141 = vector.load %arg2[%c8_103, %c0_104] : memref<9x256xf32, #tpu.memory_space<vmem>>, vector<1x256xf32>
    %142 = vector.broadcast %141 : vector<1x256xf32> to vector<8x256xf32>
    %143 = arith.mulf %140, %142 : vector<8x256xf32>
    %c336 = arith.constant 336 : index
    %c0_105 = arith.constant 0 : index
    %144 = vector.load %arg34[%c336, %c0_105] : memref<360x256xf32, #tpu.memory_space<vmem>>, vector<8x256xf32>
    tpu.vector_store %arg34[%c336, %c0_105], %143 {strides = array<i32>} : memref<360x256xf32, #tpu.memory_space<vmem>>, vector<8x256xf32>,
    %c0_106 = arith.constant 0 : index
    %c0_107 = arith.constant 0 : index
    %145 = vector.load %arg7[%c0_106, %c0_107] : memref<8x360xf32, #tpu.memory_space<vmem>>, vector<8x360xf32>
    %c0_108 = arith.constant 0 : index
    %c0_109 = arith.constant 0 : index
    %146 = vector.load %arg34[%c0_108, %c0_109] : memref<360x256xf32, #tpu.memory_space<vmem>>, vector<360x256xf32>
    %cst_110 = arith.constant dense<0.000000e+00> : vector<8x256xf32>
    %147 = tpu.matmul %145, %146, %cst_110 {dimension_numbers = #tpu.dot_dimension_numbers<[1], [0], [0], [1], [0, 0, 1, 1], [], []>} : vector<8x360xf32>, vector<360x256xf32>, vector<8x256xf32> -> vector<8x256xf32>
    %c0_111 = arith.constant 0 : index
    %c0_112 = arith.constant 0 : index
    %148 = vector.load %arg8[%c0_111, %c0_112] : memref<8x1xf32, #tpu.memory_space<vmem>>, vector<8x1xf32>
    %149 = vector.broadcast %148 : vector<8x1xf32> to vector<8x256xf32>
    %150 = arith.addf %147, %149 : vector<8x256xf32>
    %cst_113 = arith.constant 2.000000e-01 : f32
    %151 = vector.broadcast %cst_113 : f32 to vector<8x256xf32>
    %152 = arith.mulf %151, %150 : vector<8x256xf32>
    %153 = arith.maximumf %150, %152 : vector<8x256xf32>
    %c17_i32_114 = arith.constant 17 : i32
    %154 = tpu.dynamic_rotate %153 by %c17_i32_114 dim 1 : vector<8x256xf32>, i32 -> vector<8x256xf32>
    %c0_115 = arith.constant 0 : index
    %c0_116 = arith.constant 0 : index
    %155 = vector.load %arg2[%c0_115, %c0_116] : memref<9x256xf32, #tpu.memory_space<vmem>>, vector<1x256xf32>
    %156 = vector.broadcast %155 : vector<1x256xf32> to vector<8x256xf32>
    %157 = arith.mulf %154, %156 : vector<8x256xf32>
    %c24 = arith.constant 24 : index
    %c0_117 = arith.constant 0 : index
    %158 = vector.load %arg34[%c24, %c0_117] : memref<360x256xf32, #tpu.memory_space<vmem>>, vector<8x256xf32>
    tpu.vector_store %arg34[%c24, %c0_117], %157 {strides = array<i32>} : memref<360x256xf32, #tpu.memory_space<vmem>>, vector<8x256xf32>,
    %c16_i32_118 = arith.constant 16 : i32
    %159 = tpu.dynamic_rotate %153 by %c16_i32_118 dim 1 : vector<8x256xf32>, i32 -> vector<8x256xf32>
    %c1_119 = arith.constant 1 : index
    %c0_120 = arith.constant 0 : index
    %160 = vector.load %arg2[%c1_119, %c0_120] : memref<9x256xf32, #tpu.memory_space<vmem>>, vector<1x256xf32>
    %161 = vector.broadcast %160 : vector<1x256xf32> to vector<8x256xf32>
    %162 = arith.mulf %159, %161 : vector<8x256xf32>
    %c64 = arith.constant 64 : index
    %c0_121 = arith.constant 0 : index
    %163 = vector.load %arg34[%c64, %c0_121] : memref<360x256xf32, #tpu.memory_space<vmem>>, vector<8x256xf32>
    tpu.vector_store %arg34[%c64, %c0_121], %162 {strides = array<i32>} : memref<360x256xf32, #tpu.memory_space<vmem>>, vector<8x256xf32>,
    %c15_i32_122 = arith.constant 15 : i32
    %164 = tpu.dynamic_rotate %153 by %c15_i32_122 dim 1 : vector<8x256xf32>, i32 -> vector<8x256xf32>
    %c2_123 = arith.constant 2 : index
    %c0_124 = arith.constant 0 : index
    %165 = vector.load %arg2[%c2_123, %c0_124] : memref<9x256xf32, #tpu.memory_space<vmem>>, vector<1x256xf32>
    %166 = vector.broadcast %165 : vector<1x256xf32> to vector<8x256xf32>
    %167 = arith.mulf %164, %166 : vector<8x256xf32>
    %c104 = arith.constant 104 : index
    %c0_125 = arith.constant 0 : index
    %168 = vector.load %arg34[%c104, %c0_125] : memref<360x256xf32, #tpu.memory_space<vmem>>, vector<8x256xf32>
    tpu.vector_store %arg34[%c104, %c0_125], %167 {strides = array<i32>} : memref<360x256xf32, #tpu.memory_space<vmem>>, vector<8x256xf32>,
    %c1_i32_126 = arith.constant 1 : i32
    %169 = tpu.dynamic_rotate %153 by %c1_i32_126 dim 1 : vector<8x256xf32>, i32 -> vector<8x256xf32>
    %c3_127 = arith.constant 3 : index
    %c0_128 = arith.constant 0 : index
    %170 = vector.load %arg2[%c3_127, %c0_128] : memref<9x256xf32, #tpu.memory_space<vmem>>, vector<1x256xf32>
    %171 = vector.broadcast %170 : vector<1x256xf32> to vector<8x256xf32>
    %172 = arith.mulf %169, %171 : vector<8x256xf32>
    %c144 = arith.constant 144 : index
    %c0_129 = arith.constant 0 : index
    %173 = vector.load %arg34[%c144, %c0_129] : memref<360x256xf32, #tpu.memory_space<vmem>>, vector<8x256xf32>
    tpu.vector_store %arg34[%c144, %c0_129], %172 {strides = array<i32>} : memref<360x256xf32, #tpu.memory_space<vmem>>, vector<8x256xf32>,
    %c184 = arith.constant 184 : index
    %c0_130 = arith.constant 0 : index
    %174 = vector.load %arg34[%c184, %c0_130] : memref<360x256xf32, #tpu.memory_space<vmem>>, vector<8x256xf32>
    tpu.vector_store %arg34[%c184, %c0_130], %153 {strides = array<i32>} : memref<360x256xf32, #tpu.memory_space<vmem>>, vector<8x256xf32>,
    %c255_i32_131 = arith.constant 255 : i32
    %175 = tpu.dynamic_rotate %153 by %c255_i32_131 dim 1 : vector<8x256xf32>, i32 -> vector<8x256xf32>
    %c5_132 = arith.constant 5 : index
    %c0_133 = arith.constant 0 : index
    %176 = vector.load %arg2[%c5_132, %c0_133] : memref<9x256xf32, #tpu.memory_space<vmem>>, vector<1x256xf32>
    %177 = vector.broadcast %176 : vector<1x256xf32> to vector<8x256xf32>
    %178 = arith.mulf %175, %177 : vector<8x256xf32>
    %c224 = arith.constant 224 : index
    %c0_134 = arith.constant 0 : index
    %179 = vector.load %arg34[%c224, %c0_134] : memref<360x256xf32, #tpu.memory_space<vmem>>, vector<8x256xf32>
    tpu.vector_store %arg34[%c224, %c0_134], %178 {strides = array<i32>} : memref<360x256xf32, #tpu.memory_space<vmem>>, vector<8x256xf32>,
    %c241_i32_135 = arith.constant 241 : i32
    %180 = tpu.dynamic_rotate %153 by %c241_i32_135 dim 1 : vector<8x256xf32>, i32 -> vector<8x256xf32>
    %c6_136 = arith.constant 6 : index
    %c0_137 = arith.constant 0 : index
    %181 = vector.load %arg2[%c6_136, %c0_137] : memref<9x256xf32, #tpu.memory_space<vmem>>, vector<1x256xf32>
    %182 = vector.broadcast %181 : vector<1x256xf32> to vector<8x256xf32>
    %183 = arith.mulf %180, %182 : vector<8x256xf32>
    %c264 = arith.constant 264 : index
    %c0_138 = arith.constant 0 : index
    %184 = vector.load %arg34[%c264, %c0_138] : memref<360x256xf32, #tpu.memory_space<vmem>>, vector<8x256xf32>
    tpu.vector_store %arg34[%c264, %c0_138], %183 {strides = array<i32>} : memref<360x256xf32, #tpu.memory_space<vmem>>, vector<8x256xf32>,
    %c240_i32_139 = arith.constant 240 : i32
    %185 = tpu.dynamic_rotate %153 by %c240_i32_139 dim 1 : vector<8x256xf32>, i32 -> vector<8x256xf32>
    %c7_140 = arith.constant 7 : index
    %c0_141 = arith.constant 0 : index
    %186 = vector.load %arg2[%c7_140, %c0_141] : memref<9x256xf32, #tpu.memory_space<vmem>>, vector<1x256xf32>
    %187 = vector.broadcast %186 : vector<1x256xf32> to vector<8x256xf32>
    %188 = arith.mulf %185, %187 : vector<8x256xf32>
    %c304 = arith.constant 304 : index
    %c0_142 = arith.constant 0 : index
    %189 = vector.load %arg34[%c304, %c0_142] : memref<360x256xf32, #tpu.memory_space<vmem>>, vector<8x256xf32>
    tpu.vector_store %arg34[%c304, %c0_142], %188 {strides = array<i32>} : memref<360x256xf32, #tpu.memory_space<vmem>>, vector<8x256xf32>,
    %c239_i32_143 = arith.constant 239 : i32
    %190 = tpu.dynamic_rotate %153 by %c239_i32_143 dim 1 : vector<8x256xf32>, i32 -> vector<8x256xf32>
    %c8_144 = arith.constant 8 : index
    %c0_145 = arith.constant 0 : index
    %191 = vector.load %arg2[%c8_144, %c0_145] : memref<9x256xf32, #tpu.memory_space<vmem>>, vector<1x256xf32>
    %192 = vector.broadcast %191 : vector<1x256xf32> to vector<8x256xf32>
    %193 = arith.mulf %190, %192 : vector<8x256xf32>
    %c344 = arith.constant 344 : index
    %c0_146 = arith.constant 0 : index
    %194 = vector.load %arg34[%c344, %c0_146] : memref<360x256xf32, #tpu.memory_space<vmem>>, vector<8x256xf32>
    tpu.vector_store %arg34[%c344, %c0_146], %193 {strides = array<i32>} : memref<360x256xf32, #tpu.memory_space<vmem>>, vector<8x256xf32>,
    %c0_147 = arith.constant 0 : index
    %c0_148 = arith.constant 0 : index
    %195 = vector.load %arg9[%c0_147, %c0_148] : memref<8x360xf32, #tpu.memory_space<vmem>>, vector<8x360xf32>
    %c0_149 = arith.constant 0 : index
    %c0_150 = arith.constant 0 : index
    %196 = vector.load %arg34[%c0_149, %c0_150] : memref<360x256xf32, #tpu.memory_space<vmem>>, vector<360x256xf32>
    %cst_151 = arith.constant dense<0.000000e+00> : vector<8x256xf32>
    %197 = tpu.matmul %195, %196, %cst_151 {dimension_numbers = #tpu.dot_dimension_numbers<[1], [0], [0], [1], [0, 0, 1, 1], [], []>} : vector<8x360xf32>, vector<360x256xf32>, vector<8x256xf32> -> vector<8x256xf32>
    %c0_152 = arith.constant 0 : index
    %c0_153 = arith.constant 0 : index
    %198 = vector.load %arg10[%c0_152, %c0_153] : memref<8x1xf32, #tpu.memory_space<vmem>>, vector<8x1xf32>
    %199 = vector.broadcast %198 : vector<8x1xf32> to vector<8x256xf32>
    %200 = arith.addf %197, %199 : vector<8x256xf32>
    %cst_154 = arith.constant 2.000000e-01 : f32
    %201 = vector.broadcast %cst_154 : f32 to vector<8x256xf32>
    %202 = arith.mulf %201, %200 : vector<8x256xf32>
    %203 = arith.maximumf %200, %202 : vector<8x256xf32>
    %c17_i32_155 = arith.constant 17 : i32
    %204 = tpu.dynamic_rotate %203 by %c17_i32_155 dim 1 : vector<8x256xf32>, i32 -> vector<8x256xf32>
    %c0_156 = arith.constant 0 : index
    %c0_157 = arith.constant 0 : index
    %205 = vector.load %arg2[%c0_156, %c0_157] : memref<9x256xf32, #tpu.memory_space<vmem>>, vector<1x256xf32>
    %206 = vector.broadcast %205 : vector<1x256xf32> to vector<8x256xf32>
    %207 = arith.mulf %204, %206 : vector<8x256xf32>
    %c32 = arith.constant 32 : index
    %c0_158 = arith.constant 0 : index
    %208 = vector.load %arg34[%c32, %c0_158] : memref<360x256xf32, #tpu.memory_space<vmem>>, vector<8x256xf32>
    tpu.vector_store %arg34[%c32, %c0_158], %207 {strides = array<i32>} : memref<360x256xf32, #tpu.memory_space<vmem>>, vector<8x256xf32>,
    %c16_i32_159 = arith.constant 16 : i32
    %209 = tpu.dynamic_rotate %203 by %c16_i32_159 dim 1 : vector<8x256xf32>, i32 -> vector<8x256xf32>
    %c1_160 = arith.constant 1 : index
    %c0_161 = arith.constant 0 : index
    %210 = vector.load %arg2[%c1_160, %c0_161] : memref<9x256xf32, #tpu.memory_space<vmem>>, vector<1x256xf32>
    %211 = vector.broadcast %210 : vector<1x256xf32> to vector<8x256xf32>
    %212 = arith.mulf %209, %211 : vector<8x256xf32>
    %c72 = arith.constant 72 : index
    %c0_162 = arith.constant 0 : index
    %213 = vector.load %arg34[%c72, %c0_162] : memref<360x256xf32, #tpu.memory_space<vmem>>, vector<8x256xf32>
    tpu.vector_store %arg34[%c72, %c0_162], %212 {strides = array<i32>} : memref<360x256xf32, #tpu.memory_space<vmem>>, vector<8x256xf32>,
    %c15_i32_163 = arith.constant 15 : i32
    %214 = tpu.dynamic_rotate %203 by %c15_i32_163 dim 1 : vector<8x256xf32>, i32 -> vector<8x256xf32>
    %c2_164 = arith.constant 2 : index
    %c0_165 = arith.constant 0 : index
    %215 = vector.load %arg2[%c2_164, %c0_165] : memref<9x256xf32, #tpu.memory_space<vmem>>, vector<1x256xf32>
    %216 = vector.broadcast %215 : vector<1x256xf32> to vector<8x256xf32>
    %217 = arith.mulf %214, %216 : vector<8x256xf32>
    %c112 = arith.constant 112 : index
    %c0_166 = arith.constant 0 : index
    %218 = vector.load %arg34[%c112, %c0_166] : memref<360x256xf32, #tpu.memory_space<vmem>>, vector<8x256xf32>
    tpu.vector_store %arg34[%c112, %c0_166], %217 {strides = array<i32>} : memref<360x256xf32, #tpu.memory_space<vmem>>, vector<8x256xf32>,
    %c1_i32_167 = arith.constant 1 : i32
    %219 = tpu.dynamic_rotate %203 by %c1_i32_167 dim 1 : vector<8x256xf32>, i32 -> vector<8x256xf32>
    %c3_168 = arith.constant 3 : index
    %c0_169 = arith.constant 0 : index
    %220 = vector.load %arg2[%c3_168, %c0_169] : memref<9x256xf32, #tpu.memory_space<vmem>>, vector<1x256xf32>
    %221 = vector.broadcast %220 : vector<1x256xf32> to vector<8x256xf32>
    %222 = arith.mulf %219, %221 : vector<8x256xf32>
    %c152 = arith.constant 152 : index
    %c0_170 = arith.constant 0 : index
    %223 = vector.load %arg34[%c152, %c0_170] : memref<360x256xf32, #tpu.memory_space<vmem>>, vector<8x256xf32>
    tpu.vector_store %arg34[%c152, %c0_170], %222 {strides = array<i32>} : memref<360x256xf32, #tpu.memory_space<vmem>>, vector<8x256xf32>,
    %c192 = arith.constant 192 : index
    %c0_171 = arith.constant 0 : index
    %224 = vector.load %arg34[%c192, %c0_171] : memref<360x256xf32, #tpu.memory_space<vmem>>, vector<8x256xf32>
    tpu.vector_store %arg34[%c192, %c0_171], %203 {strides = array<i32>} : memref<360x256xf32, #tpu.memory_space<vmem>>, vector<8x256xf32>,
    %c255_i32_172 = arith.constant 255 : i32
    %225 = tpu.dynamic_rotate %203 by %c255_i32_172 dim 1 : vector<8x256xf32>, i32 -> vector<8x256xf32>
    %c5_173 = arith.constant 5 : index
    %c0_174 = arith.constant 0 : index
    %226 = vector.load %arg2[%c5_173, %c0_174] : memref<9x256xf32, #tpu.memory_space<vmem>>, vector<1x256xf32>
    %227 = vector.broadcast %226 : vector<1x256xf32> to vector<8x256xf32>
    %228 = arith.mulf %225, %227 : vector<8x256xf32>
    %c232 = arith.constant 232 : index
    %c0_175 = arith.constant 0 : index
    %229 = vector.load %arg34[%c232, %c0_175] : memref<360x256xf32, #tpu.memory_space<vmem>>, vector<8x256xf32>
    tpu.vector_store %arg34[%c232, %c0_175], %228 {strides = array<i32>} : memref<360x256xf32, #tpu.memory_space<vmem>>, vector<8x256xf32>,
    %c241_i32_176 = arith.constant 241 : i32
    %230 = tpu.dynamic_rotate %203 by %c241_i32_176 dim 1 : vector<8x256xf32>, i32 -> vector<8x256xf32>
    %c6_177 = arith.constant 6 : index
    %c0_178 = arith.constant 0 : index
    %231 = vector.load %arg2[%c6_177, %c0_178] : memref<9x256xf32, #tpu.memory_space<vmem>>, vector<1x256xf32>
    %232 = vector.broadcast %231 : vector<1x256xf32> to vector<8x256xf32>
    %233 = arith.mulf %230, %232 : vector<8x256xf32>
    %c272 = arith.constant 272 : index
    %c0_179 = arith.constant 0 : index
    %234 = vector.load %arg34[%c272, %c0_179] : memref<360x256xf32, #tpu.memory_space<vmem>>, vector<8x256xf32>
    tpu.vector_store %arg34[%c272, %c0_179], %233 {strides = array<i32>} : memref<360x256xf32, #tpu.memory_space<vmem>>, vector<8x256xf32>,
    %c240_i32_180 = arith.constant 240 : i32
    %235 = tpu.dynamic_rotate %203 by %c240_i32_180 dim 1 : vector<8x256xf32>, i32 -> vector<8x256xf32>
    %c7_181 = arith.constant 7 : index
    %c0_182 = arith.constant 0 : index
    %236 = vector.load %arg2[%c7_181, %c0_182] : memref<9x256xf32, #tpu.memory_space<vmem>>, vector<1x256xf32>
    %237 = vector.broadcast %236 : vector<1x256xf32> to vector<8x256xf32>
    %238 = arith.mulf %235, %237 : vector<8x256xf32>
    %c312 = arith.constant 312 : index
    %c0_183 = arith.constant 0 : index
    %239 = vector.load %arg34[%c312, %c0_183] : memref<360x256xf32, #tpu.memory_space<vmem>>, vector<8x256xf32>
    tpu.vector_store %arg34[%c312, %c0_183], %238 {strides = array<i32>} : memref<360x256xf32, #tpu.memory_space<vmem>>, vector<8x256xf32>,
    %c239_i32_184 = arith.constant 239 : i32
    %240 = tpu.dynamic_rotate %203 by %c239_i32_184 dim 1 : vector<8x256xf32>, i32 -> vector<8x256xf32>
    %c8_185 = arith.constant 8 : index
    %c0_186 = arith.constant 0 : index
    %241 = vector.load %arg2[%c8_185, %c0_186] : memref<9x256xf32, #tpu.memory_space<vmem>>, vector<1x256xf32>
    %242 = vector.broadcast %241 : vector<1x256xf32> to vector<8x256xf32>
    %243 = arith.mulf %240, %242 : vector<8x256xf32>
    %c352 = arith.constant 352 : index
    %c0_187 = arith.constant 0 : index
    %244 = vector.load %arg34[%c352, %c0_187] : memref<360x256xf32, #tpu.memory_space<vmem>>, vector<8x256xf32>
    tpu.vector_store %arg34[%c352, %c0_187], %243 {strides = array<i32>} : memref<360x256xf32, #tpu.memory_space<vmem>>, vector<8x256xf32>,
    %c0_188 = arith.constant 0 : index
    %c0_189 = arith.constant 0 : index
    %245 = vector.load %arg11[%c0_188, %c0_189] : memref<8x360xf32, #tpu.memory_space<vmem>>, vector<8x360xf32>
    %c0_190 = arith.constant 0 : index
    %c0_191 = arith.constant 0 : index
    %246 = vector.load %arg34[%c0_190, %c0_191] : memref<360x256xf32, #tpu.memory_space<vmem>>, vector<360x256xf32>
    %cst_192 = arith.constant dense<0.000000e+00> : vector<8x256xf32>
    %247 = tpu.matmul %245, %246, %cst_192 {dimension_numbers = #tpu.dot_dimension_numbers<[1], [0], [0], [1], [0, 0, 1, 1], [], []>} : vector<8x360xf32>, vector<360x256xf32>, vector<8x256xf32> -> vector<8x256xf32>
    %c0_193 = arith.constant 0 : index
    %c0_194 = arith.constant 0 : index
    %248 = vector.load %arg12[%c0_193, %c0_194] : memref<8x1xf32, #tpu.memory_space<vmem>>, vector<8x1xf32>
    %249 = vector.broadcast %248 : vector<8x1xf32> to vector<8x256xf32>
    %250 = arith.addf %247, %249 : vector<8x256xf32>
    %cst_195 = arith.constant 2.000000e-01 : f32
    %251 = vector.broadcast %cst_195 : f32 to vector<8x256xf32>
    %252 = arith.mulf %250, %251 : vector<8x256xf32>
    %253 = arith.addf %252, %3 : vector<8x256xf32>
    %c17_i32_196 = arith.constant 17 : i32
    %254 = tpu.dynamic_rotate %253 by %c17_i32_196 dim 1 : vector<8x256xf32>, i32 -> vector<8x256xf32>
    %c0_197 = arith.constant 0 : index
    %c0_198 = arith.constant 0 : index
    %255 = vector.load %arg2[%c0_197, %c0_198] : memref<9x256xf32, #tpu.memory_space<vmem>>, vector<1x256xf32>
    %256 = vector.broadcast %255 : vector<1x256xf32> to vector<8x256xf32>
    %257 = arith.mulf %254, %256 : vector<8x256xf32>
    %c0_199 = arith.constant 0 : index
    %c0_200 = arith.constant 0 : index
    %258 = vector.load %arg34[%c0_199, %c0_200] : memref<360x256xf32, #tpu.memory_space<vmem>>, vector<8x256xf32>
    tpu.vector_store %arg34[%c0_199, %c0_200], %257 {strides = array<i32>} : memref<360x256xf32, #tpu.memory_space<vmem>>, vector<8x256xf32>,
    %c16_i32_201 = arith.constant 16 : i32
    %259 = tpu.dynamic_rotate %253 by %c16_i32_201 dim 1 : vector<8x256xf32>, i32 -> vector<8x256xf32>
    %c1_202 = arith.constant 1 : index
    %c0_203 = arith.constant 0 : index
    %260 = vector.load %arg2[%c1_202, %c0_203] : memref<9x256xf32, #tpu.memory_space<vmem>>, vector<1x256xf32>
    %261 = vector.broadcast %260 : vector<1x256xf32> to vector<8x256xf32>
    %262 = arith.mulf %259, %261 : vector<8x256xf32>
    %c40_204 = arith.constant 40 : index
    %c0_205 = arith.constant 0 : index
    %263 = vector.load %arg34[%c40_204, %c0_205] : memref<360x256xf32, #tpu.memory_space<vmem>>, vector<8x256xf32>
    tpu.vector_store %arg34[%c40_204, %c0_205], %262 {strides = array<i32>} : memref<360x256xf32, #tpu.memory_space<vmem>>, vector<8x256xf32>,
    %c15_i32_206 = arith.constant 15 : i32
    %264 = tpu.dynamic_rotate %253 by %c15_i32_206 dim 1 : vector<8x256xf32>, i32 -> vector<8x256xf32>
    %c2_207 = arith.constant 2 : index
    %c0_208 = arith.constant 0 : index
    %265 = vector.load %arg2[%c2_207, %c0_208] : memref<9x256xf32, #tpu.memory_space<vmem>>, vector<1x256xf32>
    %266 = vector.broadcast %265 : vector<1x256xf32> to vector<8x256xf32>
    %267 = arith.mulf %264, %266 : vector<8x256xf32>
    %c80_209 = arith.constant 80 : index
    %c0_210 = arith.constant 0 : index
    %268 = vector.load %arg34[%c80_209, %c0_210] : memref<360x256xf32, #tpu.memory_space<vmem>>, vector<8x256xf32>
    tpu.vector_store %arg34[%c80_209, %c0_210], %267 {strides = array<i32>} : memref<360x256xf32, #tpu.memory_space<vmem>>, vector<8x256xf32>,
    %c1_i32_211 = arith.constant 1 : i32
    %269 = tpu.dynamic_rotate %253 by %c1_i32_211 dim 1 : vector<8x256xf32>, i32 -> vector<8x256xf32>
    %c3_212 = arith.constant 3 : index
    %c0_213 = arith.constant 0 : index
    %270 = vector.load %arg2[%c3_212, %c0_213] : memref<9x256xf32, #tpu.memory_space<vmem>>, vector<1x256xf32>
    %271 = vector.broadcast %270 : vector<1x256xf32> to vector<8x256xf32>
    %272 = arith.mulf %269, %271 : vector<8x256xf32>
    %c120_214 = arith.constant 120 : index
    %c0_215 = arith.constant 0 : index
    %273 = vector.load %arg34[%c120_214, %c0_215] : memref<360x256xf32, #tpu.memory_space<vmem>>, vector<8x256xf32>
    tpu.vector_store %arg34[%c120_214, %c0_215], %272 {strides = array<i32>} : memref<360x256xf32, #tpu.memory_space<vmem>>, vector<8x256xf32>,
    %c160_216 = arith.constant 160 : index
    %c0_217 = arith.constant 0 : index
    %274 = vector.load %arg34[%c160_216, %c0_217] : memref<360x256xf32, #tpu.memory_space<vmem>>, vector<8x256xf32>
    tpu.vector_store %arg34[%c160_216, %c0_217], %253 {strides = array<i32>} : memref<360x256xf32, #tpu.memory_space<vmem>>, vector<8x256xf32>,
    %c255_i32_218 = arith.constant 255 : i32
    %275 = tpu.dynamic_rotate %253 by %c255_i32_218 dim 1 : vector<8x256xf32>, i32 -> vector<8x256xf32>
    %c5_219 = arith.constant 5 : index
    %c0_220 = arith.constant 0 : index
    %276 = vector.load %arg2[%c5_219, %c0_220] : memref<9x256xf32, #tpu.memory_space<vmem>>, vector<1x256xf32>
    %277 = vector.broadcast %276 : vector<1x256xf32> to vector<8x256xf32>
    %278 = arith.mulf %275, %277 : vector<8x256xf32>
    %c200_221 = arith.constant 200 : index
    %c0_222 = arith.constant 0 : index
    %279 = vector.load %arg34[%c200_221, %c0_222] : memref<360x256xf32, #tpu.memory_space<vmem>>, vector<8x256xf32>
    tpu.vector_store %arg34[%c200_221, %c0_222], %278 {strides = array<i32>} : memref<360x256xf32, #tpu.memory_space<vmem>>, vector<8x256xf32>,
    %c241_i32_223 = arith.constant 241 : i32
    %280 = tpu.dynamic_rotate %253 by %c241_i32_223 dim 1 : vector<8x256xf32>, i32 -> vector<8x256xf32>
    %c6_224 = arith.constant 6 : index
    %c0_225 = arith.constant 0 : index
    %281 = vector.load %arg2[%c6_224, %c0_225] : memref<9x256xf32, #tpu.memory_space<vmem>>, vector<1x256xf32>
    %282 = vector.broadcast %281 : vector<1x256xf32> to vector<8x256xf32>
    %283 = arith.mulf %280, %282 : vector<8x256xf32>
    %c240_226 = arith.constant 240 : index
    %c0_227 = arith.constant 0 : index
    %284 = vector.load %arg34[%c240_226, %c0_227] : memref<360x256xf32, #tpu.memory_space<vmem>>, vector<8x256xf32>
    tpu.vector_store %arg34[%c240_226, %c0_227], %283 {strides = array<i32>} : memref<360x256xf32, #tpu.memory_space<vmem>>, vector<8x256xf32>,
    %c240_i32_228 = arith.constant 240 : i32
    %285 = tpu.dynamic_rotate %253 by %c240_i32_228 dim 1 : vector<8x256xf32>, i32 -> vector<8x256xf32>
    %c7_229 = arith.constant 7 : index
    %c0_230 = arith.constant 0 : index
    %286 = vector.load %arg2[%c7_229, %c0_230] : memref<9x256xf32, #tpu.memory_space<vmem>>, vector<1x256xf32>
    %287 = vector.broadcast %286 : vector<1x256xf32> to vector<8x256xf32>
    %288 = arith.mulf %285, %287 : vector<8x256xf32>
    %c280_231 = arith.constant 280 : index
    %c0_232 = arith.constant 0 : index
    %289 = vector.load %arg34[%c280_231, %c0_232] : memref<360x256xf32, #tpu.memory_space<vmem>>, vector<8x256xf32>
    tpu.vector_store %arg34[%c280_231, %c0_232], %288 {strides = array<i32>} : memref<360x256xf32, #tpu.memory_space<vmem>>, vector<8x256xf32>,
    %c239_i32_233 = arith.constant 239 : i32
    %290 = tpu.dynamic_rotate %253 by %c239_i32_233 dim 1 : vector<8x256xf32>, i32 -> vector<8x256xf32>
    %c8_234 = arith.constant 8 : index
    %c0_235 = arith.constant 0 : index
    %291 = vector.load %arg2[%c8_234, %c0_235] : memref<9x256xf32, #tpu.memory_space<vmem>>, vector<1x256xf32>
    %292 = vector.broadcast %291 : vector<1x256xf32> to vector<8x256xf32>
    %293 = arith.mulf %290, %292 : vector<8x256xf32>
    %c320_236 = arith.constant 320 : index
    %c0_237 = arith.constant 0 : index
    %294 = vector.load %arg34[%c320_236, %c0_237] : memref<360x256xf32, #tpu.memory_space<vmem>>, vector<8x256xf32>
    tpu.vector_store %arg34[%c320_236, %c0_237], %293 {strides = array<i32>} : memref<360x256xf32, #tpu.memory_space<vmem>>, vector<8x256xf32>,
    %c0_238 = arith.constant 0 : index
    %c0_239 = arith.constant 0 : index
    %295 = vector.load %arg13[%c0_238, %c0_239] : memref<8x360xf32, #tpu.memory_space<vmem>>, vector<8x360xf32>
    %c0_240 = arith.constant 0 : index
    %c0_241 = arith.constant 0 : index
    %296 = vector.load %arg34[%c0_240, %c0_241] : memref<360x256xf32, #tpu.memory_space<vmem>>, vector<360x256xf32>
    %cst_242 = arith.constant dense<0.000000e+00> : vector<8x256xf32>
    %297 = tpu.matmul %295, %296, %cst_242 {dimension_numbers = #tpu.dot_dimension_numbers<[1], [0], [0], [1], [0, 0, 1, 1], [], []>} : vector<8x360xf32>, vector<360x256xf32>, vector<8x256xf32> -> vector<8x256xf32>
    %c0_243 = arith.constant 0 : index
    %c0_244 = arith.constant 0 : index
    %298 = vector.load %arg14[%c0_243, %c0_244] : memref<8x1xf32, #tpu.memory_space<vmem>>, vector<8x1xf32>
    %299 = vector.broadcast %298 : vector<8x1xf32> to vector<8x256xf32>
    %300 = arith.addf %297, %299 : vector<8x256xf32>
    %cst_245 = arith.constant 2.000000e-01 : f32
    %301 = vector.broadcast %cst_245 : f32 to vector<8x256xf32>
    %302 = arith.mulf %301, %300 : vector<8x256xf32>
    %303 = arith.maximumf %300, %302 : vector<8x256xf32>
    %c17_i32_246 = arith.constant 17 : i32
    %304 = tpu.dynamic_rotate %303 by %c17_i32_246 dim 1 : vector<8x256xf32>, i32 -> vector<8x256xf32>
    %c0_247 = arith.constant 0 : index
    %c0_248 = arith.constant 0 : index
    %305 = vector.load %arg2[%c0_247, %c0_248] : memref<9x256xf32, #tpu.memory_space<vmem>>, vector<1x256xf32>
    %306 = vector.broadcast %305 : vector<1x256xf32> to vector<8x256xf32>
    %307 = arith.mulf %304, %306 : vector<8x256xf32>
    %c8_249 = arith.constant 8 : index
    %c0_250 = arith.constant 0 : index
    %308 = vector.load %arg34[%c8_249, %c0_250] : memref<360x256xf32, #tpu.memory_space<vmem>>, vector<8x256xf32>
    tpu.vector_store %arg34[%c8_249, %c0_250], %307 {strides = array<i32>} : memref<360x256xf32, #tpu.memory_space<vmem>>, vector<8x256xf32>,
    %c16_i32_251 = arith.constant 16 : i32
    %309 = tpu.dynamic_rotate %303 by %c16_i32_251 dim 1 : vector<8x256xf32>, i32 -> vector<8x256xf32>
    %c1_252 = arith.constant 1 : index
    %c0_253 = arith.constant 0 : index
    %310 = vector.load %arg2[%c1_252, %c0_253] : memref<9x256xf32, #tpu.memory_space<vmem>>, vector<1x256xf32>
    %311 = vector.broadcast %310 : vector<1x256xf32> to vector<8x256xf32>
    %312 = arith.mulf %309, %311 : vector<8x256xf32>
    %c48_254 = arith.constant 48 : index
    %c0_255 = arith.constant 0 : index
    %313 = vector.load %arg34[%c48_254, %c0_255] : memref<360x256xf32, #tpu.memory_space<vmem>>, vector<8x256xf32>
    tpu.vector_store %arg34[%c48_254, %c0_255], %312 {strides = array<i32>} : memref<360x256xf32, #tpu.memory_space<vmem>>, vector<8x256xf32>,
    %c15_i32_256 = arith.constant 15 : i32
    %314 = tpu.dynamic_rotate %303 by %c15_i32_256 dim 1 : vector<8x256xf32>, i32 -> vector<8x256xf32>
    %c2_257 = arith.constant 2 : index
    %c0_258 = arith.constant 0 : index
    %315 = vector.load %arg2[%c2_257, %c0_258] : memref<9x256xf32, #tpu.memory_space<vmem>>, vector<1x256xf32>
    %316 = vector.broadcast %315 : vector<1x256xf32> to vector<8x256xf32>
    %317 = arith.mulf %314, %316 : vector<8x256xf32>
    %c88_259 = arith.constant 88 : index
    %c0_260 = arith.constant 0 : index
    %318 = vector.load %arg34[%c88_259, %c0_260] : memref<360x256xf32, #tpu.memory_space<vmem>>, vector<8x256xf32>
    tpu.vector_store %arg34[%c88_259, %c0_260], %317 {strides = array<i32>} : memref<360x256xf32, #tpu.memory_space<vmem>>, vector<8x256xf32>,
    %c1_i32_261 = arith.constant 1 : i32
    %319 = tpu.dynamic_rotate %303 by %c1_i32_261 dim 1 : vector<8x256xf32>, i32 -> vector<8x256xf32>
    %c3_262 = arith.constant 3 : index
    %c0_263 = arith.constant 0 : index
    %320 = vector.load %arg2[%c3_262, %c0_263] : memref<9x256xf32, #tpu.memory_space<vmem>>, vector<1x256xf32>
    %321 = vector.broadcast %320 : vector<1x256xf32> to vector<8x256xf32>
    %322 = arith.mulf %319, %321 : vector<8x256xf32>
    %c128_264 = arith.constant 128 : index
    %c0_265 = arith.constant 0 : index
    %323 = vector.load %arg34[%c128_264, %c0_265] : memref<360x256xf32, #tpu.memory_space<vmem>>, vector<8x256xf32>
    tpu.vector_store %arg34[%c128_264, %c0_265], %322 {strides = array<i32>} : memref<360x256xf32, #tpu.memory_space<vmem>>, vector<8x256xf32>,
    %c168_266 = arith.constant 168 : index
    %c0_267 = arith.constant 0 : index
    %324 = vector.load %arg34[%c168_266, %c0_267] : memref<360x256xf32, #tpu.memory_space<vmem>>, vector<8x256xf32>
    tpu.vector_store %arg34[%c168_266, %c0_267], %303 {strides = array<i32>} : memref<360x256xf32, #tpu.memory_space<vmem>>, vector<8x256xf32>,
    %c255_i32_268 = arith.constant 255 : i32
    %325 = tpu.dynamic_rotate %303 by %c255_i32_268 dim 1 : vector<8x256xf32>, i32 -> vector<8x256xf32>
    %c5_269 = arith.constant 5 : index
    %c0_270 = arith.constant 0 : index
    %326 = vector.load %arg2[%c5_269, %c0_270] : memref<9x256xf32, #tpu.memory_space<vmem>>, vector<1x256xf32>
    %327 = vector.broadcast %326 : vector<1x256xf32> to vector<8x256xf32>
    %328 = arith.mulf %325, %327 : vector<8x256xf32>
    %c208_271 = arith.constant 208 : index
    %c0_272 = arith.constant 0 : index
    %329 = vector.load %arg34[%c208_271, %c0_272] : memref<360x256xf32, #tpu.memory_space<vmem>>, vector<8x256xf32>
    tpu.vector_store %arg34[%c208_271, %c0_272], %328 {strides = array<i32>} : memref<360x256xf32, #tpu.memory_space<vmem>>, vector<8x256xf32>,
    %c241_i32_273 = arith.constant 241 : i32
    %330 = tpu.dynamic_rotate %303 by %c241_i32_273 dim 1 : vector<8x256xf32>, i32 -> vector<8x256xf32>
    %c6_274 = arith.constant 6 : index
    %c0_275 = arith.constant 0 : index
    %331 = vector.load %arg2[%c6_274, %c0_275] : memref<9x256xf32, #tpu.memory_space<vmem>>, vector<1x256xf32>
    %332 = vector.broadcast %331 : vector<1x256xf32> to vector<8x256xf32>
    %333 = arith.mulf %330, %332 : vector<8x256xf32>
    %c248_276 = arith.constant 248 : index
    %c0_277 = arith.constant 0 : index
    %334 = vector.load %arg34[%c248_276, %c0_277] : memref<360x256xf32, #tpu.memory_space<vmem>>, vector<8x256xf32>
    tpu.vector_store %arg34[%c248_276, %c0_277], %333 {strides = array<i32>} : memref<360x256xf32, #tpu.memory_space<vmem>>, vector<8x256xf32>,
    %c240_i32_278 = arith.constant 240 : i32
    %335 = tpu.dynamic_rotate %303 by %c240_i32_278 dim 1 : vector<8x256xf32>, i32 -> vector<8x256xf32>
    %c7_279 = arith.constant 7 : index
    %c0_280 = arith.constant 0 : index
    %336 = vector.load %arg2[%c7_279, %c0_280] : memref<9x256xf32, #tpu.memory_space<vmem>>, vector<1x256xf32>
    %337 = vector.broadcast %336 : vector<1x256xf32> to vector<8x256xf32>
    %338 = arith.mulf %335, %337 : vector<8x256xf32>
    %c288_281 = arith.constant 288 : index
    %c0_282 = arith.constant 0 : index
    %339 = vector.load %arg34[%c288_281, %c0_282] : memref<360x256xf32, #tpu.memory_space<vmem>>, vector<8x256xf32>
    tpu.vector_store %arg34[%c288_281, %c0_282], %338 {strides = array<i32>} : memref<360x256xf32, #tpu.memory_space<vmem>>, vector<8x256xf32>,
    %c239_i32_283 = arith.constant 239 : i32
    %340 = tpu.dynamic_rotate %303 by %c239_i32_283 dim 1 : vector<8x256xf32>, i32 -> vector<8x256xf32>
    %c8_284 = arith.constant 8 : index
    %c0_285 = arith.constant 0 : index
    %341 = vector.load %arg2[%c8_284, %c0_285] : memref<9x256xf32, #tpu.memory_space<vmem>>, vector<1x256xf32>
    %342 = vector.broadcast %341 : vector<1x256xf32> to vector<8x256xf32>
    %343 = arith.mulf %340, %342 : vector<8x256xf32>
    %c328_286 = arith.constant 328 : index
    %c0_287 = arith.constant 0 : index
    %344 = vector.load %arg34[%c328_286, %c0_287] : memref<360x256xf32, #tpu.memory_space<vmem>>, vector<8x256xf32>
    tpu.vector_store %arg34[%c328_286, %c0_287], %343 {strides = array<i32>} : memref<360x256xf32, #tpu.memory_space<vmem>>, vector<8x256xf32>,
    %c0_288 = arith.constant 0 : index
    %c0_289 = arith.constant 0 : index
    %345 = vector.load %arg15[%c0_288, %c0_289] : memref<8x360xf32, #tpu.memory_space<vmem>>, vector<8x360xf32>
    %c0_290 = arith.constant 0 : index
    %c0_291 = arith.constant 0 : index
    %346 = vector.load %arg34[%c0_290, %c0_291] : memref<360x256xf32, #tpu.memory_space<vmem>>, vector<360x256xf32>
    %cst_292 = arith.constant dense<0.000000e+00> : vector<8x256xf32>
    %347 = tpu.matmul %345, %346, %cst_292 {dimension_numbers = #tpu.dot_dimension_numbers<[1], [0], [0], [1], [0, 0, 1, 1], [], []>} : vector<8x360xf32>, vector<360x256xf32>, vector<8x256xf32> -> vector<8x256xf32>
    %c0_293 = arith.constant 0 : index
    %c0_294 = arith.constant 0 : index
    %348 = vector.load %arg16[%c0_293, %c0_294] : memref<8x1xf32, #tpu.memory_space<vmem>>, vector<8x1xf32>
    %349 = vector.broadcast %348 : vector<8x1xf32> to vector<8x256xf32>
    %350 = arith.addf %347, %349 : vector<8x256xf32>
    %cst_295 = arith.constant 2.000000e-01 : f32
    %351 = vector.broadcast %cst_295 : f32 to vector<8x256xf32>
    %352 = arith.mulf %351, %350 : vector<8x256xf32>
    %353 = arith.maximumf %350, %352 : vector<8x256xf32>
    %c17_i32_296 = arith.constant 17 : i32
    %354 = tpu.dynamic_rotate %353 by %c17_i32_296 dim 1 : vector<8x256xf32>, i32 -> vector<8x256xf32>
    %c0_297 = arith.constant 0 : index
    %c0_298 = arith.constant 0 : index
    %355 = vector.load %arg2[%c0_297, %c0_298] : memref<9x256xf32, #tpu.memory_space<vmem>>, vector<1x256xf32>
    %356 = vector.broadcast %355 : vector<1x256xf32> to vector<8x256xf32>
    %357 = arith.mulf %354, %356 : vector<8x256xf32>
    %c16_299 = arith.constant 16 : index
    %c0_300 = arith.constant 0 : index
    %358 = vector.load %arg34[%c16_299, %c0_300] : memref<360x256xf32, #tpu.memory_space<vmem>>, vector<8x256xf32>
    tpu.vector_store %arg34[%c16_299, %c0_300], %357 {strides = array<i32>} : memref<360x256xf32, #tpu.memory_space<vmem>>, vector<8x256xf32>,
    %c16_i32_301 = arith.constant 16 : i32
    %359 = tpu.dynamic_rotate %353 by %c16_i32_301 dim 1 : vector<8x256xf32>, i32 -> vector<8x256xf32>
    %c1_302 = arith.constant 1 : index
    %c0_303 = arith.constant 0 : index
    %360 = vector.load %arg2[%c1_302, %c0_303] : memref<9x256xf32, #tpu.memory_space<vmem>>, vector<1x256xf32>
    %361 = vector.broadcast %360 : vector<1x256xf32> to vector<8x256xf32>
    %362 = arith.mulf %359, %361 : vector<8x256xf32>
    %c56_304 = arith.constant 56 : index
    %c0_305 = arith.constant 0 : index
    %363 = vector.load %arg34[%c56_304, %c0_305] : memref<360x256xf32, #tpu.memory_space<vmem>>, vector<8x256xf32>
    tpu.vector_store %arg34[%c56_304, %c0_305], %362 {strides = array<i32>} : memref<360x256xf32, #tpu.memory_space<vmem>>, vector<8x256xf32>,
    %c15_i32_306 = arith.constant 15 : i32
    %364 = tpu.dynamic_rotate %353 by %c15_i32_306 dim 1 : vector<8x256xf32>, i32 -> vector<8x256xf32>
    %c2_307 = arith.constant 2 : index
    %c0_308 = arith.constant 0 : index
    %365 = vector.load %arg2[%c2_307, %c0_308] : memref<9x256xf32, #tpu.memory_space<vmem>>, vector<1x256xf32>
    %366 = vector.broadcast %365 : vector<1x256xf32> to vector<8x256xf32>
    %367 = arith.mulf %364, %366 : vector<8x256xf32>
    %c96_309 = arith.constant 96 : index
    %c0_310 = arith.constant 0 : index
    %368 = vector.load %arg34[%c96_309, %c0_310] : memref<360x256xf32, #tpu.memory_space<vmem>>, vector<8x256xf32>
    tpu.vector_store %arg34[%c96_309, %c0_310], %367 {strides = array<i32>} : memref<360x256xf32, #tpu.memory_space<vmem>>, vector<8x256xf32>,
    %c1_i32_311 = arith.constant 1 : i32
    %369 = tpu.dynamic_rotate %353 by %c1_i32_311 dim 1 : vector<8x256xf32>, i32 -> vector<8x256xf32>
    %c3_312 = arith.constant 3 : index
    %c0_313 = arith.constant 0 : index
    %370 = vector.load %arg2[%c3_312, %c0_313] : memref<9x256xf32, #tpu.memory_space<vmem>>, vector<1x256xf32>
    %371 = vector.broadcast %370 : vector<1x256xf32> to vector<8x256xf32>
    %372 = arith.mulf %369, %371 : vector<8x256xf32>
    %c136_314 = arith.constant 136 : index
    %c0_315 = arith.constant 0 : index
    %373 = vector.load %arg34[%c136_314, %c0_315] : memref<360x256xf32, #tpu.memory_space<vmem>>, vector<8x256xf32>
    tpu.vector_store %arg34[%c136_314, %c0_315], %372 {strides = array<i32>} : memref<360x256xf32, #tpu.memory_space<vmem>>, vector<8x256xf32>,
    %c176_316 = arith.constant 176 : index
    %c0_317 = arith.constant 0 : index
    %374 = vector.load %arg34[%c176_316, %c0_317] : memref<360x256xf32, #tpu.memory_space<vmem>>, vector<8x256xf32>
    tpu.vector_store %arg34[%c176_316, %c0_317], %353 {strides = array<i32>} : memref<360x256xf32, #tpu.memory_space<vmem>>, vector<8x256xf32>,
    %c255_i32_318 = arith.constant 255 : i32
    %375 = tpu.dynamic_rotate %353 by %c255_i32_318 dim 1 : vector<8x256xf32>, i32 -> vector<8x256xf32>
    %c5_319 = arith.constant 5 : index
    %c0_320 = arith.constant 0 : index
    %376 = vector.load %arg2[%c5_319, %c0_320] : memref<9x256xf32, #tpu.memory_space<vmem>>, vector<1x256xf32>
    %377 = vector.broadcast %376 : vector<1x256xf32> to vector<8x256xf32>
    %378 = arith.mulf %375, %377 : vector<8x256xf32>
    %c216_321 = arith.constant 216 : index
    %c0_322 = arith.constant 0 : index
    %379 = vector.load %arg34[%c216_321, %c0_322] : memref<360x256xf32, #tpu.memory_space<vmem>>, vector<8x256xf32>
    tpu.vector_store %arg34[%c216_321, %c0_322], %378 {strides = array<i32>} : memref<360x256xf32, #tpu.memory_space<vmem>>, vector<8x256xf32>,
    %c241_i32_323 = arith.constant 241 : i32
    %380 = tpu.dynamic_rotate %353 by %c241_i32_323 dim 1 : vector<8x256xf32>, i32 -> vector<8x256xf32>
    %c6_324 = arith.constant 6 : index
    %c0_325 = arith.constant 0 : index
    %381 = vector.load %arg2[%c6_324, %c0_325] : memref<9x256xf32, #tpu.memory_space<vmem>>, vector<1x256xf32>
    %382 = vector.broadcast %381 : vector<1x256xf32> to vector<8x256xf32>
    %383 = arith.mulf %380, %382 : vector<8x256xf32>
    %c256_326 = arith.constant 256 : index
    %c0_327 = arith.constant 0 : index
    %384 = vector.load %arg34[%c256_326, %c0_327] : memref<360x256xf32, #tpu.memory_space<vmem>>, vector<8x256xf32>
    tpu.vector_store %arg34[%c256_326, %c0_327], %383 {strides = array<i32>} : memref<360x256xf32, #tpu.memory_space<vmem>>, vector<8x256xf32>,
    %c240_i32_328 = arith.constant 240 : i32
    %385 = tpu.dynamic_rotate %353 by %c240_i32_328 dim 1 : vector<8x256xf32>, i32 -> vector<8x256xf32>
    %c7_329 = arith.constant 7 : index
    %c0_330 = arith.constant 0 : index
    %386 = vector.load %arg2[%c7_329, %c0_330] : memref<9x256xf32, #tpu.memory_space<vmem>>, vector<1x256xf32>
    %387 = vector.broadcast %386 : vector<1x256xf32> to vector<8x256xf32>
    %388 = arith.mulf %385, %387 : vector<8x256xf32>
    %c296_331 = arith.constant 296 : index
    %c0_332 = arith.constant 0 : index
    %389 = vector.load %arg34[%c296_331, %c0_332] : memref<360x256xf32, #tpu.memory_space<vmem>>, vector<8x256xf32>
    tpu.vector_store %arg34[%c296_331, %c0_332], %388 {strides = array<i32>} : memref<360x256xf32, #tpu.memory_space<vmem>>, vector<8x256xf32>,
    %c239_i32_333 = arith.constant 239 : i32
    %390 = tpu.dynamic_rotate %353 by %c239_i32_333 dim 1 : vector<8x256xf32>, i32 -> vector<8x256xf32>
    %c8_334 = arith.constant 8 : index
    %c0_335 = arith.constant 0 : index
    %391 = vector.load %arg2[%c8_334, %c0_335] : memref<9x256xf32, #tpu.memory_space<vmem>>, vector<1x256xf32>
    %392 = vector.broadcast %391 : vector<1x256xf32> to vector<8x256xf32>
    %393 = arith.mulf %390, %392 : vector<8x256xf32>
    %c336_336 = arith.constant 336 : index
    %c0_337 = arith.constant 0 : index
    %394 = vector.load %arg34[%c336_336, %c0_337] : memref<360x256xf32, #tpu.memory_space<vmem>>, vector<8x256xf32>
    tpu.vector_store %arg34[%c336_336, %c0_337], %393 {strides = array<i32>} : memref<360x256xf32, #tpu.memory_space<vmem>>, vector<8x256xf32>,
    %c0_338 = arith.constant 0 : index
    %c0_339 = arith.constant 0 : index
    %395 = vector.load %arg17[%c0_338, %c0_339] : memref<8x360xf32, #tpu.memory_space<vmem>>, vector<8x360xf32>
    %c0_340 = arith.constant 0 : index
    %c0_341 = arith.constant 0 : index
    %396 = vector.load %arg34[%c0_340, %c0_341] : memref<360x256xf32, #tpu.memory_space<vmem>>, vector<360x256xf32>
    %cst_342 = arith.constant dense<0.000000e+00> : vector<8x256xf32>
    %397 = tpu.matmul %395, %396, %cst_342 {dimension_numbers = #tpu.dot_dimension_numbers<[1], [0], [0], [1], [0, 0, 1, 1], [], []>} : vector<8x360xf32>, vector<360x256xf32>, vector<8x256xf32> -> vector<8x256xf32>
    %c0_343 = arith.constant 0 : index
    %c0_344 = arith.constant 0 : index
    %398 = vector.load %arg18[%c0_343, %c0_344] : memref<8x1xf32, #tpu.memory_space<vmem>>, vector<8x1xf32>
    %399 = vector.broadcast %398 : vector<8x1xf32> to vector<8x256xf32>
    %400 = arith.addf %397, %399 : vector<8x256xf32>
    %cst_345 = arith.constant 2.000000e-01 : f32
    %401 = vector.broadcast %cst_345 : f32 to vector<8x256xf32>
    %402 = arith.mulf %401, %400 : vector<8x256xf32>
    %403 = arith.maximumf %400, %402 : vector<8x256xf32>
    %c17_i32_346 = arith.constant 17 : i32
    %404 = tpu.dynamic_rotate %403 by %c17_i32_346 dim 1 : vector<8x256xf32>, i32 -> vector<8x256xf32>
    %c0_347 = arith.constant 0 : index
    %c0_348 = arith.constant 0 : index
    %405 = vector.load %arg2[%c0_347, %c0_348] : memref<9x256xf32, #tpu.memory_space<vmem>>, vector<1x256xf32>
    %406 = vector.broadcast %405 : vector<1x256xf32> to vector<8x256xf32>
    %407 = arith.mulf %404, %406 : vector<8x256xf32>
    %c24_349 = arith.constant 24 : index
    %c0_350 = arith.constant 0 : index
    %408 = vector.load %arg34[%c24_349, %c0_350] : memref<360x256xf32, #tpu.memory_space<vmem>>, vector<8x256xf32>
    tpu.vector_store %arg34[%c24_349, %c0_350], %407 {strides = array<i32>} : memref<360x256xf32, #tpu.memory_space<vmem>>, vector<8x256xf32>,
    %c16_i32_351 = arith.constant 16 : i32
    %409 = tpu.dynamic_rotate %403 by %c16_i32_351 dim 1 : vector<8x256xf32>, i32 -> vector<8x256xf32>
    %c1_352 = arith.constant 1 : index
    %c0_353 = arith.constant 0 : index
    %410 = vector.load %arg2[%c1_352, %c0_353] : memref<9x256xf32, #tpu.memory_space<vmem>>, vector<1x256xf32>
    %411 = vector.broadcast %410 : vector<1x256xf32> to vector<8x256xf32>
    %412 = arith.mulf %409, %411 : vector<8x256xf32>
    %c64_354 = arith.constant 64 : index
    %c0_355 = arith.constant 0 : index
    %413 = vector.load %arg34[%c64_354, %c0_355] : memref<360x256xf32, #tpu.memory_space<vmem>>, vector<8x256xf32>
    tpu.vector_store %arg34[%c64_354, %c0_355], %412 {strides = array<i32>} : memref<360x256xf32, #tpu.memory_space<vmem>>, vector<8x256xf32>,
    %c15_i32_356 = arith.constant 15 : i32
    %414 = tpu.dynamic_rotate %403 by %c15_i32_356 dim 1 : vector<8x256xf32>, i32 -> vector<8x256xf32>
    %c2_357 = arith.constant 2 : index
    %c0_358 = arith.constant 0 : index
    %415 = vector.load %arg2[%c2_357, %c0_358] : memref<9x256xf32, #tpu.memory_space<vmem>>, vector<1x256xf32>
    %416 = vector.broadcast %415 : vector<1x256xf32> to vector<8x256xf32>
    %417 = arith.mulf %414, %416 : vector<8x256xf32>
    %c104_359 = arith.constant 104 : index
    %c0_360 = arith.constant 0 : index
    %418 = vector.load %arg34[%c104_359, %c0_360] : memref<360x256xf32, #tpu.memory_space<vmem>>, vector<8x256xf32>
    tpu.vector_store %arg34[%c104_359, %c0_360], %417 {strides = array<i32>} : memref<360x256xf32, #tpu.memory_space<vmem>>, vector<8x256xf32>,
    %c1_i32_361 = arith.constant 1 : i32
    %419 = tpu.dynamic_rotate %403 by %c1_i32_361 dim 1 : vector<8x256xf32>, i32 -> vector<8x256xf32>
    %c3_362 = arith.constant 3 : index
    %c0_363 = arith.constant 0 : index
    %420 = vector.load %arg2[%c3_362, %c0_363] : memref<9x256xf32, #tpu.memory_space<vmem>>, vector<1x256xf32>
    %421 = vector.broadcast %420 : vector<1x256xf32> to vector<8x256xf32>
    %422 = arith.mulf %419, %421 : vector<8x256xf32>
    %c144_364 = arith.constant 144 : index
    %c0_365 = arith.constant 0 : index
    %423 = vector.load %arg34[%c144_364, %c0_365] : memref<360x256xf32, #tpu.memory_space<vmem>>, vector<8x256xf32>
    tpu.vector_store %arg34[%c144_364, %c0_365], %422 {strides = array<i32>} : memref<360x256xf32, #tpu.memory_space<vmem>>, vector<8x256xf32>,
    %c184_366 = arith.constant 184 : index
    %c0_367 = arith.constant 0 : index
    %424 = vector.load %arg34[%c184_366, %c0_367] : memref<360x256xf32, #tpu.memory_space<vmem>>, vector<8x256xf32>
    tpu.vector_store %arg34[%c184_366, %c0_367], %403 {strides = array<i32>} : memref<360x256xf32, #tpu.memory_space<vmem>>, vector<8x256xf32>,
    %c255_i32_368 = arith.constant 255 : i32
    %425 = tpu.dynamic_rotate %403 by %c255_i32_368 dim 1 : vector<8x256xf32>, i32 -> vector<8x256xf32>
    %c5_369 = arith.constant 5 : index
    %c0_370 = arith.constant 0 : index
    %426 = vector.load %arg2[%c5_369, %c0_370] : memref<9x256xf32, #tpu.memory_space<vmem>>, vector<1x256xf32>
    %427 = vector.broadcast %426 : vector<1x256xf32> to vector<8x256xf32>
    %428 = arith.mulf %425, %427 : vector<8x256xf32>
    %c224_371 = arith.constant 224 : index
    %c0_372 = arith.constant 0 : index
    %429 = vector.load %arg34[%c224_371, %c0_372] : memref<360x256xf32, #tpu.memory_space<vmem>>, vector<8x256xf32>
    tpu.vector_store %arg34[%c224_371, %c0_372], %428 {strides = array<i32>} : memref<360x256xf32, #tpu.memory_space<vmem>>, vector<8x256xf32>,
    %c241_i32_373 = arith.constant 241 : i32
    %430 = tpu.dynamic_rotate %403 by %c241_i32_373 dim 1 : vector<8x256xf32>, i32 -> vector<8x256xf32>
    %c6_374 = arith.constant 6 : index
    %c0_375 = arith.constant 0 : index
    %431 = vector.load %arg2[%c6_374, %c0_375] : memref<9x256xf32, #tpu.memory_space<vmem>>, vector<1x256xf32>
    %432 = vector.broadcast %431 : vector<1x256xf32> to vector<8x256xf32>
    %433 = arith.mulf %430, %432 : vector<8x256xf32>
    %c264_376 = arith.constant 264 : index
    %c0_377 = arith.constant 0 : index
    %434 = vector.load %arg34[%c264_376, %c0_377] : memref<360x256xf32, #tpu.memory_space<vmem>>, vector<8x256xf32>
    tpu.vector_store %arg34[%c264_376, %c0_377], %433 {strides = array<i32>} : memref<360x256xf32, #tpu.memory_space<vmem>>, vector<8x256xf32>,
    %c240_i32_378 = arith.constant 240 : i32
    %435 = tpu.dynamic_rotate %403 by %c240_i32_378 dim 1 : vector<8x256xf32>, i32 -> vector<8x256xf32>
    %c7_379 = arith.constant 7 : index
    %c0_380 = arith.constant 0 : index
    %436 = vector.load %arg2[%c7_379, %c0_380] : memref<9x256xf32, #tpu.memory_space<vmem>>, vector<1x256xf32>
    %437 = vector.broadcast %436 : vector<1x256xf32> to vector<8x256xf32>
    %438 = arith.mulf %435, %437 : vector<8x256xf32>
    %c304_381 = arith.constant 304 : index
    %c0_382 = arith.constant 0 : index
    %439 = vector.load %arg34[%c304_381, %c0_382] : memref<360x256xf32, #tpu.memory_space<vmem>>, vector<8x256xf32>
    tpu.vector_store %arg34[%c304_381, %c0_382], %438 {strides = array<i32>} : memref<360x256xf32, #tpu.memory_space<vmem>>, vector<8x256xf32>,
    %c239_i32_383 = arith.constant 239 : i32
    %440 = tpu.dynamic_rotate %403 by %c239_i32_383 dim 1 : vector<8x256xf32>, i32 -> vector<8x256xf32>
    %c8_384 = arith.constant 8 : index
    %c0_385 = arith.constant 0 : index
    %441 = vector.load %arg2[%c8_384, %c0_385] : memref<9x256xf32, #tpu.memory_space<vmem>>, vector<1x256xf32>
    %442 = vector.broadcast %441 : vector<1x256xf32> to vector<8x256xf32>
    %443 = arith.mulf %440, %442 : vector<8x256xf32>
    %c344_386 = arith.constant 344 : index
    %c0_387 = arith.constant 0 : index
    %444 = vector.load %arg34[%c344_386, %c0_387] : memref<360x256xf32, #tpu.memory_space<vmem>>, vector<8x256xf32>
    tpu.vector_store %arg34[%c344_386, %c0_387], %443 {strides = array<i32>} : memref<360x256xf32, #tpu.memory_space<vmem>>, vector<8x256xf32>,
    %c0_388 = arith.constant 0 : index
    %c0_389 = arith.constant 0 : index
    %445 = vector.load %arg19[%c0_388, %c0_389] : memref<8x360xf32, #tpu.memory_space<vmem>>, vector<8x360xf32>
    %c0_390 = arith.constant 0 : index
    %c0_391 = arith.constant 0 : index
    %446 = vector.load %arg34[%c0_390, %c0_391] : memref<360x256xf32, #tpu.memory_space<vmem>>, vector<360x256xf32>
    %cst_392 = arith.constant dense<0.000000e+00> : vector<8x256xf32>
    %447 = tpu.matmul %445, %446, %cst_392 {dimension_numbers = #tpu.dot_dimension_numbers<[1], [0], [0], [1], [0, 0, 1, 1], [], []>} : vector<8x360xf32>, vector<360x256xf32>, vector<8x256xf32> -> vector<8x256xf32>
    %c0_393 = arith.constant 0 : index
    %c0_394 = arith.constant 0 : index
    %448 = vector.load %arg20[%c0_393, %c0_394] : memref<8x1xf32, #tpu.memory_space<vmem>>, vector<8x1xf32>
    %449 = vector.broadcast %448 : vector<8x1xf32> to vector<8x256xf32>
    %450 = arith.addf %447, %449 : vector<8x256xf32>
    %cst_395 = arith.constant 2.000000e-01 : f32
    %451 = vector.broadcast %cst_395 : f32 to vector<8x256xf32>
    %452 = arith.mulf %451, %450 : vector<8x256xf32>
    %453 = arith.maximumf %450, %452 : vector<8x256xf32>
    %c17_i32_396 = arith.constant 17 : i32
    %454 = tpu.dynamic_rotate %453 by %c17_i32_396 dim 1 : vector<8x256xf32>, i32 -> vector<8x256xf32>
    %c0_397 = arith.constant 0 : index
    %c0_398 = arith.constant 0 : index
    %455 = vector.load %arg2[%c0_397, %c0_398] : memref<9x256xf32, #tpu.memory_space<vmem>>, vector<1x256xf32>
    %456 = vector.broadcast %455 : vector<1x256xf32> to vector<8x256xf32>
    %457 = arith.mulf %454, %456 : vector<8x256xf32>
    %c32_399 = arith.constant 32 : index
    %c0_400 = arith.constant 0 : index
    %458 = vector.load %arg34[%c32_399, %c0_400] : memref<360x256xf32, #tpu.memory_space<vmem>>, vector<8x256xf32>
    tpu.vector_store %arg34[%c32_399, %c0_400], %457 {strides = array<i32>} : memref<360x256xf32, #tpu.memory_space<vmem>>, vector<8x256xf32>,
    %c16_i32_401 = arith.constant 16 : i32
    %459 = tpu.dynamic_rotate %453 by %c16_i32_401 dim 1 : vector<8x256xf32>, i32 -> vector<8x256xf32>
    %c1_402 = arith.constant 1 : index
    %c0_403 = arith.constant 0 : index
    %460 = vector.load %arg2[%c1_402, %c0_403] : memref<9x256xf32, #tpu.memory_space<vmem>>, vector<1x256xf32>
    %461 = vector.broadcast %460 : vector<1x256xf32> to vector<8x256xf32>
    %462 = arith.mulf %459, %461 : vector<8x256xf32>
    %c72_404 = arith.constant 72 : index
    %c0_405 = arith.constant 0 : index
    %463 = vector.load %arg34[%c72_404, %c0_405] : memref<360x256xf32, #tpu.memory_space<vmem>>, vector<8x256xf32>
    tpu.vector_store %arg34[%c72_404, %c0_405], %462 {strides = array<i32>} : memref<360x256xf32, #tpu.memory_space<vmem>>, vector<8x256xf32>,
    %c15_i32_406 = arith.constant 15 : i32
    %464 = tpu.dynamic_rotate %453 by %c15_i32_406 dim 1 : vector<8x256xf32>, i32 -> vector<8x256xf32>
    %c2_407 = arith.constant 2 : index
    %c0_408 = arith.constant 0 : index
    %465 = vector.load %arg2[%c2_407, %c0_408] : memref<9x256xf32, #tpu.memory_space<vmem>>, vector<1x256xf32>
    %466 = vector.broadcast %465 : vector<1x256xf32> to vector<8x256xf32>
    %467 = arith.mulf %464, %466 : vector<8x256xf32>
    %c112_409 = arith.constant 112 : index
    %c0_410 = arith.constant 0 : index
    %468 = vector.load %arg34[%c112_409, %c0_410] : memref<360x256xf32, #tpu.memory_space<vmem>>, vector<8x256xf32>
    tpu.vector_store %arg34[%c112_409, %c0_410], %467 {strides = array<i32>} : memref<360x256xf32, #tpu.memory_space<vmem>>, vector<8x256xf32>,
    %c1_i32_411 = arith.constant 1 : i32
    %469 = tpu.dynamic_rotate %453 by %c1_i32_411 dim 1 : vector<8x256xf32>, i32 -> vector<8x256xf32>
    %c3_412 = arith.constant 3 : index
    %c0_413 = arith.constant 0 : index
    %470 = vector.load %arg2[%c3_412, %c0_413] : memref<9x256xf32, #tpu.memory_space<vmem>>, vector<1x256xf32>
    %471 = vector.broadcast %470 : vector<1x256xf32> to vector<8x256xf32>
    %472 = arith.mulf %469, %471 : vector<8x256xf32>
    %c152_414 = arith.constant 152 : index
    %c0_415 = arith.constant 0 : index
    %473 = vector.load %arg34[%c152_414, %c0_415] : memref<360x256xf32, #tpu.memory_space<vmem>>, vector<8x256xf32>
    tpu.vector_store %arg34[%c152_414, %c0_415], %472 {strides = array<i32>} : memref<360x256xf32, #tpu.memory_space<vmem>>, vector<8x256xf32>,
    %c192_416 = arith.constant 192 : index
    %c0_417 = arith.constant 0 : index
    %474 = vector.load %arg34[%c192_416, %c0_417] : memref<360x256xf32, #tpu.memory_space<vmem>>, vector<8x256xf32>
    tpu.vector_store %arg34[%c192_416, %c0_417], %453 {strides = array<i32>} : memref<360x256xf32, #tpu.memory_space<vmem>>, vector<8x256xf32>,
    %c255_i32_418 = arith.constant 255 : i32
    %475 = tpu.dynamic_rotate %453 by %c255_i32_418 dim 1 : vector<8x256xf32>, i32 -> vector<8x256xf32>
    %c5_419 = arith.constant 5 : index
    %c0_420 = arith.constant 0 : index
    %476 = vector.load %arg2[%c5_419, %c0_420] : memref<9x256xf32, #tpu.memory_space<vmem>>, vector<1x256xf32>
    %477 = vector.broadcast %476 : vector<1x256xf32> to vector<8x256xf32>
    %478 = arith.mulf %475, %477 : vector<8x256xf32>
    %c232_421 = arith.constant 232 : index
    %c0_422 = arith.constant 0 : index
    %479 = vector.load %arg34[%c232_421, %c0_422] : memref<360x256xf32, #tpu.memory_space<vmem>>, vector<8x256xf32>
    tpu.vector_store %arg34[%c232_421, %c0_422], %478 {strides = array<i32>} : memref<360x256xf32, #tpu.memory_space<vmem>>, vector<8x256xf32>,
    %c241_i32_423 = arith.constant 241 : i32
    %480 = tpu.dynamic_rotate %453 by %c241_i32_423 dim 1 : vector<8x256xf32>, i32 -> vector<8x256xf32>
    %c6_424 = arith.constant 6 : index
    %c0_425 = arith.constant 0 : index
    %481 = vector.load %arg2[%c6_424, %c0_425] : memref<9x256xf32, #tpu.memory_space<vmem>>, vector<1x256xf32>
    %482 = vector.broadcast %481 : vector<1x256xf32> to vector<8x256xf32>
    %483 = arith.mulf %480, %482 : vector<8x256xf32>
    %c272_426 = arith.constant 272 : index
    %c0_427 = arith.constant 0 : index
    %484 = vector.load %arg34[%c272_426, %c0_427] : memref<360x256xf32, #tpu.memory_space<vmem>>, vector<8x256xf32>
    tpu.vector_store %arg34[%c272_426, %c0_427], %483 {strides = array<i32>} : memref<360x256xf32, #tpu.memory_space<vmem>>, vector<8x256xf32>,
    %c240_i32_428 = arith.constant 240 : i32
    %485 = tpu.dynamic_rotate %453 by %c240_i32_428 dim 1 : vector<8x256xf32>, i32 -> vector<8x256xf32>
    %c7_429 = arith.constant 7 : index
    %c0_430 = arith.constant 0 : index
    %486 = vector.load %arg2[%c7_429, %c0_430] : memref<9x256xf32, #tpu.memory_space<vmem>>, vector<1x256xf32>
    %487 = vector.broadcast %486 : vector<1x256xf32> to vector<8x256xf32>
    %488 = arith.mulf %485, %487 : vector<8x256xf32>
    %c312_431 = arith.constant 312 : index
    %c0_432 = arith.constant 0 : index
    %489 = vector.load %arg34[%c312_431, %c0_432] : memref<360x256xf32, #tpu.memory_space<vmem>>, vector<8x256xf32>
    tpu.vector_store %arg34[%c312_431, %c0_432], %488 {strides = array<i32>} : memref<360x256xf32, #tpu.memory_space<vmem>>, vector<8x256xf32>,
    %c239_i32_433 = arith.constant 239 : i32
    %490 = tpu.dynamic_rotate %453 by %c239_i32_433 dim 1 : vector<8x256xf32>, i32 -> vector<8x256xf32>
    %c8_434 = arith.constant 8 : index
    %c0_435 = arith.constant 0 : index
    %491 = vector.load %arg2[%c8_434, %c0_435] : memref<9x256xf32, #tpu.memory_space<vmem>>, vector<1x256xf32>
    %492 = vector.broadcast %491 : vector<1x256xf32> to vector<8x256xf32>
    %493 = arith.mulf %490, %492 : vector<8x256xf32>
    %c352_436 = arith.constant 352 : index
    %c0_437 = arith.constant 0 : index
    %494 = vector.load %arg34[%c352_436, %c0_437] : memref<360x256xf32, #tpu.memory_space<vmem>>, vector<8x256xf32>
    tpu.vector_store %arg34[%c352_436, %c0_437], %493 {strides = array<i32>} : memref<360x256xf32, #tpu.memory_space<vmem>>, vector<8x256xf32>,
    %c0_438 = arith.constant 0 : index
    %c0_439 = arith.constant 0 : index
    %495 = vector.load %arg21[%c0_438, %c0_439] : memref<8x360xf32, #tpu.memory_space<vmem>>, vector<8x360xf32>
    %c0_440 = arith.constant 0 : index
    %c0_441 = arith.constant 0 : index
    %496 = vector.load %arg34[%c0_440, %c0_441] : memref<360x256xf32, #tpu.memory_space<vmem>>, vector<360x256xf32>
    %cst_442 = arith.constant dense<0.000000e+00> : vector<8x256xf32>
    %497 = tpu.matmul %495, %496, %cst_442 {dimension_numbers = #tpu.dot_dimension_numbers<[1], [0], [0], [1], [0, 0, 1, 1], [], []>} : vector<8x360xf32>, vector<360x256xf32>, vector<8x256xf32> -> vector<8x256xf32>
    %c0_443 = arith.constant 0 : index
    %c0_444 = arith.constant 0 : index
    %498 = vector.load %arg22[%c0_443, %c0_444] : memref<8x1xf32, #tpu.memory_space<vmem>>, vector<8x1xf32>
    %499 = vector.broadcast %498 : vector<8x1xf32> to vector<8x256xf32>
    %500 = arith.addf %497, %499 : vector<8x256xf32>
    %cst_445 = arith.constant 2.000000e-01 : f32
    %501 = vector.broadcast %cst_445 : f32 to vector<8x256xf32>
    %502 = arith.mulf %500, %501 : vector<8x256xf32>
    %503 = arith.addf %502, %253 : vector<8x256xf32>
    %c17_i32_446 = arith.constant 17 : i32
    %504 = tpu.dynamic_rotate %503 by %c17_i32_446 dim 1 : vector<8x256xf32>, i32 -> vector<8x256xf32>
    %c0_447 = arith.constant 0 : index
    %c0_448 = arith.constant 0 : index
    %505 = vector.load %arg2[%c0_447, %c0_448] : memref<9x256xf32, #tpu.memory_space<vmem>>, vector<1x256xf32>
    %506 = vector.broadcast %505 : vector<1x256xf32> to vector<8x256xf32>
    %507 = arith.mulf %504, %506 : vector<8x256xf32>
    %c0_449 = arith.constant 0 : index
    %c0_450 = arith.constant 0 : index
    %508 = vector.load %arg34[%c0_449, %c0_450] : memref<360x256xf32, #tpu.memory_space<vmem>>, vector<8x256xf32>
    tpu.vector_store %arg34[%c0_449, %c0_450], %507 {strides = array<i32>} : memref<360x256xf32, #tpu.memory_space<vmem>>, vector<8x256xf32>,
    %c16_i32_451 = arith.constant 16 : i32
    %509 = tpu.dynamic_rotate %503 by %c16_i32_451 dim 1 : vector<8x256xf32>, i32 -> vector<8x256xf32>
    %c1_452 = arith.constant 1 : index
    %c0_453 = arith.constant 0 : index
    %510 = vector.load %arg2[%c1_452, %c0_453] : memref<9x256xf32, #tpu.memory_space<vmem>>, vector<1x256xf32>
    %511 = vector.broadcast %510 : vector<1x256xf32> to vector<8x256xf32>
    %512 = arith.mulf %509, %511 : vector<8x256xf32>
    %c40_454 = arith.constant 40 : index
    %c0_455 = arith.constant 0 : index
    %513 = vector.load %arg34[%c40_454, %c0_455] : memref<360x256xf32, #tpu.memory_space<vmem>>, vector<8x256xf32>
    tpu.vector_store %arg34[%c40_454, %c0_455], %512 {strides = array<i32>} : memref<360x256xf32, #tpu.memory_space<vmem>>, vector<8x256xf32>,
    %c15_i32_456 = arith.constant 15 : i32
    %514 = tpu.dynamic_rotate %503 by %c15_i32_456 dim 1 : vector<8x256xf32>, i32 -> vector<8x256xf32>
    %c2_457 = arith.constant 2 : index
    %c0_458 = arith.constant 0 : index
    %515 = vector.load %arg2[%c2_457, %c0_458] : memref<9x256xf32, #tpu.memory_space<vmem>>, vector<1x256xf32>
    %516 = vector.broadcast %515 : vector<1x256xf32> to vector<8x256xf32>
    %517 = arith.mulf %514, %516 : vector<8x256xf32>
    %c80_459 = arith.constant 80 : index
    %c0_460 = arith.constant 0 : index
    %518 = vector.load %arg34[%c80_459, %c0_460] : memref<360x256xf32, #tpu.memory_space<vmem>>, vector<8x256xf32>
    tpu.vector_store %arg34[%c80_459, %c0_460], %517 {strides = array<i32>} : memref<360x256xf32, #tpu.memory_space<vmem>>, vector<8x256xf32>,
    %c1_i32_461 = arith.constant 1 : i32
    %519 = tpu.dynamic_rotate %503 by %c1_i32_461 dim 1 : vector<8x256xf32>, i32 -> vector<8x256xf32>
    %c3_462 = arith.constant 3 : index
    %c0_463 = arith.constant 0 : index
    %520 = vector.load %arg2[%c3_462, %c0_463] : memref<9x256xf32, #tpu.memory_space<vmem>>, vector<1x256xf32>
    %521 = vector.broadcast %520 : vector<1x256xf32> to vector<8x256xf32>
    %522 = arith.mulf %519, %521 : vector<8x256xf32>
    %c120_464 = arith.constant 120 : index
    %c0_465 = arith.constant 0 : index
    %523 = vector.load %arg34[%c120_464, %c0_465] : memref<360x256xf32, #tpu.memory_space<vmem>>, vector<8x256xf32>
    tpu.vector_store %arg34[%c120_464, %c0_465], %522 {strides = array<i32>} : memref<360x256xf32, #tpu.memory_space<vmem>>, vector<8x256xf32>,
    %c160_466 = arith.constant 160 : index
    %c0_467 = arith.constant 0 : index
    %524 = vector.load %arg34[%c160_466, %c0_467] : memref<360x256xf32, #tpu.memory_space<vmem>>, vector<8x256xf32>
    tpu.vector_store %arg34[%c160_466, %c0_467], %503 {strides = array<i32>} : memref<360x256xf32, #tpu.memory_space<vmem>>, vector<8x256xf32>,
    %c255_i32_468 = arith.constant 255 : i32
    %525 = tpu.dynamic_rotate %503 by %c255_i32_468 dim 1 : vector<8x256xf32>, i32 -> vector<8x256xf32>
    %c5_469 = arith.constant 5 : index
    %c0_470 = arith.constant 0 : index
    %526 = vector.load %arg2[%c5_469, %c0_470] : memref<9x256xf32, #tpu.memory_space<vmem>>, vector<1x256xf32>
    %527 = vector.broadcast %526 : vector<1x256xf32> to vector<8x256xf32>
    %528 = arith.mulf %525, %527 : vector<8x256xf32>
    %c200_471 = arith.constant 200 : index
    %c0_472 = arith.constant 0 : index
    %529 = vector.load %arg34[%c200_471, %c0_472] : memref<360x256xf32, #tpu.memory_space<vmem>>, vector<8x256xf32>
    tpu.vector_store %arg34[%c200_471, %c0_472], %528 {strides = array<i32>} : memref<360x256xf32, #tpu.memory_space<vmem>>, vector<8x256xf32>,
    %c241_i32_473 = arith.constant 241 : i32
    %530 = tpu.dynamic_rotate %503 by %c241_i32_473 dim 1 : vector<8x256xf32>, i32 -> vector<8x256xf32>
    %c6_474 = arith.constant 6 : index
    %c0_475 = arith.constant 0 : index
    %531 = vector.load %arg2[%c6_474, %c0_475] : memref<9x256xf32, #tpu.memory_space<vmem>>, vector<1x256xf32>
    %532 = vector.broadcast %531 : vector<1x256xf32> to vector<8x256xf32>
    %533 = arith.mulf %530, %532 : vector<8x256xf32>
    %c240_476 = arith.constant 240 : index
    %c0_477 = arith.constant 0 : index
    %534 = vector.load %arg34[%c240_476, %c0_477] : memref<360x256xf32, #tpu.memory_space<vmem>>, vector<8x256xf32>
    tpu.vector_store %arg34[%c240_476, %c0_477], %533 {strides = array<i32>} : memref<360x256xf32, #tpu.memory_space<vmem>>, vector<8x256xf32>,
    %c240_i32_478 = arith.constant 240 : i32
    %535 = tpu.dynamic_rotate %503 by %c240_i32_478 dim 1 : vector<8x256xf32>, i32 -> vector<8x256xf32>
    %c7_479 = arith.constant 7 : index
    %c0_480 = arith.constant 0 : index
    %536 = vector.load %arg2[%c7_479, %c0_480] : memref<9x256xf32, #tpu.memory_space<vmem>>, vector<1x256xf32>
    %537 = vector.broadcast %536 : vector<1x256xf32> to vector<8x256xf32>
    %538 = arith.mulf %535, %537 : vector<8x256xf32>
    %c280_481 = arith.constant 280 : index
    %c0_482 = arith.constant 0 : index
    %539 = vector.load %arg34[%c280_481, %c0_482] : memref<360x256xf32, #tpu.memory_space<vmem>>, vector<8x256xf32>
    tpu.vector_store %arg34[%c280_481, %c0_482], %538 {strides = array<i32>} : memref<360x256xf32, #tpu.memory_space<vmem>>, vector<8x256xf32>,
    %c239_i32_483 = arith.constant 239 : i32
    %540 = tpu.dynamic_rotate %503 by %c239_i32_483 dim 1 : vector<8x256xf32>, i32 -> vector<8x256xf32>
    %c8_484 = arith.constant 8 : index
    %c0_485 = arith.constant 0 : index
    %541 = vector.load %arg2[%c8_484, %c0_485] : memref<9x256xf32, #tpu.memory_space<vmem>>, vector<1x256xf32>
    %542 = vector.broadcast %541 : vector<1x256xf32> to vector<8x256xf32>
    %543 = arith.mulf %540, %542 : vector<8x256xf32>
    %c320_486 = arith.constant 320 : index
    %c0_487 = arith.constant 0 : index
    %544 = vector.load %arg34[%c320_486, %c0_487] : memref<360x256xf32, #tpu.memory_space<vmem>>, vector<8x256xf32>
    tpu.vector_store %arg34[%c320_486, %c0_487], %543 {strides = array<i32>} : memref<360x256xf32, #tpu.memory_space<vmem>>, vector<8x256xf32>,
    %c0_488 = arith.constant 0 : index
    %c0_489 = arith.constant 0 : index
    %545 = vector.load %arg23[%c0_488, %c0_489] : memref<8x360xf32, #tpu.memory_space<vmem>>, vector<8x360xf32>
    %c0_490 = arith.constant 0 : index
    %c0_491 = arith.constant 0 : index
    %546 = vector.load %arg34[%c0_490, %c0_491] : memref<360x256xf32, #tpu.memory_space<vmem>>, vector<360x256xf32>
    %cst_492 = arith.constant dense<0.000000e+00> : vector<8x256xf32>
    %547 = tpu.matmul %545, %546, %cst_492 {dimension_numbers = #tpu.dot_dimension_numbers<[1], [0], [0], [1], [0, 0, 1, 1], [], []>} : vector<8x360xf32>, vector<360x256xf32>, vector<8x256xf32> -> vector<8x256xf32>
    %c0_493 = arith.constant 0 : index
    %c0_494 = arith.constant 0 : index
    %548 = vector.load %arg24[%c0_493, %c0_494] : memref<8x1xf32, #tpu.memory_space<vmem>>, vector<8x1xf32>
    %549 = vector.broadcast %548 : vector<8x1xf32> to vector<8x256xf32>
    %550 = arith.addf %547, %549 : vector<8x256xf32>
    %cst_495 = arith.constant 2.000000e-01 : f32
    %551 = vector.broadcast %cst_495 : f32 to vector<8x256xf32>
    %552 = arith.mulf %551, %550 : vector<8x256xf32>
    %553 = arith.maximumf %550, %552 : vector<8x256xf32>
    %c17_i32_496 = arith.constant 17 : i32
    %554 = tpu.dynamic_rotate %553 by %c17_i32_496 dim 1 : vector<8x256xf32>, i32 -> vector<8x256xf32>
    %c0_497 = arith.constant 0 : index
    %c0_498 = arith.constant 0 : index
    %555 = vector.load %arg2[%c0_497, %c0_498] : memref<9x256xf32, #tpu.memory_space<vmem>>, vector<1x256xf32>
    %556 = vector.broadcast %555 : vector<1x256xf32> to vector<8x256xf32>
    %557 = arith.mulf %554, %556 : vector<8x256xf32>
    %c8_499 = arith.constant 8 : index
    %c0_500 = arith.constant 0 : index
    %558 = vector.load %arg34[%c8_499, %c0_500] : memref<360x256xf32, #tpu.memory_space<vmem>>, vector<8x256xf32>
    tpu.vector_store %arg34[%c8_499, %c0_500], %557 {strides = array<i32>} : memref<360x256xf32, #tpu.memory_space<vmem>>, vector<8x256xf32>,
    %c16_i32_501 = arith.constant 16 : i32
    %559 = tpu.dynamic_rotate %553 by %c16_i32_501 dim 1 : vector<8x256xf32>, i32 -> vector<8x256xf32>
    %c1_502 = arith.constant 1 : index
    %c0_503 = arith.constant 0 : index
    %560 = vector.load %arg2[%c1_502, %c0_503] : memref<9x256xf32, #tpu.memory_space<vmem>>, vector<1x256xf32>
    %561 = vector.broadcast %560 : vector<1x256xf32> to vector<8x256xf32>
    %562 = arith.mulf %559, %561 : vector<8x256xf32>
    %c48_504 = arith.constant 48 : index
    %c0_505 = arith.constant 0 : index
    %563 = vector.load %arg34[%c48_504, %c0_505] : memref<360x256xf32, #tpu.memory_space<vmem>>, vector<8x256xf32>
    tpu.vector_store %arg34[%c48_504, %c0_505], %562 {strides = array<i32>} : memref<360x256xf32, #tpu.memory_space<vmem>>, vector<8x256xf32>,
    %c15_i32_506 = arith.constant 15 : i32
    %564 = tpu.dynamic_rotate %553 by %c15_i32_506 dim 1 : vector<8x256xf32>, i32 -> vector<8x256xf32>
    %c2_507 = arith.constant 2 : index
    %c0_508 = arith.constant 0 : index
    %565 = vector.load %arg2[%c2_507, %c0_508] : memref<9x256xf32, #tpu.memory_space<vmem>>, vector<1x256xf32>
    %566 = vector.broadcast %565 : vector<1x256xf32> to vector<8x256xf32>
    %567 = arith.mulf %564, %566 : vector<8x256xf32>
    %c88_509 = arith.constant 88 : index
    %c0_510 = arith.constant 0 : index
    %568 = vector.load %arg34[%c88_509, %c0_510] : memref<360x256xf32, #tpu.memory_space<vmem>>, vector<8x256xf32>
    tpu.vector_store %arg34[%c88_509, %c0_510], %567 {strides = array<i32>} : memref<360x256xf32, #tpu.memory_space<vmem>>, vector<8x256xf32>,
    %c1_i32_511 = arith.constant 1 : i32
    %569 = tpu.dynamic_rotate %553 by %c1_i32_511 dim 1 : vector<8x256xf32>, i32 -> vector<8x256xf32>
    %c3_512 = arith.constant 3 : index
    %c0_513 = arith.constant 0 : index
    %570 = vector.load %arg2[%c3_512, %c0_513] : memref<9x256xf32, #tpu.memory_space<vmem>>, vector<1x256xf32>
    %571 = vector.broadcast %570 : vector<1x256xf32> to vector<8x256xf32>
    %572 = arith.mulf %569, %571 : vector<8x256xf32>
    %c128_514 = arith.constant 128 : index
    %c0_515 = arith.constant 0 : index
    %573 = vector.load %arg34[%c128_514, %c0_515] : memref<360x256xf32, #tpu.memory_space<vmem>>, vector<8x256xf32>
    tpu.vector_store %arg34[%c128_514, %c0_515], %572 {strides = array<i32>} : memref<360x256xf32, #tpu.memory_space<vmem>>, vector<8x256xf32>,
    %c168_516 = arith.constant 168 : index
    %c0_517 = arith.constant 0 : index
    %574 = vector.load %arg34[%c168_516, %c0_517] : memref<360x256xf32, #tpu.memory_space<vmem>>, vector<8x256xf32>
    tpu.vector_store %arg34[%c168_516, %c0_517], %553 {strides = array<i32>} : memref<360x256xf32, #tpu.memory_space<vmem>>, vector<8x256xf32>,
    %c255_i32_518 = arith.constant 255 : i32
    %575 = tpu.dynamic_rotate %553 by %c255_i32_518 dim 1 : vector<8x256xf32>, i32 -> vector<8x256xf32>
    %c5_519 = arith.constant 5 : index
    %c0_520 = arith.constant 0 : index
    %576 = vector.load %arg2[%c5_519, %c0_520] : memref<9x256xf32, #tpu.memory_space<vmem>>, vector<1x256xf32>
    %577 = vector.broadcast %576 : vector<1x256xf32> to vector<8x256xf32>
    %578 = arith.mulf %575, %577 : vector<8x256xf32>
    %c208_521 = arith.constant 208 : index
    %c0_522 = arith.constant 0 : index
    %579 = vector.load %arg34[%c208_521, %c0_522] : memref<360x256xf32, #tpu.memory_space<vmem>>, vector<8x256xf32>
    tpu.vector_store %arg34[%c208_521, %c0_522], %578 {strides = array<i32>} : memref<360x256xf32, #tpu.memory_space<vmem>>, vector<8x256xf32>,
    %c241_i32_523 = arith.constant 241 : i32
    %580 = tpu.dynamic_rotate %553 by %c241_i32_523 dim 1 : vector<8x256xf32>, i32 -> vector<8x256xf32>
    %c6_524 = arith.constant 6 : index
    %c0_525 = arith.constant 0 : index
    %581 = vector.load %arg2[%c6_524, %c0_525] : memref<9x256xf32, #tpu.memory_space<vmem>>, vector<1x256xf32>
    %582 = vector.broadcast %581 : vector<1x256xf32> to vector<8x256xf32>
    %583 = arith.mulf %580, %582 : vector<8x256xf32>
    %c248_526 = arith.constant 248 : index
    %c0_527 = arith.constant 0 : index
    %584 = vector.load %arg34[%c248_526, %c0_527] : memref<360x256xf32, #tpu.memory_space<vmem>>, vector<8x256xf32>
    tpu.vector_store %arg34[%c248_526, %c0_527], %583 {strides = array<i32>} : memref<360x256xf32, #tpu.memory_space<vmem>>, vector<8x256xf32>,
    %c240_i32_528 = arith.constant 240 : i32
    %585 = tpu.dynamic_rotate %553 by %c240_i32_528 dim 1 : vector<8x256xf32>, i32 -> vector<8x256xf32>
    %c7_529 = arith.constant 7 : index
    %c0_530 = arith.constant 0 : index
    %586 = vector.load %arg2[%c7_529, %c0_530] : memref<9x256xf32, #tpu.memory_space<vmem>>, vector<1x256xf32>
    %587 = vector.broadcast %586 : vector<1x256xf32> to vector<8x256xf32>
    %588 = arith.mulf %585, %587 : vector<8x256xf32>
    %c288_531 = arith.constant 288 : index
    %c0_532 = arith.constant 0 : index
    %589 = vector.load %arg34[%c288_531, %c0_532] : memref<360x256xf32, #tpu.memory_space<vmem>>, vector<8x256xf32>
    tpu.vector_store %arg34[%c288_531, %c0_532], %588 {strides = array<i32>} : memref<360x256xf32, #tpu.memory_space<vmem>>, vector<8x256xf32>,
    %c239_i32_533 = arith.constant 239 : i32
    %590 = tpu.dynamic_rotate %553 by %c239_i32_533 dim 1 : vector<8x256xf32>, i32 -> vector<8x256xf32>
    %c8_534 = arith.constant 8 : index
    %c0_535 = arith.constant 0 : index
    %591 = vector.load %arg2[%c8_534, %c0_535] : memref<9x256xf32, #tpu.memory_space<vmem>>, vector<1x256xf32>
    %592 = vector.broadcast %591 : vector<1x256xf32> to vector<8x256xf32>
    %593 = arith.mulf %590, %592 : vector<8x256xf32>
    %c328_536 = arith.constant 328 : index
    %c0_537 = arith.constant 0 : index
    %594 = vector.load %arg34[%c328_536, %c0_537] : memref<360x256xf32, #tpu.memory_space<vmem>>, vector<8x256xf32>
    tpu.vector_store %arg34[%c328_536, %c0_537], %593 {strides = array<i32>} : memref<360x256xf32, #tpu.memory_space<vmem>>, vector<8x256xf32>,
    %c0_538 = arith.constant 0 : index
    %c0_539 = arith.constant 0 : index
    %595 = vector.load %arg25[%c0_538, %c0_539] : memref<8x360xf32, #tpu.memory_space<vmem>>, vector<8x360xf32>
    %c0_540 = arith.constant 0 : index
    %c0_541 = arith.constant 0 : index
    %596 = vector.load %arg34[%c0_540, %c0_541] : memref<360x256xf32, #tpu.memory_space<vmem>>, vector<360x256xf32>
    %cst_542 = arith.constant dense<0.000000e+00> : vector<8x256xf32>
    %597 = tpu.matmul %595, %596, %cst_542 {dimension_numbers = #tpu.dot_dimension_numbers<[1], [0], [0], [1], [0, 0, 1, 1], [], []>} : vector<8x360xf32>, vector<360x256xf32>, vector<8x256xf32> -> vector<8x256xf32>
    %c0_543 = arith.constant 0 : index
    %c0_544 = arith.constant 0 : index
    %598 = vector.load %arg26[%c0_543, %c0_544] : memref<8x1xf32, #tpu.memory_space<vmem>>, vector<8x1xf32>
    %599 = vector.broadcast %598 : vector<8x1xf32> to vector<8x256xf32>
    %600 = arith.addf %597, %599 : vector<8x256xf32>
    %cst_545 = arith.constant 2.000000e-01 : f32
    %601 = vector.broadcast %cst_545 : f32 to vector<8x256xf32>
    %602 = arith.mulf %601, %600 : vector<8x256xf32>
    %603 = arith.maximumf %600, %602 : vector<8x256xf32>
    %c17_i32_546 = arith.constant 17 : i32
    %604 = tpu.dynamic_rotate %603 by %c17_i32_546 dim 1 : vector<8x256xf32>, i32 -> vector<8x256xf32>
    %c0_547 = arith.constant 0 : index
    %c0_548 = arith.constant 0 : index
    %605 = vector.load %arg2[%c0_547, %c0_548] : memref<9x256xf32, #tpu.memory_space<vmem>>, vector<1x256xf32>
    %606 = vector.broadcast %605 : vector<1x256xf32> to vector<8x256xf32>
    %607 = arith.mulf %604, %606 : vector<8x256xf32>
    %c16_549 = arith.constant 16 : index
    %c0_550 = arith.constant 0 : index
    %608 = vector.load %arg34[%c16_549, %c0_550] : memref<360x256xf32, #tpu.memory_space<vmem>>, vector<8x256xf32>
    tpu.vector_store %arg34[%c16_549, %c0_550], %607 {strides = array<i32>} : memref<360x256xf32, #tpu.memory_space<vmem>>, vector<8x256xf32>,
    %c16_i32_551 = arith.constant 16 : i32
    %609 = tpu.dynamic_rotate %603 by %c16_i32_551 dim 1 : vector<8x256xf32>, i32 -> vector<8x256xf32>
    %c1_552 = arith.constant 1 : index
    %c0_553 = arith.constant 0 : index
    %610 = vector.load %arg2[%c1_552, %c0_553] : memref<9x256xf32, #tpu.memory_space<vmem>>, vector<1x256xf32>
    %611 = vector.broadcast %610 : vector<1x256xf32> to vector<8x256xf32>
    %612 = arith.mulf %609, %611 : vector<8x256xf32>
    %c56_554 = arith.constant 56 : index
    %c0_555 = arith.constant 0 : index
    %613 = vector.load %arg34[%c56_554, %c0_555] : memref<360x256xf32, #tpu.memory_space<vmem>>, vector<8x256xf32>
    tpu.vector_store %arg34[%c56_554, %c0_555], %612 {strides = array<i32>} : memref<360x256xf32, #tpu.memory_space<vmem>>, vector<8x256xf32>,
    %c15_i32_556 = arith.constant 15 : i32
    %614 = tpu.dynamic_rotate %603 by %c15_i32_556 dim 1 : vector<8x256xf32>, i32 -> vector<8x256xf32>
    %c2_557 = arith.constant 2 : index
    %c0_558 = arith.constant 0 : index
    %615 = vector.load %arg2[%c2_557, %c0_558] : memref<9x256xf32, #tpu.memory_space<vmem>>, vector<1x256xf32>
    %616 = vector.broadcast %615 : vector<1x256xf32> to vector<8x256xf32>
    %617 = arith.mulf %614, %616 : vector<8x256xf32>
    %c96_559 = arith.constant 96 : index
    %c0_560 = arith.constant 0 : index
    %618 = vector.load %arg34[%c96_559, %c0_560] : memref<360x256xf32, #tpu.memory_space<vmem>>, vector<8x256xf32>
    tpu.vector_store %arg34[%c96_559, %c0_560], %617 {strides = array<i32>} : memref<360x256xf32, #tpu.memory_space<vmem>>, vector<8x256xf32>,
    %c1_i32_561 = arith.constant 1 : i32
    %619 = tpu.dynamic_rotate %603 by %c1_i32_561 dim 1 : vector<8x256xf32>, i32 -> vector<8x256xf32>
    %c3_562 = arith.constant 3 : index
    %c0_563 = arith.constant 0 : index
    %620 = vector.load %arg2[%c3_562, %c0_563] : memref<9x256xf32, #tpu.memory_space<vmem>>, vector<1x256xf32>
    %621 = vector.broadcast %620 : vector<1x256xf32> to vector<8x256xf32>
    %622 = arith.mulf %619, %621 : vector<8x256xf32>
    %c136_564 = arith.constant 136 : index
    %c0_565 = arith.constant 0 : index
    %623 = vector.load %arg34[%c136_564, %c0_565] : memref<360x256xf32, #tpu.memory_space<vmem>>, vector<8x256xf32>
    tpu.vector_store %arg34[%c136_564, %c0_565], %622 {strides = array<i32>} : memref<360x256xf32, #tpu.memory_space<vmem>>, vector<8x256xf32>,
    %c176_566 = arith.constant 176 : index
    %c0_567 = arith.constant 0 : index
    %624 = vector.load %arg34[%c176_566, %c0_567] : memref<360x256xf32, #tpu.memory_space<vmem>>, vector<8x256xf32>
    tpu.vector_store %arg34[%c176_566, %c0_567], %603 {strides = array<i32>} : memref<360x256xf32, #tpu.memory_space<vmem>>, vector<8x256xf32>,
    %c255_i32_568 = arith.constant 255 : i32
    %625 = tpu.dynamic_rotate %603 by %c255_i32_568 dim 1 : vector<8x256xf32>, i32 -> vector<8x256xf32>
    %c5_569 = arith.constant 5 : index
    %c0_570 = arith.constant 0 : index
    %626 = vector.load %arg2[%c5_569, %c0_570] : memref<9x256xf32, #tpu.memory_space<vmem>>, vector<1x256xf32>
    %627 = vector.broadcast %626 : vector<1x256xf32> to vector<8x256xf32>
    %628 = arith.mulf %625, %627 : vector<8x256xf32>
    %c216_571 = arith.constant 216 : index
    %c0_572 = arith.constant 0 : index
    %629 = vector.load %arg34[%c216_571, %c0_572] : memref<360x256xf32, #tpu.memory_space<vmem>>, vector<8x256xf32>
    tpu.vector_store %arg34[%c216_571, %c0_572], %628 {strides = array<i32>} : memref<360x256xf32, #tpu.memory_space<vmem>>, vector<8x256xf32>,
    %c241_i32_573 = arith.constant 241 : i32
    %630 = tpu.dynamic_rotate %603 by %c241_i32_573 dim 1 : vector<8x256xf32>, i32 -> vector<8x256xf32>
    %c6_574 = arith.constant 6 : index
    %c0_575 = arith.constant 0 : index
    %631 = vector.load %arg2[%c6_574, %c0_575] : memref<9x256xf32, #tpu.memory_space<vmem>>, vector<1x256xf32>
    %632 = vector.broadcast %631 : vector<1x256xf32> to vector<8x256xf32>
    %633 = arith.mulf %630, %632 : vector<8x256xf32>
    %c256_576 = arith.constant 256 : index
    %c0_577 = arith.constant 0 : index
    %634 = vector.load %arg34[%c256_576, %c0_577] : memref<360x256xf32, #tpu.memory_space<vmem>>, vector<8x256xf32>
    tpu.vector_store %arg34[%c256_576, %c0_577], %633 {strides = array<i32>} : memref<360x256xf32, #tpu.memory_space<vmem>>, vector<8x256xf32>,
    %c240_i32_578 = arith.constant 240 : i32
    %635 = tpu.dynamic_rotate %603 by %c240_i32_578 dim 1 : vector<8x256xf32>, i32 -> vector<8x256xf32>
    %c7_579 = arith.constant 7 : index
    %c0_580 = arith.constant 0 : index
    %636 = vector.load %arg2[%c7_579, %c0_580] : memref<9x256xf32, #tpu.memory_space<vmem>>, vector<1x256xf32>
    %637 = vector.broadcast %636 : vector<1x256xf32> to vector<8x256xf32>
    %638 = arith.mulf %635, %637 : vector<8x256xf32>
    %c296_581 = arith.constant 296 : index
    %c0_582 = arith.constant 0 : index
    %639 = vector.load %arg34[%c296_581, %c0_582] : memref<360x256xf32, #tpu.memory_space<vmem>>, vector<8x256xf32>
    tpu.vector_store %arg34[%c296_581, %c0_582], %638 {strides = array<i32>} : memref<360x256xf32, #tpu.memory_space<vmem>>, vector<8x256xf32>,
    %c239_i32_583 = arith.constant 239 : i32
    %640 = tpu.dynamic_rotate %603 by %c239_i32_583 dim 1 : vector<8x256xf32>, i32 -> vector<8x256xf32>
    %c8_584 = arith.constant 8 : index
    %c0_585 = arith.constant 0 : index
    %641 = vector.load %arg2[%c8_584, %c0_585] : memref<9x256xf32, #tpu.memory_space<vmem>>, vector<1x256xf32>
    %642 = vector.broadcast %641 : vector<1x256xf32> to vector<8x256xf32>
    %643 = arith.mulf %640, %642 : vector<8x256xf32>
    %c336_586 = arith.constant 336 : index
    %c0_587 = arith.constant 0 : index
    %644 = vector.load %arg34[%c336_586, %c0_587] : memref<360x256xf32, #tpu.memory_space<vmem>>, vector<8x256xf32>
    tpu.vector_store %arg34[%c336_586, %c0_587], %643 {strides = array<i32>} : memref<360x256xf32, #tpu.memory_space<vmem>>, vector<8x256xf32>,
    %c0_588 = arith.constant 0 : index
    %c0_589 = arith.constant 0 : index
    %645 = vector.load %arg27[%c0_588, %c0_589] : memref<8x360xf32, #tpu.memory_space<vmem>>, vector<8x360xf32>
    %c0_590 = arith.constant 0 : index
    %c0_591 = arith.constant 0 : index
    %646 = vector.load %arg34[%c0_590, %c0_591] : memref<360x256xf32, #tpu.memory_space<vmem>>, vector<360x256xf32>
    %cst_592 = arith.constant dense<0.000000e+00> : vector<8x256xf32>
    %647 = tpu.matmul %645, %646, %cst_592 {dimension_numbers = #tpu.dot_dimension_numbers<[1], [0], [0], [1], [0, 0, 1, 1], [], []>} : vector<8x360xf32>, vector<360x256xf32>, vector<8x256xf32> -> vector<8x256xf32>
    %c0_593 = arith.constant 0 : index
    %c0_594 = arith.constant 0 : index
    %648 = vector.load %arg28[%c0_593, %c0_594] : memref<8x1xf32, #tpu.memory_space<vmem>>, vector<8x1xf32>
    %649 = vector.broadcast %648 : vector<8x1xf32> to vector<8x256xf32>
    %650 = arith.addf %647, %649 : vector<8x256xf32>
    %cst_595 = arith.constant 2.000000e-01 : f32
    %651 = vector.broadcast %cst_595 : f32 to vector<8x256xf32>
    %652 = arith.mulf %651, %650 : vector<8x256xf32>
    %653 = arith.maximumf %650, %652 : vector<8x256xf32>
    %c17_i32_596 = arith.constant 17 : i32
    %654 = tpu.dynamic_rotate %653 by %c17_i32_596 dim 1 : vector<8x256xf32>, i32 -> vector<8x256xf32>
    %c0_597 = arith.constant 0 : index
    %c0_598 = arith.constant 0 : index
    %655 = vector.load %arg2[%c0_597, %c0_598] : memref<9x256xf32, #tpu.memory_space<vmem>>, vector<1x256xf32>
    %656 = vector.broadcast %655 : vector<1x256xf32> to vector<8x256xf32>
    %657 = arith.mulf %654, %656 : vector<8x256xf32>
    %c24_599 = arith.constant 24 : index
    %c0_600 = arith.constant 0 : index
    %658 = vector.load %arg34[%c24_599, %c0_600] : memref<360x256xf32, #tpu.memory_space<vmem>>, vector<8x256xf32>
    tpu.vector_store %arg34[%c24_599, %c0_600], %657 {strides = array<i32>} : memref<360x256xf32, #tpu.memory_space<vmem>>, vector<8x256xf32>,
    %c16_i32_601 = arith.constant 16 : i32
    %659 = tpu.dynamic_rotate %653 by %c16_i32_601 dim 1 : vector<8x256xf32>, i32 -> vector<8x256xf32>
    %c1_602 = arith.constant 1 : index
    %c0_603 = arith.constant 0 : index
    %660 = vector.load %arg2[%c1_602, %c0_603] : memref<9x256xf32, #tpu.memory_space<vmem>>, vector<1x256xf32>
    %661 = vector.broadcast %660 : vector<1x256xf32> to vector<8x256xf32>
    %662 = arith.mulf %659, %661 : vector<8x256xf32>
    %c64_604 = arith.constant 64 : index
    %c0_605 = arith.constant 0 : index
    %663 = vector.load %arg34[%c64_604, %c0_605] : memref<360x256xf32, #tpu.memory_space<vmem>>, vector<8x256xf32>
    tpu.vector_store %arg34[%c64_604, %c0_605], %662 {strides = array<i32>} : memref<360x256xf32, #tpu.memory_space<vmem>>, vector<8x256xf32>,
    %c15_i32_606 = arith.constant 15 : i32
    %664 = tpu.dynamic_rotate %653 by %c15_i32_606 dim 1 : vector<8x256xf32>, i32 -> vector<8x256xf32>
    %c2_607 = arith.constant 2 : index
    %c0_608 = arith.constant 0 : index
    %665 = vector.load %arg2[%c2_607, %c0_608] : memref<9x256xf32, #tpu.memory_space<vmem>>, vector<1x256xf32>
    %666 = vector.broadcast %665 : vector<1x256xf32> to vector<8x256xf32>
    %667 = arith.mulf %664, %666 : vector<8x256xf32>
    %c104_609 = arith.constant 104 : index
    %c0_610 = arith.constant 0 : index
    %668 = vector.load %arg34[%c104_609, %c0_610] : memref<360x256xf32, #tpu.memory_space<vmem>>, vector<8x256xf32>
    tpu.vector_store %arg34[%c104_609, %c0_610], %667 {strides = array<i32>} : memref<360x256xf32, #tpu.memory_space<vmem>>, vector<8x256xf32>,
    %c1_i32_611 = arith.constant 1 : i32
    %669 = tpu.dynamic_rotate %653 by %c1_i32_611 dim 1 : vector<8x256xf32>, i32 -> vector<8x256xf32>
    %c3_612 = arith.constant 3 : index
    %c0_613 = arith.constant 0 : index
    %670 = vector.load %arg2[%c3_612, %c0_613] : memref<9x256xf32, #tpu.memory_space<vmem>>, vector<1x256xf32>
    %671 = vector.broadcast %670 : vector<1x256xf32> to vector<8x256xf32>
    %672 = arith.mulf %669, %671 : vector<8x256xf32>
    %c144_614 = arith.constant 144 : index
    %c0_615 = arith.constant 0 : index
    %673 = vector.load %arg34[%c144_614, %c0_615] : memref<360x256xf32, #tpu.memory_space<vmem>>, vector<8x256xf32>
    tpu.vector_store %arg34[%c144_614, %c0_615], %672 {strides = array<i32>} : memref<360x256xf32, #tpu.memory_space<vmem>>, vector<8x256xf32>,
    %c184_616 = arith.constant 184 : index
    %c0_617 = arith.constant 0 : index
    %674 = vector.load %arg34[%c184_616, %c0_617] : memref<360x256xf32, #tpu.memory_space<vmem>>, vector<8x256xf32>
    tpu.vector_store %arg34[%c184_616, %c0_617], %653 {strides = array<i32>} : memref<360x256xf32, #tpu.memory_space<vmem>>, vector<8x256xf32>,
    %c255_i32_618 = arith.constant 255 : i32
    %675 = tpu.dynamic_rotate %653 by %c255_i32_618 dim 1 : vector<8x256xf32>, i32 -> vector<8x256xf32>
    %c5_619 = arith.constant 5 : index
    %c0_620 = arith.constant 0 : index
    %676 = vector.load %arg2[%c5_619, %c0_620] : memref<9x256xf32, #tpu.memory_space<vmem>>, vector<1x256xf32>
    %677 = vector.broadcast %676 : vector<1x256xf32> to vector<8x256xf32>
    %678 = arith.mulf %675, %677 : vector<8x256xf32>
    %c224_621 = arith.constant 224 : index
    %c0_622 = arith.constant 0 : index
    %679 = vector.load %arg34[%c224_621, %c0_622] : memref<360x256xf32, #tpu.memory_space<vmem>>, vector<8x256xf32>
    tpu.vector_store %arg34[%c224_621, %c0_622], %678 {strides = array<i32>} : memref<360x256xf32, #tpu.memory_space<vmem>>, vector<8x256xf32>,
    %c241_i32_623 = arith.constant 241 : i32
    %680 = tpu.dynamic_rotate %653 by %c241_i32_623 dim 1 : vector<8x256xf32>, i32 -> vector<8x256xf32>
    %c6_624 = arith.constant 6 : index
    %c0_625 = arith.constant 0 : index
    %681 = vector.load %arg2[%c6_624, %c0_625] : memref<9x256xf32, #tpu.memory_space<vmem>>, vector<1x256xf32>
    %682 = vector.broadcast %681 : vector<1x256xf32> to vector<8x256xf32>
    %683 = arith.mulf %680, %682 : vector<8x256xf32>
    %c264_626 = arith.constant 264 : index
    %c0_627 = arith.constant 0 : index
    %684 = vector.load %arg34[%c264_626, %c0_627] : memref<360x256xf32, #tpu.memory_space<vmem>>, vector<8x256xf32>
    tpu.vector_store %arg34[%c264_626, %c0_627], %683 {strides = array<i32>} : memref<360x256xf32, #tpu.memory_space<vmem>>, vector<8x256xf32>,
    %c240_i32_628 = arith.constant 240 : i32
    %685 = tpu.dynamic_rotate %653 by %c240_i32_628 dim 1 : vector<8x256xf32>, i32 -> vector<8x256xf32>
    %c7_629 = arith.constant 7 : index
    %c0_630 = arith.constant 0 : index
    %686 = vector.load %arg2[%c7_629, %c0_630] : memref<9x256xf32, #tpu.memory_space<vmem>>, vector<1x256xf32>
    %687 = vector.broadcast %686 : vector<1x256xf32> to vector<8x256xf32>
    %688 = arith.mulf %685, %687 : vector<8x256xf32>
    %c304_631 = arith.constant 304 : index
    %c0_632 = arith.constant 0 : index
    %689 = vector.load %arg34[%c304_631, %c0_632] : memref<360x256xf32, #tpu.memory_space<vmem>>, vector<8x256xf32>
    tpu.vector_store %arg34[%c304_631, %c0_632], %688 {strides = array<i32>} : memref<360x256xf32, #tpu.memory_space<vmem>>, vector<8x256xf32>,
    %c239_i32_633 = arith.constant 239 : i32
    %690 = tpu.dynamic_rotate %653 by %c239_i32_633 dim 1 : vector<8x256xf32>, i32 -> vector<8x256xf32>
    %c8_634 = arith.constant 8 : index
    %c0_635 = arith.constant 0 : index
    %691 = vector.load %arg2[%c8_634, %c0_635] : memref<9x256xf32, #tpu.memory_space<vmem>>, vector<1x256xf32>
    %692 = vector.broadcast %691 : vector<1x256xf32> to vector<8x256xf32>
    %693 = arith.mulf %690, %692 : vector<8x256xf32>
    %c344_636 = arith.constant 344 : index
    %c0_637 = arith.constant 0 : index
    %694 = vector.load %arg34[%c344_636, %c0_637] : memref<360x256xf32, #tpu.memory_space<vmem>>, vector<8x256xf32>
    tpu.vector_store %arg34[%c344_636, %c0_637], %693 {strides = array<i32>} : memref<360x256xf32, #tpu.memory_space<vmem>>, vector<8x256xf32>,
    %c0_638 = arith.constant 0 : index
    %c0_639 = arith.constant 0 : index
    %695 = vector.load %arg29[%c0_638, %c0_639] : memref<8x360xf32, #tpu.memory_space<vmem>>, vector<8x360xf32>
    %c0_640 = arith.constant 0 : index
    %c0_641 = arith.constant 0 : index
    %696 = vector.load %arg34[%c0_640, %c0_641] : memref<360x256xf32, #tpu.memory_space<vmem>>, vector<360x256xf32>
    %cst_642 = arith.constant dense<0.000000e+00> : vector<8x256xf32>
    %697 = tpu.matmul %695, %696, %cst_642 {dimension_numbers = #tpu.dot_dimension_numbers<[1], [0], [0], [1], [0, 0, 1, 1], [], []>} : vector<8x360xf32>, vector<360x256xf32>, vector<8x256xf32> -> vector<8x256xf32>
    %c0_643 = arith.constant 0 : index
    %c0_644 = arith.constant 0 : index
    %698 = vector.load %arg30[%c0_643, %c0_644] : memref<8x1xf32, #tpu.memory_space<vmem>>, vector<8x1xf32>
    %699 = vector.broadcast %698 : vector<8x1xf32> to vector<8x256xf32>
    %700 = arith.addf %697, %699 : vector<8x256xf32>
    %cst_645 = arith.constant 2.000000e-01 : f32
    %701 = vector.broadcast %cst_645 : f32 to vector<8x256xf32>
    %702 = arith.mulf %701, %700 : vector<8x256xf32>
    %703 = arith.maximumf %700, %702 : vector<8x256xf32>
    %c17_i32_646 = arith.constant 17 : i32
    %704 = tpu.dynamic_rotate %703 by %c17_i32_646 dim 1 : vector<8x256xf32>, i32 -> vector<8x256xf32>
    %c0_647 = arith.constant 0 : index
    %c0_648 = arith.constant 0 : index
    %705 = vector.load %arg2[%c0_647, %c0_648] : memref<9x256xf32, #tpu.memory_space<vmem>>, vector<1x256xf32>
    %706 = vector.broadcast %705 : vector<1x256xf32> to vector<8x256xf32>
    %707 = arith.mulf %704, %706 : vector<8x256xf32>
    %c32_649 = arith.constant 32 : index
    %c0_650 = arith.constant 0 : index
    %708 = vector.load %arg34[%c32_649, %c0_650] : memref<360x256xf32, #tpu.memory_space<vmem>>, vector<8x256xf32>
    tpu.vector_store %arg34[%c32_649, %c0_650], %707 {strides = array<i32>} : memref<360x256xf32, #tpu.memory_space<vmem>>, vector<8x256xf32>,
    %c16_i32_651 = arith.constant 16 : i32
    %709 = tpu.dynamic_rotate %703 by %c16_i32_651 dim 1 : vector<8x256xf32>, i32 -> vector<8x256xf32>
    %c1_652 = arith.constant 1 : index
    %c0_653 = arith.constant 0 : index
    %710 = vector.load %arg2[%c1_652, %c0_653] : memref<9x256xf32, #tpu.memory_space<vmem>>, vector<1x256xf32>
    %711 = vector.broadcast %710 : vector<1x256xf32> to vector<8x256xf32>
    %712 = arith.mulf %709, %711 : vector<8x256xf32>
    %c72_654 = arith.constant 72 : index
    %c0_655 = arith.constant 0 : index
    %713 = vector.load %arg34[%c72_654, %c0_655] : memref<360x256xf32, #tpu.memory_space<vmem>>, vector<8x256xf32>
    tpu.vector_store %arg34[%c72_654, %c0_655], %712 {strides = array<i32>} : memref<360x256xf32, #tpu.memory_space<vmem>>, vector<8x256xf32>,
    %c15_i32_656 = arith.constant 15 : i32
    %714 = tpu.dynamic_rotate %703 by %c15_i32_656 dim 1 : vector<8x256xf32>, i32 -> vector<8x256xf32>
    %c2_657 = arith.constant 2 : index
    %c0_658 = arith.constant 0 : index
    %715 = vector.load %arg2[%c2_657, %c0_658] : memref<9x256xf32, #tpu.memory_space<vmem>>, vector<1x256xf32>
    %716 = vector.broadcast %715 : vector<1x256xf32> to vector<8x256xf32>
    %717 = arith.mulf %714, %716 : vector<8x256xf32>
    %c112_659 = arith.constant 112 : index
    %c0_660 = arith.constant 0 : index
    %718 = vector.load %arg34[%c112_659, %c0_660] : memref<360x256xf32, #tpu.memory_space<vmem>>, vector<8x256xf32>
    tpu.vector_store %arg34[%c112_659, %c0_660], %717 {strides = array<i32>} : memref<360x256xf32, #tpu.memory_space<vmem>>, vector<8x256xf32>,
    %c1_i32_661 = arith.constant 1 : i32
    %719 = tpu.dynamic_rotate %703 by %c1_i32_661 dim 1 : vector<8x256xf32>, i32 -> vector<8x256xf32>
    %c3_662 = arith.constant 3 : index
    %c0_663 = arith.constant 0 : index
    %720 = vector.load %arg2[%c3_662, %c0_663] : memref<9x256xf32, #tpu.memory_space<vmem>>, vector<1x256xf32>
    %721 = vector.broadcast %720 : vector<1x256xf32> to vector<8x256xf32>
    %722 = arith.mulf %719, %721 : vector<8x256xf32>
    %c152_664 = arith.constant 152 : index
    %c0_665 = arith.constant 0 : index
    %723 = vector.load %arg34[%c152_664, %c0_665] : memref<360x256xf32, #tpu.memory_space<vmem>>, vector<8x256xf32>
    tpu.vector_store %arg34[%c152_664, %c0_665], %722 {strides = array<i32>} : memref<360x256xf32, #tpu.memory_space<vmem>>, vector<8x256xf32>,
    %c192_666 = arith.constant 192 : index
    %c0_667 = arith.constant 0 : index
    %724 = vector.load %arg34[%c192_666, %c0_667] : memref<360x256xf32, #tpu.memory_space<vmem>>, vector<8x256xf32>
    tpu.vector_store %arg34[%c192_666, %c0_667], %703 {strides = array<i32>} : memref<360x256xf32, #tpu.memory_space<vmem>>, vector<8x256xf32>,
    %c255_i32_668 = arith.constant 255 : i32
    %725 = tpu.dynamic_rotate %703 by %c255_i32_668 dim 1 : vector<8x256xf32>, i32 -> vector<8x256xf32>
    %c5_669 = arith.constant 5 : index
    %c0_670 = arith.constant 0 : index
    %726 = vector.load %arg2[%c5_669, %c0_670] : memref<9x256xf32, #tpu.memory_space<vmem>>, vector<1x256xf32>
    %727 = vector.broadcast %726 : vector<1x256xf32> to vector<8x256xf32>
    %728 = arith.mulf %725, %727 : vector<8x256xf32>
    %c232_671 = arith.constant 232 : index
    %c0_672 = arith.constant 0 : index
    %729 = vector.load %arg34[%c232_671, %c0_672] : memref<360x256xf32, #tpu.memory_space<vmem>>, vector<8x256xf32>
    tpu.vector_store %arg34[%c232_671, %c0_672], %728 {strides = array<i32>} : memref<360x256xf32, #tpu.memory_space<vmem>>, vector<8x256xf32>,
    %c241_i32_673 = arith.constant 241 : i32
    %730 = tpu.dynamic_rotate %703 by %c241_i32_673 dim 1 : vector<8x256xf32>, i32 -> vector<8x256xf32>
    %c6_674 = arith.constant 6 : index
    %c0_675 = arith.constant 0 : index
    %731 = vector.load %arg2[%c6_674, %c0_675] : memref<9x256xf32, #tpu.memory_space<vmem>>, vector<1x256xf32>
    %732 = vector.broadcast %731 : vector<1x256xf32> to vector<8x256xf32>
    %733 = arith.mulf %730, %732 : vector<8x256xf32>
    %c272_676 = arith.constant 272 : index
    %c0_677 = arith.constant 0 : index
    %734 = vector.load %arg34[%c272_676, %c0_677] : memref<360x256xf32, #tpu.memory_space<vmem>>, vector<8x256xf32>
    tpu.vector_store %arg34[%c272_676, %c0_677], %733 {strides = array<i32>} : memref<360x256xf32, #tpu.memory_space<vmem>>, vector<8x256xf32>,
    %c240_i32_678 = arith.constant 240 : i32
    %735 = tpu.dynamic_rotate %703 by %c240_i32_678 dim 1 : vector<8x256xf32>, i32 -> vector<8x256xf32>
    %c7_679 = arith.constant 7 : index
    %c0_680 = arith.constant 0 : index
    %736 = vector.load %arg2[%c7_679, %c0_680] : memref<9x256xf32, #tpu.memory_space<vmem>>, vector<1x256xf32>
    %737 = vector.broadcast %736 : vector<1x256xf32> to vector<8x256xf32>
    %738 = arith.mulf %735, %737 : vector<8x256xf32>
    %c312_681 = arith.constant 312 : index
    %c0_682 = arith.constant 0 : index
    %739 = vector.load %arg34[%c312_681, %c0_682] : memref<360x256xf32, #tpu.memory_space<vmem>>, vector<8x256xf32>
    tpu.vector_store %arg34[%c312_681, %c0_682], %738 {strides = array<i32>} : memref<360x256xf32, #tpu.memory_space<vmem>>, vector<8x256xf32>,
    %c239_i32_683 = arith.constant 239 : i32
    %740 = tpu.dynamic_rotate %703 by %c239_i32_683 dim 1 : vector<8x256xf32>, i32 -> vector<8x256xf32>
    %c8_684 = arith.constant 8 : index
    %c0_685 = arith.constant 0 : index
    %741 = vector.load %arg2[%c8_684, %c0_685] : memref<9x256xf32, #tpu.memory_space<vmem>>, vector<1x256xf32>
    %742 = vector.broadcast %741 : vector<1x256xf32> to vector<8x256xf32>
    %743 = arith.mulf %740, %742 : vector<8x256xf32>
    %c352_686 = arith.constant 352 : index
    %c0_687 = arith.constant 0 : index
    %744 = vector.load %arg34[%c352_686, %c0_687] : memref<360x256xf32, #tpu.memory_space<vmem>>, vector<8x256xf32>
    tpu.vector_store %arg34[%c352_686, %c0_687], %743 {strides = array<i32>} : memref<360x256xf32, #tpu.memory_space<vmem>>, vector<8x256xf32>,
    %c0_688 = arith.constant 0 : index
    %c0_689 = arith.constant 0 : index
    %745 = vector.load %arg31[%c0_688, %c0_689] : memref<8x360xf32, #tpu.memory_space<vmem>>, vector<8x360xf32>
    %c0_690 = arith.constant 0 : index
    %c0_691 = arith.constant 0 : index
    %746 = vector.load %arg34[%c0_690, %c0_691] : memref<360x256xf32, #tpu.memory_space<vmem>>, vector<360x256xf32>
    %cst_692 = arith.constant dense<0.000000e+00> : vector<8x256xf32>
    %747 = tpu.matmul %745, %746, %cst_692 {dimension_numbers = #tpu.dot_dimension_numbers<[1], [0], [0], [1], [0, 0, 1, 1], [], []>} : vector<8x360xf32>, vector<360x256xf32>, vector<8x256xf32> -> vector<8x256xf32>
    %c0_693 = arith.constant 0 : index
    %c0_694 = arith.constant 0 : index
    %748 = vector.load %arg32[%c0_693, %c0_694] : memref<8x1xf32, #tpu.memory_space<vmem>>, vector<8x1xf32>
    %749 = vector.broadcast %748 : vector<8x1xf32> to vector<8x256xf32>
    %750 = arith.addf %747, %749 : vector<8x256xf32>
    %cst_695 = arith.constant 2.000000e-01 : f32
    %751 = vector.broadcast %cst_695 : f32 to vector<8x256xf32>
    %752 = arith.mulf %750, %751 : vector<8x256xf32>
    %753 = arith.addf %752, %503 : vector<8x256xf32>
    %cst_696 = arith.constant 2.000000e-01 : f32
    %754 = vector.broadcast %cst_696 : f32 to vector<8x256xf32>
    %755 = arith.mulf %753, %754 : vector<8x256xf32>
    %756 = arith.addf %755, %3 : vector<8x256xf32>
    %c0_697 = arith.constant 0 : index
    %c0_698 = arith.constant 0 : index
    %c0_699 = arith.constant 0 : index
    %757 = vector.load %arg33[%c0_697, %c0_698, %c0_699] : memref<1x8x256xf32, #tpu.memory_space<vmem>>, vector<1x8x256xf32>
    %758 = vector.shape_cast %757 : vector<1x8x256xf32> to vector<8x256xf32>
    %759 = vector.shape_cast %756 : vector<8x256xf32> to vector<1x8x256xf32>
    tpu.vector_store %arg33[%c0_697, %c0_698, %c0_699], %759 {strides = array<i32>} : memref<1x8x256xf32, #tpu.memory_space<vmem>>, vector<1x8x256xf32>,
    return
  }
  func.func @transform_0(%arg0: i32) -> (i32, i32, i32) {
    %c0_i32 = arith.constant 0 : i32
    %c0_i32_0 = arith.constant 0 : i32
    %c0_i32_1 = arith.constant 0 : i32
    return %arg0, %c0_i32, %c0_i32_0 : i32, i32, i32
  }
  func.func @transform_1(%arg0: i32) -> (i32, i32) {
    %c0_i32 = arith.constant 0 : i32
    %c0_i32_0 = arith.constant 0 : i32
    %c0_i32_1 = arith.constant 0 : i32
    return %c0_i32, %c0_i32_0 : i32, i32
  }
  func.func @transform_2(%arg0: i32) -> (i32, i32) {
    %c0_i32 = arith.constant 0 : i32
    %c0_i32_0 = arith.constant 0 : i32
    %c0_i32_1 = arith.constant 0 : i32
    return %c0_i32, %c0_i32_0 : i32, i32
  }
  func.func @transform_3(%arg0: i32) -> (i32, i32) {
    %c0_i32 = arith.constant 0 : i32
    %c0_i32_0 = arith.constant 0 : i32
    %c0_i32_1 = arith.constant 0 : i32
    return %c0_i32, %c0_i32_0 : i32, i32
  }
  func.func @transform_4(%arg0: i32) -> (i32, i32) {
    %c0_i32 = arith.constant 0 : i32
    %c0_i32_0 = arith.constant 0 : i32
    %c0_i32_1 = arith.constant 0 : i32
    return %c0_i32, %c0_i32_0 : i32, i32
  }
  func.func @transform_5(%arg0: i32) -> (i32, i32) {
    %c0_i32 = arith.constant 0 : i32
    %c0_i32_0 = arith.constant 0 : i32
    %c0_i32_1 = arith.constant 0 : i32
    return %c0_i32, %c0_i32_0 : i32, i32
  }
  func.func @transform_6(%arg0: i32) -> (i32, i32) {
    %c0_i32 = arith.constant 0 : i32
    %c0_i32_0 = arith.constant 0 : i32
    %c0_i32_1 = arith.constant 0 : i32
    return %c0_i32, %c0_i32_0 : i32, i32
  }
  func.func @transform_7(%arg0: i32) -> (i32, i32) {
    %c0_i32 = arith.constant 0 : i32
    %c0_i32_0 = arith.constant 0 : i32
    %c0_i32_1 = arith.constant 0 : i32
    return %c0_i32, %c0_i32_0 : i32, i32
  }
  func.func @transform_8(%arg0: i32) -> (i32, i32) {
    %c0_i32 = arith.constant 0 : i32
    %c0_i32_0 = arith.constant 0 : i32
    %c0_i32_1 = arith.constant 0 : i32
    return %c0_i32, %c0_i32_0 : i32, i32
  }
  func.func @transform_9(%arg0: i32) -> (i32, i32) {
    %c0_i32 = arith.constant 0 : i32
    %c0_i32_0 = arith.constant 0 : i32
    %c0_i32_1 = arith.constant 0 : i32
    return %c0_i32, %c0_i32_0 : i32, i32
  }
  func.func @transform_10(%arg0: i32) -> (i32, i32) {
    %c0_i32 = arith.constant 0 : i32
    %c0_i32_0 = arith.constant 0 : i32
    %c0_i32_1 = arith.constant 0 : i32
    return %c0_i32, %c0_i32_0 : i32, i32
  }
  func.func @transform_11(%arg0: i32) -> (i32, i32) {
    %c0_i32 = arith.constant 0 : i32
    %c0_i32_0 = arith.constant 0 : i32
    %c0_i32_1 = arith.constant 0 : i32
    return %c0_i32, %c0_i32_0 : i32, i32
  }
  func.func @transform_12(%arg0: i32) -> (i32, i32) {
    %c0_i32 = arith.constant 0 : i32
    %c0_i32_0 = arith.constant 0 : i32
    %c0_i32_1 = arith.constant 0 : i32
    return %c0_i32, %c0_i32_0 : i32, i32
  }
  func.func @transform_13(%arg0: i32) -> (i32, i32) {
    %c0_i32 = arith.constant 0 : i32
    %c0_i32_0 = arith.constant 0 : i32
    %c0_i32_1 = arith.constant 0 : i32
    return %c0_i32, %c0_i32_0 : i32, i32
  }
  func.func @transform_14(%arg0: i32) -> (i32, i32) {
    %c0_i32 = arith.constant 0 : i32
    %c0_i32_0 = arith.constant 0 : i32
    %c0_i32_1 = arith.constant 0 : i32
    return %c0_i32, %c0_i32_0 : i32, i32
  }
  func.func @transform_15(%arg0: i32) -> (i32, i32) {
    %c0_i32 = arith.constant 0 : i32
    %c0_i32_0 = arith.constant 0 : i32
    %c0_i32_1 = arith.constant 0 : i32
    return %c0_i32, %c0_i32_0 : i32, i32
  }
  func.func @transform_16(%arg0: i32) -> (i32, i32) {
    %c0_i32 = arith.constant 0 : i32
    %c0_i32_0 = arith.constant 0 : i32
    %c0_i32_1 = arith.constant 0 : i32
    return %c0_i32, %c0_i32_0 : i32, i32
  }
  func.func @transform_17(%arg0: i32) -> (i32, i32) {
    %c0_i32 = arith.constant 0 : i32
    %c0_i32_0 = arith.constant 0 : i32
    %c0_i32_1 = arith.constant 0 : i32
    return %c0_i32, %c0_i32_0 : i32, i32
  }
  func.func @transform_18(%arg0: i32) -> (i32, i32) {
    %c0_i32 = arith.constant 0 : i32
    %c0_i32_0 = arith.constant 0 : i32
    %c0_i32_1 = arith.constant 0 : i32
    return %c0_i32, %c0_i32_0 : i32, i32
  }
  func.func @transform_19(%arg0: i32) -> (i32, i32) {
    %c0_i32 = arith.constant 0 : i32
    %c0_i32_0 = arith.constant 0 : i32
    %c0_i32_1 = arith.constant 0 : i32
    return %c0_i32, %c0_i32_0 : i32, i32
  }
  func.func @transform_20(%arg0: i32) -> (i32, i32) {
    %c0_i32 = arith.constant 0 : i32
    %c0_i32_0 = arith.constant 0 : i32
    %c0_i32_1 = arith.constant 0 : i32
    return %c0_i32, %c0_i32_0 : i32, i32
  }
  func.func @transform_21(%arg0: i32) -> (i32, i32) {
    %c0_i32 = arith.constant 0 : i32
    %c0_i32_0 = arith.constant 0 : i32
    %c0_i32_1 = arith.constant 0 : i32
    return %c0_i32, %c0_i32_0 : i32, i32
  }
  func.func @transform_22(%arg0: i32) -> (i32, i32) {
    %c0_i32 = arith.constant 0 : i32
    %c0_i32_0 = arith.constant 0 : i32
    %c0_i32_1 = arith.constant 0 : i32
    return %c0_i32, %c0_i32_0 : i32, i32
  }
  func.func @transform_23(%arg0: i32) -> (i32, i32) {
    %c0_i32 = arith.constant 0 : i32
    %c0_i32_0 = arith.constant 0 : i32
    %c0_i32_1 = arith.constant 0 : i32
    return %c0_i32, %c0_i32_0 : i32, i32
  }
  func.func @transform_24(%arg0: i32) -> (i32, i32) {
    %c0_i32 = arith.constant 0 : i32
    %c0_i32_0 = arith.constant 0 : i32
    %c0_i32_1 = arith.constant 0 : i32
    return %c0_i32, %c0_i32_0 : i32, i32
  }
  func.func @transform_25(%arg0: i32) -> (i32, i32) {
    %c0_i32 = arith.constant 0 : i32
    %c0_i32_0 = arith.constant 0 : i32
    %c0_i32_1 = arith.constant 0 : i32
    return %c0_i32, %c0_i32_0 : i32, i32
  }
  func.func @transform_26(%arg0: i32) -> (i32, i32) {
    %c0_i32 = arith.constant 0 : i32
    %c0_i32_0 = arith.constant 0 : i32
    %c0_i32_1 = arith.constant 0 : i32
    return %c0_i32, %c0_i32_0 : i32, i32
  }
  func.func @transform_27(%arg0: i32) -> (i32, i32) {
    %c0_i32 = arith.constant 0 : i32
    %c0_i32_0 = arith.constant 0 : i32
    %c0_i32_1 = arith.constant 0 : i32
    return %c0_i32, %c0_i32_0 : i32, i32
  }
  func.func @transform_28(%arg0: i32) -> (i32, i32) {
    %c0_i32 = arith.constant 0 : i32
    %c0_i32_0 = arith.constant 0 : i32
    %c0_i32_1 = arith.constant 0 : i32
    return %c0_i32, %c0_i32_0 : i32, i32
  }
  func.func @transform_29(%arg0: i32) -> (i32, i32) {
    %c0_i32 = arith.constant 0 : i32
    %c0_i32_0 = arith.constant 0 : i32
    %c0_i32_1 = arith.constant 0 : i32
    return %c0_i32, %c0_i32_0 : i32, i32
  }
  func.func @transform_30(%arg0: i32) -> (i32, i32) {
    %c0_i32 = arith.constant 0 : i32
    %c0_i32_0 = arith.constant 0 : i32
    %c0_i32_1 = arith.constant 0 : i32
    return %c0_i32, %c0_i32_0 : i32, i32
  }
  func.func @transform_31(%arg0: i32) -> (i32, i32) {
    %c0_i32 = arith.constant 0 : i32
    %c0_i32_0 = arith.constant 0 : i32
    %c0_i32_1 = arith.constant 0 : i32
    return %c0_i32, %c0_i32_0 : i32, i32
  }
  func.func @transform_32(%arg0: i32) -> (i32, i32, i32) {
    %c0_i32 = arith.constant 0 : i32
    %c0_i32_0 = arith.constant 0 : i32
    %c0_i32_1 = arith.constant 0 : i32
    return %arg0, %c0_i32, %c0_i32_0 : i32, i32, i32
  }
}

</mosaic_0001>

<llo_original>
// kernel: rrdb_forward.1
$region0: #{rrdb_forward.1}
  #allocation0 [shape = 'u32[]', space=smem, size = 0x4, offset = 0x4, fixed_abs, tag = 'smem constant byte address 0x4 - core index']
  #allocation1 [shape = 'u32[72,128]{1,0:T(1,128)}', space=vmem, size = 0x9000, scoped, tag = 'internal scratch']
  #allocation2 [shape = 'f32[360,256]{1,0:T(8,128)}', space=vmem, size = 0x5a000, scoped, tag = 'scratch operand']
  %s0 = inlined_call_operand.smem [shape: u32[33], index: -1, kind: input, shape index: {}]
  %s1 = sld [smem:[%s0]]
  %s2 = scalar_lea.smem %s0, 1
  %s3 = sld [smem:[%s2]]
  %s4 = scalar_lea.smem %s0, 2
  %s5 = sld [smem:[%s4]]
  %s6 = scalar_lea.smem %s0, 3
  %s7 = sld [smem:[%s6]]
  %s8 = scalar_lea.smem %s0, 4
  %s9 = sld [smem:[%s8]]
  %s10 = scalar_lea.smem %s0, 5
  %s11 = sld [smem:[%s10]]
  %s12 = scalar_lea.smem %s0, 6
  %s13 = sld [smem:[%s12]]
  %s14 = scalar_lea.smem %s0, 7
  %s15 = sld [smem:[%s14]]
  %s16 = scalar_lea.smem %s0, 8
  %s17 = sld [smem:[%s16]]
  %s18 = scalar_lea.smem %s0, 9
  %s19 = sld [smem:[%s18]]
  %s20 = scalar_lea.smem %s0, 10
  %s21 = sld [smem:[%s20]]
  %s22 = scalar_lea.smem %s0, 11
  %s23 = sld [smem:[%s22]]
  %s24 = scalar_lea.smem %s0, 12
  %s25 = sld [smem:[%s24]]
  %s26 = scalar_lea.smem %s0, 13
  %s27 = sld [smem:[%s26]]
  %s28 = scalar_lea.smem %s0, 14
  %s29 = sld [smem:[%s28]]
  %s30 = scalar_lea.smem %s0, 15
  %s31 = sld [smem:[%s30]]
  %s32 = scalar_lea.smem %s0, 16
  %s33 = sld [smem:[%s32]]
  %s34 = scalar_lea.smem %s0, 17
  %s35 = sld [smem:[%s34]]
  %s36 = scalar_lea.smem %s0, 18
  %s37 = sld [smem:[%s36]]
  %s38 = scalar_lea.smem %s0, 19
  %s39 = sld [smem:[%s38]]
  %s40 = scalar_lea.smem %s0, 20
  %s41 = sld [smem:[%s40]]
  %s42 = scalar_lea.smem %s0, 21
  %s43 = sld [smem:[%s42]]
  %s44 = scalar_lea.smem %s0, 22
  %s45 = sld [smem:[%s44]]
  %s46 = scalar_lea.smem %s0, 23
  %s47 = sld [smem:[%s46]]
  %s48 = scalar_lea.smem %s0, 24
  %s49 = sld [smem:[%s48]]
  %s50 = scalar_lea.smem %s0, 25
  %s51 = sld [smem:[%s50]]
  %s52 = scalar_lea.smem %s0, 26
  %s53 = sld [smem:[%s52]]
  %s54 = scalar_lea.smem %s0, 27
  %s55 = sld [smem:[%s54]]
  %s56 = scalar_lea.smem %s0, 28
  %s57 = sld [smem:[%s56]]
  %s58 = scalar_lea.smem %s0, 29
  %s59 = sld [smem:[%s58]]
  %s60 = scalar_lea.smem %s0, 30
  %s61 = sld [smem:[%s60]]
  %s62 = scalar_lea.smem %s0, 31
  %s63 = sld [smem:[%s62]]
  %s64 = scalar_lea.smem %s0, 32
  %s65 = sld [smem:[%s64]]
  %s66 = sld [smem:[#allocation0]]
  $region161: #{rrdb_forward.1} parent=0
    _
  %s68 = ssub.s32 1, %s66
  %s69 = scalar_select 0, %s68, %s66
  loop: start=0, step=1, limit=4
  $region2: #{rrdb_forward.1} parent=0 // loop_pre_header
    _
  $region3: #{rrdb_forward.1} parent=0 // loop_header
    %s71 = sphi 0, %s75
    %p72 = scmp.ge.s32.totalorder %s71, 4
    %s81 = sphi 0, %s83
    %s84 = sphi 0, %s81
    %s85 = sphi 0, %s84
    %s101 = sphi 0, %s85
    %s105 = sphi 0, %s105
    %s107 = sphi 0, %s105
    %s108 = sphi 0, %s107
    %s122 = sphi 0, %s108
    %s126 = sphi 0, %s126
    %s128 = sphi 0, %s126
    %s129 = sphi 0, %s128
    %s143 = sphi 0, %s129
    %s147 = sphi 0, %s147
    %s149 = sphi 0, %s147
    %s150 = sphi 0, %s149
    %s164 = sphi 0, %s150
    %s168 = sphi 0, %s168
    %s170 = sphi 0, %s168
    %s171 = sphi 0, %s170
    %s185 = sphi 0, %s171
    %s189 = sphi 0, %s189
    %s191 = sphi 0, %s189
    %s192 = sphi 0, %s191
    %s206 = sphi 0, %s192
    %s210 = sphi 0, %s210
    %s212 = sphi 0, %s210
    %s213 = sphi 0, %s212
    %s227 = sphi 0, %s213
    %s231 = sphi 0, %s231
    %s233 = sphi 0, %s231
    %s234 = sphi 0, %s233
    %s248 = sphi 0, %s234
    %s252 = sphi 0, %s252
    %s254 = sphi 0, %s252
    %s255 = sphi 0, %s254
    %s269 = sphi 0, %s255
    %s273 = sphi 0, %s273
    %s275 = sphi 0, %s273
    %s276 = sphi 0, %s275
    %s290 = sphi 0, %s276
    %s294 = sphi 0, %s294
    %s296 = sphi 0, %s294
    %s297 = sphi 0, %s296
    %s311 = sphi 0, %s297
    %s315 = sphi 0, %s315
    %s317 = sphi 0, %s315
    %s318 = sphi 0, %s317
    %s332 = sphi 0, %s318
    %s336 = sphi 0, %s336
    %s338 = sphi 0, %s336
    %s339 = sphi 0, %s338
    %s353 = sphi 0, %s339
    %s357 = sphi 0, %s357
    %s359 = sphi 0, %s357
    %s360 = sphi 0, %s359
    %s374 = sphi 0, %s360
    %s378 = sphi 0, %s378
    %s380 = sphi 0, %s378
    %s381 = sphi 0, %s380
    %s395 = sphi 0, %s381
    %s399 = sphi 0, %s399
    %s401 = sphi 0, %s399
    %s402 = sphi 0, %s401
    %s416 = sphi 0, %s402
    %s420 = sphi 0, %s420
    %s422 = sphi 0, %s420
    %s423 = sphi 0, %s422
    %s437 = sphi 0, %s423
    %s441 = sphi 0, %s441
    %s443 = sphi 0, %s441
    %s444 = sphi 0, %s443
    %s458 = sphi 0, %s444
    %s462 = sphi 0, %s462
    %s464 = sphi 0, %s462
    %s465 = sphi 0, %s464
    %s479 = sphi 0, %s465
    %s483 = sphi 0, %s483
    %s485 = sphi 0, %s483
    %s486 = sphi 0, %s485
    %s500 = sphi 0, %s486
    %s504 = sphi 0, %s504
    %s506 = sphi 0, %s504
    %s507 = sphi 0, %s506
    %s521 = sphi 0, %s507
    %s525 = sphi 0, %s525
    %s527 = sphi 0, %s525
    %s528 = sphi 0, %s527
    %s542 = sphi 0, %s528
    %s546 = sphi 0, %s546
    %s548 = sphi 0, %s546
    %s549 = sphi 0, %s548
    %s563 = sphi 0, %s549
    %s567 = sphi 0, %s567
    %s569 = sphi 0, %s567
    %s570 = sphi 0, %s569
    %s584 = sphi 0, %s570
    %s588 = sphi 0, %s588
    %s590 = sphi 0, %s588
    %s591 = sphi 0, %s590
    %s605 = sphi 0, %s591
    %s609 = sphi 0, %s609
    %s611 = sphi 0, %s609
    %s612 = sphi 0, %s611
    %s626 = sphi 0, %s612
    %s630 = sphi 0, %s630
    %s632 = sphi 0, %s630
    %s633 = sphi 0, %s632
    %s647 = sphi 0, %s633
    %s651 = sphi 0, %s651
    %s653 = sphi 0, %s651
    %s654 = sphi 0, %s653
    %s668 = sphi 0, %s654
    %s672 = sphi 0, %s672
    %s674 = sphi 0, %s672
    %s675 = sphi 0, %s674
    %s689 = sphi 0, %s675
    %s693 = sphi 0, %s693
    %s695 = sphi 0, %s693
    %s696 = sphi 0, %s695
    %s710 = sphi 0, %s696
    %s714 = sphi 0, %s714
    %s716 = sphi 0, %s714
    %s717 = sphi 0, %s716
    %s731 = sphi 0, %s717
    %s735 = sphi 0, %s735
    %s737 = sphi 0, %s735
    %s738 = sphi 0, %s737
    %s752 = sphi 0, %s738
    %s758 = sphi 0, %s760
    %s761 = sphi 0, %s758
    %s762 = sphi 0, %s761
    %s778 = sphi 0, %s762
  $region4: #{rrdb_forward.1} parent=0 // loop_header_branch
    %74 = sbr.rel (%p72) target = $region8
  $region5: #{rrdb_forward.1} parent=0 // loop_body
    %s76 = ssub.s32 %s71, 1
    %s77 = ssub.s32 %s71, 2
    %s78 = sadd.s32 %s71, 1
    %s79 = ssub.s32 %s71, %s78
    %p80 = scmp.eq.s32.totalorder %s79, 0
    %s82 = sadd.s32 %s81, 1
    %s83 = scalar_select %p80, %s81, %s82
    %p86 = pneg %p80
    %p87 = scmp.eq.s32.totalorder %s71, 1
    %p88 = por %p86, %p87
    %p89 = scmp.ne.s32.totalorder %s81, %s84
    %p90 = scmp.eq.s32.totalorder %s71, 0
    %p91 = por %p89, %p90
    %p92 = scmp.ne.s32.totalorder %s81, %s84
    %p93 = scmp.eq.s32.totalorder %s76, 1
    %p94 = por %p92, %p93
    %p95 = scmp.ne.s32.totalorder %s84, %s85
    %p96 = scmp.eq.s32.totalorder %s76, 0
    %p97 = por %p95, %p96
    %p98 = scmp.ne.s32.totalorder %s84, %s85
    %p99 = scmp.eq.s32.totalorder %s77, 1
    %p100 = por %p98, %p99
    %p102 = scmp.ne.s32.totalorder %s85, %s101
    %p103 = scmp.eq.s32.totalorder %s77, 0
    %p104 = por %p102, %p103
    %s106 = sadd.s32 %s105, 1
    %p109 = scmp.eq.s32.totalorder %s71, 1
    %p110 = scmp.ne.s32.totalorder %s105, %s107
    %p111 = scmp.eq.s32.totalorder %s71, 0
    %p112 = por %p110, %p111
    %p113 = scmp.ne.s32.totalorder %s105, %s107
    %p114 = scmp.eq.s32.totalorder %s76, 1
    %p115 = por %p113, %p114
    %p116 = scmp.ne.s32.totalorder %s107, %s108
    %p117 = scmp.eq.s32.totalorder %s76, 0
    %p118 = por %p116, %p117
    %p119 = scmp.ne.s32.totalorder %s107, %s108
    %p120 = scmp.eq.s32.totalorder %s77, 1
    %p121 = por %p119, %p120
    %p123 = scmp.ne.s32.totalorder %s108, %s122
    %p124 = scmp.eq.s32.totalorder %s77, 0
    %p125 = por %p123, %p124
    %s127 = sadd.s32 %s126, 1
    %p130 = scmp.eq.s32.totalorder %s71, 1
    %p131 = scmp.ne.s32.totalorder %s126, %s128
    %p132 = scmp.eq.s32.totalorder %s71, 0
    %p133 = por %p131, %p132
    %p134 = scmp.ne.s32.totalorder %s126, %s128
    %p135 = scmp.eq.s32.totalorder %s76, 1
    %p136 = por %p134, %p135
    %p137 = scmp.ne.s32.totalorder %s128, %s129
    %p138 = scmp.eq.s32.totalorder %s76, 0
    %p139 = por %p137, %p138
    %p140 = scmp.ne.s32.totalorder %s128, %s129
    %p141 = scmp.eq.s32.totalorder %s77, 1
    %p142 = por %p140, %p141
    %p144 = scmp.ne.s32.totalorder %s129, %s143
    %p145 = scmp.eq.s32.totalorder %s77, 0
    %p146 = por %p144, %p145
    %s148 = sadd.s32 %s147, 1
    %p151 = scmp.eq.s32.totalorder %s71, 1
    %p152 = scmp.ne.s32.totalorder %s147, %s149
    %p153 = scmp.eq.s32.totalorder %s71, 0
    %p154 = por %p152, %p153
    %p155 = scmp.ne.s32.totalorder %s147, %s149
    %p156 = scmp.eq.s32.totalorder %s76, 1
    %p157 = por %p155, %p156
    %p158 = scmp.ne.s32.totalorder %s149, %s150
    %p159 = scmp.eq.s32.totalorder %s76, 0
    %p160 = por %p158, %p159
    %p161 = scmp.ne.s32.totalorder %s149, %s150
    %p162 = scmp.eq.s32.totalorder %s77, 1
    %p163 = por %p161, %p162
    %p165 = scmp.ne.s32.totalorder %s150, %s164
    %p166 = scmp.eq.s32.totalorder %s77, 0
    %p167 = por %p165, %p166
    %s169 = sadd.s32 %s168, 1
    %p172 = scmp.eq.s32.totalorder %s71, 1
    %p173 = scmp.ne.s32.totalorder %s168, %s170
    %p174 = scmp.eq.s32.totalorder %s71, 0
    %p175 = por %p173, %p174
    %p176 = scmp.ne.s32.totalorder %s168, %s170
    %p177 = scmp.eq.s32.totalorder %s76, 1
    %p178 = por %p176, %p177
    %p179 = scmp.ne.s32.totalorder %s170, %s171
    %p180 = scmp.eq.s32.totalorder %s76, 0
    %p181 = por %p179, %p180
    %p182 = scmp.ne.s32.totalorder %s170, %s171
    %p183 = scmp.eq.s32.totalorder %s77, 1
    %p184 = por %p182, %p183
    %p186 = scmp.ne.s32.totalorder %s171, %s185
    %p187 = scmp.eq.s32.totalorder %s77, 0
    %p188 = por %p186, %p187
    %s190 = sadd.s32 %s189, 1
    %p193 = scmp.eq.s32.totalorder %s71, 1
    %p194 = scmp.ne.s32.totalorder %s189, %s191
    %p195 = scmp.eq.s32.totalorder %s71, 0
    %p196 = por %p194, %p195
    %p197 = scmp.ne.s32.totalorder %s189, %s191
    %p198 = scmp.eq.s32.totalorder %s76, 1
    %p199 = por %p197, %p198
    %p200 = scmp.ne.s32.totalorder %s191, %s192
    %p201 = scmp.eq.s32.totalorder %s76, 0
    %p202 = por %p200, %p201
    %p203 = scmp.ne.s32.totalorder %s191, %s192
    %p204 = scmp.eq.s32.totalorder %s77, 1
    %p205 = por %p203, %p204
    %p207 = scmp.ne.s32.totalorder %s192, %s206
    %p208 = scmp.eq.s32.totalorder %s77, 0
    %p209 = por %p207, %p208
    %s211 = sadd.s32 %s210, 1
    %p214 = scmp.eq.s32.totalorder %s71, 1
    %p215 = scmp.ne.s32.totalorder %s210, %s212
    %p216 = scmp.eq.s32.totalorder %s71, 0
    %p217 = por %p215, %p216
    %p218 = scmp.ne.s32.totalorder %s210, %s212
    %p219 = scmp.eq.s32.totalorder %s76, 1
    %p220 = por %p218, %p219
    %p221 = scmp.ne.s32.totalorder %s212, %s213
    %p222 = scmp.eq.s32.totalorder %s76, 0
    %p223 = por %p221, %p222
    %p224 = scmp.ne.s32.totalorder %s212, %s213
    %p225 = scmp.eq.s32.totalorder %s77, 1
    %p226 = por %p224, %p225
    %p228 = scmp.ne.s32.totalorder %s213, %s227
    %p229 = scmp.eq.s32.totalorder %s77, 0
    %p230 = por %p228, %p229
    %s232 = sadd.s32 %s231, 1
    %p235 = scmp.eq.s32.totalorder %s71, 1
    %p236 = scmp.ne.s32.totalorder %s231, %s233
    %p237 = scmp.eq.s32.totalorder %s71, 0
    %p238 = por %p236, %p237
    %p239 = scmp.ne.s32.totalorder %s231, %s233
    %p240 = scmp.eq.s32.totalorder %s76, 1
    %p241 = por %p239, %p240
    %p242 = scmp.ne.s32.totalorder %s233, %s234
    %p243 = scmp.eq.s32.totalorder %s76, 0
    %p244 = por %p242, %p243
    %p245 = scmp.ne.s32.totalorder %s233, %s234
    %p246 = scmp.eq.s32.totalorder %s77, 1
    %p247 = por %p245, %p246
    %p249 = scmp.ne.s32.totalorder %s234, %s248
    %p250 = scmp.eq.s32.totalorder %s77, 0
    %p251 = por %p249, %p250
    %s253 = sadd.s32 %s252, 1
    %p256 = scmp.eq.s32.totalorder %s71, 1
    %p257 = scmp.ne.s32.totalorder %s252, %s254
    %p258 = scmp.eq.s32.totalorder %s71, 0
    %p259 = por %p257, %p258
    %p260 = scmp.ne.s32.totalorder %s252, %s254
    %p261 = scmp.eq.s32.totalorder %s76, 1
    %p262 = por %p260, %p261
    %p263 = scmp.ne.s32.totalorder %s254, %s255
    %p264 = scmp.eq.s32.totalorder %s76, 0
    %p265 = por %p263, %p264
    %p266 = scmp.ne.s32.totalorder %s254, %s255
    %p267 = scmp.eq.s32.totalorder %s77, 1
    %p268 = por %p266, %p267
    %p270 = scmp.ne.s32.totalorder %s255, %s269
    %p271 = scmp.eq.s32.totalorder %s77, 0
    %p272 = por %p270, %p271
    %s274 = sadd.s32 %s273, 1
    %p277 = scmp.eq.s32.totalorder %s71, 1
    %p278 = scmp.ne.s32.totalorder %s273, %s275
    %p279 = scmp.eq.s32.totalorder %s71, 0
    %p280 = por %p278, %p279
    %p281 = scmp.ne.s32.totalorder %s273, %s275
    %p282 = scmp.eq.s32.totalorder %s76, 1
    %p283 = por %p281, %p282
    %p284 = scmp.ne.s32.totalorder %s275, %s276
    %p285 = scmp.eq.s32.totalorder %s76, 0
    %p286 = por %p284, %p285
    %p287 = scmp.ne.s32.totalorder %s275, %s276
    %p288 = scmp.eq.s32.totalorder %s77, 1
    %p289 = por %p287, %p288
    %p291 = scmp.ne.s32.totalorder %s276, %s290
    %p292 = scmp.eq.s32.totalorder %s77, 0
    %p293 = por %p291, %p292
    %s295 = sadd.s32 %s294, 1
    %p298 = scmp.eq.s32.totalorder %s71, 1
    %p299 = scmp.ne.s32.totalorder %s294, %s296
    %p300 = scmp.eq.s32.totalorder %s71, 0
    %p301 = por %p299, %p300
    %p302 = scmp.ne.s32.totalorder %s294, %s296
    %p303 = scmp.eq.s32.totalorder %s76, 1
    %p304 = por %p302, %p303
    %p305 = scmp.ne.s32.totalorder %s296, %s297
    %p306 = scmp.eq.s32.totalorder %s76, 0
    %p307 = por %p305, %p306
    %p308 = scmp.ne.s32.totalorder %s296, %s297
    %p309 = scmp.eq.s32.totalorder %s77, 1
    %p310 = por %p308, %p309
    %p312 = scmp.ne.s32.totalorder %s297, %s311
    %p313 = scmp.eq.s32.totalorder %s77, 0
    %p314 = por %p312, %p313
    %s316 = sadd.s32 %s315, 1
    %p319 = scmp.eq.s32.totalorder %s71, 1
    %p320 = scmp.ne.s32.totalorder %s315, %s317
    %p321 = scmp.eq.s32.totalorder %s71, 0
    %p322 = por %p320, %p321
    %p323 = scmp.ne.s32.totalorder %s315, %s317
    %p324 = scmp.eq.s32.totalorder %s76, 1
    %p325 = por %p323, %p324
    %p326 = scmp.ne.s32.totalorder %s317, %s318
    %p327 = scmp.eq.s32.totalorder %s76, 0
    %p328 = por %p326, %p327
    %p329 = scmp.ne.s32.totalorder %s317, %s318
    %p330 = scmp.eq.s32.totalorder %s77, 1
    %p331 = por %p329, %p330
    %p333 = scmp.ne.s32.totalorder %s318, %s332
    %p334 = scmp.eq.s32.totalorder %s77, 0
    %p335 = por %p333, %p334
    %s337 = sadd.s32 %s336, 1
    %p340 = scmp.eq.s32.totalorder %s71, 1
    %p341 = scmp.ne.s32.totalorder %s336, %s338
    %p342 = scmp.eq.s32.totalorder %s71, 0
    %p343 = por %p341, %p342
    %p344 = scmp.ne.s32.totalorder %s336, %s338
    %p345 = scmp.eq.s32.totalorder %s76, 1
    %p346 = por %p344, %p345
    %p347 = scmp.ne.s32.totalorder %s338, %s339
    %p348 = scmp.eq.s32.totalorder %s76, 0
    %p349 = por %p347, %p348
    %p350 = scmp.ne.s32.totalorder %s338, %s339
    %p351 = scmp.eq.s32.totalorder %s77, 1
    %p352 = por %p350, %p351
    %p354 = scmp.ne.s32.totalorder %s339, %s353
    %p355 = scmp.eq.s32.totalorder %s77, 0
    %p356 = por %p354, %p355
    %s358 = sadd.s32 %s357, 1
    %p361 = scmp.eq.s32.totalorder %s71, 1
    %p362 = scmp.ne.s32.totalorder %s357, %s359
    %p363 = scmp.eq.s32.totalorder %s71, 0
    %p364 = por %p362, %p363
    %p365 = scmp.ne.s32.totalorder %s357, %s359
    %p366 = scmp.eq.s32.totalorder %s76, 1
    %p367 = por %p365, %p366
    %p368 = scmp.ne.s32.totalorder %s359, %s360
    %p369 = scmp.eq.s32.totalorder %s76, 0
    %p370 = por %p368, %p369
    %p371 = scmp.ne.s32.totalorder %s359, %s360
    %p372 = scmp.eq.s32.totalorder %s77, 1
    %p373 = por %p371, %p372
    %p375 = scmp.ne.s32.totalorder %s360, %s374
    %p376 = scmp.eq.s32.totalorder %s77, 0
    %p377 = por %p375, %p376
    %s379 = sadd.s32 %s378, 1
    %p382 = scmp.eq.s32.totalorder %s71, 1
    %p383 = scmp.ne.s32.totalorder %s378, %s380
    %p384 = scmp.eq.s32.totalorder %s71, 0
    %p385 = por %p383, %p384
    %p386 = scmp.ne.s32.totalorder %s378, %s380
    %p387 = scmp.eq.s32.totalorder %s76, 1
    %p388 = por %p386, %p387
    %p389 = scmp.ne.s32.totalorder %s380, %s381
    %p390 = scmp.eq.s32.totalorder %s76, 0
    %p391 = por %p389, %p390
    %p392 = scmp.ne.s32.totalorder %s380, %s381
    %p393 = scmp.eq.s32.totalorder %s77, 1
    %p394 = por %p392, %p393
    %p396 = scmp.ne.s32.totalorder %s381, %s395
    %p397 = scmp.eq.s32.totalorder %s77, 0
    %p398 = por %p396, %p397
    %s400 = sadd.s32 %s399, 1
    %p403 = scmp.eq.s32.totalorder %s71, 1
    %p404 = scmp.ne.s32.totalorder %s399, %s401
    %p405 = scmp.eq.s32.totalorder %s71, 0
    %p406 = por %p404, %p405
    %p407 = scmp.ne.s32.totalorder %s399, %s401
    %p408 = scmp.eq.s32.totalorder %s76, 1
    %p409 = por %p407, %p408
    %p410 = scmp.ne.s32.totalorder %s401, %s402
    %p411 = scmp.eq.s32.totalorder %s76, 0
    %p412 = por %p410, %p411
    %p413 = scmp.ne.s32.totalorder %s401, %s402
    %p414 = scmp.eq.s32.totalorder %s77, 1
    %p415 = por %p413, %p414
    %p417 = scmp.ne.s32.totalorder %s402, %s416
    %p418 = scmp.eq.s32.totalorder %s77, 0
    %p419 = por %p417, %p418
    %s421 = sadd.s32 %s420, 1
    %p424 = scmp.eq.s32.totalorder %s71, 1
    %p425 = scmp.ne.s32.totalorder %s420, %s422
    %p426 = scmp.eq.s32.totalorder %s71, 0
    %p427 = por %p425, %p426
    %p428 = scmp.ne.s32.totalorder %s420, %s422
    %p429 = scmp.eq.s32.totalorder %s76, 1
    %p430 = por %p428, %p429
    %p431 = scmp.ne.s32.totalorder %s422, %s423
    %p432 = scmp.eq.s32.totalorder %s76, 0
    %p433 = por %p431, %p432
    %p434 = scmp.ne.s32.totalorder %s422, %s423
    %p435 = scmp.eq.s32.totalorder %s77, 1
    %p436 = por %p434, %p435
    %p438 = scmp.ne.s32.totalorder %s423, %s437
    %p439 = scmp.eq.s32.totalorder %s77, 0
    %p440 = por %p438, %p439
    %s442 = sadd.s32 %s441, 1
    %p445 = scmp.eq.s32.totalorder %s71, 1
    %p446 = scmp.ne.s32.totalorder %s441, %s443
    %p447 = scmp.eq.s32.totalorder %s71, 0
    %p448 = por %p446, %p447
    %p449 = scmp.ne.s32.totalorder %s441, %s443
    %p450 = scmp.eq.s32.totalorder %s76, 1
    %p451 = por %p449, %p450
    %p452 = scmp.ne.s32.totalorder %s443, %s444
    %p453 = scmp.eq.s32.totalorder %s76, 0
    %p454 = por %p452, %p453
    %p455 = scmp.ne.s32.totalorder %s443, %s444
    %p456 = scmp.eq.s32.totalorder %s77, 1
    %p457 = por %p455, %p456
    %p459 = scmp.ne.s32.totalorder %s444, %s458
    %p460 = scmp.eq.s32.totalorder %s77, 0
    %p461 = por %p459, %p460
    %s463 = sadd.s32 %s462, 1
    %p466 = scmp.eq.s32.totalorder %s71, 1
    %p467 = scmp.ne.s32.totalorder %s462, %s464
    %p468 = scmp.eq.s32.totalorder %s71, 0
    %p469 = por %p467, %p468
    %p470 = scmp.ne.s32.totalorder %s462, %s464
    %p471 = scmp.eq.s32.totalorder %s76, 1
    %p472 = por %p470, %p471
    %p473 = scmp.ne.s32.totalorder %s464, %s465
    %p474 = scmp.eq.s32.totalorder %s76, 0
    %p475 = por %p473, %p474
    %p476 = scmp.ne.s32.totalorder %s464, %s465
    %p477 = scmp.eq.s32.totalorder %s77, 1
    %p478 = por %p476, %p477
    %p480 = scmp.ne.s32.totalorder %s465, %s479
    %p481 = scmp.eq.s32.totalorder %s77, 0
    %p482 = por %p480, %p481
    %s484 = sadd.s32 %s483, 1
    %p487 = scmp.eq.s32.totalorder %s71, 1
    %p488 = scmp.ne.s32.totalorder %s483, %s485
    %p489 = scmp.eq.s32.totalorder %s71, 0
    %p490 = por %p488, %p489
    %p491 = scmp.ne.s32.totalorder %s483, %s485
    %p492 = scmp.eq.s32.totalorder %s76, 1
    %p493 = por %p491, %p492
    %p494 = scmp.ne.s32.totalorder %s485, %s486
    %p495 = scmp.eq.s32.totalorder %s76, 0
    %p496 = por %p494, %p495
    %p497 = scmp.ne.s32.totalorder %s485, %s486
    %p498 = scmp.eq.s32.totalorder %s77, 1
    %p499 = por %p497, %p498
    %p501 = scmp.ne.s32.totalorder %s486, %s500
    %p502 = scmp.eq.s32.totalorder %s77, 0
    %p503 = por %p501, %p502
    %s505 = sadd.s32 %s504, 1
    %p508 = scmp.eq.s32.totalorder %s71, 1
    %p509 = scmp.ne.s32.totalorder %s504, %s506
    %p510 = scmp.eq.s32.totalorder %s71, 0
    %p511 = por %p509, %p510
    %p512 = scmp.ne.s32.totalorder %s504, %s506
    %p513 = scmp.eq.s32.totalorder %s76, 1
    %p514 = por %p512, %p513
    %p515 = scmp.ne.s32.totalorder %s506, %s507
    %p516 = scmp.eq.s32.totalorder %s76, 0
    %p517 = por %p515, %p516
    %p518 = scmp.ne.s32.totalorder %s506, %s507
    %p519 = scmp.eq.s32.totalorder %s77, 1
    %p520 = por %p518, %p519
    %p522 = scmp.ne.s32.totalorder %s507, %s521
    %p523 = scmp.eq.s32.totalorder %s77, 0
    %p524 = por %p522, %p523
    %s526 = sadd.s32 %s525, 1
    %p529 = scmp.eq.s32.totalorder %s71, 1
    %p530 = scmp.ne.s32.totalorder %s525, %s527
    %p531 = scmp.eq.s32.totalorder %s71, 0
    %p532 = por %p530, %p531
    %p533 = scmp.ne.s32.totalorder %s525, %s527
    %p534 = scmp.eq.s32.totalorder %s76, 1
    %p535 = por %p533, %p534
    %p536 = scmp.ne.s32.totalorder %s527, %s528
    %p537 = scmp.eq.s32.totalorder %s76, 0
    %p538 = por %p536, %p537
    %p539 = scmp.ne.s32.totalorder %s527, %s528
    %p540 = scmp.eq.s32.totalorder %s77, 1
    %p541 = por %p539, %p540
    %p543 = scmp.ne.s32.totalorder %s528, %s542
    %p544 = scmp.eq.s32.totalorder %s77, 0
    %p545 = por %p543, %p544
    %s547 = sadd.s32 %s546, 1
    %p550 = scmp.eq.s32.totalorder %s71, 1
    %p551 = scmp.ne.s32.totalorder %s546, %s548
    %p552 = scmp.eq.s32.totalorder %s71, 0
    %p553 = por %p551, %p552
    %p554 = scmp.ne.s32.totalorder %s546, %s548
    %p555 = scmp.eq.s32.totalorder %s76, 1
    %p556 = por %p554, %p555
    %p557 = scmp.ne.s32.totalorder %s548, %s549
    %p558 = scmp.eq.s32.totalorder %s76, 0
    %p559 = por %p557, %p558
    %p560 = scmp.ne.s32.totalorder %s548, %s549
    %p561 = scmp.eq.s32.totalorder %s77, 1
    %p562 = por %p560, %p561
    %p564 = scmp.ne.s32.totalorder %s549, %s563
    %p565 = scmp.eq.s32.totalorder %s77, 0
    %p566 = por %p564, %p565
    %s568 = sadd.s32 %s567, 1
    %p571 = scmp.eq.s32.totalorder %s71, 1
    %p572 = scmp.ne.s32.totalorder %s567, %s569
    %p573 = scmp.eq.s32.totalorder %s71, 0
    %p574 = por %p572, %p573
    %p575 = scmp.ne.s32.totalorder %s567, %s569
    %p576 = scmp.eq.s32.totalorder %s76, 1
    %p577 = por %p575, %p576
    %p578 = scmp.ne.s32.totalorder %s569, %s570
    %p579 = scmp.eq.s32.totalorder %s76, 0
    %p580 = por %p578, %p579
    %p581 = scmp.ne.s32.totalorder %s569, %s570
    %p582 = scmp.eq.s32.totalorder %s77, 1
    %p583 = por %p581, %p582
    %p585 = scmp.ne.s32.totalorder %s570, %s584
    %p586 = scmp.eq.s32.totalorder %s77, 0
    %p587 = por %p585, %p586
    %s589 = sadd.s32 %s588, 1
    %p592 = scmp.eq.s32.totalorder %s71, 1
    %p593 = scmp.ne.s32.totalorder %s588, %s590
    %p594 = scmp.eq.s32.totalorder %s71, 0
    %p595 = por %p593, %p594
    %p596 = scmp.ne.s32.totalorder %s588, %s590
    %p597 = scmp.eq.s32.totalorder %s76, 1
    %p598 = por %p596, %p597
    %p599 = scmp.ne.s32.totalorder %s590, %s591
    %p600 = scmp.eq.s32.totalorder %s76, 0
    %p601 = por %p599, %p600
    %p602 = scmp.ne.s32.totalorder %s590, %s591
    %p603 = scmp.eq.s32.totalorder %s77, 1
    %p604 = por %p602, %p603
    %p606 = scmp.ne.s32.totalorder %s591, %s605
    %p607 = scmp.eq.s32.totalorder %s77, 0
    %p608 = por %p606, %p607
    %s610 = sadd.s32 %s609, 1
    %p613 = scmp.eq.s32.totalorder %s71, 1
    %p614 = scmp.ne.s32.totalorder %s609, %s611
    %p615 = scmp.eq.s32.totalorder %s71, 0
    %p616 = por %p614, %p615
    %p617 = scmp.ne.s32.totalorder %s609, %s611
    %p618 = scmp.eq.s32.totalorder %s76, 1
    %p619 = por %p617, %p618
    %p620 = scmp.ne.s32.totalorder %s611, %s612
    %p621 = scmp.eq.s32.totalorder %s76, 0
    %p622 = por %p620, %p621
    %p623 = scmp.ne.s32.totalorder %s611, %s612
    %p624 = scmp.eq.s32.totalorder %s77, 1
    %p625 = por %p623, %p624
    %p627 = scmp.ne.s32.totalorder %s612, %s626
    %p628 = scmp.eq.s32.totalorder %s77, 0
    %p629 = por %p627, %p628
    %s631 = sadd.s32 %s630, 1
    %p634 = scmp.eq.s32.totalorder %s71, 1
    %p635 = scmp.ne.s32.totalorder %s630, %s632
    %p636 = scmp.eq.s32.totalorder %s71, 0
    %p637 = por %p635, %p636
    %p638 = scmp.ne.s32.totalorder %s630, %s632
    %p639 = scmp.eq.s32.totalorder %s76, 1
    %p640 = por %p638, %p639
    %p641 = scmp.ne.s32.totalorder %s632, %s633
    %p642 = scmp.eq.s32.totalorder %s76, 0
    %p643 = por %p641, %p642
    %p644 = scmp.ne.s32.totalorder %s632, %s633
    %p645 = scmp.eq.s32.totalorder %s77, 1
    %p646 = por %p644, %p645
    %p648 = scmp.ne.s32.totalorder %s633, %s647
    %p649 = scmp.eq.s32.totalorder %s77, 0
    %p650 = por %p648, %p649
    %s652 = sadd.s32 %s651, 1
    %p655 = scmp.eq.s32.totalorder %s71, 1
    %p656 = scmp.ne.s32.totalorder %s651, %s653
    %p657 = scmp.eq.s32.totalorder %s71, 0
    %p658 = por %p656, %p657
    %p659 = scmp.ne.s32.totalorder %s651, %s653
    %p660 = scmp.eq.s32.totalorder %s76, 1
    %p661 = por %p659, %p660
    %p662 = scmp.ne.s32.totalorder %s653, %s654
    %p663 = scmp.eq.s32.totalorder %s76, 0
    %p664 = por %p662, %p663
    %p665 = scmp.ne.s32.totalorder %s653, %s654
    %p666 = scmp.eq.s32.totalorder %s77, 1
    %p667 = por %p665, %p666
    %p669 = scmp.ne.s32.totalorder %s654, %s668
    %p670 = scmp.eq.s32.totalorder %s77, 0
    %p671 = por %p669, %p670
    %s673 = sadd.s32 %s672, 1
    %p676 = scmp.eq.s32.totalorder %s71, 1
    %p677 = scmp.ne.s32.totalorder %s672, %s674
    %p678 = scmp.eq.s32.totalorder %s71, 0
    %p679 = por %p677, %p678
    %p680 = scmp.ne.s32.totalorder %s672, %s674
    %p681 = scmp.eq.s32.totalorder %s76, 1
    %p682 = por %p680, %p681
    %p683 = scmp.ne.s32.totalorder %s674, %s675
    %p684 = scmp.eq.s32.totalorder %s76, 0
    %p685 = por %p683, %p684
    %p686 = scmp.ne.s32.totalorder %s674, %s675
    %p687 = scmp.eq.s32.totalorder %s77, 1
    %p688 = por %p686, %p687
    %p690 = scmp.ne.s32.totalorder %s675, %s689
    %p691 = scmp.eq.s32.totalorder %s77, 0
    %p692 = por %p690, %p691
    %s694 = sadd.s32 %s693, 1
    %p697 = scmp.eq.s32.totalorder %s71, 1
    %p698 = scmp.ne.s32.totalorder %s693, %s695
    %p699 = scmp.eq.s32.totalorder %s71, 0
    %p700 = por %p698, %p699
    %p701 = scmp.ne.s32.totalorder %s693, %s695
    %p702 = scmp.eq.s32.totalorder %s76, 1
    %p703 = por %p701, %p702
    %p704 = scmp.ne.s32.totalorder %s695, %s696
    %p705 = scmp.eq.s32.totalorder %s76, 0
    %p706 = por %p704, %p705
    %p707 = scmp.ne.s32.totalorder %s695, %s696
    %p708 = scmp.eq.s32.totalorder %s77, 1
    %p709 = por %p707, %p708
    %p711 = scmp.ne.s32.totalorder %s696, %s710
    %p712 = scmp.eq.s32.totalorder %s77, 0
    %p713 = por %p711, %p712
    %s715 = sadd.s32 %s714, 1
    %p718 = scmp.eq.s32.totalorder %s71, 1
    %p719 = scmp.ne.s32.totalorder %s714, %s716
    %p720 = scmp.eq.s32.totalorder %s71, 0
    %p721 = por %p719, %p720
    %p722 = scmp.ne.s32.totalorder %s714, %s716
    %p723 = scmp.eq.s32.totalorder %s76, 1
    %p724 = por %p722, %p723
    %p725 = scmp.ne.s32.totalorder %s716, %s717
    %p726 = scmp.eq.s32.totalorder %s76, 0
    %p727 = por %p725, %p726
    %p728 = scmp.ne.s32.totalorder %s716, %s717
    %p729 = scmp.eq.s32.totalorder %s77, 1
    %p730 = por %p728, %p729
    %p732 = scmp.ne.s32.totalorder %s717, %s731
    %p733 = scmp.eq.s32.totalorder %s77, 0
    %p734 = por %p732, %p733
    %s736 = sadd.s32 %s735, 1
    %p739 = scmp.eq.s32.totalorder %s71, 1
    %p740 = scmp.ne.s32.totalorder %s735, %s737
    %p741 = scmp.eq.s32.totalorder %s71, 0
    %p742 = por %p740, %p741
    %p743 = scmp.ne.s32.totalorder %s735, %s737
    %p744 = scmp.eq.s32.totalorder %s76, 1
    %p745 = por %p743, %p744
    %p746 = scmp.ne.s32.totalorder %s737, %s738
    %p747 = scmp.eq.s32.totalorder %s76, 0
    %p748 = por %p746, %p747
    %p749 = scmp.ne.s32.totalorder %s737, %s738
    %p750 = scmp.eq.s32.totalorder %s77, 1
    %p751 = por %p749, %p750
    %p753 = scmp.ne.s32.totalorder %s738, %s752
    %p754 = scmp.eq.s32.totalorder %s77, 0
    %p755 = por %p753, %p754
    %s756 = ssub.s32 %s71, %s78
    %p757 = scmp.eq.s32.totalorder %s756, 0
    %s759 = sadd.s32 %s758, 1
    %s760 = scalar_select %p757, %s758, %s759
    %p763 = pneg %p757
    %p764 = scmp.eq.s32.totalorder %s71, 1
    %p765 = por %p763, %p764
    %p766 = scmp.ne.s32.totalorder %s758, %s761
    %p767 = scmp.eq.s32.totalorder %s71, 0
    %p768 = por %p766, %p767
    %p769 = scmp.ne.s32.totalorder %s758, %s761
    %p770 = scmp.eq.s32.totalorder %s76, 1
    %p771 = por %p769, %p770
    %p772 = scmp.ne.s32.totalorder %s761, %s762
    %p773 = scmp.eq.s32.totalorder %s76, 0
    %p774 = por %p772, %p773
    %p775 = scmp.ne.s32.totalorder %s761, %s762
    %p776 = scmp.eq.s32.totalorder %s77, 1
    %p777 = por %p775, %p776
    %p779 = scmp.ne.s32.totalorder %s762, %s778
    %p780 = scmp.eq.s32.totalorder %s77, 0
    %p781 = por %p779, %p780
    %p782 = scmp.le.s32.totalorder 1, %s71
    %p783 = scmp.lt.s32.totalorder %s71, 3
    %p784 = pnand %p782, %p783
    %p785 = pneg %p784
    // Predicated region
    $region9: #{rrdb_forward.1} parent=5 // pred_check
      _
    $region10: #{rrdb_forward.1} parent=5 // pred_check_branch
      %787 = sbr.rel (%p784) target = $region12
    $region11: #{rrdb_forward.1} parent=5 // pred_region
      %s788 = ssub.s32 %s71, 1
      // Predicated region
      $region13: #{rrdb_forward.1} parent=11 // pred_check
        %p789 = pneg %p118
      $region14: #{rrdb_forward.1} parent=11 // pred_check_branch
        %791 = sbr.rel (%p789) target = $region16
      $region15: #{rrdb_forward.1} parent=11 // pred_region
        _
      $region16: #{rrdb_forward.1} parent=11 // pred_fallthru
        _
      // Predicated region
      $region17: #{rrdb_forward.1} parent=11 // pred_check
        %p792 = pneg %p139
      $region18: #{rrdb_forward.1} parent=11 // pred_check_branch
        %794 = sbr.rel (%p792) target = $region20
      $region19: #{rrdb_forward.1} parent=11 // pred_region
        _
      $region20: #{rrdb_forward.1} parent=11 // pred_fallthru
        _
      // Predicated region
      $region21: #{rrdb_forward.1} parent=11 // pred_check
        %p795 = pneg %p160
      $region22: #{rrdb_forward.1} parent=11 // pred_check_branch
        %797 = sbr.rel (%p795) target = $region24
      $region23: #{rrdb_forward.1} parent=11 // pred_region
        _
      $region24: #{rrdb_forward.1} parent=11 // pred_fallthru
        _
      // Predicated region
      $region25: #{rrdb_forward.1} parent=11 // pred_check
        %p798 = pneg %p181
      $region26: #{rrdb_forward.1} parent=11 // pred_check_branch
        %800 = sbr.rel (%p798) target = $region28
      $region27: #{rrdb_forward.1} parent=11 // pred_region
        _
      $region28: #{rrdb_forward.1} parent=11 // pred_fallthru
        _
      // Predicated region
      $region29: #{rrdb_forward.1} parent=11 // pred_check
        %p801 = pneg %p202
      $region30: #{rrdb_forward.1} parent=11 // pred_check_branch
        %803 = sbr.rel (%p801) target = $region32
      $region31: #{rrdb_forward.1} parent=11 // pred_region
        _
      $region32: #{rrdb_forward.1} parent=11 // pred_fallthru
        _
      // Predicated region
      $region33: #{rrdb_forward.1} parent=11 // pred_check
        %p804 = pneg %p223
      $region34: #{rrdb_forward.1} parent=11 // pred_check_branch
        %806 = sbr.rel (%p804) target = $region36
      $region35: #{rrdb_forward.1} parent=11 // pred_region
        _
      $region36: #{rrdb_forward.1} parent=11 // pred_fallthru
        _
      // Predicated region
      $region37: #{rrdb_forward.1} parent=11 // pred_check
        %p807 = pneg %p244
      $region38: #{rrdb_forward.1} parent=11 // pred_check_branch
        %809 = sbr.rel (%p807) target = $region40
      $region39: #{rrdb_forward.1} parent=11 // pred_region
        _
      $region40: #{rrdb_forward.1} parent=11 // pred_fallthru
        _
      // Predicated region
      $region41: #{rrdb_forward.1} parent=11 // pred_check
        %p810 = pneg %p265
      $region42: #{rrdb_forward.1} parent=11 // pred_check_branch
        %812 = sbr.rel (%p810) target = $region44
      $region43: #{rrdb_forward.1} parent=11 // pred_region
        _
      $region44: #{rrdb_forward.1} parent=11 // pred_fallthru
        _
      // Predicated region
      $region45: #{rrdb_forward.1} parent=11 // pred_check
        %p813 = pneg %p286
      $region46: #{rrdb_forward.1} parent=11 // pred_check_branch
        %815 = sbr.rel (%p813) target = $region48
      $region47: #{rrdb_forward.1} parent=11 // pred_region
        _
      $region48: #{rrdb_forward.1} parent=11 // pred_fallthru
        _
      // Predicated region
      $region49: #{rrdb_forward.1} parent=11 // pred_check
        %p816 = pneg %p307
      $region50: #{rrdb_forward.1} parent=11 // pred_check_branch
        %818 = sbr.rel (%p816) target = $region52
      $region51: #{rrdb_forward.1} parent=11 // pred_region
        _
      $region52: #{rrdb_forward.1} parent=11 // pred_fallthru
        _
      // Predicated region
      $region53: #{rrdb_forward.1} parent=11 // pred_check
        %p819 = pneg %p328
      $region54: #{rrdb_forward.1} parent=11 // pred_check_branch
        %821 = sbr.rel (%p819) target = $region56
      $region55: #{rrdb_forward.1} parent=11 // pred_region
        _
      $region56: #{rrdb_forward.1} parent=11 // pred_fallthru
        _
      // Predicated region
      $region57: #{rrdb_forward.1} parent=11 // pred_check
        %p822 = pneg %p349
      $region58: #{rrdb_forward.1} parent=11 // pred_check_branch
        %824 = sbr.rel (%p822) target = $region60
      $region59: #{rrdb_forward.1} parent=11 // pred_region
        _
      $region60: #{rrdb_forward.1} parent=11 // pred_fallthru
        _
      // Predicated region
      $region61: #{rrdb_forward.1} parent=11 // pred_check
        %p825 = pneg %p370
      $region62: #{rrdb_forward.1} parent=11 // pred_check_branch
        %827 = sbr.rel (%p825) target = $region64
      $region63: #{rrdb_forward.1} parent=11 // pred_region
        _
      $region64: #{rrdb_forward.1} parent=11 // pred_fallthru
        _
      // Predicated region
      $region65: #{rrdb_forward.1} parent=11 // pred_check
        %p828 = pneg %p391
      $region66: #{rrdb_forward.1} parent=11 // pred_check_branch
        %830 = sbr.rel (%p828) target = $region68
      $region67: #{rrdb_forward.1} parent=11 // pred_region
        _
      $region68: #{rrdb_forward.1} parent=11 // pred_fallthru
        _
      // Predicated region
      $region69: #{rrdb_forward.1} parent=11 // pred_check
        %p831 = pneg %p412
      $region70: #{rrdb_forward.1} parent=11 // pred_check_branch
        %833 = sbr.rel (%p831) target = $region72
      $region71: #{rrdb_forward.1} parent=11 // pred_region
        _
      $region72: #{rrdb_forward.1} parent=11 // pred_fallthru
        _
      // Predicated region
      $region73: #{rrdb_forward.1} parent=11 // pred_check
        %p834 = pneg %p433
      $region74: #{rrdb_forward.1} parent=11 // pred_check_branch
        %836 = sbr.rel (%p834) target = $region76
      $region75: #{rrdb_forward.1} parent=11 // pred_region
        _
      $region76: #{rrdb_forward.1} parent=11 // pred_fallthru
        _
      // Predicated region
      $region77: #{rrdb_forward.1} parent=11 // pred_check
        %p837 = pneg %p454
      $region78: #{rrdb_forward.1} parent=11 // pred_check_branch
        %839 = sbr.rel (%p837) target = $region80
      $region79: #{rrdb_forward.1} parent=11 // pred_region
        _
      $region80: #{rrdb_forward.1} parent=11 // pred_fallthru
        _
      // Predicated region
      $region81: #{rrdb_forward.1} parent=11 // pred_check
        %p840 = pneg %p475
      $region82: #{rrdb_forward.1} parent=11 // pred_check_branch
        %842 = sbr.rel (%p840) target = $region84
      $region83: #{rrdb_forward.1} parent=11 // pred_region
        _
      $region84: #{rrdb_forward.1} parent=11 // pred_fallthru
        _
      // Predicated region
      $region85: #{rrdb_forward.1} parent=11 // pred_check
        %p843 = pneg %p496
      $region86: #{rrdb_forward.1} parent=11 // pred_check_branch
        %845 = sbr.rel (%p843) target = $region88
      $region87: #{rrdb_forward.1} parent=11 // pred_region
        _
      $region88: #{rrdb_forward.1} parent=11 // pred_fallthru
        _
      // Predicated region
      $region89: #{rrdb_forward.1} parent=11 // pred_check
        %p846 = pneg %p517
      $region90: #{rrdb_forward.1} parent=11 // pred_check_branch
        %848 = sbr.rel (%p846) target = $region92
      $region91: #{rrdb_forward.1} parent=11 // pred_region
        _
      $region92: #{rrdb_forward.1} parent=11 // pred_fallthru
        _
      // Predicated region
      $region93: #{rrdb_forward.1} parent=11 // pred_check
        %p849 = pneg %p538
      $region94: #{rrdb_forward.1} parent=11 // pred_check_branch
        %851 = sbr.rel (%p849) target = $region96
      $region95: #{rrdb_forward.1} parent=11 // pred_region
        _
      $region96: #{rrdb_forward.1} parent=11 // pred_fallthru
        _
      // Predicated region
      $region97: #{rrdb_forward.1} parent=11 // pred_check
        %p852 = pneg %p559
      $region98: #{rrdb_forward.1} parent=11 // pred_check_branch
        %854 = sbr.rel (%p852) target = $region100
      $region99: #{rrdb_forward.1} parent=11 // pred_region
        _
      $region100: #{rrdb_forward.1} parent=11 // pred_fallthru
        _
      // Predicated region
      $region101: #{rrdb_forward.1} parent=11 // pred_check
        %p855 = pneg %p580
      $region102: #{rrdb_forward.1} parent=11 // pred_check_branch
        %857 = sbr.rel (%p855) target = $region104
      $region103: #{rrdb_forward.1} parent=11 // pred_region
        _
      $region104: #{rrdb_forward.1} parent=11 // pred_fallthru
        _
      // Predicated region
      $region105: #{rrdb_forward.1} parent=11 // pred_check
        %p858 = pneg %p601
      $region106: #{rrdb_forward.1} parent=11 // pred_check_branch
        %860 = sbr.rel (%p858) target = $region108
      $region107: #{rrdb_forward.1} parent=11 // pred_region
        _
      $region108: #{rrdb_forward.1} parent=11 // pred_fallthru
        _
      // Predicated region
      $region109: #{rrdb_forward.1} parent=11 // pred_check
        %p861 = pneg %p622
      $region110: #{rrdb_forward.1} parent=11 // pred_check_branch
        %863 = sbr.rel (%p861) target = $region112
      $region111: #{rrdb_forward.1} parent=11 // pred_region
        _
      $region112: #{rrdb_forward.1} parent=11 // pred_fallthru
        _
      // Predicated region
      $region113: #{rrdb_forward.1} parent=11 // pred_check
        %p864 = pneg %p643
      $region114: #{rrdb_forward.1} parent=11 // pred_check_branch
        %866 = sbr.rel (%p864) target = $region116
      $region115: #{rrdb_forward.1} parent=11 // pred_region
        _
      $region116: #{rrdb_forward.1} parent=11 // pred_fallthru
        _
      // Predicated region
      $region117: #{rrdb_forward.1} parent=11 // pred_check
        %p867 = pneg %p664
      $region118: #{rrdb_forward.1} parent=11 // pred_check_branch
        %869 = sbr.rel (%p867) target = $region120
      $region119: #{rrdb_forward.1} parent=11 // pred_region
        _
      $region120: #{rrdb_forward.1} parent=11 // pred_fallthru
        _
      // Predicated region
      $region121: #{rrdb_forward.1} parent=11 // pred_check
        %p870 = pneg %p685
      $region122: #{rrdb_forward.1} parent=11 // pred_check_branch
        %872 = sbr.rel (%p870) target = $region124
      $region123: #{rrdb_forward.1} parent=11 // pred_region
        _
      $region124: #{rrdb_forward.1} parent=11 // pred_fallthru
        _
      // Predicated region
      $region125: #{rrdb_forward.1} parent=11 // pred_check
        %p873 = pneg %p706
      $region126: #{rrdb_forward.1} parent=11 // pred_check_branch
        %875 = sbr.rel (%p873) target = $region128
      $region127: #{rrdb_forward.1} parent=11 // pred_region
        _
      $region128: #{rrdb_forward.1} parent=11 // pred_fallthru
        _
      // Predicated region
      $region129: #{rrdb_forward.1} parent=11 // pred_check
        %p876 = pneg %p727
      $region130: #{rrdb_forward.1} parent=11 // pred_check_branch
        %878 = sbr.rel (%p876) target = $region132
      $region131: #{rrdb_forward.1} parent=11 // pred_region
        _
      $region132: #{rrdb_forward.1} parent=11 // pred_fallthru
        _
      // Predicated region
      $region133: #{rrdb_forward.1} parent=11 // pred_check
        %p879 = pneg %p748
      $region134: #{rrdb_forward.1} parent=11 // pred_check_branch
        %881 = sbr.rel (%p879) target = $region136
      $region135: #{rrdb_forward.1} parent=11 // pred_region
        _
      $region136: #{rrdb_forward.1} parent=11 // pred_fallthru
        _
    $region12: #{rrdb_forward.1} parent=5 // pred_fallthru
      _
    %p882 = scmp.lt.s32.totalorder %s71, 2
    // Predicated region
    $region137: #{rrdb_forward.1} parent=5 // pred_check
      %p883 = pneg %p882
    $region138: #{rrdb_forward.1} parent=5 // pred_check_branch
      %885 = sbr.rel (%p883) target = $region140
    $region139: #{rrdb_forward.1} parent=5 // pred_region
      // Predicated region
      $region141: #{rrdb_forward.1} parent=139 // pred_check
        %p886 = pneg %p91
      $region142: #{rrdb_forward.1} parent=139 // pred_check_branch
        %888 = sbr.rel (%p886) target = $region144
      $region143: #{rrdb_forward.1} parent=139 // pred_region
        %p889 = scmp.lt.s32.totalorder %s71, 1
        %s890 = scalar_select %p889, %s71, 1
        %s891 = smul.addr %s890, 2
        %s892 = smul.addr %s891, 8
        %s893 = scalar_lea.vmem %s1, %s892
      $region144: #{rrdb_forward.1} parent=139 // pred_fallthru
        _
    $region140: #{rrdb_forward.1} parent=5 // pred_fallthru
      _
    %p894 = scmp.le.s32.totalorder 1, %s71
    %p895 = scmp.lt.s32.totalorder %s71, 3
    %p896 = pnand %p894, %p895
    %p897 = pneg %p896
    // Predicated region
    $region145: #{rrdb_forward.1} parent=5 // pred_check
      _
    $region146: #{rrdb_forward.1} parent=5 // pred_check_branch
      %899 = sbr.rel (%p896) target = $region148
    $region147: #{rrdb_forward.1} parent=5 // pred_region
      %s900 = ssub.s32 %s71, 1
      %p901 = scmp.lt.s32.totalorder %s76, 1
      %s902 = scalar_select %p901, %s76, 1
      %s903 = smul.addr %s902, 2
      %s904 = smul.addr %s903, 8
      %s905 = scalar_lea.vmem %s1, %s904
      %p906 = pneg %p97
      %p907 = pneg %p94
      %p908 = pneg %p118
      %p909 = pneg %p115
      %p910 = pneg %p139
      %p911 = pneg %p136
      %p912 = pneg %p160
      %p913 = pneg %p157
      %p914 = pneg %p181
      %p915 = pneg %p178
      %p916 = pneg %p202
      %p917 = pneg %p199
      %p918 = pneg %p223
      %p919 = pneg %p220
      %p920 = pneg %p244
      %p921 = pneg %p241
      %p922 = pneg %p265
      %p923 = pneg %p262
      %p924 = pneg %p286
      %p925 = pneg %p283
      %p926 = pneg %p307
      %p927 = pneg %p304
      %p928 = pneg %p328
      %p929 = pneg %p325
      %p930 = pneg %p349
      %p931 = pneg %p346
      %p932 = pneg %p370
      %p933 = pneg %p367
      %p934 = pneg %p391
      %p935 = pneg %p388
      %p936 = pneg %p412
      %p937 = pneg %p409
      %p938 = pneg %p433
      %p939 = pneg %p430
      %p940 = pneg %p454
      %p941 = pneg %p451
      %p942 = pneg %p475
      %p943 = pneg %p472
      %p944 = pneg %p496
      %p945 = pneg %p493
      %p946 = pneg %p517
      %p947 = pneg %p514
      %p948 = pneg %p538
      %p949 = pneg %p535
      %p950 = pneg %p559
      %p951 = pneg %p556
      %p952 = pneg %p580
      %p953 = pneg %p577
      %p954 = pneg %p601
      %p955 = pneg %p598
      %p956 = pneg %p622
      %p957 = pneg %p619
      %p958 = pneg %p643
      %p959 = pneg %p640
      %p960 = pneg %p664
      %p961 = pneg %p661
      %p962 = pneg %p685
      %p963 = pneg %p682
      %p964 = pneg %p706
      %p965 = pneg %p703
      %p966 = pneg %p727
      %p967 = pneg %p724
      %p968 = pneg %p748
      %p969 = pneg %p745
      %p970 = pneg %p774
      %p971 = pneg %p771
      %p972 = scmp.lt.s32.totalorder %s76, 1
      %s973 = scalar_select %p972, %s76, 1
      %s974 = smul.addr %s973, 2
      %s975 = smul.addr %s974, 8
      %s976 = scalar_lea.vmem %s65, %s975
      %p977 = scmp.lt.s32.totalorder %s76, 1
      %s978 = scalar_select %p977, %s76, 1
      %s979 = smul.addr %s978, 2
      %s980 = smul.addr %s979, 8
      %s981 = scalar_lea.vmem %s1, %s980
      %p982 = scmp.lt.s32.totalorder %s76, 1
      %s983 = scalar_select %p982, %s76, 1
      %s984 = smul.addr %s983, 2
      %s985 = smul.addr %s984, 8
      %s986 = scalar_lea.vmem %s65, %s985
      %987 = vst [vmem:[#allocation2] sm:$0xff] 0.0
      %988 = vst [vmem:[#allocation2 + $0x8] sm:$0xff] 0.0
      %989 = vst [vmem:[#allocation2 + $0x10] sm:$0xff] 0.0
      %990 = vst [vmem:[#allocation2 + $0x18] sm:$0xff] 0.0
      %991 = vst [vmem:[#allocation2 + $0x20] sm:$0xff] 0.0
      %992 = vst [vmem:[#allocation2 + $0x28] sm:$0xff] 0.0
      %993 = vst [vmem:[#allocation2 + $0x30] sm:$0xff] 0.0
      %994 = vst [vmem:[#allocation2 + $0x38] sm:$0xff] 0.0
      %995 = vst [vmem:[#allocation2 + $0x40] sm:$0xff] 0.0
      %996 = vst [vmem:[#allocation2 + $0x48] sm:$0xff] 0.0
      %997 = vst [vmem:[#allocation2 + $0x50] sm:$0xff] 0.0
      %998 = vst [vmem:[#allocation2 + $0x58] sm:$0xff] 0.0
      %999 = vst [vmem:[#allocation2 + $0x60] sm:$0xff] 0.0
      %1000 = vst [vmem:[#allocation2 + $0x68] sm:$0xff] 0.0
      %1001 = vst [vmem:[#allocation2 + $0x70] sm:$0xff] 0.0
      %1002 = vst [vmem:[#allocation2 + $0x78] sm:$0xff] 0.0
      %1003 = vst [vmem:[#allocation2 + $0x80] sm:$0xff] 0.0
      %1004 = vst [vmem:[#allocation2 + $0x88] sm:$0xff] 0.0
      %1005 = vst [vmem:[#allocation2 + $0x90] sm:$0xff] 0.0
      %1006 = vst [vmem:[#allocation2 + $0x98] sm:$0xff] 0.0
      %1007 = vst [vmem:[#allocation2 + $0xa0] sm:$0xff] 0.0
      %1008 = vst [vmem:[#allocation2 + $0xa8] sm:$0xff] 0.0
      %1009 = vst [vmem:[#allocation2 + $0xb0] sm:$0xff] 0.0
      %1010 = vst [vmem:[#allocation2 + $0xb8] sm:$0xff] 0.0
      %1011 = vst [vmem:[#allocation2 + $0xc0] sm:$0xff] 0.0
      %1012 = vst [vmem:[#allocation2 + $0xc8] sm:$0xff] 0.0
      %1013 = vst [vmem:[#allocation2 + $0xd0] sm:$0xff] 0.0
      %1014 = vst [vmem:[#allocation2 + $0xd8] sm:$0xff] 0.0
      %1015 = vst [vmem:[#allocation2 + $0xe0] sm:$0xff] 0.0
      %1016 = vst [vmem:[#allocation2 + $0xe8] sm:$0xff] 0.0
      %1017 = vst [vmem:[#allocation2 + $0xf0] sm:$0xff] 0.0
      %1018 = vst [vmem:[#allocation2 + $0xf8] sm:$0xff] 0.0
      %1019 = vst [vmem:[#allocation2 + $0x100] sm:$0xff] 0.0
      %1020 = vst [vmem:[#allocation2 + $0x108] sm:$0xff] 0.0
      %1021 = vst [vmem:[#allocation2 + $0x110] sm:$0xff] 0.0
      %1022 = vst [vmem:[#allocation2 + $0x118] sm:$0xff] 0.0
      %1023 = vst [vmem:[#allocation2 + $0x120] sm:$0xff] 0.0
      %1024 = vst [vmem:[#allocation2 + $0x128] sm:$0xff] 0.0
      %1025 = vst [vmem:[#allocation2 + $0x130] sm:$0xff] 0.0
      %1026 = vst [vmem:[#allocation2 + $0x138] sm:$0xff] 0.0
      %1027 = vst [vmem:[#allocation2 + $0x140] sm:$0xff] 0.0
      %1028 = vst [vmem:[#allocation2 + $0x148] sm:$0xff] 0.0
      %1029 = vst [vmem:[#allocation2 + $0x150] sm:$0xff] 0.0
      %1030 = vst [vmem:[#allocation2 + $0x158] sm:$0xff] 0.0
      %1031 = vst [vmem:[#allocation2 + $0x160] sm:$0xff] 0.0
      %1032 = vst [vmem:[#allocation2 + $0x168] sm:$0xff] 0.0
      %1033 = vst [vmem:[#allocation2 + $0x170] sm:$0xff] 0.0
      %1034 = vst [vmem:[#allocation2 + $0x178] sm:$0xff] 0.0
      %1035 = vst [vmem:[#allocation2 + $0x180] sm:$0xff] 0.0
      %1036 = vst [vmem:[#allocation2 + $0x188] sm:$0xff] 0.0
      %1037 = vst [vmem:[#allocation2 + $0x190] sm:$0xff] 0.0
      %1038 = vst [vmem:[#allocation2 + $0x198] sm:$0xff] 0.0
      %1039 = vst [vmem:[#allocation2 + $0x1a0] sm:$0xff] 0.0
      %1040 = vst [vmem:[#allocation2 + $0x1a8] sm:$0xff] 0.0
      %1041 = vst [vmem:[#allocation2 + $0x1b0] sm:$0xff] 0.0
      %1042 = vst [vmem:[#allocation2 + $0x1b8] sm:$0xff] 0.0
      %1043 = vst [vmem:[#allocation2 + $0x1c0] sm:$0xff] 0.0
      %1044 = vst [vmem:[#allocation2 + $0x1c8] sm:$0xff] 0.0
      %1045 = vst [vmem:[#allocation2 + $0x1d0] sm:$0xff] 0.0
      %1046 = vst [vmem:[#allocation2 + $0x1d8] sm:$0xff] 0.0
      %1047 = vst [vmem:[#allocation2 + $0x1e0] sm:$0xff] 0.0
      %1048 = vst [vmem:[#allocation2 + $0x1e8] sm:$0xff] 0.0
      %1049 = vst [vmem:[#allocation2 + $0x1f0] sm:$0xff] 0.0
      %1050 = vst [vmem:[#allocation2 + $0x1f8] sm:$0xff] 0.0
      %1051 = vst [vmem:[#allocation2 + $0x200] sm:$0xff] 0.0
      %1052 = vst [vmem:[#allocation2 + $0x208] sm:$0xff] 0.0
      %1053 = vst [vmem:[#allocation2 + $0x210] sm:$0xff] 0.0
      %1054 = vst [vmem:[#allocation2 + $0x218] sm:$0xff] 0.0
      %1055 = vst [vmem:[#allocation2 + $0x220] sm:$0xff] 0.0
      %1056 = vst [vmem:[#allocation2 + $0x228] sm:$0xff] 0.0
      %1057 = vst [vmem:[#allocation2 + $0x230] sm:$0xff] 0.0
      %1058 = vst [vmem:[#allocation2 + $0x238] sm:$0xff] 0.0
      %1059 = vst [vmem:[#allocation2 + $0x240] sm:$0xff] 0.0
      %1060 = vst [vmem:[#allocation2 + $0x248] sm:$0xff] 0.0
      %1061 = vst [vmem:[#allocation2 + $0x250] sm:$0xff] 0.0
      %1062 = vst [vmem:[#allocation2 + $0x258] sm:$0xff] 0.0
      %1063 = vst [vmem:[#allocation2 + $0x260] sm:$0xff] 0.0
      %1064 = vst [vmem:[#allocation2 + $0x268] sm:$0xff] 0.0
      %1065 = vst [vmem:[#allocation2 + $0x270] sm:$0xff] 0.0
      %1066 = vst [vmem:[#allocation2 + $0x278] sm:$0xff] 0.0
      %1067 = vst [vmem:[#allocation2 + $0x280] sm:$0xff] 0.0
      %1068 = vst [vmem:[#allocation2 + $0x288] sm:$0xff] 0.0
      %1069 = vst [vmem:[#allocation2 + $0x290] sm:$0xff] 0.0
      %1070 = vst [vmem:[#allocation2 + $0x298] sm:$0xff] 0.0
      %1071 = vst [vmem:[#allocation2 + $0x2a0] sm:$0xff] 0.0
      %1072 = vst [vmem:[#allocation2 + $0x2a8] sm:$0xff] 0.0
      %1073 = vst [vmem:[#allocation2 + $0x2b0] sm:$0xff] 0.0
      %1074 = vst [vmem:[#allocation2 + $0x2b8] sm:$0xff] 0.0
      %1075 = vst [vmem:[#allocation2 + $0x2c0] sm:$0xff] 0.0
      %1076 = vst [vmem:[#allocation2 + $0x2c8] sm:$0xff] 0.0
      %v1077 = vld [vmem:[%s981] sm:$0xff]
      %v1078 = vld [vmem:[%s981 + $0x8] sm:$0xff]
      %1079 = vrot.lane.b32.xlu0 %v1077, 17
      %v1080 = vpop.permute.xlu0 %1079
      %1081 = vrot.lane.b32.xlu0 %v1078, 17
      %v1082 = vpop.permute.xlu0 %1081
      %v1083 = vlaneseq
      %v1084 = vand.u32 %v1083, 127
      %vm1085 = vcmp.lt.s32.totalorder %v1084, 17
      %v1086 = vsel %vm1085, %v1080, %v1082
      %v1087 = vsel %vm1085, %v1082, %v1080
      %v1088 = vld [vmem:[%s3] ss:$8 sm:$0x3]
      %v1090 = vperm.slane %v1088, 0
      %v1091 = vperm.slane %v1088, 1
      %v1094 = vmul.f32 %v1087, %v1090
      %v1095 = vmul.f32 %v1086, %v1091
      %1096 = vst [vmem:[#allocation2] sm:$0xff] %v1094
      %1097 = vst [vmem:[#allocation2 + $0x8] sm:$0xff] %v1095
      %1098 = vrot.lane.b32.xlu0 %v1077, 16
      %v1099 = vpop.permute.xlu0 %1098
      %1100 = vrot.lane.b32.xlu0 %v1078, 16
      %v1101 = vpop.permute.xlu0 %1100
      %vm1102 = vcmp.lt.s32.totalorder %v1084, 16
      %v1103 = vsel %vm1102, %v1099, %v1101
      %v1104 = vsel %vm1102, %v1101, %v1099
      %s1105 = scalar_lea.vmem %s3, 1
      %v1106 = vld [vmem:[%s1105] ss:$8 sm:$0x3]
      %v1108 = vperm.slane %v1106, 0
      %v1109 = vperm.slane %v1106, 1
      %v1112 = vmul.f32 %v1104, %v1108
      %v1113 = vmul.f32 %v1103, %v1109
      %1114 = vst [vmem:[#allocation2 + $0x50] sm:$0xff] %v1112
      %1115 = vst [vmem:[#allocation2 + $0x58] sm:$0xff] %v1113
      %1116 = vrot.lane.b32.xlu0 %v1077, 15
      %v1117 = vpop.permute.xlu0 %1116
      %1118 = vrot.lane.b32.xlu0 %v1078, 15
      %v1119 = vpop.permute.xlu0 %1118
      %vm1120 = vcmp.lt.s32.totalorder %v1084, 15
      %v1121 = vsel %vm1120, %v1117, %v1119
      %v1122 = vsel %vm1120, %v1119, %v1117
      %s1123 = scalar_lea.vmem %s3, 2
      %v1124 = vld [vmem:[%s1123] ss:$8 sm:$0x3]
      %v1126 = vperm.slane %v1124, 0
      %v1127 = vperm.slane %v1124, 1
      %v1130 = vmul.f32 %v1122, %v1126
      %v1131 = vmul.f32 %v1121, %v1127
      %1132 = vst [vmem:[#allocation2 + $0xa0] sm:$0xff] %v1130
      %1133 = vst [vmem:[#allocation2 + $0xa8] sm:$0xff] %v1131
      %1134 = vrot.lane.b32.xlu0 %v1077, 1
      %v1135 = vpop.permute.xlu0 %1134
      %1136 = vrot.lane.b32.xlu0 %v1078, 1
      %v1137 = vpop.permute.xlu0 %1136
      %vm1138 = vcmp.lt.s32.totalorder %v1084, 1
      %v1139 = vsel %vm1138, %v1135, %v1137
      %v1140 = vsel %vm1138, %v1137, %v1135
      %s1141 = scalar_lea.vmem %s3, 3
      %v1142 = vld [vmem:[%s1141] ss:$8 sm:$0x3]
      %v1144 = vperm.slane %v1142, 0
      %v1145 = vperm.slane %v1142, 1
      %v1148 = vmul.f32 %v1140, %v1144
      %v1149 = vmul.f32 %v1139, %v1145
      %1150 = vst [vmem:[#allocation2 + $0xf0] sm:$0xff] %v1148
      %1151 = vst [vmem:[#allocation2 + $0xf8] sm:$0xff] %v1149
      %1152 = vst [vmem:[#allocation2 + $0x140] sm:$0xff] %v1077
      %1153 = vst [vmem:[#allocation2 + $0x148] sm:$0xff] %v1078
      %1154 = vrot.lane.b32.xlu0 %v1077, 127
      %v1155 = vpop.permute.xlu0 %1154
      %1156 = vrot.lane.b32.xlu0 %v1078, 127
      %v1157 = vpop.permute.xlu0 %1156
      %vm1158 = vcmp.lt.s32.totalorder %v1084, 127
      %v1159 = vsel %vm1158, %v1155, %v1157
      %v1160 = vsel %vm1158, %v1157, %v1155
      %s1161 = scalar_lea.vmem %s3, 5
      %v1162 = vld [vmem:[%s1161] ss:$8 sm:$0x3]
      %v1164 = vperm.slane %v1162, 0
      %v1165 = vperm.slane %v1162, 1
      %v1168 = vmul.f32 %v1159, %v1164
      %v1169 = vmul.f32 %v1160, %v1165
      %1170 = vst [vmem:[#allocation2 + $0x190] sm:$0xff] %v1168
      %1171 = vst [vmem:[#allocation2 + $0x198] sm:$0xff] %v1169
      %1172 = vrot.lane.b32.xlu0 %v1077, 113
      %v1173 = vpop.permute.xlu0 %1172
      %1174 = vrot.lane.b32.xlu0 %v1078, 113
      %v1175 = vpop.permute.xlu0 %1174
      %vm1176 = vcmp.lt.s32.totalorder %v1084, 113
      %v1177 = vsel %vm1176, %v1173, %v1175
      %v1178 = vsel %vm1176, %v1175, %v1173
      %s1179 = scalar_lea.vmem %s3, 6
      %v1180 = vld [vmem:[%s1179] ss:$8 sm:$0x3]
      %v1182 = vperm.slane %v1180, 0
      %v1183 = vperm.slane %v1180, 1
      %v1186 = vmul.f32 %v1177, %v1182
      %v1187 = vmul.f32 %v1178, %v1183
      %1188 = vst [vmem:[#allocation2 + $0x1e0] sm:$0xff] %v1186
      %1189 = vst [vmem:[#allocation2 + $0x1e8] sm:$0xff] %v1187
      %1190 = vrot.lane.b32.xlu0 %v1077, 112
      %v1191 = vpop.permute.xlu0 %1190
      %1192 = vrot.lane.b32.xlu0 %v1078, 112
      %v1193 = vpop.permute.xlu0 %1192
      %vm1194 = vcmp.lt.s32.totalorder %v1084, 112
      %v1195 = vsel %vm1194, %v1191, %v1193
      %v1196 = vsel %vm1194, %v1193, %v1191
      %s1197 = scalar_lea.vmem %s3, 7
      %v1198 = vld [vmem:[%s1197] ss:$8 sm:$0x3]
      %v1200 = vperm.slane %v1198, 0
      %v1201 = vperm.slane %v1198, 1
      %v1204 = vmul.f32 %v1195, %v1200
      %v1205 = vmul.f32 %v1196, %v1201
      %1206 = vst [vmem:[#allocation2 + $0x230] sm:$0xff] %v1204
      %1207 = vst [vmem:[#allocation2 + $0x238] sm:$0xff] %v1205
      %1208 = vrot.lane.b32.xlu0 %v1077, 111
      %v1209 = vpop.permute.xlu0 %1208
      %1210 = vrot.lane.b32.xlu0 %v1078, 111
      %v1211 = vpop.permute.xlu0 %1210
      %vm1212 = vcmp.lt.s32.totalorder %v1084, 111
      %v1213 = vsel %vm1212, %v1209, %v1211
      %v1214 = vsel %vm1212, %v1211, %v1209
      %s1215 = scalar_lea.vmem %s3, 16
      %v1216 = vld [vmem:[%s1215] ss:$8 sm:$0x3]
      %v1218 = vperm.slane %v1216, 0
      %v1219 = vperm.slane %v1216, 1
      %v1222 = vmul.f32 %v1213, %v1218
      %v1223 = vmul.f32 %v1214, %v1219
      %1224 = vst [vmem:[#allocation2 + $0x280] sm:$0xff] %v1222
      %1225 = vst [vmem:[#allocation2 + $0x288] sm:$0xff] %v1223
      %v1226 = vld [vmem:[%s5] sm:$0xff]
      %v1227 = vld [vmem:[%s5 + $0x8] sm:$0xff]
      %v1228 = vld [vmem:[%s5 + $0x10] sm:$0xff]
      %v1229 = vld [vmem:[#allocation2] sm:$0xff]
      %v1230 = vld [vmem:[#allocation2 + $0x8] sm:$0xff]
      %v1231 = vld [vmem:[#allocation2 + $0x10] sm:$0xff]
      %v1232 = vld [vmem:[#allocation2 + $0x18] sm:$0xff]
      %v1233 = vld [vmem:[#allocation2 + $0x20] sm:$0xff]
      %v1234 = vld [vmem:[#allocation2 + $0x28] sm:$0xff]
      %v1235 = vld [vmem:[#allocation2 + $0x30] sm:$0xff]
      %v1236 = vld [vmem:[#allocation2 + $0x38] sm:$0xff]
      %v1237 = vld [vmem:[#allocation2 + $0x40] sm:$0xff]
      %v1238 = vld [vmem:[#allocation2 + $0x48] sm:$0xff]
      %v1239 = vld [vmem:[#allocation2 + $0x50] sm:$0xff]
      %v1240 = vld [vmem:[#allocation2 + $0x58] sm:$0xff]
      %v1241 = vld [vmem:[#allocation2 + $0x60] sm:$0xff]
      %v1242 = vld [vmem:[#allocation2 + $0x68] sm:$0xff]
      %v1243 = vld [vmem:[#allocation2 + $0x70] sm:$0xff]
      %v1244 = vld [vmem:[#allocation2 + $0x78] sm:$0xff]
      %v1245 = vld [vmem:[#allocation2 + $0x80] sm:$0xff]
      %v1246 = vld [vmem:[#allocation2 + $0x88] sm:$0xff]
      %v1247 = vld [vmem:[#allocation2 + $0x90] sm:$0xff]
      %v1248 = vld [vmem:[#allocation2 + $0x98] sm:$0xff]
      %v1249 = vld [vmem:[#allocation2 + $0xa0] sm:$0xff]
      %v1250 = vld [vmem:[#allocation2 + $0xa8] sm:$0xff]
      %v1251 = vld [vmem:[#allocation2 + $0xb0] sm:$0xff]
      %v1252 = vld [vmem:[#allocation2 + $0xb8] sm:$0xff]
      %v1253 = vld [vmem:[#allocation2 + $0xc0] sm:$0xff]
      %v1254 = vld [vmem:[#allocation2 + $0xc8] sm:$0xff]
      %v1255 = vld [vmem:[#allocation2 + $0xd0] sm:$0xff]
      %v1256 = vld [vmem:[#allocation2 + $0xd8] sm:$0xff]
      %v1257 = vld [vmem:[#allocation2 + $0xe0] sm:$0xff]
      %v1258 = vld [vmem:[#allocation2 + $0xe8] sm:$0xff]
      %v1259 = vld [vmem:[#allocation2 + $0xf0] sm:$0xff]
      %v1260 = vld [vmem:[#allocation2 + $0xf8] sm:$0xff]
      %v1261 = vld [vmem:[#allocation2 + $0x100] sm:$0xff]
      %v1262 = vld [vmem:[#allocation2 + $0x108] sm:$0xff]
      %v1263 = vld [vmem:[#allocation2 + $0x110] sm:$0xff]
      %v1264 = vld [vmem:[#allocation2 + $0x118] sm:$0xff]
      %v1265 = vld [vmem:[#allocation2 + $0x120] sm:$0xff]
      %v1266 = vld [vmem:[#allocation2 + $0x128] sm:$0xff]
      %v1267 = vld [vmem:[#allocation2 + $0x130] sm:$0xff]
      %v1268 = vld [vmem:[#allocation2 + $0x138] sm:$0xff]
      %v1269 = vld [vmem:[#allocation2 + $0x140] sm:$0xff]
      %v1270 = vld [vmem:[#allocation2 + $0x148] sm:$0xff]
      %v1271 = vld [vmem:[#allocation2 + $0x150] sm:$0xff]
      %v1272 = vld [vmem:[#allocation2 + $0x158] sm:$0xff]
      %v1273 = vld [vmem:[#allocation2 + $0x160] sm:$0xff]
      %v1274 = vld [vmem:[#allocation2 + $0x168] sm:$0xff]
      %v1275 = vld [vmem:[#allocation2 + $0x170] sm:$0xff]
      %v1276 = vld [vmem:[#allocation2 + $0x178] sm:$0xff]
      %v1277 = vld [vmem:[#allocation2 + $0x180] sm:$0xff]
      %v1278 = vld [vmem:[#allocation2 + $0x188] sm:$0xff]
      %v1279 = vld [vmem:[#allocation2 + $0x190] sm:$0xff]
      %v1280 = vld [vmem:[#allocation2 + $0x198] sm:$0xff]
      %v1281 = vld [vmem:[#allocation2 + $0x1a0] sm:$0xff]
      %v1282 = vld [vmem:[#allocation2 + $0x1a8] sm:$0xff]
      %v1283 = vld [vmem:[#allocation2 + $0x1b0] sm:$0xff]
      %v1284 = vld [vmem:[#allocation2 + $0x1b8] sm:$0xff]
      %v1285 = vld [vmem:[#allocation2 + $0x1c0] sm:$0xff]
      %v1286 = vld [vmem:[#allocation2 + $0x1c8] sm:$0xff]
      %v1287 = vld [vmem:[#allocation2 + $0x1d0] sm:$0xff]
      %v1288 = vld [vmem:[#allocation2 + $0x1d8] sm:$0xff]
      %v1289 = vld [vmem:[#allocation2 + $0x1e0] sm:$0xff]
      %v1290 = vld [vmem:[#allocation2 + $0x1e8] sm:$0xff]
      %v1291 = vld [vmem:[#allocation2 + $0x1f0] sm:$0xff]
      %v1292 = vld [vmem:[#allocation2 + $0x1f8] sm:$0xff]
      %v1293 = vld [vmem:[#allocation2 + $0x200] sm:$0xff]
      %v1294 = vld [vmem:[#allocation2 + $0x208] sm:$0xff]
      %v1295 = vld [vmem:[#allocation2 + $0x210] sm:$0xff]
      %v1296 = vld [vmem:[#allocation2 + $0x218] sm:$0xff]
      %v1297 = vld [vmem:[#allocation2 + $0x220] sm:$0xff]
      %v1298 = vld [vmem:[#allocation2 + $0x228] sm:$0xff]
      %v1299 = vld [vmem:[#allocation2 + $0x230] sm:$0xff]
      %v1300 = vld [vmem:[#allocation2 + $0x238] sm:$0xff]
      %v1301 = vld [vmem:[#allocation2 + $0x240] sm:$0xff]
      %v1302 = vld [vmem:[#allocation2 + $0x248] sm:$0xff]
      %v1303 = vld [vmem:[#allocation2 + $0x250] sm:$0xff]
      %v1304 = vld [vmem:[#allocation2 + $0x258] sm:$0xff]
      %v1305 = vld [vmem:[#allocation2 + $0x260] sm:$0xff]
      %v1306 = vld [vmem:[#allocation2 + $0x268] sm:$0xff]
      %v1307 = vld [vmem:[#allocation2 + $0x270] sm:$0xff]
      %v1308 = vld [vmem:[#allocation2 + $0x278] sm:$0xff]
      %v1309 = vld [vmem:[#allocation2 + $0x280] sm:$0xff]
      %v1310 = vld [vmem:[#allocation2 + $0x288] sm:$0xff]
      %v1311 = vld [vmem:[#allocation2 + $0x290] sm:$0xff]
      %v1312 = vld [vmem:[#allocation2 + $0x298] sm:$0xff]
      %v1313 = vld [vmem:[#allocation2 + $0x2a0] sm:$0xff]
      %v1314 = vld [vmem:[#allocation2 + $0x2a8] sm:$0xff]
      %v1315 = vld [vmem:[#allocation2 + $0x2b0] sm:$0xff]
      %v1316 = vld [vmem:[#allocation2 + $0x2b8] sm:$0xff]
      %v1317 = vld [vmem:[#allocation2 + $0x2c0] sm:$0xff]
      %v1318 = vld [vmem:[#allocation2 + $0x2c8] sm:$0xff]
      %v1319 = vld [vmem:[%s7] sm:$0xff]
      %1321 = vset.pattern.permute.xlu0 0
      %1322 = vperm.xlu0 %1321, %v1319
      %v1323 = vpop.permute.xlu0 %1322
      %vm1325 = vcmask 850944
      %v1327 = vsel %vm1325, %v1228, 0
      %1329 = vmatpush.msra.mxu0 %v1259
      %1330 = vmatpush.msra.mxu0 %v1257
      %1331 = vmatpush.msra.mxu0 %v1255
      %1332 = vmatpush.msra.mxu0 %v1253
      %1333 = vmatpush.msra.mxu0 %v1251
      %1334 = vmatpush.msra.mxu0 %v1249
      %1335 = vmatpush.msra.mxu0 %v1247
      %1336 = vmatpush.msra.mxu0 %v1245
      %1337 = vmatpush.msra.mxu0 %v1243
      %1338 = vmatpush.msra.mxu0 %v1241
      %1339 = vmatpush.msra.mxu0 %v1239
      %1340 = vmatpush.msra.mxu0 %v1237
      %1341 = vmatpush.msra.mxu0 %v1235
      %1342 = vmatpush.msra.mxu0 %v1233
      %1343 = vmatpush.msra.mxu0 %v1231
      %1344 = vmatpush.msra.mxu0 %v1229
      %1345 = vmatmul.f32.gmra.mxu0 %v1226
      %v1346 = vpop.f32.mrf.mxu0
      %v1347 = vadd.f32 %v1323, %v1346
      %1348 = vdwg.mxu0
      %1349 = vmatpush.msra.mxu0 %v1291
      %1350 = vmatpush.msra.mxu0 %v1289
      %1351 = vmatpush.msra.mxu0 %v1287
      %1352 = vmatpush.msra.mxu0 %v1285
      %1353 = vmatpush.msra.mxu0 %v1283
      %1354 = vmatpush.msra.mxu0 %v1281
      %1355 = vmatpush.msra.mxu0 %v1279
      %1356 = vmatpush.msra.mxu0 %v1277
      %1357 = vmatpush.msra.mxu0 %v1275
      %1358 = vmatpush.msra.mxu0 %v1273
      %1359 = vmatpush.msra.mxu0 %v1271
      %1360 = vmatpush.msra.mxu0 %v1269
      %1361 = vmatpush.msra.mxu0 %v1267
      %1362 = vmatpush.msra.mxu0 %v1265
      %1363 = vmatpush.msra.mxu0 %v1263
      %1364 = vmatpush.msra.mxu0 %v1261
      %1365 = vmatmul.f32.gmra.mxu0 %v1227
      %v1366 = vpop.f32.mrf.mxu0
      %v1367 = vadd.f32 %v1347, %v1366
      %1368 = vdwg.mxu0
      %1369 = vmatpush.msra.mxu0 0.0
      %1370 = vmatpush.msra.mxu0 0.0
      %1371 = vmatpush.msra.mxu0 0.0
      %1372 = vmatpush.msra.mxu0 %v1317
      %1373 = vmatpush.msra.mxu0 %v1315
      %1374 = vmatpush.msra.mxu0 %v1313
      %1375 = vmatpush.msra.mxu0 %v1311
      %1376 = vmatpush.msra.mxu0 %v1309
      %1377 = vmatpush.msra.mxu0 %v1307
      %1378 = vmatpush.msra.mxu0 %v1305
      %1379 = vmatpush.msra.mxu0 %v1303
      %1380 = vmatpush.msra.mxu0 %v1301
      %1381 = vmatpush.msra.mxu0 %v1299
      %1382 = vmatpush.msra.mxu0 %v1297
      %1383 = vmatpush.msra.mxu0 %v1295
      %1384 = vmatpush.msra.mxu0 %v1293
      %1385 = vmatmul.f32.gmra.mxu0 %v1327
      %v1386 = vpop.f32.mrf.mxu0
      %v1387 = vadd.f32 %v1367, %v1386
      %1388 = vdwg.mxu0
      %1389 = vmatpush.msra.mxu0 %v1260
      %1390 = vmatpush.msra.mxu0 %v1258
      %1391 = vmatpush.msra.mxu0 %v1256
      %1392 = vmatpush.msra.mxu0 %v1254
      %1393 = vmatpush.msra.mxu0 %v1252
      %1394 = vmatpush.msra.mxu0 %v1250
      %1395 = vmatpush.msra.mxu0 %v1248
      %1396 = vmatpush.msra.mxu0 %v1246
      %1397 = vmatpush.msra.mxu0 %v1244
      %1398 = vmatpush.msra.mxu0 %v1242
      %1399 = vmatpush.msra.mxu0 %v1240
      %1400 = vmatpush.msra.mxu0 %v1238
      %1401 = vmatpush.msra.mxu0 %v1236
      %1402 = vmatpush.msra.mxu0 %v1234
      %1403 = vmatpush.msra.mxu0 %v1232
      %1404 = vmatpush.msra.mxu0 %v1230
      %1405 = vmatmul.f32.gmra.mxu0 %v1226
      %v1406 = vpop.f32.mrf.mxu0
      %v1407 = vadd.f32 %v1323, %v1406
      %1408 = vdwg.mxu0
      %1409 = vmatpush.msra.mxu0 %v1292
      %1410 = vmatpush.msra.mxu0 %v1290
      %1411 = vmatpush.msra.mxu0 %v1288
      %1412 = vmatpush.msra.mxu0 %v1286
      %1413 = vmatpush.msra.mxu0 %v1284
      %1414 = vmatpush.msra.mxu0 %v1282
      %1415 = vmatpush.msra.mxu0 %v1280
      %1416 = vmatpush.msra.mxu0 %v1278
      %1417 = vmatpush.msra.mxu0 %v1276
      %1418 = vmatpush.msra.mxu0 %v1274
      %1419 = vmatpush.msra.mxu0 %v1272
      %1420 = vmatpush.msra.mxu0 %v1270
      %1421 = vmatpush.msra.mxu0 %v1268
      %1422 = vmatpush.msra.mxu0 %v1266
      %1423 = vmatpush.msra.mxu0 %v1264
      %1424 = vmatpush.msra.mxu0 %v1262
      %1425 = vmatmul.f32.gmra.mxu0 %v1227
      %v1426 = vpop.f32.mrf.mxu0
      %v1427 = vadd.f32 %v1407, %v1426
      %1428 = vdwg.mxu0
      %1429 = vmatpush.msra.mxu0 0.0
      %1430 = vmatpush.msra.mxu0 0.0
      %1431 = vmatpush.msra.mxu0 0.0
      %1432 = vmatpush.msra.mxu0 %v1318
      %1433 = vmatpush.msra.mxu0 %v1316
      %1434 = vmatpush.msra.mxu0 %v1314
      %1435 = vmatpush.msra.mxu0 %v1312
      %1436 = vmatpush.msra.mxu0 %v1310
      %1437 = vmatpush.msra.mxu0 %v1308
      %1438 = vmatpush.msra.mxu0 %v1306
      %1439 = vmatpush.msra.mxu0 %v1304
      %1440 = vmatpush.msra.mxu0 %v1302
      %1441 = vmatpush.msra.mxu0 %v1300
      %1442 = vmatpush.msra.mxu0 %v1298
      %1443 = vmatpush.msra.mxu0 %v1296
      %1444 = vmatpush.msra.mxu0 %v1294
      %1445 = vmatmul.f32.gmra.mxu0 %v1327
      %v1446 = vpop.f32.mrf.mxu0
      %v1447 = vadd.f32 %v1427, %v1446
      %1448 = vdwg.mxu0
      %v1449 = vmul.f32 %v1387, 0.2
      %v1450 = vmul.f32 %v1447, 0.2
      %v1451 = vmax.f32 %v1387, %v1449
      %v1452 = vmax.f32 %v1447, %v1450
      %1453 = vrot.lane.b32.xlu0 %v1451, 17
      %v1454 = vpop.permute.xlu0 %1453
      %1455 = vrot.lane.b32.xlu0 %v1452, 17
      %v1456 = vpop.permute.xlu0 %1455
      %v1457 = vsel %vm1085, %v1454, %v1456
      %v1458 = vsel %vm1085, %v1456, %v1454
      %v1459 = vld [vmem:[%s3] ss:$8 sm:$0x3]
      %v1461 = vperm.slane %v1459, 0
      %v1462 = vperm.slane %v1459, 1
      %v1465 = vmul.f32 %v1458, %v1461
      %v1466 = vmul.f32 %v1457, %v1462
      %1467 = vst [vmem:[#allocation2 + $0x10] sm:$0xff] %v1465
      %1468 = vst [vmem:[#allocation2 + $0x18] sm:$0xff] %v1466
      %1469 = vrot.lane.b32.xlu0 %v1451, 16
      %v1470 = vpop.permute.xlu0 %1469
      %1471 = vrot.lane.b32.xlu0 %v1452, 16
      %v1472 = vpop.permute.xlu0 %1471
      %v1473 = vsel %vm1102, %v1470, %v1472
      %v1474 = vsel %vm1102, %v1472, %v1470
      %v1475 = vld [vmem:[%s1105] ss:$8 sm:$0x3]
      %v1477 = vperm.slane %v1475, 0
      %v1478 = vperm.slane %v1475, 1
      %v1481 = vmul.f32 %v1474, %v1477
      %v1482 = vmul.f32 %v1473, %v1478
      %1483 = vst [vmem:[#allocation2 + $0x60] sm:$0xff] %v1481
      %1484 = vst [vmem:[#allocation2 + $0x68] sm:$0xff] %v1482
      %1485 = vrot.lane.b32.xlu0 %v1451, 15
      %v1486 = vpop.permute.xlu0 %1485
      %1487 = vrot.lane.b32.xlu0 %v1452, 15
      %v1488 = vpop.permute.xlu0 %1487
      %v1489 = vsel %vm1120, %v1486, %v1488
      %v1490 = vsel %vm1120, %v1488, %v1486
      %v1491 = vld [vmem:[%s1123] ss:$8 sm:$0x3]
      %v1493 = vperm.slane %v1491, 0
      %v1494 = vperm.slane %v1491, 1
      %v1497 = vmul.f32 %v1490, %v1493
      %v1498 = vmul.f32 %v1489, %v1494
      %1499 = vst [vmem:[#allocation2 + $0xb0] sm:$0xff] %v1497
      %1500 = vst [vmem:[#allocation2 + $0xb8] sm:$0xff] %v1498
      %1501 = vrot.lane.b32.xlu0 %v1451, 1
      %v1502 = vpop.permute.xlu0 %1501
      %1503 = vrot.lane.b32.xlu0 %v1452, 1
      %v1504 = vpop.permute.xlu0 %1503
      %v1505 = vsel %vm1138, %v1502, %v1504
      %v1506 = vsel %vm1138, %v1504, %v1502
      %v1507 = vld [vmem:[%s1141] ss:$8 sm:$0x3]
      %v1509 = vperm.slane %v1507, 0
      %v1510 = vperm.slane %v1507, 1
      %v1513 = vmul.f32 %v1506, %v1509
      %v1514 = vmul.f32 %v1505, %v1510
      %1515 = vst [vmem:[#allocation2 + $0x100] sm:$0xff] %v1513
      %1516 = vst [vmem:[#allocation2 + $0x108] sm:$0xff] %v1514
      %1517 = vst [vmem:[#allocation2 + $0x150] sm:$0xff] %v1451
      %1518 = vst [vmem:[#allocation2 + $0x158] sm:$0xff] %v1452
      %1519 = vrot.lane.b32.xlu0 %v1451, 127
      %v1520 = vpop.permute.xlu0 %1519
      %1521 = vrot.lane.b32.xlu0 %v1452, 127
      %v1522 = vpop.permute.xlu0 %1521
      %v1523 = vsel %vm1158, %v1520, %v1522
      %v1524 = vsel %vm1158, %v1522, %v1520
      %v1525 = vld [vmem:[%s1161] ss:$8 sm:$0x3]
      %v1527 = vperm.slane %v1525, 0
      %v1528 = vperm.slane %v1525, 1
      %v1531 = vmul.f32 %v1523, %v1527
      %v1532 = vmul.f32 %v1524, %v1528
      %1533 = vst [vmem:[#allocation2 + $0x1a0] sm:$0xff] %v1531
      %1534 = vst [vmem:[#allocation2 + $0x1a8] sm:$0xff] %v1532
      %1535 = vrot.lane.b32.xlu0 %v1451, 113
      %v1536 = vpop.permute.xlu0 %1535
      %1537 = vrot.lane.b32.xlu0 %v1452, 113
      %v1538 = vpop.permute.xlu0 %1537
      %v1539 = vsel %vm1176, %v1536, %v1538
      %v1540 = vsel %vm1176, %v1538, %v1536
      %v1541 = vld [vmem:[%s1179] ss:$8 sm:$0x3]
      %v1543 = vperm.slane %v1541, 0
      %v1544 = vperm.slane %v1541, 1
      %v1547 = vmul.f32 %v1539, %v1543
      %v1548 = vmul.f32 %v1540, %v1544
      %1549 = vst [vmem:[#allocation2 + $0x1f0] sm:$0xff] %v1547
      %1550 = vst [vmem:[#allocation2 + $0x1f8] sm:$0xff] %v1548
      %1551 = vrot.lane.b32.xlu0 %v1451, 112
      %v1552 = vpop.permute.xlu0 %1551
      %1553 = vrot.lane.b32.xlu0 %v1452, 112
      %v1554 = vpop.permute.xlu0 %1553
      %v1555 = vsel %vm1194, %v1552, %v1554
      %v1556 = vsel %vm1194, %v1554, %v1552
      %v1557 = vld [vmem:[%s1197] ss:$8 sm:$0x3]
      %v1559 = vperm.slane %v1557, 0
      %v1560 = vperm.slane %v1557, 1
      %v1563 = vmul.f32 %v1555, %v1559
      %v1564 = vmul.f32 %v1556, %v1560
      %1565 = vst [vmem:[#allocation2 + $0x240] sm:$0xff] %v1563
      %1566 = vst [vmem:[#allocation2 + $0x248] sm:$0xff] %v1564
      %1567 = vrot.lane.b32.xlu0 %v1451, 111
      %v1568 = vpop.permute.xlu0 %1567
      %1569 = vrot.lane.b32.xlu0 %v1452, 111
      %v1570 = vpop.permute.xlu0 %1569
      %v1571 = vsel %vm1212, %v1568, %v1570
      %v1572 = vsel %vm1212, %v1570, %v1568
      %v1573 = vld [vmem:[%s1215] ss:$8 sm:$0x3]
      %v1575 = vperm.slane %v1573, 0
      %v1576 = vperm.slane %v1573, 1
      %v1579 = vmul.f32 %v1571, %v1575
      %v1580 = vmul.f32 %v1572, %v1576
      %1581 = vst [vmem:[#allocation2 + $0x290] sm:$0xff] %v1579
      %1582 = vst [vmem:[#allocation2 + $0x298] sm:$0xff] %v1580
      %v1583 = vld [vmem:[%s9] sm:$0xff]
      %v1584 = vld [vmem:[%s9 + $0x8] sm:$0xff]
      %v1585 = vld [vmem:[%s9 + $0x10] sm:$0xff]
      %v1586 = vld [vmem:[#allocation2] sm:$0xff]
      %v1587 = vld [vmem:[#allocation2 + $0x8] sm:$0xff]
      %v1588 = vld [vmem:[#allocation2 + $0x10] sm:$0xff]
      %v1589 = vld [vmem:[#allocation2 + $0x18] sm:$0xff]
      %v1590 = vld [vmem:[#allocation2 + $0x20] sm:$0xff]
      %v1591 = vld [vmem:[#allocation2 + $0x28] sm:$0xff]
      %v1592 = vld [vmem:[#allocation2 + $0x30] sm:$0xff]
      %v1593 = vld [vmem:[#allocation2 + $0x38] sm:$0xff]
      %v1594 = vld [vmem:[#allocation2 + $0x40] sm:$0xff]
      %v1595 = vld [vmem:[#allocation2 + $0x48] sm:$0xff]
      %v1596 = vld [vmem:[#allocation2 + $0x50] sm:$0xff]
      %v1597 = vld [vmem:[#allocation2 + $0x58] sm:$0xff]
      %v1598 = vld [vmem:[#allocation2 + $0x60] sm:$0xff]
      %v1599 = vld [vmem:[#allocation2 + $0x68] sm:$0xff]
      %v1600 = vld [vmem:[#allocation2 + $0x70] sm:$0xff]
      %v1601 = vld [vmem:[#allocation2 + $0x78] sm:$0xff]
      %v1602 = vld [vmem:[#allocation2 + $0x80] sm:$0xff]
      %v1603 = vld [vmem:[#allocation2 + $0x88] sm:$0xff]
      %v1604 = vld [vmem:[#allocation2 + $0x90] sm:$0xff]
      %v1605 = vld [vmem:[#allocation2 + $0x98] sm:$0xff]
      %v1606 = vld [vmem:[#allocation2 + $0xa0] sm:$0xff]
      %v1607 = vld [vmem:[#allocation2 + $0xa8] sm:$0xff]
      %v1608 = vld [vmem:[#allocation2 + $0xb0] sm:$0xff]
      %v1609 = vld [vmem:[#allocation2 + $0xb8] sm:$0xff]
      %v1610 = vld [vmem:[#allocation2 + $0xc0] sm:$0xff]
      %v1611 = vld [vmem:[#allocation2 + $0xc8] sm:$0xff]
      %v1612 = vld [vmem:[#allocation2 + $0xd0] sm:$0xff]
      %v1613 = vld [vmem:[#allocation2 + $0xd8] sm:$0xff]
      %v1614 = vld [vmem:[#allocation2 + $0xe0] sm:$0xff]
      %v1615 = vld [vmem:[#allocation2 + $0xe8] sm:$0xff]
      %v1616 = vld [vmem:[#allocation2 + $0xf0] sm:$0xff]
      %v1617 = vld [vmem:[#allocation2 + $0xf8] sm:$0xff]
      %v1618 = vld [vmem:[#allocation2 + $0x100] sm:$0xff]
      %v1619 = vld [vmem:[#allocation2 + $0x108] sm:$0xff]
      %v1620 = vld [vmem:[#allocation2 + $0x110] sm:$0xff]
      %v1621 = vld [vmem:[#allocation2 + $0x118] sm:$0xff]
      %v1622 = vld [vmem:[#allocation2 + $0x120] sm:$0xff]
      %v1623 = vld [vmem:[#allocation2 + $0x128] sm:$0xff]
      %v1624 = vld [vmem:[#allocation2 + $0x130] sm:$0xff]
      %v1625 = vld [vmem:[#allocation2 + $0x138] sm:$0xff]
      %v1626 = vld [vmem:[#allocation2 + $0x140] sm:$0xff]
      %v1627 = vld [vmem:[#allocation2 + $0x148] sm:$0xff]
      %v1628 = vld [vmem:[#allocation2 + $0x150] sm:$0xff]
      %v1629 = vld [vmem:[#allocation2 + $0x158] sm:$0xff]
      %v1630 = vld [vmem:[#allocation2 + $0x160] sm:$0xff]
      %v1631 = vld [vmem:[#allocation2 + $0x168] sm:$0xff]
      %v1632 = vld [vmem:[#allocation2 + $0x170] sm:$0xff]
      %v1633 = vld [vmem:[#allocation2 + $0x178] sm:$0xff]
      %v1634 = vld [vmem:[#allocation2 + $0x180] sm:$0xff]
      %v1635 = vld [vmem:[#allocation2 + $0x188] sm:$0xff]
      %v1636 = vld [vmem:[#allocation2 + $0x190] sm:$0xff]
      %v1637 = vld [vmem:[#allocation2 + $0x198] sm:$0xff]
      %v1638 = vld [vmem:[#allocation2 + $0x1a0] sm:$0xff]
      %v1639 = vld [vmem:[#allocation2 + $0x1a8] sm:$0xff]
      %v1640 = vld [vmem:[#allocation2 + $0x1b0] sm:$0xff]
      %v1641 = vld [vmem:[#allocation2 + $0x1b8] sm:$0xff]
      %v1642 = vld [vmem:[#allocation2 + $0x1c0] sm:$0xff]
      %v1643 = vld [vmem:[#allocation2 + $0x1c8] sm:$0xff]
      %v1644 = vld [vmem:[#allocation2 + $0x1d0] sm:$0xff]
      %v1645 = vld [vmem:[#allocation2 + $0x1d8] sm:$0xff]
      %v1646 = vld [vmem:[#allocation2 + $0x1e0] sm:$0xff]
      %v1647 = vld [vmem:[#allocation2 + $0x1e8] sm:$0xff]
      %v1648 = vld [vmem:[#allocation2 + $0x1f0] sm:$0xff]
      %v1649 = vld [vmem:[#allocation2 + $0x1f8] sm:$0xff]
      %v1650 = vld [vmem:[#allocation2 + $0x200] sm:$0xff]
      %v1651 = vld [vmem:[#allocation2 + $0x208] sm:$0xff]
      %v1652 = vld [vmem:[#allocation2 + $0x210] sm:$0xff]
      %v1653 = vld [vmem:[#allocation2 + $0x218] sm:$0xff]
      %v1654 = vld [vmem:[#allocation2 + $0x220] sm:$0xff]
      %v1655 = vld [vmem:[#allocation2 + $0x228] sm:$0xff]
      %v1656 = vld [vmem:[#allocation2 + $0x230] sm:$0xff]
      %v1657 = vld [vmem:[#allocation2 + $0x238] sm:$0xff]
      %v1658 = vld [vmem:[#allocation2 + $0x240] sm:$0xff]
      %v1659 = vld [vmem:[#allocation2 + $0x248] sm:$0xff]
      %v1660 = vld [vmem:[#allocation2 + $0x250] sm:$0xff]
      %v1661 = vld [vmem:[#allocation2 + $0x258] sm:$0xff]
      %v1662 = vld [vmem:[#allocation2 + $0x260] sm:$0xff]
      %v1663 = vld [vmem:[#allocation2 + $0x268] sm:$0xff]
      %v1664 = vld [vmem:[#allocation2 + $0x270] sm:$0xff]
      %v1665 = vld [vmem:[#allocation2 + $0x278] sm:$0xff]
      %v1666 = vld [vmem:[#allocation2 + $0x280] sm:$0xff]
      %v1667 = vld [vmem:[#allocation2 + $0x288] sm:$0xff]
      %v1668 = vld [vmem:[#allocation2 + $0x290] sm:$0xff]
      %v1669 = vld [vmem:[#allocation2 + $0x298] sm:$0xff]
      %v1670 = vld [vmem:[#allocation2 + $0x2a0] sm:$0xff]
      %v1671 = vld [vmem:[#allocation2 + $0x2a8] sm:$0xff]
      %v1672 = vld [vmem:[#allocation2 + $0x2b0] sm:$0xff]
      %v1673 = vld [vmem:[#allocation2 + $0x2b8] sm:$0xff]
      %v1674 = vld [vmem:[#allocation2 + $0x2c0] sm:$0xff]
      %v1675 = vld [vmem:[#allocation2 + $0x2c8] sm:$0xff]
      %v1676 = vld [vmem:[%s11] sm:$0xff]
      %1678 = vset.pattern.permute.xlu0 0
      %1679 = vperm.xlu0 %1678, %v1676
      %v1680 = vpop.permute.xlu0 %1679
      %v1683 = vsel %vm1325, %v1585, 0
      %1685 = vmatpush.msra.mxu0 %v1616
      %1686 = vmatpush.msra.mxu0 %v1614
      %1687 = vmatpush.msra.mxu0 %v1612
      %1688 = vmatpush.msra.mxu0 %v1610
      %1689 = vmatpush.msra.mxu0 %v1608
      %1690 = vmatpush.msra.mxu0 %v1606
      %1691 = vmatpush.msra.mxu0 %v1604
      %1692 = vmatpush.msra.mxu0 %v1602
      %1693 = vmatpush.msra.mxu0 %v1600
      %1694 = vmatpush.msra.mxu0 %v1598
      %1695 = vmatpush.msra.mxu0 %v1596
      %1696 = vmatpush.msra.mxu0 %v1594
      %1697 = vmatpush.msra.mxu0 %v1592
      %1698 = vmatpush.msra.mxu0 %v1590
      %1699 = vmatpush.msra.mxu0 %v1588
      %1700 = vmatpush.msra.mxu0 %v1586
      %1701 = vmatmul.f32.gmra.mxu0 %v1583
      %v1702 = vpop.f32.mrf.mxu0
      %v1703 = vadd.f32 %v1680, %v1702
      %1704 = vdwg.mxu0
      %1705 = vmatpush.msra.mxu0 %v1648
      %1706 = vmatpush.msra.mxu0 %v1646
      %1707 = vmatpush.msra.mxu0 %v1644
      %1708 = vmatpush.msra.mxu0 %v1642
      %1709 = vmatpush.msra.mxu0 %v1640
      %1710 = vmatpush.msra.mxu0 %v1638
      %1711 = vmatpush.msra.mxu0 %v1636
      %1712 = vmatpush.msra.mxu0 %v1634
      %1713 = vmatpush.msra.mxu0 %v1632
      %1714 = vmatpush.msra.mxu0 %v1630
      %1715 = vmatpush.msra.mxu0 %v1628
      %1716 = vmatpush.msra.mxu0 %v1626
      %1717 = vmatpush.msra.mxu0 %v1624
      %1718 = vmatpush.msra.mxu0 %v1622
      %1719 = vmatpush.msra.mxu0 %v1620
      %1720 = vmatpush.msra.mxu0 %v1618
      %1721 = vmatmul.f32.gmra.mxu0 %v1584
      %v1722 = vpop.f32.mrf.mxu0
      %v1723 = vadd.f32 %v1703, %v1722
      %1724 = vdwg.mxu0
      %1725 = vmatpush.msra.mxu0 0.0
      %1726 = vmatpush.msra.mxu0 0.0
      %1727 = vmatpush.msra.mxu0 0.0
      %1728 = vmatpush.msra.mxu0 %v1674
      %1729 = vmatpush.msra.mxu0 %v1672
      %1730 = vmatpush.msra.mxu0 %v1670
      %1731 = vmatpush.msra.mxu0 %v1668
      %1732 = vmatpush.msra.mxu0 %v1666
      %1733 = vmatpush.msra.mxu0 %v1664
      %1734 = vmatpush.msra.mxu0 %v1662
      %1735 = vmatpush.msra.mxu0 %v1660
      %1736 = vmatpush.msra.mxu0 %v1658
      %1737 = vmatpush.msra.mxu0 %v1656
      %1738 = vmatpush.msra.mxu0 %v1654
      %1739 = vmatpush.msra.mxu0 %v1652
      %1740 = vmatpush.msra.mxu0 %v1650
      %1741 = vmatmul.f32.gmra.mxu0 %v1683
      %v1742 = vpop.f32.mrf.mxu0
      %v1743 = vadd.f32 %v1723, %v1742
      %1744 = vdwg.mxu0
      %1745 = vmatpush.msra.mxu0 %v1617
      %1746 = vmatpush.msra.mxu0 %v1615
      %1747 = vmatpush.msra.mxu0 %v1613
      %1748 = vmatpush.msra.mxu0 %v1611
      %1749 = vmatpush.msra.mxu0 %v1609
      %1750 = vmatpush.msra.mxu0 %v1607
      %1751 = vmatpush.msra.mxu0 %v1605
      %1752 = vmatpush.msra.mxu0 %v1603
      %1753 = vmatpush.msra.mxu0 %v1601
      %1754 = vmatpush.msra.mxu0 %v1599
      %1755 = vmatpush.msra.mxu0 %v1597
      %1756 = vmatpush.msra.mxu0 %v1595
      %1757 = vmatpush.msra.mxu0 %v1593
      %1758 = vmatpush.msra.mxu0 %v1591
      %1759 = vmatpush.msra.mxu0 %v1589
      %1760 = vmatpush.msra.mxu0 %v1587
      %1761 = vmatmul.f32.gmra.mxu0 %v1583
      %v1762 = vpop.f32.mrf.mxu0
      %v1763 = vadd.f32 %v1680, %v1762
      %1764 = vdwg.mxu0
      %1765 = vmatpush.msra.mxu0 %v1649
      %1766 = vmatpush.msra.mxu0 %v1647
      %1767 = vmatpush.msra.mxu0 %v1645
      %1768 = vmatpush.msra.mxu0 %v1643
      %1769 = vmatpush.msra.mxu0 %v1641
      %1770 = vmatpush.msra.mxu0 %v1639
      %1771 = vmatpush.msra.mxu0 %v1637
      %1772 = vmatpush.msra.mxu0 %v1635
      %1773 = vmatpush.msra.mxu0 %v1633
      %1774 = vmatpush.msra.mxu0 %v1631
      %1775 = vmatpush.msra.mxu0 %v1629
      %1776 = vmatpush.msra.mxu0 %v1627
      %1777 = vmatpush.msra.mxu0 %v1625
      %1778 = vmatpush.msra.mxu0 %v1623
      %1779 = vmatpush.msra.mxu0 %v1621
      %1780 = vmatpush.msra.mxu0 %v1619
      %1781 = vmatmul.f32.gmra.mxu0 %v1584
      %v1782 = vpop.f32.mrf.mxu0
      %v1783 = vadd.f32 %v1763, %v1782
      %1784 = vdwg.mxu0
      %1785 = vmatpush.msra.mxu0 0.0
      %1786 = vmatpush.msra.mxu0 0.0
      %1787 = vmatpush.msra.mxu0 0.0
      %1788 = vmatpush.msra.mxu0 %v1675
      %1789 = vmatpush.msra.mxu0 %v1673
      %1790 = vmatpush.msra.mxu0 %v1671
      %1791 = vmatpush.msra.mxu0 %v1669
      %1792 = vmatpush.msra.mxu0 %v1667
      %1793 = vmatpush.msra.mxu0 %v1665
      %1794 = vmatpush.msra.mxu0 %v1663
      %1795 = vmatpush.msra.mxu0 %v1661
      %1796 = vmatpush.msra.mxu0 %v1659
      %1797 = vmatpush.msra.mxu0 %v1657
      %1798 = vmatpush.msra.mxu0 %v1655
      %1799 = vmatpush.msra.mxu0 %v1653
      %1800 = vmatpush.msra.mxu0 %v1651
      %1801 = vmatmul.f32.gmra.mxu0 %v1683
      %v1802 = vpop.f32.mrf.mxu0
      %v1803 = vadd.f32 %v1783, %v1802
      %1804 = vdwg.mxu0
      %v1805 = vmul.f32 %v1743, 0.2
      %v1806 = vmul.f32 %v1803, 0.2
      %v1807 = vmax.f32 %v1743, %v1805
      %v1808 = vmax.f32 %v1803, %v1806
      %1809 = vrot.lane.b32.xlu0 %v1807, 17
      %v1810 = vpop.permute.xlu0 %1809
      %1811 = vrot.lane.b32.xlu0 %v1808, 17
      %v1812 = vpop.permute.xlu0 %1811
      %v1813 = vsel %vm1085, %v1810, %v1812
      %v1814 = vsel %vm1085, %v1812, %v1810
      %v1815 = vld [vmem:[%s3] ss:$8 sm:$0x3]
      %v1817 = vperm.slane %v1815, 0
      %v1818 = vperm.slane %v1815, 1
      %v1821 = vmul.f32 %v1814, %v1817
      %v1822 = vmul.f32 %v1813, %v1818
      %1823 = vst [vmem:[#allocation2 + $0x20] sm:$0xff] %v1821
      %1824 = vst [vmem:[#allocation2 + $0x28] sm:$0xff] %v1822
      %1825 = vrot.lane.b32.xlu0 %v1807, 16
      %v1826 = vpop.permute.xlu0 %1825
      %1827 = vrot.lane.b32.xlu0 %v1808, 16
      %v1828 = vpop.permute.xlu0 %1827
      %v1829 = vsel %vm1102, %v1826, %v1828
      %v1830 = vsel %vm1102, %v1828, %v1826
      %v1831 = vld [vmem:[%s1105] ss:$8 sm:$0x3]
      %v1833 = vperm.slane %v1831, 0
      %v1834 = vperm.slane %v1831, 1
      %v1837 = vmul.f32 %v1830, %v1833
      %v1838 = vmul.f32 %v1829, %v1834
      %1839 = vst [vmem:[#allocation2 + $0x70] sm:$0xff] %v1837
      %1840 = vst [vmem:[#allocation2 + $0x78] sm:$0xff] %v1838
      %1841 = vrot.lane.b32.xlu0 %v1807, 15
      %v1842 = vpop.permute.xlu0 %1841
      %1843 = vrot.lane.b32.xlu0 %v1808, 15
      %v1844 = vpop.permute.xlu0 %1843
      %v1845 = vsel %vm1120, %v1842, %v1844
      %v1846 = vsel %vm1120, %v1844, %v1842
      %v1847 = vld [vmem:[%s1123] ss:$8 sm:$0x3]
      %v1849 = vperm.slane %v1847, 0
      %v1850 = vperm.slane %v1847, 1
      %v1853 = vmul.f32 %v1846, %v1849
      %v1854 = vmul.f32 %v1845, %v1850
      %1855 = vst [vmem:[#allocation2 + $0xc0] sm:$0xff] %v1853
      %1856 = vst [vmem:[#allocation2 + $0xc8] sm:$0xff] %v1854
      %1857 = vrot.lane.b32.xlu0 %v1807, 1
      %v1858 = vpop.permute.xlu0 %1857
      %1859 = vrot.lane.b32.xlu0 %v1808, 1
      %v1860 = vpop.permute.xlu0 %1859
      %v1861 = vsel %vm1138, %v1858, %v1860
      %v1862 = vsel %vm1138, %v1860, %v1858
      %v1863 = vld [vmem:[%s1141] ss:$8 sm:$0x3]
      %v1865 = vperm.slane %v1863, 0
      %v1866 = vperm.slane %v1863, 1
      %v1869 = vmul.f32 %v1862, %v1865
      %v1870 = vmul.f32 %v1861, %v1866
      %1871 = vst [vmem:[#allocation2 + $0x110] sm:$0xff] %v1869
      %1872 = vst [vmem:[#allocation2 + $0x118] sm:$0xff] %v1870
      %1873 = vst [vmem:[#allocation2 + $0x160] sm:$0xff] %v1807
      %1874 = vst [vmem:[#allocation2 + $0x168] sm:$0xff] %v1808
      %1875 = vrot.lane.b32.xlu0 %v1807, 127
      %v1876 = vpop.permute.xlu0 %1875
      %1877 = vrot.lane.b32.xlu0 %v1808, 127
      %v1878 = vpop.permute.xlu0 %1877
      %v1879 = vsel %vm1158, %v1876, %v1878
      %v1880 = vsel %vm1158, %v1878, %v1876
      %v1881 = vld [vmem:[%s1161] ss:$8 sm:$0x3]
      %v1883 = vperm.slane %v1881, 0
      %v1884 = vperm.slane %v1881, 1
      %v1887 = vmul.f32 %v1879, %v1883
      %v1888 = vmul.f32 %v1880, %v1884
      %1889 = vst [vmem:[#allocation2 + $0x1b0] sm:$0xff] %v1887
      %1890 = vst [vmem:[#allocation2 + $0x1b8] sm:$0xff] %v1888
      %1891 = vrot.lane.b32.xlu0 %v1807, 113
      %v1892 = vpop.permute.xlu0 %1891
      %1893 = vrot.lane.b32.xlu0 %v1808, 113
      %v1894 = vpop.permute.xlu0 %1893
      %v1895 = vsel %vm1176, %v1892, %v1894
      %v1896 = vsel %vm1176, %v1894, %v1892
      %v1897 = vld [vmem:[%s1179] ss:$8 sm:$0x3]
      %v1899 = vperm.slane %v1897, 0
      %v1900 = vperm.slane %v1897, 1
      %v1903 = vmul.f32 %v1895, %v1899
      %v1904 = vmul.f32 %v1896, %v1900
      %1905 = vst [vmem:[#allocation2 + $0x200] sm:$0xff] %v1903
      %1906 = vst [vmem:[#allocation2 + $0x208] sm:$0xff] %v1904
      %1907 = vrot.lane.b32.xlu0 %v1807, 112
      %v1908 = vpop.permute.xlu0 %1907
      %1909 = vrot.lane.b32.xlu0 %v1808, 112
      %v1910 = vpop.permute.xlu0 %1909
      %v1911 = vsel %vm1194, %v1908, %v1910
      %v1912 = vsel %vm1194, %v1910, %v1908
      %v1913 = vld [vmem:[%s1197] ss:$8 sm:$0x3]
      %v1915 = vperm.slane %v1913, 0
      %v1916 = vperm.slane %v1913, 1
      %v1919 = vmul.f32 %v1911, %v1915
      %v1920 = vmul.f32 %v1912, %v1916
      %1921 = vst [vmem:[#allocation2 + $0x250] sm:$0xff] %v1919
      %1922 = vst [vmem:[#allocation2 + $0x258] sm:$0xff] %v1920
      %1923 = vrot.lane.b32.xlu0 %v1807, 111
      %v1924 = vpop.permute.xlu0 %1923
      %1925 = vrot.lane.b32.xlu0 %v1808, 111
      %v1926 = vpop.permute.xlu0 %1925
      %v1927 = vsel %vm1212, %v1924, %v1926
      %v1928 = vsel %vm1212, %v1926, %v1924
      %v1929 = vld [vmem:[%s1215] ss:$8 sm:$0x3]
      %v1931 = vperm.slane %v1929, 0
      %v1932 = vperm.slane %v1929, 1
      %v1935 = vmul.f32 %v1927, %v1931
      %v1936 = vmul.f32 %v1928, %v1932
      %1937 = vst [vmem:[#allocation2 + $0x2a0] sm:$0xff] %v1935
      %1938 = vst [vmem:[#allocation2 + $0x2a8] sm:$0xff] %v1936
      %v1939 = vld [vmem:[%s13] sm:$0xff]
      %v1940 = vld [vmem:[%s13 + $0x8] sm:$0xff]
      %v1941 = vld [vmem:[%s13 + $0x10] sm:$0xff]
      %v1942 = vld [vmem:[#allocation2] sm:$0xff]
      %v1943 = vld [vmem:[#allocation2 + $0x8] sm:$0xff]
      %v1944 = vld [vmem:[#allocation2 + $0x10] sm:$0xff]
      %v1945 = vld [vmem:[#allocation2 + $0x18] sm:$0xff]
      %v1946 = vld [vmem:[#allocation2 + $0x20] sm:$0xff]
      %v1947 = vld [vmem:[#allocation2 + $0x28] sm:$0xff]
      %v1948 = vld [vmem:[#allocation2 + $0x30] sm:$0xff]
      %v1949 = vld [vmem:[#allocation2 + $0x38] sm:$0xff]
      %v1950 = vld [vmem:[#allocation2 + $0x40] sm:$0xff]
      %v1951 = vld [vmem:[#allocation2 + $0x48] sm:$0xff]
      %v1952 = vld [vmem:[#allocation2 + $0x50] sm:$0xff]
      %v1953 = vld [vmem:[#allocation2 + $0x58] sm:$0xff]
      %v1954 = vld [vmem:[#allocation2 + $0x60] sm:$0xff]
      %v1955 = vld [vmem:[#allocation2 + $0x68] sm:$0xff]
      %v1956 = vld [vmem:[#allocation2 + $0x70] sm:$0xff]
      %v1957 = vld [vmem:[#allocation2 + $0x78] sm:$0xff]
      %v1958 = vld [vmem:[#allocation2 + $0x80] sm:$0xff]
      %v1959 = vld [vmem:[#allocation2 + $0x88] sm:$0xff]
      %v1960 = vld [vmem:[#allocation2 + $0x90] sm:$0xff]
      %v1961 = vld [vmem:[#allocation2 + $0x98] sm:$0xff]
      %v1962 = vld [vmem:[#allocation2 + $0xa0] sm:$0xff]
      %v1963 = vld [vmem:[#allocation2 + $0xa8] sm:$0xff]
      %v1964 = vld [vmem:[#allocation2 + $0xb0] sm:$0xff]
      %v1965 = vld [vmem:[#allocation2 + $0xb8] sm:$0xff]
      %v1966 = vld [vmem:[#allocation2 + $0xc0] sm:$0xff]
      %v1967 = vld [vmem:[#allocation2 + $0xc8] sm:$0xff]
      %v1968 = vld [vmem:[#allocation2 + $0xd0] sm:$0xff]
      %v1969 = vld [vmem:[#allocation2 + $0xd8] sm:$0xff]
      %v1970 = vld [vmem:[#allocation2 + $0xe0] sm:$0xff]
      %v1971 = vld [vmem:[#allocation2 + $0xe8] sm:$0xff]
      %v1972 = vld [vmem:[#allocation2 + $0xf0] sm:$0xff]
      %v1973 = vld [vmem:[#allocation2 + $0xf8] sm:$0xff]
      %v1974 = vld [vmem:[#allocation2 + $0x100] sm:$0xff]
      %v1975 = vld [vmem:[#allocation2 + $0x108] sm:$0xff]
      %v1976 = vld [vmem:[#allocation2 + $0x110] sm:$0xff]
      %v1977 = vld [vmem:[#allocation2 + $0x118] sm:$0xff]
      %v1978 = vld [vmem:[#allocation2 + $0x120] sm:$0xff]
      %v1979 = vld [vmem:[#allocation2 + $0x128] sm:$0xff]
      %v1980 = vld [vmem:[#allocation2 + $0x130] sm:$0xff]
      %v1981 = vld [vmem:[#allocation2 + $0x138] sm:$0xff]
      %v1982 = vld [vmem:[#allocation2 + $0x140] sm:$0xff]
      %v1983 = vld [vmem:[#allocation2 + $0x148] sm:$0xff]
      %v1984 = vld [vmem:[#allocation2 + $0x150] sm:$0xff]
      %v1985 = vld [vmem:[#allocation2 + $0x158] sm:$0xff]
      %v1986 = vld [vmem:[#allocation2 + $0x160] sm:$0xff]
      %v1987 = vld [vmem:[#allocation2 + $0x168] sm:$0xff]
      %v1988 = vld [vmem:[#allocation2 + $0x170] sm:$0xff]
      %v1989 = vld [vmem:[#allocation2 + $0x178] sm:$0xff]
      %v1990 = vld [vmem:[#allocation2 + $0x180] sm:$0xff]
      %v1991 = vld [vmem:[#allocation2 + $0x188] sm:$0xff]
      %v1992 = vld [vmem:[#allocation2 + $0x190] sm:$0xff]
      %v1993 = vld [vmem:[#allocation2 + $0x198] sm:$0xff]
      %v1994 = vld [vmem:[#allocation2 + $0x1a0] sm:$0xff]
      %v1995 = vld [vmem:[#allocation2 + $0x1a8] sm:$0xff]
      %v1996 = vld [vmem:[#allocation2 + $0x1b0] sm:$0xff]
      %v1997 = vld [vmem:[#allocation2 + $0x1b8] sm:$0xff]
      %v1998 = vld [vmem:[#allocation2 + $0x1c0] sm:$0xff]
      %v1999 = vld [vmem:[#allocation2 + $0x1c8] sm:$0xff]
      %v2000 = vld [vmem:[#allocation2 + $0x1d0] sm:$0xff]
      %v2001 = vld [vmem:[#allocation2 + $0x1d8] sm:$0xff]
      %v2002 = vld [vmem:[#allocation2 + $0x1e0] sm:$0xff]
      %v2003 = vld [vmem:[#allocation2 + $0x1e8] sm:$0xff]
      %v2004 = vld [vmem:[#allocation2 + $0x1f0] sm:$0xff]
      %v2005 = vld [vmem:[#allocation2 + $0x1f8] sm:$0xff]
      %v2006 = vld [vmem:[#allocation2 + $0x200] sm:$0xff]
      %v2007 = vld [vmem:[#allocation2 + $0x208] sm:$0xff]
      %v2008 = vld [vmem:[#allocation2 + $0x210] sm:$0xff]
      %v2009 = vld [vmem:[#allocation2 + $0x218] sm:$0xff]
      %v2010 = vld [vmem:[#allocation2 + $0x220] sm:$0xff]
      %v2011 = vld [vmem:[#allocation2 + $0x228] sm:$0xff]
      %v2012 = vld [vmem:[#allocation2 + $0x230] sm:$0xff]
      %v2013 = vld [vmem:[#allocation2 + $0x238] sm:$0xff]
      %v2014 = vld [vmem:[#allocation2 + $0x240] sm:$0xff]
      %v2015 = vld [vmem:[#allocation2 + $0x248] sm:$0xff]
      %v2016 = vld [vmem:[#allocation2 + $0x250] sm:$0xff]
      %v2017 = vld [vmem:[#allocation2 + $0x258] sm:$0xff]
      %v2018 = vld [vmem:[#allocation2 + $0x260] sm:$0xff]
      %v2019 = vld [vmem:[#allocation2 + $0x268] sm:$0xff]
      %v2020 = vld [vmem:[#allocation2 + $0x270] sm:$0xff]
      %v2021 = vld [vmem:[#allocation2 + $0x278] sm:$0xff]
      %v2022 = vld [vmem:[#allocation2 + $0x280] sm:$0xff]
      %v2023 = vld [vmem:[#allocation2 + $0x288] sm:$0xff]
      %v2024 = vld [vmem:[#allocation2 + $0x290] sm:$0xff]
      %v2025 = vld [vmem:[#allocation2 + $0x298] sm:$0xff]
      %v2026 = vld [vmem:[#allocation2 + $0x2a0] sm:$0xff]
      %v2027 = vld [vmem:[#allocation2 + $0x2a8] sm:$0xff]
      %v2028 = vld [vmem:[#allocation2 + $0x2b0] sm:$0xff]
      %v2029 = vld [vmem:[#allocation2 + $0x2b8] sm:$0xff]
      %v2030 = vld [vmem:[#allocation2 + $0x2c0] sm:$0xff]
      %v2031 = vld [vmem:[#allocation2 + $0x2c8] sm:$0xff]
      %v2032 = vld [vmem:[%s15] sm:$0xff]
      %2034 = vset.pattern.permute.xlu0 0
      %2035 = vperm.xlu0 %2034, %v2032
      %v2036 = vpop.permute.xlu0 %2035
      %v2039 = vsel %vm1325, %v1941, 0
      %2041 = vmatpush.msra.mxu0 %v1972
      %2042 = vmatpush.msra.mxu0 %v1970
      %2043 = vmatpush.msra.mxu0 %v1968
      %2044 = vmatpush.msra.mxu0 %v1966
      %2045 = vmatpush.msra.mxu0 %v1964
      %2046 = vmatpush.msra.mxu0 %v1962
      %2047 = vmatpush.msra.mxu0 %v1960
      %2048 = vmatpush.msra.mxu0 %v1958
      %2049 = vmatpush.msra.mxu0 %v1956
      %2050 = vmatpush.msra.mxu0 %v1954
      %2051 = vmatpush.msra.mxu0 %v1952
      %2052 = vmatpush.msra.mxu0 %v1950
      %2053 = vmatpush.msra.mxu0 %v1948
      %2054 = vmatpush.msra.mxu0 %v1946
      %2055 = vmatpush.msra.mxu0 %v1944
      %2056 = vmatpush.msra.mxu0 %v1942
      %2057 = vmatmul.f32.gmra.mxu0 %v1939
      %v2058 = vpop.f32.mrf.mxu0
      %v2059 = vadd.f32 %v2036, %v2058
      %2060 = vdwg.mxu0
      %2061 = vmatpush.msra.mxu0 %v2004
      %2062 = vmatpush.msra.mxu0 %v2002
      %2063 = vmatpush.msra.mxu0 %v2000
      %2064 = vmatpush.msra.mxu0 %v1998
      %2065 = vmatpush.msra.mxu0 %v1996
      %2066 = vmatpush.msra.mxu0 %v1994
      %2067 = vmatpush.msra.mxu0 %v1992
      %2068 = vmatpush.msra.mxu0 %v1990
      %2069 = vmatpush.msra.mxu0 %v1988
      %2070 = vmatpush.msra.mxu0 %v1986
      %2071 = vmatpush.msra.mxu0 %v1984
      %2072 = vmatpush.msra.mxu0 %v1982
      %2073 = vmatpush.msra.mxu0 %v1980
      %2074 = vmatpush.msra.mxu0 %v1978
      %2075 = vmatpush.msra.mxu0 %v1976
      %2076 = vmatpush.msra.mxu0 %v1974
      %2077 = vmatmul.f32.gmra.mxu0 %v1940
      %v2078 = vpop.f32.mrf.mxu0
      %v2079 = vadd.f32 %v2059, %v2078
      %2080 = vdwg.mxu0
      %2081 = vmatpush.msra.mxu0 0.0
      %2082 = vmatpush.msra.mxu0 0.0
      %2083 = vmatpush.msra.mxu0 0.0
      %2084 = vmatpush.msra.mxu0 %v2030
      %2085 = vmatpush.msra.mxu0 %v2028
      %2086 = vmatpush.msra.mxu0 %v2026
      %2087 = vmatpush.msra.mxu0 %v2024
      %2088 = vmatpush.msra.mxu0 %v2022
      %2089 = vmatpush.msra.mxu0 %v2020
      %2090 = vmatpush.msra.mxu0 %v2018
      %2091 = vmatpush.msra.mxu0 %v2016
      %2092 = vmatpush.msra.mxu0 %v2014
      %2093 = vmatpush.msra.mxu0 %v2012
      %2094 = vmatpush.msra.mxu0 %v2010
      %2095 = vmatpush.msra.mxu0 %v2008
      %2096 = vmatpush.msra.mxu0 %v2006
      %2097 = vmatmul.f32.gmra.mxu0 %v2039
      %v2098 = vpop.f32.mrf.mxu0
      %v2099 = vadd.f32 %v2079, %v2098
      %2100 = vdwg.mxu0
      %2101 = vmatpush.msra.mxu0 %v1973
      %2102 = vmatpush.msra.mxu0 %v1971
      %2103 = vmatpush.msra.mxu0 %v1969
      %2104 = vmatpush.msra.mxu0 %v1967
      %2105 = vmatpush.msra.mxu0 %v1965
      %2106 = vmatpush.msra.mxu0 %v1963
      %2107 = vmatpush.msra.mxu0 %v1961
      %2108 = vmatpush.msra.mxu0 %v1959
      %2109 = vmatpush.msra.mxu0 %v1957
      %2110 = vmatpush.msra.mxu0 %v1955
      %2111 = vmatpush.msra.mxu0 %v1953
      %2112 = vmatpush.msra.mxu0 %v1951
      %2113 = vmatpush.msra.mxu0 %v1949
      %2114 = vmatpush.msra.mxu0 %v1947
      %2115 = vmatpush.msra.mxu0 %v1945
      %2116 = vmatpush.msra.mxu0 %v1943
      %2117 = vmatmul.f32.gmra.mxu0 %v1939
      %v2118 = vpop.f32.mrf.mxu0
      %v2119 = vadd.f32 %v2036, %v2118
      %2120 = vdwg.mxu0
      %2121 = vmatpush.msra.mxu0 %v2005
      %2122 = vmatpush.msra.mxu0 %v2003
      %2123 = vmatpush.msra.mxu0 %v2001
      %2124 = vmatpush.msra.mxu0 %v1999
      %2125 = vmatpush.msra.mxu0 %v1997
      %2126 = vmatpush.msra.mxu0 %v1995
      %2127 = vmatpush.msra.mxu0 %v1993
      %2128 = vmatpush.msra.mxu0 %v1991
      %2129 = vmatpush.msra.mxu0 %v1989
      %2130 = vmatpush.msra.mxu0 %v1987
      %2131 = vmatpush.msra.mxu0 %v1985
      %2132 = vmatpush.msra.mxu0 %v1983
      %2133 = vmatpush.msra.mxu0 %v1981
      %2134 = vmatpush.msra.mxu0 %v1979
      %2135 = vmatpush.msra.mxu0 %v1977
      %2136 = vmatpush.msra.mxu0 %v1975
      %2137 = vmatmul.f32.gmra.mxu0 %v1940
      %v2138 = vpop.f32.mrf.mxu0
      %v2139 = vadd.f32 %v2119, %v2138
      %2140 = vdwg.mxu0
      %2141 = vmatpush.msra.mxu0 0.0
      %2142 = vmatpush.msra.mxu0 0.0
      %2143 = vmatpush.msra.mxu0 0.0
      %2144 = vmatpush.msra.mxu0 %v2031
      %2145 = vmatpush.msra.mxu0 %v2029
      %2146 = vmatpush.msra.mxu0 %v2027
      %2147 = vmatpush.msra.mxu0 %v2025
      %2148 = vmatpush.msra.mxu0 %v2023
      %2149 = vmatpush.msra.mxu0 %v2021
      %2150 = vmatpush.msra.mxu0 %v2019
      %2151 = vmatpush.msra.mxu0 %v2017
      %2152 = vmatpush.msra.mxu0 %v2015
      %2153 = vmatpush.msra.mxu0 %v2013
      %2154 = vmatpush.msra.mxu0 %v2011
      %2155 = vmatpush.msra.mxu0 %v2009
      %2156 = vmatpush.msra.mxu0 %v2007
      %2157 = vmatmul.f32.gmra.mxu0 %v2039
      %v2158 = vpop.f32.mrf.mxu0
      %v2159 = vadd.f32 %v2139, %v2158
      %2160 = vdwg.mxu0
      %v2161 = vmul.f32 %v2099, 0.2
      %v2162 = vmul.f32 %v2159, 0.2
      %v2163 = vmax.f32 %v2099, %v2161
      %v2164 = vmax.f32 %v2159, %v2162
      %2165 = vrot.lane.b32.xlu0 %v2163, 17
      %v2166 = vpop.permute.xlu0 %2165
      %2167 = vrot.lane.b32.xlu0 %v2164, 17
      %v2168 = vpop.permute.xlu0 %2167
      %v2169 = vsel %vm1085, %v2166, %v2168
      %v2170 = vsel %vm1085, %v2168, %v2166
      %v2171 = vld [vmem:[%s3] ss:$8 sm:$0x3]
      %v2173 = vperm.slane %v2171, 0
      %v2174 = vperm.slane %v2171, 1
      %v2177 = vmul.f32 %v2170, %v2173
      %v2178 = vmul.f32 %v2169, %v2174
      %2179 = vst [vmem:[#allocation2 + $0x30] sm:$0xff] %v2177
      %2180 = vst [vmem:[#allocation2 + $0x38] sm:$0xff] %v2178
      %2181 = vrot.lane.b32.xlu0 %v2163, 16
      %v2182 = vpop.permute.xlu0 %2181
      %2183 = vrot.lane.b32.xlu0 %v2164, 16
      %v2184 = vpop.permute.xlu0 %2183
      %v2185 = vsel %vm1102, %v2182, %v2184
      %v2186 = vsel %vm1102, %v2184, %v2182
      %v2187 = vld [vmem:[%s1105] ss:$8 sm:$0x3]
      %v2189 = vperm.slane %v2187, 0
      %v2190 = vperm.slane %v2187, 1
      %v2193 = vmul.f32 %v2186, %v2189
      %v2194 = vmul.f32 %v2185, %v2190
      %2195 = vst [vmem:[#allocation2 + $0x80] sm:$0xff] %v2193
      %2196 = vst [vmem:[#allocation2 + $0x88] sm:$0xff] %v2194
      %2197 = vrot.lane.b32.xlu0 %v2163, 15
      %v2198 = vpop.permute.xlu0 %2197
      %2199 = vrot.lane.b32.xlu0 %v2164, 15
      %v2200 = vpop.permute.xlu0 %2199
      %v2201 = vsel %vm1120, %v2198, %v2200
      %v2202 = vsel %vm1120, %v2200, %v2198
      %v2203 = vld [vmem:[%s1123] ss:$8 sm:$0x3]
      %v2205 = vperm.slane %v2203, 0
      %v2206 = vperm.slane %v2203, 1
      %v2209 = vmul.f32 %v2202, %v2205
      %v2210 = vmul.f32 %v2201, %v2206
      %2211 = vst [vmem:[#allocation2 + $0xd0] sm:$0xff] %v2209
      %2212 = vst [vmem:[#allocation2 + $0xd8] sm:$0xff] %v2210
      %2213 = vrot.lane.b32.xlu0 %v2163, 1
      %v2214 = vpop.permute.xlu0 %2213
      %2215 = vrot.lane.b32.xlu0 %v2164, 1
      %v2216 = vpop.permute.xlu0 %2215
      %v2217 = vsel %vm1138, %v2214, %v2216
      %v2218 = vsel %vm1138, %v2216, %v2214
      %v2219 = vld [vmem:[%s1141] ss:$8 sm:$0x3]
      %v2221 = vperm.slane %v2219, 0
      %v2222 = vperm.slane %v2219, 1
      %v2225 = vmul.f32 %v2218, %v2221
      %v2226 = vmul.f32 %v2217, %v2222
      %2227 = vst [vmem:[#allocation2 + $0x120] sm:$0xff] %v2225
      %2228 = vst [vmem:[#allocation2 + $0x128] sm:$0xff] %v2226
      %2229 = vst [vmem:[#allocation2 + $0x170] sm:$0xff] %v2163
      %2230 = vst [vmem:[#allocation2 + $0x178] sm:$0xff] %v2164
      %2231 = vrot.lane.b32.xlu0 %v2163, 127
      %v2232 = vpop.permute.xlu0 %2231
      %2233 = vrot.lane.b32.xlu0 %v2164, 127
      %v2234 = vpop.permute.xlu0 %2233
      %v2235 = vsel %vm1158, %v2232, %v2234
      %v2236 = vsel %vm1158, %v2234, %v2232
      %v2237 = vld [vmem:[%s1161] ss:$8 sm:$0x3]
      %v2239 = vperm.slane %v2237, 0
      %v2240 = vperm.slane %v2237, 1
      %v2243 = vmul.f32 %v2235, %v2239
      %v2244 = vmul.f32 %v2236, %v2240
      %2245 = vst [vmem:[#allocation2 + $0x1c0] sm:$0xff] %v2243
      %2246 = vst [vmem:[#allocation2 + $0x1c8] sm:$0xff] %v2244
      %2247 = vrot.lane.b32.xlu0 %v2163, 113
      %v2248 = vpop.permute.xlu0 %2247
      %2249 = vrot.lane.b32.xlu0 %v2164, 113
      %v2250 = vpop.permute.xlu0 %2249
      %v2251 = vsel %vm1176, %v2248, %v2250
      %v2252 = vsel %vm1176, %v2250, %v2248
      %v2253 = vld [vmem:[%s1179] ss:$8 sm:$0x3]
      %v2255 = vperm.slane %v2253, 0
      %v2256 = vperm.slane %v2253, 1
      %v2259 = vmul.f32 %v2251, %v2255
      %v2260 = vmul.f32 %v2252, %v2256
      %2261 = vst [vmem:[#allocation2 + $0x210] sm:$0xff] %v2259
      %2262 = vst [vmem:[#allocation2 + $0x218] sm:$0xff] %v2260
      %2263 = vrot.lane.b32.xlu0 %v2163, 112
      %v2264 = vpop.permute.xlu0 %2263
      %2265 = vrot.lane.b32.xlu0 %v2164, 112
      %v2266 = vpop.permute.xlu0 %2265
      %v2267 = vsel %vm1194, %v2264, %v2266
      %v2268 = vsel %vm1194, %v2266, %v2264
      %v2269 = vld [vmem:[%s1197] ss:$8 sm:$0x3]
      %v2271 = vperm.slane %v2269, 0
      %v2272 = vperm.slane %v2269, 1
      %v2275 = vmul.f32 %v2267, %v2271
      %v2276 = vmul.f32 %v2268, %v2272
      %2277 = vst [vmem:[#allocation2 + $0x260] sm:$0xff] %v2275
      %2278 = vst [vmem:[#allocation2 + $0x268] sm:$0xff] %v2276
      %2279 = vrot.lane.b32.xlu0 %v2163, 111
      %v2280 = vpop.permute.xlu0 %2279
      %2281 = vrot.lane.b32.xlu0 %v2164, 111
      %v2282 = vpop.permute.xlu0 %2281
      %v2283 = vsel %vm1212, %v2280, %v2282
      %v2284 = vsel %vm1212, %v2282, %v2280
      %v2285 = vld [vmem:[%s1215] ss:$8 sm:$0x3]
      %v2287 = vperm.slane %v2285, 0
      %v2288 = vperm.slane %v2285, 1
      %v2291 = vmul.f32 %v2283, %v2287
      %v2292 = vmul.f32 %v2284, %v2288
      %2293 = vst [vmem:[#allocation2 + $0x2b0] sm:$0xff] %v2291
      %2294 = vst [vmem:[#allocation2 + $0x2b8] sm:$0xff] %v2292
      %v2295 = vld [vmem:[%s17] sm:$0xff]
      %v2296 = vld [vmem:[%s17 + $0x8] sm:$0xff]
      %v2297 = vld [vmem:[%s17 + $0x10] sm:$0xff]
      %v2298 = vld [vmem:[#allocation2] sm:$0xff]
      %v2299 = vld [vmem:[#allocation2 + $0x8] sm:$0xff]
      %v2300 = vld [vmem:[#allocation2 + $0x10] sm:$0xff]
      %v2301 = vld [vmem:[#allocation2 + $0x18] sm:$0xff]
      %v2302 = vld [vmem:[#allocation2 + $0x20] sm:$0xff]
      %v2303 = vld [vmem:[#allocation2 + $0x28] sm:$0xff]
      %v2304 = vld [vmem:[#allocation2 + $0x30] sm:$0xff]
      %v2305 = vld [vmem:[#allocation2 + $0x38] sm:$0xff]
      %v2306 = vld [vmem:[#allocation2 + $0x40] sm:$0xff]
      %v2307 = vld [vmem:[#allocation2 + $0x48] sm:$0xff]
      %v2308 = vld [vmem:[#allocation2 + $0x50] sm:$0xff]
      %v2309 = vld [vmem:[#allocation2 + $0x58] sm:$0xff]
      %v2310 = vld [vmem:[#allocation2 + $0x60] sm:$0xff]
      %v2311 = vld [vmem:[#allocation2 + $0x68] sm:$0xff]
      %v2312 = vld [vmem:[#allocation2 + $0x70] sm:$0xff]
      %v2313 = vld [vmem:[#allocation2 + $0x78] sm:$0xff]
      %v2314 = vld [vmem:[#allocation2 + $0x80] sm:$0xff]
      %v2315 = vld [vmem:[#allocation2 + $0x88] sm:$0xff]
      %v2316 = vld [vmem:[#allocation2 + $0x90] sm:$0xff]
      %v2317 = vld [vmem:[#allocation2 + $0x98] sm:$0xff]
      %v2318 = vld [vmem:[#allocation2 + $0xa0] sm:$0xff]
      %v2319 = vld [vmem:[#allocation2 + $0xa8] sm:$0xff]
      %v2320 = vld [vmem:[#allocation2 + $0xb0] sm:$0xff]
      %v2321 = vld [vmem:[#allocation2 + $0xb8] sm:$0xff]
      %v2322 = vld [vmem:[#allocation2 + $0xc0] sm:$0xff]
      %v2323 = vld [vmem:[#allocation2 + $0xc8] sm:$0xff]
      %v2324 = vld [vmem:[#allocation2 + $0xd0] sm:$0xff]
      %v2325 = vld [vmem:[#allocation2 + $0xd8] sm:$0xff]
      %v2326 = vld [vmem:[#allocation2 + $0xe0] sm:$0xff]
      %v2327 = vld [vmem:[#allocation2 + $0xe8] sm:$0xff]
      %v2328 = vld [vmem:[#allocation2 + $0xf0] sm:$0xff]
      %v2329 = vld [vmem:[#allocation2 + $0xf8] sm:$0xff]
      %v2330 = vld [vmem:[#allocation2 + $0x100] sm:$0xff]
      %v2331 = vld [vmem:[#allocation2 + $0x108] sm:$0xff]
      %v2332 = vld [vmem:[#allocation2 + $0x110] sm:$0xff]
      %v2333 = vld [vmem:[#allocation2 + $0x118] sm:$0xff]
      %v2334 = vld [vmem:[#allocation2 + $0x120] sm:$0xff]
      %v2335 = vld [vmem:[#allocation2 + $0x128] sm:$0xff]
      %v2336 = vld [vmem:[#allocation2 + $0x130] sm:$0xff]
      %v2337 = vld [vmem:[#allocation2 + $0x138] sm:$0xff]
      %v2338 = vld [vmem:[#allocation2 + $0x140] sm:$0xff]
      %v2339 = vld [vmem:[#allocation2 + $0x148] sm:$0xff]
      %v2340 = vld [vmem:[#allocation2 + $0x150] sm:$0xff]
      %v2341 = vld [vmem:[#allocation2 + $0x158] sm:$0xff]
      %v2342 = vld [vmem:[#allocation2 + $0x160] sm:$0xff]
      %v2343 = vld [vmem:[#allocation2 + $0x168] sm:$0xff]
      %v2344 = vld [vmem:[#allocation2 + $0x170] sm:$0xff]
      %v2345 = vld [vmem:[#allocation2 + $0x178] sm:$0xff]
      %v2346 = vld [vmem:[#allocation2 + $0x180] sm:$0xff]
      %v2347 = vld [vmem:[#allocation2 + $0x188] sm:$0xff]
      %v2348 = vld [vmem:[#allocation2 + $0x190] sm:$0xff]
      %v2349 = vld [vmem:[#allocation2 + $0x198] sm:$0xff]
      %v2350 = vld [vmem:[#allocation2 + $0x1a0] sm:$0xff]
      %v2351 = vld [vmem:[#allocation2 + $0x1a8] sm:$0xff]
      %v2352 = vld [vmem:[#allocation2 + $0x1b0] sm:$0xff]
      %v2353 = vld [vmem:[#allocation2 + $0x1b8] sm:$0xff]
      %v2354 = vld [vmem:[#allocation2 + $0x1c0] sm:$0xff]
      %v2355 = vld [vmem:[#allocation2 + $0x1c8] sm:$0xff]
      %v2356 = vld [vmem:[#allocation2 + $0x1d0] sm:$0xff]
      %v2357 = vld [vmem:[#allocation2 + $0x1d8] sm:$0xff]
      %v2358 = vld [vmem:[#allocation2 + $0x1e0] sm:$0xff]
      %v2359 = vld [vmem:[#allocation2 + $0x1e8] sm:$0xff]
      %v2360 = vld [vmem:[#allocation2 + $0x1f0] sm:$0xff]
      %v2361 = vld [vmem:[#allocation2 + $0x1f8] sm:$0xff]
      %v2362 = vld [vmem:[#allocation2 + $0x200] sm:$0xff]
      %v2363 = vld [vmem:[#allocation2 + $0x208] sm:$0xff]
      %v2364 = vld [vmem:[#allocation2 + $0x210] sm:$0xff]
      %v2365 = vld [vmem:[#allocation2 + $0x218] sm:$0xff]
      %v2366 = vld [vmem:[#allocation2 + $0x220] sm:$0xff]
      %v2367 = vld [vmem:[#allocation2 + $0x228] sm:$0xff]
      %v2368 = vld [vmem:[#allocation2 + $0x230] sm:$0xff]
      %v2369 = vld [vmem:[#allocation2 + $0x238] sm:$0xff]
      %v2370 = vld [vmem:[#allocation2 + $0x240] sm:$0xff]
      %v2371 = vld [vmem:[#allocation2 + $0x248] sm:$0xff]
      %v2372 = vld [vmem:[#allocation2 + $0x250] sm:$0xff]
      %v2373 = vld [vmem:[#allocation2 + $0x258] sm:$0xff]
      %v2374 = vld [vmem:[#allocation2 + $0x260] sm:$0xff]
      %v2375 = vld [vmem:[#allocation2 + $0x268] sm:$0xff]
      %v2376 = vld [vmem:[#allocation2 + $0x270] sm:$0xff]
      %v2377 = vld [vmem:[#allocation2 + $0x278] sm:$0xff]
      %v2378 = vld [vmem:[#allocation2 + $0x280] sm:$0xff]
      %v2379 = vld [vmem:[#allocation2 + $0x288] sm:$0xff]
      %v2380 = vld [vmem:[#allocation2 + $0x290] sm:$0xff]
      %v2381 = vld [vmem:[#allocation2 + $0x298] sm:$0xff]
      %v2382 = vld [vmem:[#allocation2 + $0x2a0] sm:$0xff]
      %v2383 = vld [vmem:[#allocation2 + $0x2a8] sm:$0xff]
      %v2384 = vld [vmem:[#allocation2 + $0x2b0] sm:$0xff]
      %v2385 = vld [vmem:[#allocation2 + $0x2b8] sm:$0xff]
      %v2386 = vld [vmem:[#allocation2 + $0x2c0] sm:$0xff]
      %v2387 = vld [vmem:[#allocation2 + $0x2c8] sm:$0xff]
      %v2388 = vld [vmem:[%s19] sm:$0xff]
      %2390 = vset.pattern.permute.xlu0 0
      %2391 = vperm.xlu0 %2390, %v2388
      %v2392 = vpop.permute.xlu0 %2391
      %v2395 = vsel %vm1325, %v2297, 0
      %2397 = vmatpush.msra.mxu0 %v2328
      %2398 = vmatpush.msra.mxu0 %v2326
      %2399 = vmatpush.msra.mxu0 %v2324
      %2400 = vmatpush.msra.mxu0 %v2322
      %2401 = vmatpush.msra.mxu0 %v2320
      %2402 = vmatpush.msra.mxu0 %v2318
      %2403 = vmatpush.msra.mxu0 %v2316
      %2404 = vmatpush.msra.mxu0 %v2314
      %2405 = vmatpush.msra.mxu0 %v2312
      %2406 = vmatpush.msra.mxu0 %v2310
      %2407 = vmatpush.msra.mxu0 %v2308
      %2408 = vmatpush.msra.mxu0 %v2306
      %2409 = vmatpush.msra.mxu0 %v2304
      %2410 = vmatpush.msra.mxu0 %v2302
      %2411 = vmatpush.msra.mxu0 %v2300
      %2412 = vmatpush.msra.mxu0 %v2298
      %2413 = vmatmul.f32.gmra.mxu0 %v2295
      %v2414 = vpop.f32.mrf.mxu0
      %v2415 = vadd.f32 %v2392, %v2414
      %2416 = vdwg.mxu0
      %2417 = vmatpush.msra.mxu0 %v2360
      %2418 = vmatpush.msra.mxu0 %v2358
      %2419 = vmatpush.msra.mxu0 %v2356
      %2420 = vmatpush.msra.mxu0 %v2354
      %2421 = vmatpush.msra.mxu0 %v2352
      %2422 = vmatpush.msra.mxu0 %v2350
      %2423 = vmatpush.msra.mxu0 %v2348
      %2424 = vmatpush.msra.mxu0 %v2346
      %2425 = vmatpush.msra.mxu0 %v2344
      %2426 = vmatpush.msra.mxu0 %v2342
      %2427 = vmatpush.msra.mxu0 %v2340
      %2428 = vmatpush.msra.mxu0 %v2338
      %2429 = vmatpush.msra.mxu0 %v2336
      %2430 = vmatpush.msra.mxu0 %v2334
      %2431 = vmatpush.msra.mxu0 %v2332
      %2432 = vmatpush.msra.mxu0 %v2330
      %2433 = vmatmul.f32.gmra.mxu0 %v2296
      %v2434 = vpop.f32.mrf.mxu0
      %v2435 = vadd.f32 %v2415, %v2434
      %2436 = vdwg.mxu0
      %2437 = vmatpush.msra.mxu0 0.0
      %2438 = vmatpush.msra.mxu0 0.0
      %2439 = vmatpush.msra.mxu0 0.0
      %2440 = vmatpush.msra.mxu0 %v2386
      %2441 = vmatpush.msra.mxu0 %v2384
      %2442 = vmatpush.msra.mxu0 %v2382
      %2443 = vmatpush.msra.mxu0 %v2380
      %2444 = vmatpush.msra.mxu0 %v2378
      %2445 = vmatpush.msra.mxu0 %v2376
      %2446 = vmatpush.msra.mxu0 %v2374
      %2447 = vmatpush.msra.mxu0 %v2372
      %2448 = vmatpush.msra.mxu0 %v2370
      %2449 = vmatpush.msra.mxu0 %v2368
      %2450 = vmatpush.msra.mxu0 %v2366
      %2451 = vmatpush.msra.mxu0 %v2364
      %2452 = vmatpush.msra.mxu0 %v2362
      %2453 = vmatmul.f32.gmra.mxu0 %v2395
      %v2454 = vpop.f32.mrf.mxu0
      %v2455 = vadd.f32 %v2435, %v2454
      %2456 = vdwg.mxu0
      %2457 = vmatpush.msra.mxu0 %v2329
      %2458 = vmatpush.msra.mxu0 %v2327
      %2459 = vmatpush.msra.mxu0 %v2325
      %2460 = vmatpush.msra.mxu0 %v2323
      %2461 = vmatpush.msra.mxu0 %v2321
      %2462 = vmatpush.msra.mxu0 %v2319
      %2463 = vmatpush.msra.mxu0 %v2317
      %2464 = vmatpush.msra.mxu0 %v2315
      %2465 = vmatpush.msra.mxu0 %v2313
      %2466 = vmatpush.msra.mxu0 %v2311
      %2467 = vmatpush.msra.mxu0 %v2309
      %2468 = vmatpush.msra.mxu0 %v2307
      %2469 = vmatpush.msra.mxu0 %v2305
      %2470 = vmatpush.msra.mxu0 %v2303
      %2471 = vmatpush.msra.mxu0 %v2301
      %2472 = vmatpush.msra.mxu0 %v2299
      %2473 = vmatmul.f32.gmra.mxu0 %v2295
      %v2474 = vpop.f32.mrf.mxu0
      %v2475 = vadd.f32 %v2392, %v2474
      %2476 = vdwg.mxu0
      %2477 = vmatpush.msra.mxu0 %v2361
      %2478 = vmatpush.msra.mxu0 %v2359
      %2479 = vmatpush.msra.mxu0 %v2357
      %2480 = vmatpush.msra.mxu0 %v2355
      %2481 = vmatpush.msra.mxu0 %v2353
      %2482 = vmatpush.msra.mxu0 %v2351
      %2483 = vmatpush.msra.mxu0 %v2349
      %2484 = vmatpush.msra.mxu0 %v2347
      %2485 = vmatpush.msra.mxu0 %v2345
      %2486 = vmatpush.msra.mxu0 %v2343
      %2487 = vmatpush.msra.mxu0 %v2341
      %2488 = vmatpush.msra.mxu0 %v2339
      %2489 = vmatpush.msra.mxu0 %v2337
      %2490 = vmatpush.msra.mxu0 %v2335
      %2491 = vmatpush.msra.mxu0 %v2333
      %2492 = vmatpush.msra.mxu0 %v2331
      %2493 = vmatmul.f32.gmra.mxu0 %v2296
      %v2494 = vpop.f32.mrf.mxu0
      %v2495 = vadd.f32 %v2475, %v2494
      %2496 = vdwg.mxu0
      %2497 = vmatpush.msra.mxu0 0.0
      %2498 = vmatpush.msra.mxu0 0.0
      %2499 = vmatpush.msra.mxu0 0.0
      %2500 = vmatpush.msra.mxu0 %v2387
      %2501 = vmatpush.msra.mxu0 %v2385
      %2502 = vmatpush.msra.mxu0 %v2383
      %2503 = vmatpush.msra.mxu0 %v2381
      %2504 = vmatpush.msra.mxu0 %v2379
      %2505 = vmatpush.msra.mxu0 %v2377
      %2506 = vmatpush.msra.mxu0 %v2375
      %2507 = vmatpush.msra.mxu0 %v2373
      %2508 = vmatpush.msra.mxu0 %v2371
      %2509 = vmatpush.msra.mxu0 %v2369
      %2510 = vmatpush.msra.mxu0 %v2367
      %2511 = vmatpush.msra.mxu0 %v2365
      %2512 = vmatpush.msra.mxu0 %v2363
      %2513 = vmatmul.f32.gmra.mxu0 %v2395
      %v2514 = vpop.f32.mrf.mxu0
      %v2515 = vadd.f32 %v2495, %v2514
      %2516 = vdwg.mxu0
      %v2517 = vmul.f32 %v2455, 0.2
      %v2518 = vmul.f32 %v2515, 0.2
      %v2519 = vmax.f32 %v2455, %v2517
      %v2520 = vmax.f32 %v2515, %v2518
      %2521 = vrot.lane.b32.xlu0 %v2519, 17
      %v2522 = vpop.permute.xlu0 %2521
      %2523 = vrot.lane.b32.xlu0 %v2520, 17
      %v2524 = vpop.permute.xlu0 %2523
      %v2525 = vsel %vm1085, %v2522, %v2524
      %v2526 = vsel %vm1085, %v2524, %v2522
      %v2527 = vld [vmem:[%s3] ss:$8 sm:$0x3]
      %v2529 = vperm.slane %v2527, 0
      %v2530 = vperm.slane %v2527, 1
      %v2533 = vmul.f32 %v2526, %v2529
      %v2534 = vmul.f32 %v2525, %v2530
      %2535 = vst [vmem:[#allocation2 + $0x40] sm:$0xff] %v2533
      %2536 = vst [vmem:[#allocation2 + $0x48] sm:$0xff] %v2534
      %2537 = vrot.lane.b32.xlu0 %v2519, 16
      %v2538 = vpop.permute.xlu0 %2537
      %2539 = vrot.lane.b32.xlu0 %v2520, 16
      %v2540 = vpop.permute.xlu0 %2539
      %v2541 = vsel %vm1102, %v2538, %v2540
      %v2542 = vsel %vm1102, %v2540, %v2538
      %v2543 = vld [vmem:[%s1105] ss:$8 sm:$0x3]
      %v2545 = vperm.slane %v2543, 0
      %v2546 = vperm.slane %v2543, 1
      %v2549 = vmul.f32 %v2542, %v2545
      %v2550 = vmul.f32 %v2541, %v2546
      %2551 = vst [vmem:[#allocation2 + $0x90] sm:$0xff] %v2549
      %2552 = vst [vmem:[#allocation2 + $0x98] sm:$0xff] %v2550
      %2553 = vrot.lane.b32.xlu0 %v2519, 15
      %v2554 = vpop.permute.xlu0 %2553
      %2555 = vrot.lane.b32.xlu0 %v2520, 15
      %v2556 = vpop.permute.xlu0 %2555
      %v2557 = vsel %vm1120, %v2554, %v2556
      %v2558 = vsel %vm1120, %v2556, %v2554
      %v2559 = vld [vmem:[%s1123] ss:$8 sm:$0x3]
      %v2561 = vperm.slane %v2559, 0
      %v2562 = vperm.slane %v2559, 1
      %v2565 = vmul.f32 %v2558, %v2561
      %v2566 = vmul.f32 %v2557, %v2562
      %2567 = vst [vmem:[#allocation2 + $0xe0] sm:$0xff] %v2565
      %2568 = vst [vmem:[#allocation2 + $0xe8] sm:$0xff] %v2566
      %2569 = vrot.lane.b32.xlu0 %v2519, 1
      %v2570 = vpop.permute.xlu0 %2569
      %2571 = vrot.lane.b32.xlu0 %v2520, 1
      %v2572 = vpop.permute.xlu0 %2571
      %v2573 = vsel %vm1138, %v2570, %v2572
      %v2574 = vsel %vm1138, %v2572, %v2570
      %v2575 = vld [vmem:[%s1141] ss:$8 sm:$0x3]
      %v2577 = vperm.slane %v2575, 0
      %v2578 = vperm.slane %v2575, 1
      %v2581 = vmul.f32 %v2574, %v2577
      %v2582 = vmul.f32 %v2573, %v2578
      %2583 = vst [vmem:[#allocation2 + $0x130] sm:$0xff] %v2581
      %2584 = vst [vmem:[#allocation2 + $0x138] sm:$0xff] %v2582
      %2585 = vst [vmem:[#allocation2 + $0x180] sm:$0xff] %v2519
      %2586 = vst [vmem:[#allocation2 + $0x188] sm:$0xff] %v2520
      %2587 = vrot.lane.b32.xlu0 %v2519, 127
      %v2588 = vpop.permute.xlu0 %2587
      %2589 = vrot.lane.b32.xlu0 %v2520, 127
      %v2590 = vpop.permute.xlu0 %2589
      %v2591 = vsel %vm1158, %v2588, %v2590
      %v2592 = vsel %vm1158, %v2590, %v2588
      %v2593 = vld [vmem:[%s1161] ss:$8 sm:$0x3]
      %v2595 = vperm.slane %v2593, 0
      %v2596 = vperm.slane %v2593, 1
      %v2599 = vmul.f32 %v2591, %v2595
      %v2600 = vmul.f32 %v2592, %v2596
      %2601 = vst [vmem:[#allocation2 + $0x1d0] sm:$0xff] %v2599
      %2602 = vst [vmem:[#allocation2 + $0x1d8] sm:$0xff] %v2600
      %2603 = vrot.lane.b32.xlu0 %v2519, 113
      %v2604 = vpop.permute.xlu0 %2603
      %2605 = vrot.lane.b32.xlu0 %v2520, 113
      %v2606 = vpop.permute.xlu0 %2605
      %v2607 = vsel %vm1176, %v2604, %v2606
      %v2608 = vsel %vm1176, %v2606, %v2604
      %v2609 = vld [vmem:[%s1179] ss:$8 sm:$0x3]
      %v2611 = vperm.slane %v2609, 0
      %v2612 = vperm.slane %v2609, 1
      %v2615 = vmul.f32 %v2607, %v2611
      %v2616 = vmul.f32 %v2608, %v2612
      %2617 = vst [vmem:[#allocation2 + $0x220] sm:$0xff] %v2615
      %2618 = vst [vmem:[#allocation2 + $0x228] sm:$0xff] %v2616
      %2619 = vrot.lane.b32.xlu0 %v2519, 112
      %v2620 = vpop.permute.xlu0 %2619
      %2621 = vrot.lane.b32.xlu0 %v2520, 112
      %v2622 = vpop.permute.xlu0 %2621
      %v2623 = vsel %vm1194, %v2620, %v2622
      %v2624 = vsel %vm1194, %v2622, %v2620
      %v2625 = vld [vmem:[%s1197] ss:$8 sm:$0x3]
      %v2627 = vperm.slane %v2625, 0
      %v2628 = vperm.slane %v2625, 1
      %v2631 = vmul.f32 %v2623, %v2627
      %v2632 = vmul.f32 %v2624, %v2628
      %2633 = vst [vmem:[#allocation2 + $0x270] sm:$0xff] %v2631
      %2634 = vst [vmem:[#allocation2 + $0x278] sm:$0xff] %v2632
      %2635 = vrot.lane.b32.xlu0 %v2519, 111
      %v2636 = vpop.permute.xlu0 %2635
      %2637 = vrot.lane.b32.xlu0 %v2520, 111
      %v2638 = vpop.permute.xlu0 %2637
      %v2639 = vsel %vm1212, %v2636, %v2638
      %v2640 = vsel %vm1212, %v2638, %v2636
      %v2641 = vld [vmem:[%s1215] ss:$8 sm:$0x3]
      %v2643 = vperm.slane %v2641, 0
      %v2644 = vperm.slane %v2641, 1
      %v2647 = vmul.f32 %v2639, %v2643
      %v2648 = vmul.f32 %v2640, %v2644
      %2649 = vst [vmem:[#allocation2 + $0x2c0] sm:$0xff] %v2647
      %2650 = vst [vmem:[#allocation2 + $0x2c8] sm:$0xff] %v2648
      %v2651 = vld [vmem:[%s21] sm:$0xff]
      %v2652 = vld [vmem:[%s21 + $0x8] sm:$0xff]
      %v2653 = vld [vmem:[%s21 + $0x10] sm:$0xff]
      %v2654 = vld [vmem:[#allocation2] sm:$0xff]
      %v2655 = vld [vmem:[#allocation2 + $0x8] sm:$0xff]
      %v2656 = vld [vmem:[#allocation2 + $0x10] sm:$0xff]
      %v2657 = vld [vmem:[#allocation2 + $0x18] sm:$0xff]
      %v2658 = vld [vmem:[#allocation2 + $0x20] sm:$0xff]
      %v2659 = vld [vmem:[#allocation2 + $0x28] sm:$0xff]
      %v2660 = vld [vmem:[#allocation2 + $0x30] sm:$0xff]
      %v2661 = vld [vmem:[#allocation2 + $0x38] sm:$0xff]
      %v2662 = vld [vmem:[#allocation2 + $0x40] sm:$0xff]
      %v2663 = vld [vmem:[#allocation2 + $0x48] sm:$0xff]
      %v2664 = vld [vmem:[#allocation2 + $0x50] sm:$0xff]
      %v2665 = vld [vmem:[#allocation2 + $0x58] sm:$0xff]
      %v2666 = vld [vmem:[#allocation2 + $0x60] sm:$0xff]
      %v2667 = vld [vmem:[#allocation2 + $0x68] sm:$0xff]
      %v2668 = vld [vmem:[#allocation2 + $0x70] sm:$0xff]
      %v2669 = vld [vmem:[#allocation2 + $0x78] sm:$0xff]
      %v2670 = vld [vmem:[#allocation2 + $0x80] sm:$0xff]
      %v2671 = vld [vmem:[#allocation2 + $0x88] sm:$0xff]
      %v2672 = vld [vmem:[#allocation2 + $0x90] sm:$0xff]
      %v2673 = vld [vmem:[#allocation2 + $0x98] sm:$0xff]
      %v2674 = vld [vmem:[#allocation2 + $0xa0] sm:$0xff]
      %v2675 = vld [vmem:[#allocation2 + $0xa8] sm:$0xff]
      %v2676 = vld [vmem:[#allocation2 + $0xb0] sm:$0xff]
      %v2677 = vld [vmem:[#allocation2 + $0xb8] sm:$0xff]
      %v2678 = vld [vmem:[#allocation2 + $0xc0] sm:$0xff]
      %v2679 = vld [vmem:[#allocation2 + $0xc8] sm:$0xff]
      %v2680 = vld [vmem:[#allocation2 + $0xd0] sm:$0xff]
      %v2681 = vld [vmem:[#allocation2 + $0xd8] sm:$0xff]
      %v2682 = vld [vmem:[#allocation2 + $0xe0] sm:$0xff]
      %v2683 = vld [vmem:[#allocation2 + $0xe8] sm:$0xff]
      %v2684 = vld [vmem:[#allocation2 + $0xf0] sm:$0xff]
      %v2685 = vld [vmem:[#allocation2 + $0xf8] sm:$0xff]
      %v2686 = vld [vmem:[#allocation2 + $0x100] sm:$0xff]
      %v2687 = vld [vmem:[#allocation2 + $0x108] sm:$0xff]
      %v2688 = vld [vmem:[#allocation2 + $0x110] sm:$0xff]
      %v2689 = vld [vmem:[#allocation2 + $0x118] sm:$0xff]
      %v2690 = vld [vmem:[#allocation2 + $0x120] sm:$0xff]
      %v2691 = vld [vmem:[#allocation2 + $0x128] sm:$0xff]
      %v2692 = vld [vmem:[#allocation2 + $0x130] sm:$0xff]
      %v2693 = vld [vmem:[#allocation2 + $0x138] sm:$0xff]
      %v2694 = vld [vmem:[#allocation2 + $0x140] sm:$0xff]
      %v2695 = vld [vmem:[#allocation2 + $0x148] sm:$0xff]
      %v2696 = vld [vmem:[#allocation2 + $0x150] sm:$0xff]
      %v2697 = vld [vmem:[#allocation2 + $0x158] sm:$0xff]
      %v2698 = vld [vmem:[#allocation2 + $0x160] sm:$0xff]
      %v2699 = vld [vmem:[#allocation2 + $0x168] sm:$0xff]
      %v2700 = vld [vmem:[#allocation2 + $0x170] sm:$0xff]
      %v2701 = vld [vmem:[#allocation2 + $0x178] sm:$0xff]
      %v2702 = vld [vmem:[#allocation2 + $0x180] sm:$0xff]
      %v2703 = vld [vmem:[#allocation2 + $0x188] sm:$0xff]
      %v2704 = vld [vmem:[#allocation2 + $0x190] sm:$0xff]
      %v2705 = vld [vmem:[#allocation2 + $0x198] sm:$0xff]
      %v2706 = vld [vmem:[#allocation2 + $0x1a0] sm:$0xff]
      %v2707 = vld [vmem:[#allocation2 + $0x1a8] sm:$0xff]
      %v2708 = vld [vmem:[#allocation2 + $0x1b0] sm:$0xff]
      %v2709 = vld [vmem:[#allocation2 + $0x1b8] sm:$0xff]
      %v2710 = vld [vmem:[#allocation2 + $0x1c0] sm:$0xff]
      %v2711 = vld [vmem:[#allocation2 + $0x1c8] sm:$0xff]
      %v2712 = vld [vmem:[#allocation2 + $0x1d0] sm:$0xff]
      %v2713 = vld [vmem:[#allocation2 + $0x1d8] sm:$0xff]
      %v2714 = vld [vmem:[#allocation2 + $0x1e0] sm:$0xff]
      %v2715 = vld [vmem:[#allocation2 + $0x1e8] sm:$0xff]
      %v2716 = vld [vmem:[#allocation2 + $0x1f0] sm:$0xff]
      %v2717 = vld [vmem:[#allocation2 + $0x1f8] sm:$0xff]
      %v2718 = vld [vmem:[#allocation2 + $0x200] sm:$0xff]
      %v2719 = vld [vmem:[#allocation2 + $0x208] sm:$0xff]
      %v2720 = vld [vmem:[#allocation2 + $0x210] sm:$0xff]
      %v2721 = vld [vmem:[#allocation2 + $0x218] sm:$0xff]
      %v2722 = vld [vmem:[#allocation2 + $0x220] sm:$0xff]
      %v2723 = vld [vmem:[#allocation2 + $0x228] sm:$0xff]
      %v2724 = vld [vmem:[#allocation2 + $0x230] sm:$0xff]
      %v2725 = vld [vmem:[#allocation2 + $0x238] sm:$0xff]
      %v2726 = vld [vmem:[#allocation2 + $0x240] sm:$0xff]
      %v2727 = vld [vmem:[#allocation2 + $0x248] sm:$0xff]
      %v2728 = vld [vmem:[#allocation2 + $0x250] sm:$0xff]
      %v2729 = vld [vmem:[#allocation2 + $0x258] sm:$0xff]
      %v2730 = vld [vmem:[#allocation2 + $0x260] sm:$0xff]
      %v2731 = vld [vmem:[#allocation2 + $0x268] sm:$0xff]
      %v2732 = vld [vmem:[#allocation2 + $0x270] sm:$0xff]
      %v2733 = vld [vmem:[#allocation2 + $0x278] sm:$0xff]
      %v2734 = vld [vmem:[#allocation2 + $0x280] sm:$0xff]
      %v2735 = vld [vmem:[#allocation2 + $0x288] sm:$0xff]
      %v2736 = vld [vmem:[#allocation2 + $0x290] sm:$0xff]
      %v2737 = vld [vmem:[#allocation2 + $0x298] sm:$0xff]
      %v2738 = vld [vmem:[#allocation2 + $0x2a0] sm:$0xff]
      %v2739 = vld [vmem:[#allocation2 + $0x2a8] sm:$0xff]
      %v2740 = vld [vmem:[#allocation2 + $0x2b0] sm:$0xff]
      %v2741 = vld [vmem:[#allocation2 + $0x2b8] sm:$0xff]
      %v2742 = vld [vmem:[#allocation2 + $0x2c0] sm:$0xff]
      %v2743 = vld [vmem:[#allocation2 + $0x2c8] sm:$0xff]
      %v2744 = vld [vmem:[%s23] sm:$0xff]
      %2746 = vset.pattern.permute.xlu0 0
      %2747 = vperm.xlu0 %2746, %v2744
      %v2748 = vpop.permute.xlu0 %2747
      %v2751 = vsel %vm1325, %v2653, 0
      %2753 = vmatpush.msra.mxu0 %v2684
      %2754 = vmatpush.msra.mxu0 %v2682
      %2755 = vmatpush.msra.mxu0 %v2680
      %2756 = vmatpush.msra.mxu0 %v2678
      %2757 = vmatpush.msra.mxu0 %v2676
      %2758 = vmatpush.msra.mxu0 %v2674
      %2759 = vmatpush.msra.mxu0 %v2672
      %2760 = vmatpush.msra.mxu0 %v2670
      %2761 = vmatpush.msra.mxu0 %v2668
      %2762 = vmatpush.msra.mxu0 %v2666
      %2763 = vmatpush.msra.mxu0 %v2664
      %2764 = vmatpush.msra.mxu0 %v2662
      %2765 = vmatpush.msra.mxu0 %v2660
      %2766 = vmatpush.msra.mxu0 %v2658
      %2767 = vmatpush.msra.mxu0 %v2656
      %2768 = vmatpush.msra.mxu0 %v2654
      %2769 = vmatmul.f32.gmra.mxu0 %v2651
      %v2770 = vpop.f32.mrf.mxu0
      %v2771 = vadd.f32 %v2748, %v2770
      %2772 = vdwg.mxu0
      %2773 = vmatpush.msra.mxu0 %v2716
      %2774 = vmatpush.msra.mxu0 %v2714
      %2775 = vmatpush.msra.mxu0 %v2712
      %2776 = vmatpush.msra.mxu0 %v2710
      %2777 = vmatpush.msra.mxu0 %v2708
      %2778 = vmatpush.msra.mxu0 %v2706
      %2779 = vmatpush.msra.mxu0 %v2704
      %2780 = vmatpush.msra.mxu0 %v2702
      %2781 = vmatpush.msra.mxu0 %v2700
      %2782 = vmatpush.msra.mxu0 %v2698
      %2783 = vmatpush.msra.mxu0 %v2696
      %2784 = vmatpush.msra.mxu0 %v2694
      %2785 = vmatpush.msra.mxu0 %v2692
      %2786 = vmatpush.msra.mxu0 %v2690
      %2787 = vmatpush.msra.mxu0 %v2688
      %2788 = vmatpush.msra.mxu0 %v2686
      %2789 = vmatmul.f32.gmra.mxu0 %v2652
      %v2790 = vpop.f32.mrf.mxu0
      %v2791 = vadd.f32 %v2771, %v2790
      %2792 = vdwg.mxu0
      %2793 = vmatpush.msra.mxu0 0.0
      %2794 = vmatpush.msra.mxu0 0.0
      %2795 = vmatpush.msra.mxu0 0.0
      %2796 = vmatpush.msra.mxu0 %v2742
      %2797 = vmatpush.msra.mxu0 %v2740
      %2798 = vmatpush.msra.mxu0 %v2738
      %2799 = vmatpush.msra.mxu0 %v2736
      %2800 = vmatpush.msra.mxu0 %v2734
      %2801 = vmatpush.msra.mxu0 %v2732
      %2802 = vmatpush.msra.mxu0 %v2730
      %2803 = vmatpush.msra.mxu0 %v2728
      %2804 = vmatpush.msra.mxu0 %v2726
      %2805 = vmatpush.msra.mxu0 %v2724
      %2806 = vmatpush.msra.mxu0 %v2722
      %2807 = vmatpush.msra.mxu0 %v2720
      %2808 = vmatpush.msra.mxu0 %v2718
      %2809 = vmatmul.f32.gmra.mxu0 %v2751
      %v2810 = vpop.f32.mrf.mxu0
      %v2811 = vadd.f32 %v2791, %v2810
      %2812 = vdwg.mxu0
      %2813 = vmatpush.msra.mxu0 %v2685
      %2814 = vmatpush.msra.mxu0 %v2683
      %2815 = vmatpush.msra.mxu0 %v2681
      %2816 = vmatpush.msra.mxu0 %v2679
      %2817 = vmatpush.msra.mxu0 %v2677
      %2818 = vmatpush.msra.mxu0 %v2675
      %2819 = vmatpush.msra.mxu0 %v2673
      %2820 = vmatpush.msra.mxu0 %v2671
      %2821 = vmatpush.msra.mxu0 %v2669
      %2822 = vmatpush.msra.mxu0 %v2667
      %2823 = vmatpush.msra.mxu0 %v2665
      %2824 = vmatpush.msra.mxu0 %v2663
      %2825 = vmatpush.msra.mxu0 %v2661
      %2826 = vmatpush.msra.mxu0 %v2659
      %2827 = vmatpush.msra.mxu0 %v2657
      %2828 = vmatpush.msra.mxu0 %v2655
      %2829 = vmatmul.f32.gmra.mxu0 %v2651
      %v2830 = vpop.f32.mrf.mxu0
      %v2831 = vadd.f32 %v2748, %v2830
      %2832 = vdwg.mxu0
      %2833 = vmatpush.msra.mxu0 %v2717
      %2834 = vmatpush.msra.mxu0 %v2715
      %2835 = vmatpush.msra.mxu0 %v2713
      %2836 = vmatpush.msra.mxu0 %v2711
      %2837 = vmatpush.msra.mxu0 %v2709
      %2838 = vmatpush.msra.mxu0 %v2707
      %2839 = vmatpush.msra.mxu0 %v2705
      %2840 = vmatpush.msra.mxu0 %v2703
      %2841 = vmatpush.msra.mxu0 %v2701
      %2842 = vmatpush.msra.mxu0 %v2699
      %2843 = vmatpush.msra.mxu0 %v2697
      %2844 = vmatpush.msra.mxu0 %v2695
      %2845 = vmatpush.msra.mxu0 %v2693
      %2846 = vmatpush.msra.mxu0 %v2691
      %2847 = vmatpush.msra.mxu0 %v2689
      %2848 = vmatpush.msra.mxu0 %v2687
      %2849 = vmatmul.f32.gmra.mxu0 %v2652
      %v2850 = vpop.f32.mrf.mxu0
      %v2851 = vadd.f32 %v2831, %v2850
      %2852 = vdwg.mxu0
      %2853 = vmatpush.msra.mxu0 0.0
      %2854 = vmatpush.msra.mxu0 0.0
      %2855 = vmatpush.msra.mxu0 0.0
      %2856 = vmatpush.msra.mxu0 %v2743
      %2857 = vmatpush.msra.mxu0 %v2741
      %2858 = vmatpush.msra.mxu0 %v2739
      %2859 = vmatpush.msra.mxu0 %v2737
      %2860 = vmatpush.msra.mxu0 %v2735
      %2861 = vmatpush.msra.mxu0 %v2733
      %2862 = vmatpush.msra.mxu0 %v2731
      %2863 = vmatpush.msra.mxu0 %v2729
      %2864 = vmatpush.msra.mxu0 %v2727
      %2865 = vmatpush.msra.mxu0 %v2725
      %2866 = vmatpush.msra.mxu0 %v2723
      %2867 = vmatpush.msra.mxu0 %v2721
      %2868 = vmatpush.msra.mxu0 %v2719
      %2869 = vmatmul.f32.gmra.mxu0 %v2751
      %v2870 = vpop.f32.mrf.mxu0
      %v2871 = vadd.f32 %v2851, %v2870
      %2872 = vdwg.mxu0
      %v2873 = vmul.f32 %v2811, 0.2
      %v2874 = vmul.f32 %v2871, 0.2
      %v2875 = vadd.f32 %v2873, %v1077
      %v2876 = vadd.f32 %v2874, %v1078
      %2877 = vrot.lane.b32.xlu0 %v2875, 17
      %v2878 = vpop.permute.xlu0 %2877
      %2879 = vrot.lane.b32.xlu0 %v2876, 17
      %v2880 = vpop.permute.xlu0 %2879
      %v2881 = vsel %vm1085, %v2878, %v2880
      %v2882 = vsel %vm1085, %v2880, %v2878
      %v2883 = vld [vmem:[%s3] ss:$8 sm:$0x3]
      %v2885 = vperm.slane %v2883, 0
      %v2886 = vperm.slane %v2883, 1
      %v2889 = vmul.f32 %v2882, %v2885
      %v2890 = vmul.f32 %v2881, %v2886
      %2891 = vst [vmem:[#allocation2] sm:$0xff] %v2889
      %2892 = vst [vmem:[#allocation2 + $0x8] sm:$0xff] %v2890
      %2893 = vrot.lane.b32.xlu0 %v2875, 16
      %v2894 = vpop.permute.xlu0 %2893
      %2895 = vrot.lane.b32.xlu0 %v2876, 16
      %v2896 = vpop.permute.xlu0 %2895
      %v2897 = vsel %vm1102, %v2894, %v2896
      %v2898 = vsel %vm1102, %v2896, %v2894
      %v2899 = vld [vmem:[%s1105] ss:$8 sm:$0x3]
      %v2901 = vperm.slane %v2899, 0
      %v2902 = vperm.slane %v2899, 1
      %v2905 = vmul.f32 %v2898, %v2901
      %v2906 = vmul.f32 %v2897, %v2902
      %2907 = vst [vmem:[#allocation2 + $0x50] sm:$0xff] %v2905
      %2908 = vst [vmem:[#allocation2 + $0x58] sm:$0xff] %v2906
      %2909 = vrot.lane.b32.xlu0 %v2875, 15
      %v2910 = vpop.permute.xlu0 %2909
      %2911 = vrot.lane.b32.xlu0 %v2876, 15
      %v2912 = vpop.permute.xlu0 %2911
      %v2913 = vsel %vm1120, %v2910, %v2912
      %v2914 = vsel %vm1120, %v2912, %v2910
      %v2915 = vld [vmem:[%s1123] ss:$8 sm:$0x3]
      %v2917 = vperm.slane %v2915, 0
      %v2918 = vperm.slane %v2915, 1
      %v2921 = vmul.f32 %v2914, %v2917
      %v2922 = vmul.f32 %v2913, %v2918
      %2923 = vst [vmem:[#allocation2 + $0xa0] sm:$0xff] %v2921
      %2924 = vst [vmem:[#allocation2 + $0xa8] sm:$0xff] %v2922
      %2925 = vrot.lane.b32.xlu0 %v2875, 1
      %v2926 = vpop.permute.xlu0 %2925
      %2927 = vrot.lane.b32.xlu0 %v2876, 1
      %v2928 = vpop.permute.xlu0 %2927
      %v2929 = vsel %vm1138, %v2926, %v2928
      %v2930 = vsel %vm1138, %v2928, %v2926
      %v2931 = vld [vmem:[%s1141] ss:$8 sm:$0x3]
      %v2933 = vperm.slane %v2931, 0
      %v2934 = vperm.slane %v2931, 1
      %v2937 = vmul.f32 %v2930, %v2933
      %v2938 = vmul.f32 %v2929, %v2934
      %2939 = vst [vmem:[#allocation2 + $0xf0] sm:$0xff] %v2937
      %2940 = vst [vmem:[#allocation2 + $0xf8] sm:$0xff] %v2938
      %2941 = vst [vmem:[#allocation2 + $0x140] sm:$0xff] %v2875
      %2942 = vst [vmem:[#allocation2 + $0x148] sm:$0xff] %v2876
      %2943 = vrot.lane.b32.xlu0 %v2875, 127
      %v2944 = vpop.permute.xlu0 %2943
      %2945 = vrot.lane.b32.xlu0 %v2876, 127
      %v2946 = vpop.permute.xlu0 %2945
      %v2947 = vsel %vm1158, %v2944, %v2946
      %v2948 = vsel %vm1158, %v2946, %v2944
      %v2949 = vld [vmem:[%s1161] ss:$8 sm:$0x3]
      %v2951 = vperm.slane %v2949, 0
      %v2952 = vperm.slane %v2949, 1
      %v2955 = vmul.f32 %v2947, %v2951
      %v2956 = vmul.f32 %v2948, %v2952
      %2957 = vst [vmem:[#allocation2 + $0x190] sm:$0xff] %v2955
      %2958 = vst [vmem:[#allocation2 + $0x198] sm:$0xff] %v2956
      %2959 = vrot.lane.b32.xlu0 %v2875, 113
      %v2960 = vpop.permute.xlu0 %2959
      %2961 = vrot.lane.b32.xlu0 %v2876, 113
      %v2962 = vpop.permute.xlu0 %2961
      %v2963 = vsel %vm1176, %v2960, %v2962
      %v2964 = vsel %vm1176, %v2962, %v2960
      %v2965 = vld [vmem:[%s1179] ss:$8 sm:$0x3]
      %v2967 = vperm.slane %v2965, 0
      %v2968 = vperm.slane %v2965, 1
      %v2971 = vmul.f32 %v2963, %v2967
      %v2972 = vmul.f32 %v2964, %v2968
      %2973 = vst [vmem:[#allocation2 + $0x1e0] sm:$0xff] %v2971
      %2974 = vst [vmem:[#allocation2 + $0x1e8] sm:$0xff] %v2972
      %2975 = vrot.lane.b32.xlu0 %v2875, 112
      %v2976 = vpop.permute.xlu0 %2975
      %2977 = vrot.lane.b32.xlu0 %v2876, 112
      %v2978 = vpop.permute.xlu0 %2977
      %v2979 = vsel %vm1194, %v2976, %v2978
      %v2980 = vsel %vm1194, %v2978, %v2976
      %v2981 = vld [vmem:[%s1197] ss:$8 sm:$0x3]
      %v2983 = vperm.slane %v2981, 0
      %v2984 = vperm.slane %v2981, 1
      %v2987 = vmul.f32 %v2979, %v2983
      %v2988 = vmul.f32 %v2980, %v2984
      %2989 = vst [vmem:[#allocation2 + $0x230] sm:$0xff] %v2987
      %2990 = vst [vmem:[#allocation2 + $0x238] sm:$0xff] %v2988
      %2991 = vrot.lane.b32.xlu0 %v2875, 111
      %v2992 = vpop.permute.xlu0 %2991
      %2993 = vrot.lane.b32.xlu0 %v2876, 111
      %v2994 = vpop.permute.xlu0 %2993
      %v2995 = vsel %vm1212, %v2992, %v2994
      %v2996 = vsel %vm1212, %v2994, %v2992
      %v2997 = vld [vmem:[%s1215] ss:$8 sm:$0x3]
      %v2999 = vperm.slane %v2997, 0
      %v3000 = vperm.slane %v2997, 1
      %v3003 = vmul.f32 %v2995, %v2999
      %v3004 = vmul.f32 %v2996, %v3000
      %3005 = vst [vmem:[#allocation2 + $0x280] sm:$0xff] %v3003
      %3006 = vst [vmem:[#allocation2 + $0x288] sm:$0xff] %v3004
      %v3007 = vld [vmem:[%s25] sm:$0xff]
      %v3008 = vld [vmem:[%s25 + $0x8] sm:$0xff]
      %v3009 = vld [vmem:[%s25 + $0x10] sm:$0xff]
      %v3010 = vld [vmem:[#allocation2] sm:$0xff]
      %v3011 = vld [vmem:[#allocation2 + $0x8] sm:$0xff]
      %v3012 = vld [vmem:[#allocation2 + $0x10] sm:$0xff]
      %v3013 = vld [vmem:[#allocation2 + $0x18] sm:$0xff]
      %v3014 = vld [vmem:[#allocation2 + $0x20] sm:$0xff]
      %v3015 = vld [vmem:[#allocation2 + $0x28] sm:$0xff]
      %v3016 = vld [vmem:[#allocation2 + $0x30] sm:$0xff]
      %v3017 = vld [vmem:[#allocation2 + $0x38] sm:$0xff]
      %v3018 = vld [vmem:[#allocation2 + $0x40] sm:$0xff]
      %v3019 = vld [vmem:[#allocation2 + $0x48] sm:$0xff]
      %v3020 = vld [vmem:[#allocation2 + $0x50] sm:$0xff]
      %v3021 = vld [vmem:[#allocation2 + $0x58] sm:$0xff]
      %v3022 = vld [vmem:[#allocation2 + $0x60] sm:$0xff]
      %v3023 = vld [vmem:[#allocation2 + $0x68] sm:$0xff]
      %v3024 = vld [vmem:[#allocation2 + $0x70] sm:$0xff]
      %v3025 = vld [vmem:[#allocation2 + $0x78] sm:$0xff]
      %v3026 = vld [vmem:[#allocation2 + $0x80] sm:$0xff]
      %v3027 = vld [vmem:[#allocation2 + $0x88] sm:$0xff]
      %v3028 = vld [vmem:[#allocation2 + $0x90] sm:$0xff]
      %v3029 = vld [vmem:[#allocation2 + $0x98] sm:$0xff]
      %v3030 = vld [vmem:[#allocation2 + $0xa0] sm:$0xff]
      %v3031 = vld [vmem:[#allocation2 + $0xa8] sm:$0xff]
      %v3032 = vld [vmem:[#allocation2 + $0xb0] sm:$0xff]
      %v3033 = vld [vmem:[#allocation2 + $0xb8] sm:$0xff]
      %v3034 = vld [vmem:[#allocation2 + $0xc0] sm:$0xff]
      %v3035 = vld [vmem:[#allocation2 + $0xc8] sm:$0xff]
      %v3036 = vld [vmem:[#allocation2 + $0xd0] sm:$0xff]
      %v3037 = vld [vmem:[#allocation2 + $0xd8] sm:$0xff]
      %v3038 = vld [vmem:[#allocation2 + $0xe0] sm:$0xff]
      %v3039 = vld [vmem:[#allocation2 + $0xe8] sm:$0xff]
      %v3040 = vld [vmem:[#allocation2 + $0xf0] sm:$0xff]
      %v3041 = vld [vmem:[#allocation2 + $0xf8] sm:$0xff]
      %v3042 = vld [vmem:[#allocation2 + $0x100] sm:$0xff]
      %v3043 = vld [vmem:[#allocation2 + $0x108] sm:$0xff]
      %v3044 = vld [vmem:[#allocation2 + $0x110] sm:$0xff]
      %v3045 = vld [vmem:[#allocation2 + $0x118] sm:$0xff]
      %v3046 = vld [vmem:[#allocation2 + $0x120] sm:$0xff]
      %v3047 = vld [vmem:[#allocation2 + $0x128] sm:$0xff]
      %v3048 = vld [vmem:[#allocation2 + $0x130] sm:$0xff]
      %v3049 = vld [vmem:[#allocation2 + $0x138] sm:$0xff]
      %v3050 = vld [vmem:[#allocation2 + $0x140] sm:$0xff]
      %v3051 = vld [vmem:[#allocation2 + $0x148] sm:$0xff]
      %v3052 = vld [vmem:[#allocation2 + $0x150] sm:$0xff]
      %v3053 = vld [vmem:[#allocation2 + $0x158] sm:$0xff]
      %v3054 = vld [vmem:[#allocation2 + $0x160] sm:$0xff]
      %v3055 = vld [vmem:[#allocation2 + $0x168] sm:$0xff]
      %v3056 = vld [vmem:[#allocation2 + $0x170] sm:$0xff]
      %v3057 = vld [vmem:[#allocation2 + $0x178] sm:$0xff]
      %v3058 = vld [vmem:[#allocation2 + $0x180] sm:$0xff]
      %v3059 = vld [vmem:[#allocation2 + $0x188] sm:$0xff]
      %v3060 = vld [vmem:[#allocation2 + $0x190] sm:$0xff]
      %v3061 = vld [vmem:[#allocation2 + $0x198] sm:$0xff]
      %v3062 = vld [vmem:[#allocation2 + $0x1a0] sm:$0xff]
      %v3063 = vld [vmem:[#allocation2 + $0x1a8] sm:$0xff]
      %v3064 = vld [vmem:[#allocation2 + $0x1b0] sm:$0xff]
      %v3065 = vld [vmem:[#allocation2 + $0x1b8] sm:$0xff]
      %v3066 = vld [vmem:[#allocation2 + $0x1c0] sm:$0xff]
      %v3067 = vld [vmem:[#allocation2 + $0x1c8] sm:$0xff]
      %v3068 = vld [vmem:[#allocation2 + $0x1d0] sm:$0xff]
      %v3069 = vld [vmem:[#allocation2 + $0x1d8] sm:$0xff]
      %v3070 = vld [vmem:[#allocation2 + $0x1e0] sm:$0xff]
      %v3071 = vld [vmem:[#allocation2 + $0x1e8] sm:$0xff]
      %v3072 = vld [vmem:[#allocation2 + $0x1f0] sm:$0xff]
      %v3073 = vld [vmem:[#allocation2 + $0x1f8] sm:$0xff]
      %v3074 = vld [vmem:[#allocation2 + $0x200] sm:$0xff]
      %v3075 = vld [vmem:[#allocation2 + $0x208] sm:$0xff]
      %v3076 = vld [vmem:[#allocation2 + $0x210] sm:$0xff]
      %v3077 = vld [vmem:[#allocation2 + $0x218] sm:$0xff]
      %v3078 = vld [vmem:[#allocation2 + $0x220] sm:$0xff]
      %v3079 = vld [vmem:[#allocation2 + $0x228] sm:$0xff]
      %v3080 = vld [vmem:[#allocation2 + $0x230] sm:$0xff]
      %v3081 = vld [vmem:[#allocation2 + $0x238] sm:$0xff]
      %v3082 = vld [vmem:[#allocation2 + $0x240] sm:$0xff]
      %v3083 = vld [vmem:[#allocation2 + $0x248] sm:$0xff]
      %v3084 = vld [vmem:[#allocation2 + $0x250] sm:$0xff]
      %v3085 = vld [vmem:[#allocation2 + $0x258] sm:$0xff]
      %v3086 = vld [vmem:[#allocation2 + $0x260] sm:$0xff]
      %v3087 = vld [vmem:[#allocation2 + $0x268] sm:$0xff]
      %v3088 = vld [vmem:[#allocation2 + $0x270] sm:$0xff]
      %v3089 = vld [vmem:[#allocation2 + $0x278] sm:$0xff]
      %v3090 = vld [vmem:[#allocation2 + $0x280] sm:$0xff]
      %v3091 = vld [vmem:[#allocation2 + $0x288] sm:$0xff]
      %v3092 = vld [vmem:[#allocation2 + $0x290] sm:$0xff]
      %v3093 = vld [vmem:[#allocation2 + $0x298] sm:$0xff]
      %v3094 = vld [vmem:[#allocation2 + $0x2a0] sm:$0xff]
      %v3095 = vld [vmem:[#allocation2 + $0x2a8] sm:$0xff]
      %v3096 = vld [vmem:[#allocation2 + $0x2b0] sm:$0xff]
      %v3097 = vld [vmem:[#allocation2 + $0x2b8] sm:$0xff]
      %v3098 = vld [vmem:[#allocation2 + $0x2c0] sm:$0xff]
      %v3099 = vld [vmem:[#allocation2 + $0x2c8] sm:$0xff]
      %v3100 = vld [vmem:[%s27] sm:$0xff]
      %3102 = vset.pattern.permute.xlu0 0
      %3103 = vperm.xlu0 %3102, %v3100
      %v3104 = vpop.permute.xlu0 %3103
      %v3107 = vsel %vm1325, %v3009, 0
      %3109 = vmatpush.msra.mxu0 %v3040
      %3110 = vmatpush.msra.mxu0 %v3038
      %3111 = vmatpush.msra.mxu0 %v3036
      %3112 = vmatpush.msra.mxu0 %v3034
      %3113 = vmatpush.msra.mxu0 %v3032
      %3114 = vmatpush.msra.mxu0 %v3030
      %3115 = vmatpush.msra.mxu0 %v3028
      %3116 = vmatpush.msra.mxu0 %v3026
      %3117 = vmatpush.msra.mxu0 %v3024
      %3118 = vmatpush.msra.mxu0 %v3022
      %3119 = vmatpush.msra.mxu0 %v3020
      %3120 = vmatpush.msra.mxu0 %v3018
      %3121 = vmatpush.msra.mxu0 %v3016
      %3122 = vmatpush.msra.mxu0 %v3014
      %3123 = vmatpush.msra.mxu0 %v3012
      %3124 = vmatpush.msra.mxu0 %v3010
      %3125 = vmatmul.f32.gmra.mxu0 %v3007
      %v3126 = vpop.f32.mrf.mxu0
      %v3127 = vadd.f32 %v3104, %v3126
      %3128 = vdwg.mxu0
      %3129 = vmatpush.msra.mxu0 %v3072
      %3130 = vmatpush.msra.mxu0 %v3070
      %3131 = vmatpush.msra.mxu0 %v3068
      %3132 = vmatpush.msra.mxu0 %v3066
      %3133 = vmatpush.msra.mxu0 %v3064
      %3134 = vmatpush.msra.mxu0 %v3062
      %3135 = vmatpush.msra.mxu0 %v3060
      %3136 = vmatpush.msra.mxu0 %v3058
      %3137 = vmatpush.msra.mxu0 %v3056
      %3138 = vmatpush.msra.mxu0 %v3054
      %3139 = vmatpush.msra.mxu0 %v3052
      %3140 = vmatpush.msra.mxu0 %v3050
      %3141 = vmatpush.msra.mxu0 %v3048
      %3142 = vmatpush.msra.mxu0 %v3046
      %3143 = vmatpush.msra.mxu0 %v3044
      %3144 = vmatpush.msra.mxu0 %v3042
      %3145 = vmatmul.f32.gmra.mxu0 %v3008
      %v3146 = vpop.f32.mrf.mxu0
      %v3147 = vadd.f32 %v3127, %v3146
      %3148 = vdwg.mxu0
      %3149 = vmatpush.msra.mxu0 0.0
      %3150 = vmatpush.msra.mxu0 0.0
      %3151 = vmatpush.msra.mxu0 0.0
      %3152 = vmatpush.msra.mxu0 %v3098
      %3153 = vmatpush.msra.mxu0 %v3096
      %3154 = vmatpush.msra.mxu0 %v3094
      %3155 = vmatpush.msra.mxu0 %v3092
      %3156 = vmatpush.msra.mxu0 %v3090
      %3157 = vmatpush.msra.mxu0 %v3088
      %3158 = vmatpush.msra.mxu0 %v3086
      %3159 = vmatpush.msra.mxu0 %v3084
      %3160 = vmatpush.msra.mxu0 %v3082
      %3161 = vmatpush.msra.mxu0 %v3080
      %3162 = vmatpush.msra.mxu0 %v3078
      %3163 = vmatpush.msra.mxu0 %v3076
      %3164 = vmatpush.msra.mxu0 %v3074
      %3165 = vmatmul.f32.gmra.mxu0 %v3107
      %v3166 = vpop.f32.mrf.mxu0
      %v3167 = vadd.f32 %v3147, %v3166
      %3168 = vdwg.mxu0
      %3169 = vmatpush.msra.mxu0 %v3041
      %3170 = vmatpush.msra.mxu0 %v3039
      %3171 = vmatpush.msra.mxu0 %v3037
      %3172 = vmatpush.msra.mxu0 %v3035
      %3173 = vmatpush.msra.mxu0 %v3033
      %3174 = vmatpush.msra.mxu0 %v3031
      %3175 = vmatpush.msra.mxu0 %v3029
      %3176 = vmatpush.msra.mxu0 %v3027
      %3177 = vmatpush.msra.mxu0 %v3025
      %3178 = vmatpush.msra.mxu0 %v3023
      %3179 = vmatpush.msra.mxu0 %v3021
      %3180 = vmatpush.msra.mxu0 %v3019
      %3181 = vmatpush.msra.mxu0 %v3017
      %3182 = vmatpush.msra.mxu0 %v3015
      %3183 = vmatpush.msra.mxu0 %v3013
      %3184 = vmatpush.msra.mxu0 %v3011
      %3185 = vmatmul.f32.gmra.mxu0 %v3007
      %v3186 = vpop.f32.mrf.mxu0
      %v3187 = vadd.f32 %v3104, %v3186
      %3188 = vdwg.mxu0
      %3189 = vmatpush.msra.mxu0 %v3073
      %3190 = vmatpush.msra.mxu0 %v3071
      %3191 = vmatpush.msra.mxu0 %v3069
      %3192 = vmatpush.msra.mxu0 %v3067
      %3193 = vmatpush.msra.mxu0 %v3065
      %3194 = vmatpush.msra.mxu0 %v3063
      %3195 = vmatpush.msra.mxu0 %v3061
      %3196 = vmatpush.msra.mxu0 %v3059
      %3197 = vmatpush.msra.mxu0 %v3057
      %3198 = vmatpush.msra.mxu0 %v3055
      %3199 = vmatpush.msra.mxu0 %v3053
      %3200 = vmatpush.msra.mxu0 %v3051
      %3201 = vmatpush.msra.mxu0 %v3049
      %3202 = vmatpush.msra.mxu0 %v3047
      %3203 = vmatpush.msra.mxu0 %v3045
      %3204 = vmatpush.msra.mxu0 %v3043
      %3205 = vmatmul.f32.gmra.mxu0 %v3008
      %v3206 = vpop.f32.mrf.mxu0
      %v3207 = vadd.f32 %v3187, %v3206
      %3208 = vdwg.mxu0
      %3209 = vmatpush.msra.mxu0 0.0
      %3210 = vmatpush.msra.mxu0 0.0
      %3211 = vmatpush.msra.mxu0 0.0
      %3212 = vmatpush.msra.mxu0 %v3099
      %3213 = vmatpush.msra.mxu0 %v3097
      %3214 = vmatpush.msra.mxu0 %v3095
      %3215 = vmatpush.msra.mxu0 %v3093
      %3216 = vmatpush.msra.mxu0 %v3091
      %3217 = vmatpush.msra.mxu0 %v3089
      %3218 = vmatpush.msra.mxu0 %v3087
      %3219 = vmatpush.msra.mxu0 %v3085
      %3220 = vmatpush.msra.mxu0 %v3083
      %3221 = vmatpush.msra.mxu0 %v3081
      %3222 = vmatpush.msra.mxu0 %v3079
      %3223 = vmatpush.msra.mxu0 %v3077
      %3224 = vmatpush.msra.mxu0 %v3075
      %3225 = vmatmul.f32.gmra.mxu0 %v3107
      %v3226 = vpop.f32.mrf.mxu0
      %v3227 = vadd.f32 %v3207, %v3226
      %3228 = vdwg.mxu0
      %v3229 = vmul.f32 %v3167, 0.2
      %v3230 = vmul.f32 %v3227, 0.2
      %v3231 = vmax.f32 %v3167, %v3229
      %v3232 = vmax.f32 %v3227, %v3230
      %3233 = vrot.lane.b32.xlu0 %v3231, 17
      %v3234 = vpop.permute.xlu0 %3233
      %3235 = vrot.lane.b32.xlu0 %v3232, 17
      %v3236 = vpop.permute.xlu0 %3235
      %v3237 = vsel %vm1085, %v3234, %v3236
      %v3238 = vsel %vm1085, %v3236, %v3234
      %v3239 = vld [vmem:[%s3] ss:$8 sm:$0x3]
      %v3241 = vperm.slane %v3239, 0
      %v3242 = vperm.slane %v3239, 1
      %v3245 = vmul.f32 %v3238, %v3241
      %v3246 = vmul.f32 %v3237, %v3242
      %3247 = vst [vmem:[#allocation2 + $0x10] sm:$0xff] %v3245
      %3248 = vst [vmem:[#allocation2 + $0x18] sm:$0xff] %v3246
      %3249 = vrot.lane.b32.xlu0 %v3231, 16
      %v3250 = vpop.permute.xlu0 %3249
      %3251 = vrot.lane.b32.xlu0 %v3232, 16
      %v3252 = vpop.permute.xlu0 %3251
      %v3253 = vsel %vm1102, %v3250, %v3252
      %v3254 = vsel %vm1102, %v3252, %v3250
      %v3255 = vld [vmem:[%s1105] ss:$8 sm:$0x3]
      %v3257 = vperm.slane %v3255, 0
      %v3258 = vperm.slane %v3255, 1
      %v3261 = vmul.f32 %v3254, %v3257
      %v3262 = vmul.f32 %v3253, %v3258
      %3263 = vst [vmem:[#allocation2 + $0x60] sm:$0xff] %v3261
      %3264 = vst [vmem:[#allocation2 + $0x68] sm:$0xff] %v3262
      %3265 = vrot.lane.b32.xlu0 %v3231, 15
      %v3266 = vpop.permute.xlu0 %3265
      %3267 = vrot.lane.b32.xlu0 %v3232, 15
      %v3268 = vpop.permute.xlu0 %3267
      %v3269 = vsel %vm1120, %v3266, %v3268
      %v3270 = vsel %vm1120, %v3268, %v3266
      %v3271 = vld [vmem:[%s1123] ss:$8 sm:$0x3]
      %v3273 = vperm.slane %v3271, 0
      %v3274 = vperm.slane %v3271, 1
      %v3277 = vmul.f32 %v3270, %v3273
      %v3278 = vmul.f32 %v3269, %v3274
      %3279 = vst [vmem:[#allocation2 + $0xb0] sm:$0xff] %v3277
      %3280 = vst [vmem:[#allocation2 + $0xb8] sm:$0xff] %v3278
      %3281 = vrot.lane.b32.xlu0 %v3231, 1
      %v3282 = vpop.permute.xlu0 %3281
      %3283 = vrot.lane.b32.xlu0 %v3232, 1
      %v3284 = vpop.permute.xlu0 %3283
      %v3285 = vsel %vm1138, %v3282, %v3284
      %v3286 = vsel %vm1138, %v3284, %v3282
      %v3287 = vld [vmem:[%s1141] ss:$8 sm:$0x3]
      %v3289 = vperm.slane %v3287, 0
      %v3290 = vperm.slane %v3287, 1
      %v3293 = vmul.f32 %v3286, %v3289
      %v3294 = vmul.f32 %v3285, %v3290
      %3295 = vst [vmem:[#allocation2 + $0x100] sm:$0xff] %v3293
      %3296 = vst [vmem:[#allocation2 + $0x108] sm:$0xff] %v3294
      %3297 = vst [vmem:[#allocation2 + $0x150] sm:$0xff] %v3231
      %3298 = vst [vmem:[#allocation2 + $0x158] sm:$0xff] %v3232
      %3299 = vrot.lane.b32.xlu0 %v3231, 127
      %v3300 = vpop.permute.xlu0 %3299
      %3301 = vrot.lane.b32.xlu0 %v3232, 127
      %v3302 = vpop.permute.xlu0 %3301
      %v3303 = vsel %vm1158, %v3300, %v3302
      %v3304 = vsel %vm1158, %v3302, %v3300
      %v3305 = vld [vmem:[%s1161] ss:$8 sm:$0x3]
      %v3307 = vperm.slane %v3305, 0
      %v3308 = vperm.slane %v3305, 1
      %v3311 = vmul.f32 %v3303, %v3307
      %v3312 = vmul.f32 %v3304, %v3308
      %3313 = vst [vmem:[#allocation2 + $0x1a0] sm:$0xff] %v3311
      %3314 = vst [vmem:[#allocation2 + $0x1a8] sm:$0xff] %v3312
      %3315 = vrot.lane.b32.xlu0 %v3231, 113
      %v3316 = vpop.permute.xlu0 %3315
      %3317 = vrot.lane.b32.xlu0 %v3232, 113
      %v3318 = vpop.permute.xlu0 %3317
      %v3319 = vsel %vm1176, %v3316, %v3318
      %v3320 = vsel %vm1176, %v3318, %v3316
      %v3321 = vld [vmem:[%s1179] ss:$8 sm:$0x3]
      %v3323 = vperm.slane %v3321, 0
      %v3324 = vperm.slane %v3321, 1
      %v3327 = vmul.f32 %v3319, %v3323
      %v3328 = vmul.f32 %v3320, %v3324
      %3329 = vst [vmem:[#allocation2 + $0x1f0] sm:$0xff] %v3327
      %3330 = vst [vmem:[#allocation2 + $0x1f8] sm:$0xff] %v3328
      %3331 = vrot.lane.b32.xlu0 %v3231, 112
      %v3332 = vpop.permute.xlu0 %3331
      %3333 = vrot.lane.b32.xlu0 %v3232, 112
      %v3334 = vpop.permute.xlu0 %3333
      %v3335 = vsel %vm1194, %v3332, %v3334
      %v3336 = vsel %vm1194, %v3334, %v3332
      %v3337 = vld [vmem:[%s1197] ss:$8 sm:$0x3]
      %v3339 = vperm.slane %v3337, 0
      %v3340 = vperm.slane %v3337, 1
      %v3343 = vmul.f32 %v3335, %v3339
      %v3344 = vmul.f32 %v3336, %v3340
      %3345 = vst [vmem:[#allocation2 + $0x240] sm:$0xff] %v3343
      %3346 = vst [vmem:[#allocation2 + $0x248] sm:$0xff] %v3344
      %3347 = vrot.lane.b32.xlu0 %v3231, 111
      %v3348 = vpop.permute.xlu0 %3347
      %3349 = vrot.lane.b32.xlu0 %v3232, 111
      %v3350 = vpop.permute.xlu0 %3349
      %v3351 = vsel %vm1212, %v3348, %v3350
      %v3352 = vsel %vm1212, %v3350, %v3348
      %v3353 = vld [vmem:[%s1215] ss:$8 sm:$0x3]
      %v3355 = vperm.slane %v3353, 0
      %v3356 = vperm.slane %v3353, 1
      %v3359 = vmul.f32 %v3351, %v3355
      %v3360 = vmul.f32 %v3352, %v3356
      %3361 = vst [vmem:[#allocation2 + $0x290] sm:$0xff] %v3359
      %3362 = vst [vmem:[#allocation2 + $0x298] sm:$0xff] %v3360
      %v3363 = vld [vmem:[%s29] sm:$0xff]
      %v3364 = vld [vmem:[%s29 + $0x8] sm:$0xff]
      %v3365 = vld [vmem:[%s29 + $0x10] sm:$0xff]
      %v3366 = vld [vmem:[#allocation2] sm:$0xff]
      %v3367 = vld [vmem:[#allocation2 + $0x8] sm:$0xff]
      %v3368 = vld [vmem:[#allocation2 + $0x10] sm:$0xff]
      %v3369 = vld [vmem:[#allocation2 + $0x18] sm:$0xff]
      %v3370 = vld [vmem:[#allocation2 + $0x20] sm:$0xff]
      %v3371 = vld [vmem:[#allocation2 + $0x28] sm:$0xff]
      %v3372 = vld [vmem:[#allocation2 + $0x30] sm:$0xff]
      %v3373 = vld [vmem:[#allocation2 + $0x38] sm:$0xff]
      %v3374 = vld [vmem:[#allocation2 + $0x40] sm:$0xff]
      %v3375 = vld [vmem:[#allocation2 + $0x48] sm:$0xff]
      %v3376 = vld [vmem:[#allocation2 + $0x50] sm:$0xff]
      %v3377 = vld [vmem:[#allocation2 + $0x58] sm:$0xff]
      %v3378 = vld [vmem:[#allocation2 + $0x60] sm:$0xff]
      %v3379 = vld [vmem:[#allocation2 + $0x68] sm:$0xff]
      %v3380 = vld [vmem:[#allocation2 + $0x70] sm:$0xff]
      %v3381 = vld [vmem:[#allocation2 + $0x78] sm:$0xff]
      %v3382 = vld [vmem:[#allocation2 + $0x80] sm:$0xff]
      %v3383 = vld [vmem:[#allocation2 + $0x88] sm:$0xff]
      %v3384 = vld [vmem:[#allocation2 + $0x90] sm:$0xff]
      %v3385 = vld [vmem:[#allocation2 + $0x98] sm:$0xff]
      %v3386 = vld [vmem:[#allocation2 + $0xa0] sm:$0xff]
      %v3387 = vld [vmem:[#allocation2 + $0xa8] sm:$0xff]
      %v3388 = vld [vmem:[#allocation2 + $0xb0] sm:$0xff]
      %v3389 = vld [vmem:[#allocation2 + $0xb8] sm:$0xff]
      %v3390 = vld [vmem:[#allocation2 + $0xc0] sm:$0xff]
      %v3391 = vld [vmem:[#allocation2 + $0xc8] sm:$0xff]
      %v3392 = vld [vmem:[#allocation2 + $0xd0] sm:$0xff]
      %v3393 = vld [vmem:[#allocation2 + $0xd8] sm:$0xff]
      %v3394 = vld [vmem:[#allocation2 + $0xe0] sm:$0xff]
      %v3395 = vld [vmem:[#allocation2 + $0xe8] sm:$0xff]
      %v3396 = vld [vmem:[#allocation2 + $0xf0] sm:$0xff]
      %v3397 = vld [vmem:[#allocation2 + $0xf8] sm:$0xff]
      %v3398 = vld [vmem:[#allocation2 + $0x100] sm:$0xff]
      %v3399 = vld [vmem:[#allocation2 + $0x108] sm:$0xff]
      %v3400 = vld [vmem:[#allocation2 + $0x110] sm:$0xff]
      %v3401 = vld [vmem:[#allocation2 + $0x118] sm:$0xff]
      %v3402 = vld [vmem:[#allocation2 + $0x120] sm:$0xff]
      %v3403 = vld [vmem:[#allocation2 + $0x128] sm:$0xff]
      %v3404 = vld [vmem:[#allocation2 + $0x130] sm:$0xff]
      %v3405 = vld [vmem:[#allocation2 + $0x138] sm:$0xff]
      %v3406 = vld [vmem:[#allocation2 + $0x140] sm:$0xff]
      %v3407 = vld [vmem:[#allocation2 + $0x148] sm:$0xff]
      %v3408 = vld [vmem:[#allocation2 + $0x150] sm:$0xff]
      %v3409 = vld [vmem:[#allocation2 + $0x158] sm:$0xff]
      %v3410 = vld [vmem:[#allocation2 + $0x160] sm:$0xff]
      %v3411 = vld [vmem:[#allocation2 + $0x168] sm:$0xff]
      %v3412 = vld [vmem:[#allocation2 + $0x170] sm:$0xff]
      %v3413 = vld [vmem:[#allocation2 + $0x178] sm:$0xff]
      %v3414 = vld [vmem:[#allocation2 + $0x180] sm:$0xff]
      %v3415 = vld [vmem:[#allocation2 + $0x188] sm:$0xff]
      %v3416 = vld [vmem:[#allocation2 + $0x190] sm:$0xff]
      %v3417 = vld [vmem:[#allocation2 + $0x198] sm:$0xff]
      %v3418 = vld [vmem:[#allocation2 + $0x1a0] sm:$0xff]
      %v3419 = vld [vmem:[#allocation2 + $0x1a8] sm:$0xff]
      %v3420 = vld [vmem:[#allocation2 + $0x1b0] sm:$0xff]
      %v3421 = vld [vmem:[#allocation2 + $0x1b8] sm:$0xff]
      %v3422 = vld [vmem:[#allocation2 + $0x1c0] sm:$0xff]
      %v3423 = vld [vmem:[#allocation2 + $0x1c8] sm:$0xff]
      %v3424 = vld [vmem:[#allocation2 + $0x1d0] sm:$0xff]
      %v3425 = vld [vmem:[#allocation2 + $0x1d8] sm:$0xff]
      %v3426 = vld [vmem:[#allocation2 + $0x1e0] sm:$0xff]
      %v3427 = vld [vmem:[#allocation2 + $0x1e8] sm:$0xff]
      %v3428 = vld [vmem:[#allocation2 + $0x1f0] sm:$0xff]
      %v3429 = vld [vmem:[#allocation2 + $0x1f8] sm:$0xff]
      %v3430 = vld [vmem:[#allocation2 + $0x200] sm:$0xff]
      %v3431 = vld [vmem:[#allocation2 + $0x208] sm:$0xff]
      %v3432 = vld [vmem:[#allocation2 + $0x210] sm:$0xff]
      %v3433 = vld [vmem:[#allocation2 + $0x218] sm:$0xff]
      %v3434 = vld [vmem:[#allocation2 + $0x220] sm:$0xff]
      %v3435 = vld [vmem:[#allocation2 + $0x228] sm:$0xff]
      %v3436 = vld [vmem:[#allocation2 + $0x230] sm:$0xff]
      %v3437 = vld [vmem:[#allocation2 + $0x238] sm:$0xff]
      %v3438 = vld [vmem:[#allocation2 + $0x240] sm:$0xff]
      %v3439 = vld [vmem:[#allocation2 + $0x248] sm:$0xff]
      %v3440 = vld [vmem:[#allocation2 + $0x250] sm:$0xff]
      %v3441 = vld [vmem:[#allocation2 + $0x258] sm:$0xff]
      %v3442 = vld [vmem:[#allocation2 + $0x260] sm:$0xff]
      %v3443 = vld [vmem:[#allocation2 + $0x268] sm:$0xff]
      %v3444 = vld [vmem:[#allocation2 + $0x270] sm:$0xff]
      %v3445 = vld [vmem:[#allocation2 + $0x278] sm:$0xff]
      %v3446 = vld [vmem:[#allocation2 + $0x280] sm:$0xff]
      %v3447 = vld [vmem:[#allocation2 + $0x288] sm:$0xff]
      %v3448 = vld [vmem:[#allocation2 + $0x290] sm:$0xff]
      %v3449 = vld [vmem:[#allocation2 + $0x298] sm:$0xff]
      %v3450 = vld [vmem:[#allocation2 + $0x2a0] sm:$0xff]
      %v3451 = vld [vmem:[#allocation2 + $0x2a8] sm:$0xff]
      %v3452 = vld [vmem:[#allocation2 + $0x2b0] sm:$0xff]
      %v3453 = vld [vmem:[#allocation2 + $0x2b8] sm:$0xff]
      %v3454 = vld [vmem:[#allocation2 + $0x2c0] sm:$0xff]
      %v3455 = vld [vmem:[#allocation2 + $0x2c8] sm:$0xff]
      %v3456 = vld [vmem:[%s31] sm:$0xff]
      %3458 = vset.pattern.permute.xlu0 0
      %3459 = vperm.xlu0 %3458, %v3456
      %v3460 = vpop.permute.xlu0 %3459
      %v3463 = vsel %vm1325, %v3365, 0
      %3465 = vmatpush.msra.mxu0 %v3396
      %3466 = vmatpush.msra.mxu0 %v3394
      %3467 = vmatpush.msra.mxu0 %v3392
      %3468 = vmatpush.msra.mxu0 %v3390
      %3469 = vmatpush.msra.mxu0 %v3388
      %3470 = vmatpush.msra.mxu0 %v3386
      %3471 = vmatpush.msra.mxu0 %v3384
      %3472 = vmatpush.msra.mxu0 %v3382
      %3473 = vmatpush.msra.mxu0 %v3380
      %3474 = vmatpush.msra.mxu0 %v3378
      %3475 = vmatpush.msra.mxu0 %v3376
      %3476 = vmatpush.msra.mxu0 %v3374
      %3477 = vmatpush.msra.mxu0 %v3372
      %3478 = vmatpush.msra.mxu0 %v3370
      %3479 = vmatpush.msra.mxu0 %v3368
      %3480 = vmatpush.msra.mxu0 %v3366
      %3481 = vmatmul.f32.gmra.mxu0 %v3363
      %v3482 = vpop.f32.mrf.mxu0
      %v3483 = vadd.f32 %v3460, %v3482
      %3484 = vdwg.mxu0
      %3485 = vmatpush.msra.mxu0 %v3428
      %3486 = vmatpush.msra.mxu0 %v3426
      %3487 = vmatpush.msra.mxu0 %v3424
      %3488 = vmatpush.msra.mxu0 %v3422
      %3489 = vmatpush.msra.mxu0 %v3420
      %3490 = vmatpush.msra.mxu0 %v3418
      %3491 = vmatpush.msra.mxu0 %v3416
      %3492 = vmatpush.msra.mxu0 %v3414
      %3493 = vmatpush.msra.mxu0 %v3412
      %3494 = vmatpush.msra.mxu0 %v3410
      %3495 = vmatpush.msra.mxu0 %v3408
      %3496 = vmatpush.msra.mxu0 %v3406
      %3497 = vmatpush.msra.mxu0 %v3404
      %3498 = vmatpush.msra.mxu0 %v3402
      %3499 = vmatpush.msra.mxu0 %v3400
      %3500 = vmatpush.msra.mxu0 %v3398
      %3501 = vmatmul.f32.gmra.mxu0 %v3364
      %v3502 = vpop.f32.mrf.mxu0
      %v3503 = vadd.f32 %v3483, %v3502
      %3504 = vdwg.mxu0
      %3505 = vmatpush.msra.mxu0 0.0
      %3506 = vmatpush.msra.mxu0 0.0
      %3507 = vmatpush.msra.mxu0 0.0
      %3508 = vmatpush.msra.mxu0 %v3454
      %3509 = vmatpush.msra.mxu0 %v3452
      %3510 = vmatpush.msra.mxu0 %v3450
      %3511 = vmatpush.msra.mxu0 %v3448
      %3512 = vmatpush.msra.mxu0 %v3446
      %3513 = vmatpush.msra.mxu0 %v3444
      %3514 = vmatpush.msra.mxu0 %v3442
      %3515 = vmatpush.msra.mxu0 %v3440
      %3516 = vmatpush.msra.mxu0 %v3438
      %3517 = vmatpush.msra.mxu0 %v3436
      %3518 = vmatpush.msra.mxu0 %v3434
      %3519 = vmatpush.msra.mxu0 %v3432
      %3520 = vmatpush.msra.mxu0 %v3430
      %3521 = vmatmul.f32.gmra.mxu0 %v3463
      %v3522 = vpop.f32.mrf.mxu0
      %v3523 = vadd.f32 %v3503, %v3522
      %3524 = vdwg.mxu0
      %3525 = vmatpush.msra.mxu0 %v3397
      %3526 = vmatpush.msra.mxu0 %v3395
      %3527 = vmatpush.msra.mxu0 %v3393
      %3528 = vmatpush.msra.mxu0 %v3391
      %3529 = vmatpush.msra.mxu0 %v3389
      %3530 = vmatpush.msra.mxu0 %v3387
      %3531 = vmatpush.msra.mxu0 %v3385
      %3532 = vmatpush.msra.mxu0 %v3383
      %3533 = vmatpush.msra.mxu0 %v3381
      %3534 = vmatpush.msra.mxu0 %v3379
      %3535 = vmatpush.msra.mxu0 %v3377
      %3536 = vmatpush.msra.mxu0 %v3375
      %3537 = vmatpush.msra.mxu0 %v3373
      %3538 = vmatpush.msra.mxu0 %v3371
      %3539 = vmatpush.msra.mxu0 %v3369
      %3540 = vmatpush.msra.mxu0 %v3367
      %3541 = vmatmul.f32.gmra.mxu0 %v3363
      %v3542 = vpop.f32.mrf.mxu0
      %v3543 = vadd.f32 %v3460, %v3542
      %3544 = vdwg.mxu0
      %3545 = vmatpush.msra.mxu0 %v3429
      %3546 = vmatpush.msra.mxu0 %v3427
      %3547 = vmatpush.msra.mxu0 %v3425
      %3548 = vmatpush.msra.mxu0 %v3423
      %3549 = vmatpush.msra.mxu0 %v3421
      %3550 = vmatpush.msra.mxu0 %v3419
      %3551 = vmatpush.msra.mxu0 %v3417
      %3552 = vmatpush.msra.mxu0 %v3415
      %3553 = vmatpush.msra.mxu0 %v3413
      %3554 = vmatpush.msra.mxu0 %v3411
      %3555 = vmatpush.msra.mxu0 %v3409
      %3556 = vmatpush.msra.mxu0 %v3407
      %3557 = vmatpush.msra.mxu0 %v3405
      %3558 = vmatpush.msra.mxu0 %v3403
      %3559 = vmatpush.msra.mxu0 %v3401
      %3560 = vmatpush.msra.mxu0 %v3399
      %3561 = vmatmul.f32.gmra.mxu0 %v3364
      %v3562 = vpop.f32.mrf.mxu0
      %v3563 = vadd.f32 %v3543, %v3562
      %3564 = vdwg.mxu0
      %3565 = vmatpush.msra.mxu0 0.0
      %3566 = vmatpush.msra.mxu0 0.0
      %3567 = vmatpush.msra.mxu0 0.0
      %3568 = vmatpush.msra.mxu0 %v3455
      %3569 = vmatpush.msra.mxu0 %v3453
      %3570 = vmatpush.msra.mxu0 %v3451
      %3571 = vmatpush.msra.mxu0 %v3449
      %3572 = vmatpush.msra.mxu0 %v3447
      %3573 = vmatpush.msra.mxu0 %v3445
      %3574 = vmatpush.msra.mxu0 %v3443
      %3575 = vmatpush.msra.mxu0 %v3441
      %3576 = vmatpush.msra.mxu0 %v3439
      %3577 = vmatpush.msra.mxu0 %v3437
      %3578 = vmatpush.msra.mxu0 %v3435
      %3579 = vmatpush.msra.mxu0 %v3433
      %3580 = vmatpush.msra.mxu0 %v3431
      %3581 = vmatmul.f32.gmra.mxu0 %v3463
      %v3582 = vpop.f32.mrf.mxu0
      %v3583 = vadd.f32 %v3563, %v3582
      %3584 = vdwg.mxu0
      %v3585 = vmul.f32 %v3523, 0.2
      %v3586 = vmul.f32 %v3583, 0.2
      %v3587 = vmax.f32 %v3523, %v3585
      %v3588 = vmax.f32 %v3583, %v3586
      %3589 = vrot.lane.b32.xlu0 %v3587, 17
      %v3590 = vpop.permute.xlu0 %3589
      %3591 = vrot.lane.b32.xlu0 %v3588, 17
      %v3592 = vpop.permute.xlu0 %3591
      %v3593 = vsel %vm1085, %v3590, %v3592
      %v3594 = vsel %vm1085, %v3592, %v3590
      %v3595 = vld [vmem:[%s3] ss:$8 sm:$0x3]
      %v3597 = vperm.slane %v3595, 0
      %v3598 = vperm.slane %v3595, 1
      %v3601 = vmul.f32 %v3594, %v3597
      %v3602 = vmul.f32 %v3593, %v3598
      %3603 = vst [vmem:[#allocation2 + $0x20] sm:$0xff] %v3601
      %3604 = vst [vmem:[#allocation2 + $0x28] sm:$0xff] %v3602
      %3605 = vrot.lane.b32.xlu0 %v3587, 16
      %v3606 = vpop.permute.xlu0 %3605
      %3607 = vrot.lane.b32.xlu0 %v3588, 16
      %v3608 = vpop.permute.xlu0 %3607
      %v3609 = vsel %vm1102, %v3606, %v3608
      %v3610 = vsel %vm1102, %v3608, %v3606
      %v3611 = vld [vmem:[%s1105] ss:$8 sm:$0x3]
      %v3613 = vperm.slane %v3611, 0
      %v3614 = vperm.slane %v3611, 1
      %v3617 = vmul.f32 %v3610, %v3613
      %v3618 = vmul.f32 %v3609, %v3614
      %3619 = vst [vmem:[#allocation2 + $0x70] sm:$0xff] %v3617
      %3620 = vst [vmem:[#allocation2 + $0x78] sm:$0xff] %v3618
      %3621 = vrot.lane.b32.xlu0 %v3587, 15
      %v3622 = vpop.permute.xlu0 %3621
      %3623 = vrot.lane.b32.xlu0 %v3588, 15
      %v3624 = vpop.permute.xlu0 %3623
      %v3625 = vsel %vm1120, %v3622, %v3624
      %v3626 = vsel %vm1120, %v3624, %v3622
      %v3627 = vld [vmem:[%s1123] ss:$8 sm:$0x3]
      %v3629 = vperm.slane %v3627, 0
      %v3630 = vperm.slane %v3627, 1
      %v3633 = vmul.f32 %v3626, %v3629
      %v3634 = vmul.f32 %v3625, %v3630
      %3635 = vst [vmem:[#allocation2 + $0xc0] sm:$0xff] %v3633
      %3636 = vst [vmem:[#allocation2 + $0xc8] sm:$0xff] %v3634
      %3637 = vrot.lane.b32.xlu0 %v3587, 1
      %v3638 = vpop.permute.xlu0 %3637
      %3639 = vrot.lane.b32.xlu0 %v3588, 1
      %v3640 = vpop.permute.xlu0 %3639
      %v3641 = vsel %vm1138, %v3638, %v3640
      %v3642 = vsel %vm1138, %v3640, %v3638
      %v3643 = vld [vmem:[%s1141] ss:$8 sm:$0x3]
      %v3645 = vperm.slane %v3643, 0
      %v3646 = vperm.slane %v3643, 1
      %v3649 = vmul.f32 %v3642, %v3645
      %v3650 = vmul.f32 %v3641, %v3646
      %3651 = vst [vmem:[#allocation2 + $0x110] sm:$0xff] %v3649
      %3652 = vst [vmem:[#allocation2 + $0x118] sm:$0xff] %v3650
      %3653 = vst [vmem:[#allocation2 + $0x160] sm:$0xff] %v3587
      %3654 = vst [vmem:[#allocation2 + $0x168] sm:$0xff] %v3588
      %3655 = vrot.lane.b32.xlu0 %v3587, 127
      %v3656 = vpop.permute.xlu0 %3655
      %3657 = vrot.lane.b32.xlu0 %v3588, 127
      %v3658 = vpop.permute.xlu0 %3657
      %v3659 = vsel %vm1158, %v3656, %v3658
      %v3660 = vsel %vm1158, %v3658, %v3656
      %v3661 = vld [vmem:[%s1161] ss:$8 sm:$0x3]
      %v3663 = vperm.slane %v3661, 0
      %v3664 = vperm.slane %v3661, 1
      %v3667 = vmul.f32 %v3659, %v3663
      %v3668 = vmul.f32 %v3660, %v3664
      %3669 = vst [vmem:[#allocation2 + $0x1b0] sm:$0xff] %v3667
      %3670 = vst [vmem:[#allocation2 + $0x1b8] sm:$0xff] %v3668
      %3671 = vrot.lane.b32.xlu0 %v3587, 113
      %v3672 = vpop.permute.xlu0 %3671
      %3673 = vrot.lane.b32.xlu0 %v3588, 113
      %v3674 = vpop.permute.xlu0 %3673
      %v3675 = vsel %vm1176, %v3672, %v3674
      %v3676 = vsel %vm1176, %v3674, %v3672
      %v3677 = vld [vmem:[%s1179] ss:$8 sm:$0x3]
      %v3679 = vperm.slane %v3677, 0
      %v3680 = vperm.slane %v3677, 1
      %v3683 = vmul.f32 %v3675, %v3679
      %v3684 = vmul.f32 %v3676, %v3680
      %3685 = vst [vmem:[#allocation2 + $0x200] sm:$0xff] %v3683
      %3686 = vst [vmem:[#allocation2 + $0x208] sm:$0xff] %v3684
      %3687 = vrot.lane.b32.xlu0 %v3587, 112
      %v3688 = vpop.permute.xlu0 %3687
      %3689 = vrot.lane.b32.xlu0 %v3588, 112
      %v3690 = vpop.permute.xlu0 %3689
      %v3691 = vsel %vm1194, %v3688, %v3690
      %v3692 = vsel %vm1194, %v3690, %v3688
      %v3693 = vld [vmem:[%s1197] ss:$8 sm:$0x3]
      %v3695 = vperm.slane %v3693, 0
      %v3696 = vperm.slane %v3693, 1
      %v3699 = vmul.f32 %v3691, %v3695
      %v3700 = vmul.f32 %v3692, %v3696
      %3701 = vst [vmem:[#allocation2 + $0x250] sm:$0xff] %v3699
      %3702 = vst [vmem:[#allocation2 + $0x258] sm:$0xff] %v3700
      %3703 = vrot.lane.b32.xlu0 %v3587, 111
      %v3704 = vpop.permute.xlu0 %3703
      %3705 = vrot.lane.b32.xlu0 %v3588, 111
      %v3706 = vpop.permute.xlu0 %3705
      %v3707 = vsel %vm1212, %v3704, %v3706
      %v3708 = vsel %vm1212, %v3706, %v3704
      %v3709 = vld [vmem:[%s1215] ss:$8 sm:$0x3]
      %v3711 = vperm.slane %v3709, 0
      %v3712 = vperm.slane %v3709, 1
      %v3715 = vmul.f32 %v3707, %v3711
      %v3716 = vmul.f32 %v3708, %v3712
      %3717 = vst [vmem:[#allocation2 + $0x2a0] sm:$0xff] %v3715
      %3718 = vst [vmem:[#allocation2 + $0x2a8] sm:$0xff] %v3716
      %v3719 = vld [vmem:[%s33] sm:$0xff]
      %v3720 = vld [vmem:[%s33 + $0x8] sm:$0xff]
      %v3721 = vld [vmem:[%s33 + $0x10] sm:$0xff]
      %v3722 = vld [vmem:[#allocation2] sm:$0xff]
      %v3723 = vld [vmem:[#allocation2 + $0x8] sm:$0xff]
      %v3724 = vld [vmem:[#allocation2 + $0x10] sm:$0xff]
      %v3725 = vld [vmem:[#allocation2 + $0x18] sm:$0xff]
      %v3726 = vld [vmem:[#allocation2 + $0x20] sm:$0xff]
      %v3727 = vld [vmem:[#allocation2 + $0x28] sm:$0xff]
      %v3728 = vld [vmem:[#allocation2 + $0x30] sm:$0xff]
      %v3729 = vld [vmem:[#allocation2 + $0x38] sm:$0xff]
      %v3730 = vld [vmem:[#allocation2 + $0x40] sm:$0xff]
      %v3731 = vld [vmem:[#allocation2 + $0x48] sm:$0xff]
      %v3732 = vld [vmem:[#allocation2 + $0x50] sm:$0xff]
      %v3733 = vld [vmem:[#allocation2 + $0x58] sm:$0xff]
      %v3734 = vld [vmem:[#allocation2 + $0x60] sm:$0xff]
      %v3735 = vld [vmem:[#allocation2 + $0x68] sm:$0xff]
      %v3736 = vld [vmem:[#allocation2 + $0x70] sm:$0xff]
      %v3737 = vld [vmem:[#allocation2 + $0x78] sm:$0xff]
      %v3738 = vld [vmem:[#allocation2 + $0x80] sm:$0xff]
      %v3739 = vld [vmem:[#allocation2 + $0x88] sm:$0xff]
      %v3740 = vld [vmem:[#allocation2 + $0x90] sm:$0xff]
      %v3741 = vld [vmem:[#allocation2 + $0x98] sm:$0xff]
      %v3742 = vld [vmem:[#allocation2 + $0xa0] sm:$0xff]
      %v3743 = vld [vmem:[#allocation2 + $0xa8] sm:$0xff]
      %v3744 = vld [vmem:[#allocation2 + $0xb0] sm:$0xff]
      %v3745 = vld [vmem:[#allocation2 + $0xb8] sm:$0xff]
      %v3746 = vld [vmem:[#allocation2 + $0xc0] sm:$0xff]
      %v3747 = vld [vmem:[#allocation2 + $0xc8] sm:$0xff]
      %v3748 = vld [vmem:[#allocation2 + $0xd0] sm:$0xff]
      %v3749 = vld [vmem:[#allocation2 + $0xd8] sm:$0xff]
      %v3750 = vld [vmem:[#allocation2 + $0xe0] sm:$0xff]
      %v3751 = vld [vmem:[#allocation2 + $0xe8] sm:$0xff]
      %v3752 = vld [vmem:[#allocation2 + $0xf0] sm:$0xff]
      %v3753 = vld [vmem:[#allocation2 + $0xf8] sm:$0xff]
      %v3754 = vld [vmem:[#allocation2 + $0x100] sm:$0xff]
      %v3755 = vld [vmem:[#allocation2 + $0x108] sm:$0xff]
      %v3756 = vld [vmem:[#allocation2 + $0x110] sm:$0xff]
      %v3757 = vld [vmem:[#allocation2 + $0x118] sm:$0xff]
      %v3758 = vld [vmem:[#allocation2 + $0x120] sm:$0xff]
      %v3759 = vld [vmem:[#allocation2 + $0x128] sm:$0xff]
      %v3760 = vld [vmem:[#allocation2 + $0x130] sm:$0xff]
      %v3761 = vld [vmem:[#allocation2 + $0x138] sm:$0xff]
      %v3762 = vld [vmem:[#allocation2 + $0x140] sm:$0xff]
      %v3763 = vld [vmem:[#allocation2 + $0x148] sm:$0xff]
      %v3764 = vld [vmem:[#allocation2 + $0x150] sm:$0xff]
      %v3765 = vld [vmem:[#allocation2 + $0x158] sm:$0xff]
      %v3766 = vld [vmem:[#allocation2 + $0x160] sm:$0xff]
      %v3767 = vld [vmem:[#allocation2 + $0x168] sm:$0xff]
      %v3768 = vld [vmem:[#allocation2 + $0x170] sm:$0xff]
      %v3769 = vld [vmem:[#allocation2 + $0x178] sm:$0xff]
      %v3770 = vld [vmem:[#allocation2 + $0x180] sm:$0xff]
      %v3771 = vld [vmem:[#allocation2 + $0x188] sm:$0xff]
      %v3772 = vld [vmem:[#allocation2 + $0x190] sm:$0xff]
      %v3773 = vld [vmem:[#allocation2 + $0x198] sm:$0xff]
      %v3774 = vld [vmem:[#allocation2 + $0x1a0] sm:$0xff]
      %v3775 = vld [vmem:[#allocation2 + $0x1a8] sm:$0xff]
      %v3776 = vld [vmem:[#allocation2 + $0x1b0] sm:$0xff]
      %v3777 = vld [vmem:[#allocation2 + $0x1b8] sm:$0xff]
      %v3778 = vld [vmem:[#allocation2 + $0x1c0] sm:$0xff]
      %v3779 = vld [vmem:[#allocation2 + $0x1c8] sm:$0xff]
      %v3780 = vld [vmem:[#allocation2 + $0x1d0] sm:$0xff]
      %v3781 = vld [vmem:[#allocation2 + $0x1d8] sm:$0xff]
      %v3782 = vld [vmem:[#allocation2 + $0x1e0] sm:$0xff]
      %v3783 = vld [vmem:[#allocation2 + $0x1e8] sm:$0xff]
      %v3784 = vld [vmem:[#allocation2 + $0x1f0] sm:$0xff]
      %v3785 = vld [vmem:[#allocation2 + $0x1f8] sm:$0xff]
      %v3786 = vld [vmem:[#allocation2 + $0x200] sm:$0xff]
      %v3787 = vld [vmem:[#allocation2 + $0x208] sm:$0xff]
      %v3788 = vld [vmem:[#allocation2 + $0x210] sm:$0xff]
      %v3789 = vld [vmem:[#allocation2 + $0x218] sm:$0xff]
      %v3790 = vld [vmem:[#allocation2 + $0x220] sm:$0xff]
      %v3791 = vld [vmem:[#allocation2 + $0x228] sm:$0xff]
      %v3792 = vld [vmem:[#allocation2 + $0x230] sm:$0xff]
      %v3793 = vld [vmem:[#allocation2 + $0x238] sm:$0xff]
      %v3794 = vld [vmem:[#allocation2 + $0x240] sm:$0xff]
      %v3795 = vld [vmem:[#allocation2 + $0x248] sm:$0xff]
      %v3796 = vld [vmem:[#allocation2 + $0x250] sm:$0xff]
      %v3797 = vld [vmem:[#allocation2 + $0x258] sm:$0xff]
      %v3798 = vld [vmem:[#allocation2 + $0x260] sm:$0xff]
      %v3799 = vld [vmem:[#allocation2 + $0x268] sm:$0xff]
      %v3800 = vld [vmem:[#allocation2 + $0x270] sm:$0xff]
      %v3801 = vld [vmem:[#allocation2 + $0x278] sm:$0xff]
      %v3802 = vld [vmem:[#allocation2 + $0x280] sm:$0xff]
      %v3803 = vld [vmem:[#allocation2 + $0x288] sm:$0xff]
      %v3804 = vld [vmem:[#allocation2 + $0x290] sm:$0xff]
      %v3805 = vld [vmem:[#allocation2 + $0x298] sm:$0xff]
      %v3806 = vld [vmem:[#allocation2 + $0x2a0] sm:$0xff]
      %v3807 = vld [vmem:[#allocation2 + $0x2a8] sm:$0xff]
      %v3808 = vld [vmem:[#allocation2 + $0x2b0] sm:$0xff]
      %v3809 = vld [vmem:[#allocation2 + $0x2b8] sm:$0xff]
      %v3810 = vld [vmem:[#allocation2 + $0x2c0] sm:$0xff]
      %v3811 = vld [vmem:[#allocation2 + $0x2c8] sm:$0xff]
      %v3812 = vld [vmem:[%s35] sm:$0xff]
      %3814 = vset.pattern.permute.xlu0 0
      %3815 = vperm.xlu0 %3814, %v3812
      %v3816 = vpop.permute.xlu0 %3815
      %v3819 = vsel %vm1325, %v3721, 0
      %3821 = vmatpush.msra.mxu0 %v3752
      %3822 = vmatpush.msra.mxu0 %v3750
      %3823 = vmatpush.msra.mxu0 %v3748
      %3824 = vmatpush.msra.mxu0 %v3746
      %3825 = vmatpush.msra.mxu0 %v3744
      %3826 = vmatpush.msra.mxu0 %v3742
      %3827 = vmatpush.msra.mxu0 %v3740
      %3828 = vmatpush.msra.mxu0 %v3738
      %3829 = vmatpush.msra.mxu0 %v3736
      %3830 = vmatpush.msra.mxu0 %v3734
      %3831 = vmatpush.msra.mxu0 %v3732
      %3832 = vmatpush.msra.mxu0 %v3730
      %3833 = vmatpush.msra.mxu0 %v3728
      %3834 = vmatpush.msra.mxu0 %v3726
      %3835 = vmatpush.msra.mxu0 %v3724
      %3836 = vmatpush.msra.mxu0 %v3722
      %3837 = vmatmul.f32.gmra.mxu0 %v3719
      %v3838 = vpop.f32.mrf.mxu0
      %v3839 = vadd.f32 %v3816, %v3838
      %3840 = vdwg.mxu0
      %3841 = vmatpush.msra.mxu0 %v3784
      %3842 = vmatpush.msra.mxu0 %v3782
      %3843 = vmatpush.msra.mxu0 %v3780
      %3844 = vmatpush.msra.mxu0 %v3778
      %3845 = vmatpush.msra.mxu0 %v3776
      %3846 = vmatpush.msra.mxu0 %v3774
      %3847 = vmatpush.msra.mxu0 %v3772
      %3848 = vmatpush.msra.mxu0 %v3770
      %3849 = vmatpush.msra.mxu0 %v3768
      %3850 = vmatpush.msra.mxu0 %v3766
      %3851 = vmatpush.msra.mxu0 %v3764
      %3852 = vmatpush.msra.mxu0 %v3762
      %3853 = vmatpush.msra.mxu0 %v3760
      %3854 = vmatpush.msra.mxu0 %v3758
      %3855 = vmatpush.msra.mxu0 %v3756
      %3856 = vmatpush.msra.mxu0 %v3754
      %3857 = vmatmul.f32.gmra.mxu0 %v3720
      %v3858 = vpop.f32.mrf.mxu0
      %v3859 = vadd.f32 %v3839, %v3858
      %3860 = vdwg.mxu0
      %3861 = vmatpush.msra.mxu0 0.0
      %3862 = vmatpush.msra.mxu0 0.0
      %3863 = vmatpush.msra.mxu0 0.0
      %3864 = vmatpush.msra.mxu0 %v3810
      %3865 = vmatpush.msra.mxu0 %v3808
      %3866 = vmatpush.msra.mxu0 %v3806
      %3867 = vmatpush.msra.mxu0 %v3804
      %3868 = vmatpush.msra.mxu0 %v3802
      %3869 = vmatpush.msra.mxu0 %v3800
      %3870 = vmatpush.msra.mxu0 %v3798
      %3871 = vmatpush.msra.mxu0 %v3796
      %3872 = vmatpush.msra.mxu0 %v3794
      %3873 = vmatpush.msra.mxu0 %v3792
      %3874 = vmatpush.msra.mxu0 %v3790
      %3875 = vmatpush.msra.mxu0 %v3788
      %3876 = vmatpush.msra.mxu0 %v3786
      %3877 = vmatmul.f32.gmra.mxu0 %v3819
      %v3878 = vpop.f32.mrf.mxu0
      %v3879 = vadd.f32 %v3859, %v3878
      %3880 = vdwg.mxu0
      %3881 = vmatpush.msra.mxu0 %v3753
      %3882 = vmatpush.msra.mxu0 %v3751
      %3883 = vmatpush.msra.mxu0 %v3749
      %3884 = vmatpush.msra.mxu0 %v3747
      %3885 = vmatpush.msra.mxu0 %v3745
      %3886 = vmatpush.msra.mxu0 %v3743
      %3887 = vmatpush.msra.mxu0 %v3741
      %3888 = vmatpush.msra.mxu0 %v3739
      %3889 = vmatpush.msra.mxu0 %v3737
      %3890 = vmatpush.msra.mxu0 %v3735
      %3891 = vmatpush.msra.mxu0 %v3733
      %3892 = vmatpush.msra.mxu0 %v3731
      %3893 = vmatpush.msra.mxu0 %v3729
      %3894 = vmatpush.msra.mxu0 %v3727
      %3895 = vmatpush.msra.mxu0 %v3725
      %3896 = vmatpush.msra.mxu0 %v3723
      %3897 = vmatmul.f32.gmra.mxu0 %v3719
      %v3898 = vpop.f32.mrf.mxu0
      %v3899 = vadd.f32 %v3816, %v3898
      %3900 = vdwg.mxu0
      %3901 = vmatpush.msra.mxu0 %v3785
      %3902 = vmatpush.msra.mxu0 %v3783
      %3903 = vmatpush.msra.mxu0 %v3781
      %3904 = vmatpush.msra.mxu0 %v3779
      %3905 = vmatpush.msra.mxu0 %v3777
      %3906 = vmatpush.msra.mxu0 %v3775
      %3907 = vmatpush.msra.mxu0 %v3773
      %3908 = vmatpush.msra.mxu0 %v3771
      %3909 = vmatpush.msra.mxu0 %v3769
      %3910 = vmatpush.msra.mxu0 %v3767
      %3911 = vmatpush.msra.mxu0 %v3765
      %3912 = vmatpush.msra.mxu0 %v3763
      %3913 = vmatpush.msra.mxu0 %v3761
      %3914 = vmatpush.msra.mxu0 %v3759
      %3915 = vmatpush.msra.mxu0 %v3757
      %3916 = vmatpush.msra.mxu0 %v3755
      %3917 = vmatmul.f32.gmra.mxu0 %v3720
      %v3918 = vpop.f32.mrf.mxu0
      %v3919 = vadd.f32 %v3899, %v3918
      %3920 = vdwg.mxu0
      %3921 = vmatpush.msra.mxu0 0.0
      %3922 = vmatpush.msra.mxu0 0.0
      %3923 = vmatpush.msra.mxu0 0.0
      %3924 = vmatpush.msra.mxu0 %v3811
      %3925 = vmatpush.msra.mxu0 %v3809
      %3926 = vmatpush.msra.mxu0 %v3807
      %3927 = vmatpush.msra.mxu0 %v3805
      %3928 = vmatpush.msra.mxu0 %v3803
      %3929 = vmatpush.msra.mxu0 %v3801
      %3930 = vmatpush.msra.mxu0 %v3799
      %3931 = vmatpush.msra.mxu0 %v3797
      %3932 = vmatpush.msra.mxu0 %v3795
      %3933 = vmatpush.msra.mxu0 %v3793
      %3934 = vmatpush.msra.mxu0 %v3791
      %3935 = vmatpush.msra.mxu0 %v3789
      %3936 = vmatpush.msra.mxu0 %v3787
      %3937 = vmatmul.f32.gmra.mxu0 %v3819
      %v3938 = vpop.f32.mrf.mxu0
      %v3939 = vadd.f32 %v3919, %v3938
      %3940 = vdwg.mxu0
      %v3941 = vmul.f32 %v3879, 0.2
      %v3942 = vmul.f32 %v3939, 0.2
      %v3943 = vmax.f32 %v3879, %v3941
      %v3944 = vmax.f32 %v3939, %v3942
      %3945 = vrot.lane.b32.xlu0 %v3943, 17
      %v3946 = vpop.permute.xlu0 %3945
      %3947 = vrot.lane.b32.xlu0 %v3944, 17
      %v3948 = vpop.permute.xlu0 %3947
      %v3949 = vsel %vm1085, %v3946, %v3948
      %v3950 = vsel %vm1085, %v3948, %v3946
      %v3951 = vld [vmem:[%s3] ss:$8 sm:$0x3]
      %v3953 = vperm.slane %v3951, 0
      %v3954 = vperm.slane %v3951, 1
      %v3957 = vmul.f32 %v3950, %v3953
      %v3958 = vmul.f32 %v3949, %v3954
      %3959 = vst [vmem:[#allocation2 + $0x30] sm:$0xff] %v3957
      %3960 = vst [vmem:[#allocation2 + $0x38] sm:$0xff] %v3958
      %3961 = vrot.lane.b32.xlu0 %v3943, 16
      %v3962 = vpop.permute.xlu0 %3961
      %3963 = vrot.lane.b32.xlu0 %v3944, 16
      %v3964 = vpop.permute.xlu0 %3963
      %v3965 = vsel %vm1102, %v3962, %v3964
      %v3966 = vsel %vm1102, %v3964, %v3962
      %v3967 = vld [vmem:[%s1105] ss:$8 sm:$0x3]
      %v3969 = vperm.slane %v3967, 0
      %v3970 = vperm.slane %v3967, 1
      %v3973 = vmul.f32 %v3966, %v3969
      %v3974 = vmul.f32 %v3965, %v3970
      %3975 = vst [vmem:[#allocation2 + $0x80] sm:$0xff] %v3973
      %3976 = vst [vmem:[#allocation2 + $0x88] sm:$0xff] %v3974
      %3977 = vrot.lane.b32.xlu0 %v3943, 15
      %v3978 = vpop.permute.xlu0 %3977
      %3979 = vrot.lane.b32.xlu0 %v3944, 15
      %v3980 = vpop.permute.xlu0 %3979
      %v3981 = vsel %vm1120, %v3978, %v3980
      %v3982 = vsel %vm1120, %v3980, %v3978
      %v3983 = vld [vmem:[%s1123] ss:$8 sm:$0x3]
      %v3985 = vperm.slane %v3983, 0
      %v3986 = vperm.slane %v3983, 1
      %v3989 = vmul.f32 %v3982, %v3985
      %v3990 = vmul.f32 %v3981, %v3986
      %3991 = vst [vmem:[#allocation2 + $0xd0] sm:$0xff] %v3989
      %3992 = vst [vmem:[#allocation2 + $0xd8] sm:$0xff] %v3990
      %3993 = vrot.lane.b32.xlu0 %v3943, 1
      %v3994 = vpop.permute.xlu0 %3993
      %3995 = vrot.lane.b32.xlu0 %v3944, 1
      %v3996 = vpop.permute.xlu0 %3995
      %v3997 = vsel %vm1138, %v3994, %v3996
      %v3998 = vsel %vm1138, %v3996, %v3994
      %v3999 = vld [vmem:[%s1141] ss:$8 sm:$0x3]
      %v4001 = vperm.slane %v3999, 0
      %v4002 = vperm.slane %v3999, 1
      %v4005 = vmul.f32 %v3998, %v4001
      %v4006 = vmul.f32 %v3997, %v4002
      %4007 = vst [vmem:[#allocation2 + $0x120] sm:$0xff] %v4005
      %4008 = vst [vmem:[#allocation2 + $0x128] sm:$0xff] %v4006
      %4009 = vst [vmem:[#allocation2 + $0x170] sm:$0xff] %v3943
      %4010 = vst [vmem:[#allocation2 + $0x178] sm:$0xff] %v3944
      %4011 = vrot.lane.b32.xlu0 %v3943, 127
      %v4012 = vpop.permute.xlu0 %4011
      %4013 = vrot.lane.b32.xlu0 %v3944, 127
      %v4014 = vpop.permute.xlu0 %4013
      %v4015 = vsel %vm1158, %v4012, %v4014
      %v4016 = vsel %vm1158, %v4014, %v4012
      %v4017 = vld [vmem:[%s1161] ss:$8 sm:$0x3]
      %v4019 = vperm.slane %v4017, 0
      %v4020 = vperm.slane %v4017, 1
      %v4023 = vmul.f32 %v4015, %v4019
      %v4024 = vmul.f32 %v4016, %v4020
      %4025 = vst [vmem:[#allocation2 + $0x1c0] sm:$0xff] %v4023
      %4026 = vst [vmem:[#allocation2 + $0x1c8] sm:$0xff] %v4024
      %4027 = vrot.lane.b32.xlu0 %v3943, 113
      %v4028 = vpop.permute.xlu0 %4027
      %4029 = vrot.lane.b32.xlu0 %v3944, 113
      %v4030 = vpop.permute.xlu0 %4029
      %v4031 = vsel %vm1176, %v4028, %v4030
      %v4032 = vsel %vm1176, %v4030, %v4028
      %v4033 = vld [vmem:[%s1179] ss:$8 sm:$0x3]
      %v4035 = vperm.slane %v4033, 0
      %v4036 = vperm.slane %v4033, 1
      %v4039 = vmul.f32 %v4031, %v4035
      %v4040 = vmul.f32 %v4032, %v4036
      %4041 = vst [vmem:[#allocation2 + $0x210] sm:$0xff] %v4039
      %4042 = vst [vmem:[#allocation2 + $0x218] sm:$0xff] %v4040
      %4043 = vrot.lane.b32.xlu0 %v3943, 112
      %v4044 = vpop.permute.xlu0 %4043
      %4045 = vrot.lane.b32.xlu0 %v3944, 112
      %v4046 = vpop.permute.xlu0 %4045
      %v4047 = vsel %vm1194, %v4044, %v4046
      %v4048 = vsel %vm1194, %v4046, %v4044
      %v4049 = vld [vmem:[%s1197] ss:$8 sm:$0x3]
      %v4051 = vperm.slane %v4049, 0
      %v4052 = vperm.slane %v4049, 1
      %v4055 = vmul.f32 %v4047, %v4051
      %v4056 = vmul.f32 %v4048, %v4052
      %4057 = vst [vmem:[#allocation2 + $0x260] sm:$0xff] %v4055
      %4058 = vst [vmem:[#allocation2 + $0x268] sm:$0xff] %v4056
      %4059 = vrot.lane.b32.xlu0 %v3943, 111
      %v4060 = vpop.permute.xlu0 %4059
      %4061 = vrot.lane.b32.xlu0 %v3944, 111
      %v4062 = vpop.permute.xlu0 %4061
      %v4063 = vsel %vm1212, %v4060, %v4062
      %v4064 = vsel %vm1212, %v4062, %v4060
      %v4065 = vld [vmem:[%s1215] ss:$8 sm:$0x3]
      %v4067 = vperm.slane %v4065, 0
      %v4068 = vperm.slane %v4065, 1
      %v4071 = vmul.f32 %v4063, %v4067
      %v4072 = vmul.f32 %v4064, %v4068
      %4073 = vst [vmem:[#allocation2 + $0x2b0] sm:$0xff] %v4071
      %4074 = vst [vmem:[#allocation2 + $0x2b8] sm:$0xff] %v4072
      %v4075 = vld [vmem:[%s37] sm:$0xff]
      %v4076 = vld [vmem:[%s37 + $0x8] sm:$0xff]
      %v4077 = vld [vmem:[%s37 + $0x10] sm:$0xff]
      %v4078 = vld [vmem:[#allocation2] sm:$0xff]
      %v4079 = vld [vmem:[#allocation2 + $0x8] sm:$0xff]
      %v4080 = vld [vmem:[#allocation2 + $0x10] sm:$0xff]
      %v4081 = vld [vmem:[#allocation2 + $0x18] sm:$0xff]
      %v4082 = vld [vmem:[#allocation2 + $0x20] sm:$0xff]
      %v4083 = vld [vmem:[#allocation2 + $0x28] sm:$0xff]
      %v4084 = vld [vmem:[#allocation2 + $0x30] sm:$0xff]
      %v4085 = vld [vmem:[#allocation2 + $0x38] sm:$0xff]
      %v4086 = vld [vmem:[#allocation2 + $0x40] sm:$0xff]
      %v4087 = vld [vmem:[#allocation2 + $0x48] sm:$0xff]
      %v4088 = vld [vmem:[#allocation2 + $0x50] sm:$0xff]
      %v4089 = vld [vmem:[#allocation2 + $0x58] sm:$0xff]
      %v4090 = vld [vmem:[#allocation2 + $0x60] sm:$0xff]
      %v4091 = vld [vmem:[#allocation2 + $0x68] sm:$0xff]
      %v4092 = vld [vmem:[#allocation2 + $0x70] sm:$0xff]
      %v4093 = vld [vmem:[#allocation2 + $0x78] sm:$0xff]
      %v4094 = vld [vmem:[#allocation2 + $0x80] sm:$0xff]
      %v4095 = vld [vmem:[#allocation2 + $0x88] sm:$0xff]
      %v4096 = vld [vmem:[#allocation2 + $0x90] sm:$0xff]
      %v4097 = vld [vmem:[#allocation2 + $0x98] sm:$0xff]
      %v4098 = vld [vmem:[#allocation2 + $0xa0] sm:$0xff]
      %v4099 = vld [vmem:[#allocation2 + $0xa8] sm:$0xff]
      %v4100 = vld [vmem:[#allocation2 + $0xb0] sm:$0xff]
      %v4101 = vld [vmem:[#allocation2 + $0xb8] sm:$0xff]
      %v4102 = vld [vmem:[#allocation2 + $0xc0] sm:$0xff]
      %v4103 = vld [vmem:[#allocation2 + $0xc8] sm:$0xff]
      %v4104 = vld [vmem:[#allocation2 + $0xd0] sm:$0xff]
      %v4105 = vld [vmem:[#allocation2 + $0xd8] sm:$0xff]
      %v4106 = vld [vmem:[#allocation2 + $0xe0] sm:$0xff]
      %v4107 = vld [vmem:[#allocation2 + $0xe8] sm:$0xff]
      %v4108 = vld [vmem:[#allocation2 + $0xf0] sm:$0xff]
      %v4109 = vld [vmem:[#allocation2 + $0xf8] sm:$0xff]
      %v4110 = vld [vmem:[#allocation2 + $0x100] sm:$0xff]
      %v4111 = vld [vmem:[#allocation2 + $0x108] sm:$0xff]
      %v4112 = vld [vmem:[#allocation2 + $0x110] sm:$0xff]
      %v4113 = vld [vmem:[#allocation2 + $0x118] sm:$0xff]
      %v4114 = vld [vmem:[#allocation2 + $0x120] sm:$0xff]
      %v4115 = vld [vmem:[#allocation2 + $0x128] sm:$0xff]
      %v4116 = vld [vmem:[#allocation2 + $0x130] sm:$0xff]
      %v4117 = vld [vmem:[#allocation2 + $0x138] sm:$0xff]
      %v4118 = vld [vmem:[#allocation2 + $0x140] sm:$0xff]
      %v4119 = vld [vmem:[#allocation2 + $0x148] sm:$0xff]
      %v4120 = vld [vmem:[#allocation2 + $0x150] sm:$0xff]
      %v4121 = vld [vmem:[#allocation2 + $0x158] sm:$0xff]
      %v4122 = vld [vmem:[#allocation2 + $0x160] sm:$0xff]
      %v4123 = vld [vmem:[#allocation2 + $0x168] sm:$0xff]
      %v4124 = vld [vmem:[#allocation2 + $0x170] sm:$0xff]
      %v4125 = vld [vmem:[#allocation2 + $0x178] sm:$0xff]
      %v4126 = vld [vmem:[#allocation2 + $0x180] sm:$0xff]
      %v4127 = vld [vmem:[#allocation2 + $0x188] sm:$0xff]
      %v4128 = vld [vmem:[#allocation2 + $0x190] sm:$0xff]
      %v4129 = vld [vmem:[#allocation2 + $0x198] sm:$0xff]
      %v4130 = vld [vmem:[#allocation2 + $0x1a0] sm:$0xff]
      %v4131 = vld [vmem:[#allocation2 + $0x1a8] sm:$0xff]
      %v4132 = vld [vmem:[#allocation2 + $0x1b0] sm:$0xff]
      %v4133 = vld [vmem:[#allocation2 + $0x1b8] sm:$0xff]
      %v4134 = vld [vmem:[#allocation2 + $0x1c0] sm:$0xff]
      %v4135 = vld [vmem:[#allocation2 + $0x1c8] sm:$0xff]
      %v4136 = vld [vmem:[#allocation2 + $0x1d0] sm:$0xff]
      %v4137 = vld [vmem:[#allocation2 + $0x1d8] sm:$0xff]
      %v4138 = vld [vmem:[#allocation2 + $0x1e0] sm:$0xff]
      %v4139 = vld [vmem:[#allocation2 + $0x1e8] sm:$0xff]
      %v4140 = vld [vmem:[#allocation2 + $0x1f0] sm:$0xff]
      %v4141 = vld [vmem:[#allocation2 + $0x1f8] sm:$0xff]
      %v4142 = vld [vmem:[#allocation2 + $0x200] sm:$0xff]
      %v4143 = vld [vmem:[#allocation2 + $0x208] sm:$0xff]
      %v4144 = vld [vmem:[#allocation2 + $0x210] sm:$0xff]
      %v4145 = vld [vmem:[#allocation2 + $0x218] sm:$0xff]
      %v4146 = vld [vmem:[#allocation2 + $0x220] sm:$0xff]
      %v4147 = vld [vmem:[#allocation2 + $0x228] sm:$0xff]
      %v4148 = vld [vmem:[#allocation2 + $0x230] sm:$0xff]
      %v4149 = vld [vmem:[#allocation2 + $0x238] sm:$0xff]
      %v4150 = vld [vmem:[#allocation2 + $0x240] sm:$0xff]
      %v4151 = vld [vmem:[#allocation2 + $0x248] sm:$0xff]
      %v4152 = vld [vmem:[#allocation2 + $0x250] sm:$0xff]
      %v4153 = vld [vmem:[#allocation2 + $0x258] sm:$0xff]
      %v4154 = vld [vmem:[#allocation2 + $0x260] sm:$0xff]
      %v4155 = vld [vmem:[#allocation2 + $0x268] sm:$0xff]
      %v4156 = vld [vmem:[#allocation2 + $0x270] sm:$0xff]
      %v4157 = vld [vmem:[#allocation2 + $0x278] sm:$0xff]
      %v4158 = vld [vmem:[#allocation2 + $0x280] sm:$0xff]
      %v4159 = vld [vmem:[#allocation2 + $0x288] sm:$0xff]
      %v4160 = vld [vmem:[#allocation2 + $0x290] sm:$0xff]
      %v4161 = vld [vmem:[#allocation2 + $0x298] sm:$0xff]
      %v4162 = vld [vmem:[#allocation2 + $0x2a0] sm:$0xff]
      %v4163 = vld [vmem:[#allocation2 + $0x2a8] sm:$0xff]
      %v4164 = vld [vmem:[#allocation2 + $0x2b0] sm:$0xff]
      %v4165 = vld [vmem:[#allocation2 + $0x2b8] sm:$0xff]
      %v4166 = vld [vmem:[#allocation2 + $0x2c0] sm:$0xff]
      %v4167 = vld [vmem:[#allocation2 + $0x2c8] sm:$0xff]
      %v4168 = vld [vmem:[%s39] sm:$0xff]
      %4170 = vset.pattern.permute.xlu0 0
      %4171 = vperm.xlu0 %4170, %v4168
      %v4172 = vpop.permute.xlu0 %4171
      %v4175 = vsel %vm1325, %v4077, 0
      %4177 = vmatpush.msra.mxu0 %v4108
      %4178 = vmatpush.msra.mxu0 %v4106
      %4179 = vmatpush.msra.mxu0 %v4104
      %4180 = vmatpush.msra.mxu0 %v4102
      %4181 = vmatpush.msra.mxu0 %v4100
      %4182 = vmatpush.msra.mxu0 %v4098
      %4183 = vmatpush.msra.mxu0 %v4096
      %4184 = vmatpush.msra.mxu0 %v4094
      %4185 = vmatpush.msra.mxu0 %v4092
      %4186 = vmatpush.msra.mxu0 %v4090
      %4187 = vmatpush.msra.mxu0 %v4088
      %4188 = vmatpush.msra.mxu0 %v4086
      %4189 = vmatpush.msra.mxu0 %v4084
      %4190 = vmatpush.msra.mxu0 %v4082
      %4191 = vmatpush.msra.mxu0 %v4080
      %4192 = vmatpush.msra.mxu0 %v4078
      %4193 = vmatmul.f32.gmra.mxu0 %v4075
      %v4194 = vpop.f32.mrf.mxu0
      %v4195 = vadd.f32 %v4172, %v4194
      %4196 = vdwg.mxu0
      %4197 = vmatpush.msra.mxu0 %v4140
      %4198 = vmatpush.msra.mxu0 %v4138
      %4199 = vmatpush.msra.mxu0 %v4136
      %4200 = vmatpush.msra.mxu0 %v4134
      %4201 = vmatpush.msra.mxu0 %v4132
      %4202 = vmatpush.msra.mxu0 %v4130
      %4203 = vmatpush.msra.mxu0 %v4128
      %4204 = vmatpush.msra.mxu0 %v4126
      %4205 = vmatpush.msra.mxu0 %v4124
      %4206 = vmatpush.msra.mxu0 %v4122
      %4207 = vmatpush.msra.mxu0 %v4120
      %4208 = vmatpush.msra.mxu0 %v4118
      %4209 = vmatpush.msra.mxu0 %v4116
      %4210 = vmatpush.msra.mxu0 %v4114
      %4211 = vmatpush.msra.mxu0 %v4112
      %4212 = vmatpush.msra.mxu0 %v4110
      %4213 = vmatmul.f32.gmra.mxu0 %v4076
      %v4214 = vpop.f32.mrf.mxu0
      %v4215 = vadd.f32 %v4195, %v4214
      %4216 = vdwg.mxu0
      %4217 = vmatpush.msra.mxu0 0.0
      %4218 = vmatpush.msra.mxu0 0.0
      %4219 = vmatpush.msra.mxu0 0.0
      %4220 = vmatpush.msra.mxu0 %v4166
      %4221 = vmatpush.msra.mxu0 %v4164
      %4222 = vmatpush.msra.mxu0 %v4162
      %4223 = vmatpush.msra.mxu0 %v4160
      %4224 = vmatpush.msra.mxu0 %v4158
      %4225 = vmatpush.msra.mxu0 %v4156
      %4226 = vmatpush.msra.mxu0 %v4154
      %4227 = vmatpush.msra.mxu0 %v4152
      %4228 = vmatpush.msra.mxu0 %v4150
      %4229 = vmatpush.msra.mxu0 %v4148
      %4230 = vmatpush.msra.mxu0 %v4146
      %4231 = vmatpush.msra.mxu0 %v4144
      %4232 = vmatpush.msra.mxu0 %v4142
      %4233 = vmatmul.f32.gmra.mxu0 %v4175
      %v4234 = vpop.f32.mrf.mxu0
      %v4235 = vadd.f32 %v4215, %v4234
      %4236 = vdwg.mxu0
      %4237 = vmatpush.msra.mxu0 %v4109
      %4238 = vmatpush.msra.mxu0 %v4107
      %4239 = vmatpush.msra.mxu0 %v4105
      %4240 = vmatpush.msra.mxu0 %v4103
      %4241 = vmatpush.msra.mxu0 %v4101
      %4242 = vmatpush.msra.mxu0 %v4099
      %4243 = vmatpush.msra.mxu0 %v4097
      %4244 = vmatpush.msra.mxu0 %v4095
      %4245 = vmatpush.msra.mxu0 %v4093
      %4246 = vmatpush.msra.mxu0 %v4091
      %4247 = vmatpush.msra.mxu0 %v4089
      %4248 = vmatpush.msra.mxu0 %v4087
      %4249 = vmatpush.msra.mxu0 %v4085
      %4250 = vmatpush.msra.mxu0 %v4083
      %4251 = vmatpush.msra.mxu0 %v4081
      %4252 = vmatpush.msra.mxu0 %v4079
      %4253 = vmatmul.f32.gmra.mxu0 %v4075
      %v4254 = vpop.f32.mrf.mxu0
      %v4255 = vadd.f32 %v4172, %v4254
      %4256 = vdwg.mxu0
      %4257 = vmatpush.msra.mxu0 %v4141
      %4258 = vmatpush.msra.mxu0 %v4139
      %4259 = vmatpush.msra.mxu0 %v4137
      %4260 = vmatpush.msra.mxu0 %v4135
      %4261 = vmatpush.msra.mxu0 %v4133
      %4262 = vmatpush.msra.mxu0 %v4131
      %4263 = vmatpush.msra.mxu0 %v4129
      %4264 = vmatpush.msra.mxu0 %v4127
      %4265 = vmatpush.msra.mxu0 %v4125
      %4266 = vmatpush.msra.mxu0 %v4123
      %4267 = vmatpush.msra.mxu0 %v4121
      %4268 = vmatpush.msra.mxu0 %v4119
      %4269 = vmatpush.msra.mxu0 %v4117
      %4270 = vmatpush.msra.mxu0 %v4115
      %4271 = vmatpush.msra.mxu0 %v4113
      %4272 = vmatpush.msra.mxu0 %v4111
      %4273 = vmatmul.f32.gmra.mxu0 %v4076
      %v4274 = vpop.f32.mrf.mxu0
      %v4275 = vadd.f32 %v4255, %v4274
      %4276 = vdwg.mxu0
      %4277 = vmatpush.msra.mxu0 0.0
      %4278 = vmatpush.msra.mxu0 0.0
      %4279 = vmatpush.msra.mxu0 0.0
      %4280 = vmatpush.msra.mxu0 %v4167
      %4281 = vmatpush.msra.mxu0 %v4165
      %4282 = vmatpush.msra.mxu0 %v4163
      %4283 = vmatpush.msra.mxu0 %v4161
      %4284 = vmatpush.msra.mxu0 %v4159
      %4285 = vmatpush.msra.mxu0 %v4157
      %4286 = vmatpush.msra.mxu0 %v4155
      %4287 = vmatpush.msra.mxu0 %v4153
      %4288 = vmatpush.msra.mxu0 %v4151
      %4289 = vmatpush.msra.mxu0 %v4149
      %4290 = vmatpush.msra.mxu0 %v4147
      %4291 = vmatpush.msra.mxu0 %v4145
      %4292 = vmatpush.msra.mxu0 %v4143
      %4293 = vmatmul.f32.gmra.mxu0 %v4175
      %v4294 = vpop.f32.mrf.mxu0
      %v4295 = vadd.f32 %v4275, %v4294
      %4296 = vdwg.mxu0
      %v4297 = vmul.f32 %v4235, 0.2
      %v4298 = vmul.f32 %v4295, 0.2
      %v4299 = vmax.f32 %v4235, %v4297
      %v4300 = vmax.f32 %v4295, %v4298
      %4301 = vrot.lane.b32.xlu0 %v4299, 17
      %v4302 = vpop.permute.xlu0 %4301
      %4303 = vrot.lane.b32.xlu0 %v4300, 17
      %v4304 = vpop.permute.xlu0 %4303
      %v4305 = vsel %vm1085, %v4302, %v4304
      %v4306 = vsel %vm1085, %v4304, %v4302
      %v4307 = vld [vmem:[%s3] ss:$8 sm:$0x3]
      %v4309 = vperm.slane %v4307, 0
      %v4310 = vperm.slane %v4307, 1
      %v4313 = vmul.f32 %v4306, %v4309
      %v4314 = vmul.f32 %v4305, %v4310
      %4315 = vst [vmem:[#allocation2 + $0x40] sm:$0xff] %v4313
      %4316 = vst [vmem:[#allocation2 + $0x48] sm:$0xff] %v4314
      %4317 = vrot.lane.b32.xlu0 %v4299, 16
      %v4318 = vpop.permute.xlu0 %4317
      %4319 = vrot.lane.b32.xlu0 %v4300, 16
      %v4320 = vpop.permute.xlu0 %4319
      %v4321 = vsel %vm1102, %v4318, %v4320
      %v4322 = vsel %vm1102, %v4320, %v4318
      %v4323 = vld [vmem:[%s1105] ss:$8 sm:$0x3]
      %v4325 = vperm.slane %v4323, 0
      %v4326 = vperm.slane %v4323, 1
      %v4329 = vmul.f32 %v4322, %v4325
      %v4330 = vmul.f32 %v4321, %v4326
      %4331 = vst [vmem:[#allocation2 + $0x90] sm:$0xff] %v4329
      %4332 = vst [vmem:[#allocation2 + $0x98] sm:$0xff] %v4330
      %4333 = vrot.lane.b32.xlu0 %v4299, 15
      %v4334 = vpop.permute.xlu0 %4333
      %4335 = vrot.lane.b32.xlu0 %v4300, 15
      %v4336 = vpop.permute.xlu0 %4335
      %v4337 = vsel %vm1120, %v4334, %v4336
      %v4338 = vsel %vm1120, %v4336, %v4334
      %v4339 = vld [vmem:[%s1123] ss:$8 sm:$0x3]
      %v4341 = vperm.slane %v4339, 0
      %v4342 = vperm.slane %v4339, 1
      %v4345 = vmul.f32 %v4338, %v4341
      %v4346 = vmul.f32 %v4337, %v4342
      %4347 = vst [vmem:[#allocation2 + $0xe0] sm:$0xff] %v4345
      %4348 = vst [vmem:[#allocation2 + $0xe8] sm:$0xff] %v4346
      %4349 = vrot.lane.b32.xlu0 %v4299, 1
      %v4350 = vpop.permute.xlu0 %4349
      %4351 = vrot.lane.b32.xlu0 %v4300, 1
      %v4352 = vpop.permute.xlu0 %4351
      %v4353 = vsel %vm1138, %v4350, %v4352
      %v4354 = vsel %vm1138, %v4352, %v4350
      %v4355 = vld [vmem:[%s1141] ss:$8 sm:$0x3]
      %v4357 = vperm.slane %v4355, 0
      %v4358 = vperm.slane %v4355, 1
      %v4361 = vmul.f32 %v4354, %v4357
      %v4362 = vmul.f32 %v4353, %v4358
      %4363 = vst [vmem:[#allocation2 + $0x130] sm:$0xff] %v4361
      %4364 = vst [vmem:[#allocation2 + $0x138] sm:$0xff] %v4362
      %4365 = vst [vmem:[#allocation2 + $0x180] sm:$0xff] %v4299
      %4366 = vst [vmem:[#allocation2 + $0x188] sm:$0xff] %v4300
      %4367 = vrot.lane.b32.xlu0 %v4299, 127
      %v4368 = vpop.permute.xlu0 %4367
      %4369 = vrot.lane.b32.xlu0 %v4300, 127
      %v4370 = vpop.permute.xlu0 %4369
      %v4371 = vsel %vm1158, %v4368, %v4370
      %v4372 = vsel %vm1158, %v4370, %v4368
      %v4373 = vld [vmem:[%s1161] ss:$8 sm:$0x3]
      %v4375 = vperm.slane %v4373, 0
      %v4376 = vperm.slane %v4373, 1
      %v4379 = vmul.f32 %v4371, %v4375
      %v4380 = vmul.f32 %v4372, %v4376
      %4381 = vst [vmem:[#allocation2 + $0x1d0] sm:$0xff] %v4379
      %4382 = vst [vmem:[#allocation2 + $0x1d8] sm:$0xff] %v4380
      %4383 = vrot.lane.b32.xlu0 %v4299, 113
      %v4384 = vpop.permute.xlu0 %4383
      %4385 = vrot.lane.b32.xlu0 %v4300, 113
      %v4386 = vpop.permute.xlu0 %4385
      %v4387 = vsel %vm1176, %v4384, %v4386
      %v4388 = vsel %vm1176, %v4386, %v4384
      %v4389 = vld [vmem:[%s1179] ss:$8 sm:$0x3]
      %v4391 = vperm.slane %v4389, 0
      %v4392 = vperm.slane %v4389, 1
      %v4395 = vmul.f32 %v4387, %v4391
      %v4396 = vmul.f32 %v4388, %v4392
      %4397 = vst [vmem:[#allocation2 + $0x220] sm:$0xff] %v4395
      %4398 = vst [vmem:[#allocation2 + $0x228] sm:$0xff] %v4396
      %4399 = vrot.lane.b32.xlu0 %v4299, 112
      %v4400 = vpop.permute.xlu0 %4399
      %4401 = vrot.lane.b32.xlu0 %v4300, 112
      %v4402 = vpop.permute.xlu0 %4401
      %v4403 = vsel %vm1194, %v4400, %v4402
      %v4404 = vsel %vm1194, %v4402, %v4400
      %v4405 = vld [vmem:[%s1197] ss:$8 sm:$0x3]
      %v4407 = vperm.slane %v4405, 0
      %v4408 = vperm.slane %v4405, 1
      %v4411 = vmul.f32 %v4403, %v4407
      %v4412 = vmul.f32 %v4404, %v4408
      %4413 = vst [vmem:[#allocation2 + $0x270] sm:$0xff] %v4411
      %4414 = vst [vmem:[#allocation2 + $0x278] sm:$0xff] %v4412
      %4415 = vrot.lane.b32.xlu0 %v4299, 111
      %v4416 = vpop.permute.xlu0 %4415
      %4417 = vrot.lane.b32.xlu0 %v4300, 111
      %v4418 = vpop.permute.xlu0 %4417
      %v4419 = vsel %vm1212, %v4416, %v4418
      %v4420 = vsel %vm1212, %v4418, %v4416
      %v4421 = vld [vmem:[%s1215] ss:$8 sm:$0x3]
      %v4423 = vperm.slane %v4421, 0
      %v4424 = vperm.slane %v4421, 1
      %v4427 = vmul.f32 %v4419, %v4423
      %v4428 = vmul.f32 %v4420, %v4424
      %4429 = vst [vmem:[#allocation2 + $0x2c0] sm:$0xff] %v4427
      %4430 = vst [vmem:[#allocation2 + $0x2c8] sm:$0xff] %v4428
      %v4431 = vld [vmem:[%s41] sm:$0xff]
      %v4432 = vld [vmem:[%s41 + $0x8] sm:$0xff]
      %v4433 = vld [vmem:[%s41 + $0x10] sm:$0xff]
      %v4434 = vld [vmem:[#allocation2] sm:$0xff]
      %v4435 = vld [vmem:[#allocation2 + $0x8] sm:$0xff]
      %v4436 = vld [vmem:[#allocation2 + $0x10] sm:$0xff]
      %v4437 = vld [vmem:[#allocation2 + $0x18] sm:$0xff]
      %v4438 = vld [vmem:[#allocation2 + $0x20] sm:$0xff]
      %v4439 = vld [vmem:[#allocation2 + $0x28] sm:$0xff]
      %v4440 = vld [vmem:[#allocation2 + $0x30] sm:$0xff]
      %v4441 = vld [vmem:[#allocation2 + $0x38] sm:$0xff]
      %v4442 = vld [vmem:[#allocation2 + $0x40] sm:$0xff]
      %v4443 = vld [vmem:[#allocation2 + $0x48] sm:$0xff]
      %v4444 = vld [vmem:[#allocation2 + $0x50] sm:$0xff]
      %v4445 = vld [vmem:[#allocation2 + $0x58] sm:$0xff]
      %v4446 = vld [vmem:[#allocation2 + $0x60] sm:$0xff]
      %v4447 = vld [vmem:[#allocation2 + $0x68] sm:$0xff]
      %v4448 = vld [vmem:[#allocation2 + $0x70] sm:$0xff]
      %v4449 = vld [vmem:[#allocation2 + $0x78] sm:$0xff]
      %v4450 = vld [vmem:[#allocation2 + $0x80] sm:$0xff]
      %v4451 = vld [vmem:[#allocation2 + $0x88] sm:$0xff]
      %v4452 = vld [vmem:[#allocation2 + $0x90] sm:$0xff]
      %v4453 = vld [vmem:[#allocation2 + $0x98] sm:$0xff]
      %v4454 = vld [vmem:[#allocation2 + $0xa0] sm:$0xff]
      %v4455 = vld [vmem:[#allocation2 + $0xa8] sm:$0xff]
      %v4456 = vld [vmem:[#allocation2 + $0xb0] sm:$0xff]
      %v4457 = vld [vmem:[#allocation2 + $0xb8] sm:$0xff]
      %v4458 = vld [vmem:[#allocation2 + $0xc0] sm:$0xff]
      %v4459 = vld [vmem:[#allocation2 + $0xc8] sm:$0xff]
      %v4460 = vld [vmem:[#allocation2 + $0xd0] sm:$0xff]
      %v4461 = vld [vmem:[#allocation2 + $0xd8] sm:$0xff]
      %v4462 = vld [vmem:[#allocation2 + $0xe0] sm:$0xff]
      %v4463 = vld [vmem:[#allocation2 + $0xe8] sm:$0xff]
      %v4464 = vld [vmem:[#allocation2 + $0xf0] sm:$0xff]
      %v4465 = vld [vmem:[#allocation2 + $0xf8] sm:$0xff]
      %v4466 = vld [vmem:[#allocation2 + $0x100] sm:$0xff]
      %v4467 = vld [vmem:[#allocation2 + $0x108] sm:$0xff]
      %v4468 = vld [vmem:[#allocation2 + $0x110] sm:$0xff]
      %v4469 = vld [vmem:[#allocation2 + $0x118] sm:$0xff]
      %v4470 = vld [vmem:[#allocation2 + $0x120] sm:$0xff]
      %v4471 = vld [vmem:[#allocation2 + $0x128] sm:$0xff]
      %v4472 = vld [vmem:[#allocation2 + $0x130] sm:$0xff]
      %v4473 = vld [vmem:[#allocation2 + $0x138] sm:$0xff]
      %v4474 = vld [vmem:[#allocation2 + $0x140] sm:$0xff]
      %v4475 = vld [vmem:[#allocation2 + $0x148] sm:$0xff]
      %v4476 = vld [vmem:[#allocation2 + $0x150] sm:$0xff]
      %v4477 = vld [vmem:[#allocation2 + $0x158] sm:$0xff]
      %v4478 = vld [vmem:[#allocation2 + $0x160] sm:$0xff]
      %v4479 = vld [vmem:[#allocation2 + $0x168] sm:$0xff]
      %v4480 = vld [vmem:[#allocation2 + $0x170] sm:$0xff]
      %v4481 = vld [vmem:[#allocation2 + $0x178] sm:$0xff]
      %v4482 = vld [vmem:[#allocation2 + $0x180] sm:$0xff]
      %v4483 = vld [vmem:[#allocation2 + $0x188] sm:$0xff]
      %v4484 = vld [vmem:[#allocation2 + $0x190] sm:$0xff]
      %v4485 = vld [vmem:[#allocation2 + $0x198] sm:$0xff]
      %v4486 = vld [vmem:[#allocation2 + $0x1a0] sm:$0xff]
      %v4487 = vld [vmem:[#allocation2 + $0x1a8] sm:$0xff]
      %v4488 = vld [vmem:[#allocation2 + $0x1b0] sm:$0xff]
      %v4489 = vld [vmem:[#allocation2 + $0x1b8] sm:$0xff]
      %v4490 = vld [vmem:[#allocation2 + $0x1c0] sm:$0xff]
      %v4491 = vld [vmem:[#allocation2 + $0x1c8] sm:$0xff]
      %v4492 = vld [vmem:[#allocation2 + $0x1d0] sm:$0xff]
      %v4493 = vld [vmem:[#allocation2 + $0x1d8] sm:$0xff]
      %v4494 = vld [vmem:[#allocation2 + $0x1e0] sm:$0xff]
      %v4495 = vld [vmem:[#allocation2 + $0x1e8] sm:$0xff]
      %v4496 = vld [vmem:[#allocation2 + $0x1f0] sm:$0xff]
      %v4497 = vld [vmem:[#allocation2 + $0x1f8] sm:$0xff]
      %v4498 = vld [vmem:[#allocation2 + $0x200] sm:$0xff]
      %v4499 = vld [vmem:[#allocation2 + $0x208] sm:$0xff]
      %v4500 = vld [vmem:[#allocation2 + $0x210] sm:$0xff]
      %v4501 = vld [vmem:[#allocation2 + $0x218] sm:$0xff]
      %v4502 = vld [vmem:[#allocation2 + $0x220] sm:$0xff]
      %v4503 = vld [vmem:[#allocation2 + $0x228] sm:$0xff]
      %v4504 = vld [vmem:[#allocation2 + $0x230] sm:$0xff]
      %v4505 = vld [vmem:[#allocation2 + $0x238] sm:$0xff]
      %v4506 = vld [vmem:[#allocation2 + $0x240] sm:$0xff]
      %v4507 = vld [vmem:[#allocation2 + $0x248] sm:$0xff]
      %v4508 = vld [vmem:[#allocation2 + $0x250] sm:$0xff]
      %v4509 = vld [vmem:[#allocation2 + $0x258] sm:$0xff]
      %v4510 = vld [vmem:[#allocation2 + $0x260] sm:$0xff]
      %v4511 = vld [vmem:[#allocation2 + $0x268] sm:$0xff]
      %v4512 = vld [vmem:[#allocation2 + $0x270] sm:$0xff]
      %v4513 = vld [vmem:[#allocation2 + $0x278] sm:$0xff]
      %v4514 = vld [vmem:[#allocation2 + $0x280] sm:$0xff]
      %v4515 = vld [vmem:[#allocation2 + $0x288] sm:$0xff]
      %v4516 = vld [vmem:[#allocation2 + $0x290] sm:$0xff]
      %v4517 = vld [vmem:[#allocation2 + $0x298] sm:$0xff]
      %v4518 = vld [vmem:[#allocation2 + $0x2a0] sm:$0xff]
      %v4519 = vld [vmem:[#allocation2 + $0x2a8] sm:$0xff]
      %v4520 = vld [vmem:[#allocation2 + $0x2b0] sm:$0xff]
      %v4521 = vld [vmem:[#allocation2 + $0x2b8] sm:$0xff]
      %v4522 = vld [vmem:[#allocation2 + $0x2c0] sm:$0xff]
      %v4523 = vld [vmem:[#allocation2 + $0x2c8] sm:$0xff]
      %v4524 = vld [vmem:[%s43] sm:$0xff]
      %4526 = vset.pattern.permute.xlu0 0
      %4527 = vperm.xlu0 %4526, %v4524
      %v4528 = vpop.permute.xlu0 %4527
      %v4531 = vsel %vm1325, %v4433, 0
      %4533 = vmatpush.msra.mxu0 %v4464
      %4534 = vmatpush.msra.mxu0 %v4462
      %4535 = vmatpush.msra.mxu0 %v4460
      %4536 = vmatpush.msra.mxu0 %v4458
      %4537 = vmatpush.msra.mxu0 %v4456
      %4538 = vmatpush.msra.mxu0 %v4454
      %4539 = vmatpush.msra.mxu0 %v4452
      %4540 = vmatpush.msra.mxu0 %v4450
      %4541 = vmatpush.msra.mxu0 %v4448
      %4542 = vmatpush.msra.mxu0 %v4446
      %4543 = vmatpush.msra.mxu0 %v4444
      %4544 = vmatpush.msra.mxu0 %v4442
      %4545 = vmatpush.msra.mxu0 %v4440
      %4546 = vmatpush.msra.mxu0 %v4438
      %4547 = vmatpush.msra.mxu0 %v4436
      %4548 = vmatpush.msra.mxu0 %v4434
      %4549 = vmatmul.f32.gmra.mxu0 %v4431
      %v4550 = vpop.f32.mrf.mxu0
      %v4551 = vadd.f32 %v4528, %v4550
      %4552 = vdwg.mxu0
      %4553 = vmatpush.msra.mxu0 %v4496
      %4554 = vmatpush.msra.mxu0 %v4494
      %4555 = vmatpush.msra.mxu0 %v4492
      %4556 = vmatpush.msra.mxu0 %v4490
      %4557 = vmatpush.msra.mxu0 %v4488
      %4558 = vmatpush.msra.mxu0 %v4486
      %4559 = vmatpush.msra.mxu0 %v4484
      %4560 = vmatpush.msra.mxu0 %v4482
      %4561 = vmatpush.msra.mxu0 %v4480
      %4562 = vmatpush.msra.mxu0 %v4478
      %4563 = vmatpush.msra.mxu0 %v4476
      %4564 = vmatpush.msra.mxu0 %v4474
      %4565 = vmatpush.msra.mxu0 %v4472
      %4566 = vmatpush.msra.mxu0 %v4470
      %4567 = vmatpush.msra.mxu0 %v4468
      %4568 = vmatpush.msra.mxu0 %v4466
      %4569 = vmatmul.f32.gmra.mxu0 %v4432
      %v4570 = vpop.f32.mrf.mxu0
      %v4571 = vadd.f32 %v4551, %v4570
      %4572 = vdwg.mxu0
      %4573 = vmatpush.msra.mxu0 0.0
      %4574 = vmatpush.msra.mxu0 0.0
      %4575 = vmatpush.msra.mxu0 0.0
      %4576 = vmatpush.msra.mxu0 %v4522
      %4577 = vmatpush.msra.mxu0 %v4520
      %4578 = vmatpush.msra.mxu0 %v4518
      %4579 = vmatpush.msra.mxu0 %v4516
      %4580 = vmatpush.msra.mxu0 %v4514
      %4581 = vmatpush.msra.mxu0 %v4512
      %4582 = vmatpush.msra.mxu0 %v4510
      %4583 = vmatpush.msra.mxu0 %v4508
      %4584 = vmatpush.msra.mxu0 %v4506
      %4585 = vmatpush.msra.mxu0 %v4504
      %4586 = vmatpush.msra.mxu0 %v4502
      %4587 = vmatpush.msra.mxu0 %v4500
      %4588 = vmatpush.msra.mxu0 %v4498
      %4589 = vmatmul.f32.gmra.mxu0 %v4531
      %v4590 = vpop.f32.mrf.mxu0
      %v4591 = vadd.f32 %v4571, %v4590
      %4592 = vdwg.mxu0
      %4593 = vmatpush.msra.mxu0 %v4465
      %4594 = vmatpush.msra.mxu0 %v4463
      %4595 = vmatpush.msra.mxu0 %v4461
      %4596 = vmatpush.msra.mxu0 %v4459
      %4597 = vmatpush.msra.mxu0 %v4457
      %4598 = vmatpush.msra.mxu0 %v4455
      %4599 = vmatpush.msra.mxu0 %v4453
      %4600 = vmatpush.msra.mxu0 %v4451
      %4601 = vmatpush.msra.mxu0 %v4449
      %4602 = vmatpush.msra.mxu0 %v4447
      %4603 = vmatpush.msra.mxu0 %v4445
      %4604 = vmatpush.msra.mxu0 %v4443
      %4605 = vmatpush.msra.mxu0 %v4441
      %4606 = vmatpush.msra.mxu0 %v4439
      %4607 = vmatpush.msra.mxu0 %v4437
      %4608 = vmatpush.msra.mxu0 %v4435
      %4609 = vmatmul.f32.gmra.mxu0 %v4431
      %v4610 = vpop.f32.mrf.mxu0
      %v4611 = vadd.f32 %v4528, %v4610
      %4612 = vdwg.mxu0
      %4613 = vmatpush.msra.mxu0 %v4497
      %4614 = vmatpush.msra.mxu0 %v4495
      %4615 = vmatpush.msra.mxu0 %v4493
      %4616 = vmatpush.msra.mxu0 %v4491
      %4617 = vmatpush.msra.mxu0 %v4489
      %4618 = vmatpush.msra.mxu0 %v4487
      %4619 = vmatpush.msra.mxu0 %v4485
      %4620 = vmatpush.msra.mxu0 %v4483
      %4621 = vmatpush.msra.mxu0 %v4481
      %4622 = vmatpush.msra.mxu0 %v4479
      %4623 = vmatpush.msra.mxu0 %v4477
      %4624 = vmatpush.msra.mxu0 %v4475
      %4625 = vmatpush.msra.mxu0 %v4473
      %4626 = vmatpush.msra.mxu0 %v4471
      %4627 = vmatpush.msra.mxu0 %v4469
      %4628 = vmatpush.msra.mxu0 %v4467
      %4629 = vmatmul.f32.gmra.mxu0 %v4432
      %v4630 = vpop.f32.mrf.mxu0
      %v4631 = vadd.f32 %v4611, %v4630
      %4632 = vdwg.mxu0
      %4633 = vmatpush.msra.mxu0 0.0
      %4634 = vmatpush.msra.mxu0 0.0
      %4635 = vmatpush.msra.mxu0 0.0
      %4636 = vmatpush.msra.mxu0 %v4523
      %4637 = vmatpush.msra.mxu0 %v4521
      %4638 = vmatpush.msra.mxu0 %v4519
      %4639 = vmatpush.msra.mxu0 %v4517
      %4640 = vmatpush.msra.mxu0 %v4515
      %4641 = vmatpush.msra.mxu0 %v4513
      %4642 = vmatpush.msra.mxu0 %v4511
      %4643 = vmatpush.msra.mxu0 %v4509
      %4644 = vmatpush.msra.mxu0 %v4507
      %4645 = vmatpush.msra.mxu0 %v4505
      %4646 = vmatpush.msra.mxu0 %v4503
      %4647 = vmatpush.msra.mxu0 %v4501
      %4648 = vmatpush.msra.mxu0 %v4499
      %4649 = vmatmul.f32.gmra.mxu0 %v4531
      %v4650 = vpop.f32.mrf.mxu0
      %v4651 = vadd.f32 %v4631, %v4650
      %4652 = vdwg.mxu0
      %v4653 = vmul.f32 %v4591, 0.2
      %v4654 = vmul.f32 %v4651, 0.2
      %v4655 = vadd.f32 %v4653, %v2875
      %v4656 = vadd.f32 %v4654, %v2876
      %4657 = vrot.lane.b32.xlu0 %v4655, 17
      %v4658 = vpop.permute.xlu0 %4657
      %4659 = vrot.lane.b32.xlu0 %v4656, 17
      %v4660 = vpop.permute.xlu0 %4659
      %v4661 = vsel %vm1085, %v4658, %v4660
      %v4662 = vsel %vm1085, %v4660, %v4658
      %v4663 = vld [vmem:[%s3] ss:$8 sm:$0x3]
      %v4665 = vperm.slane %v4663, 0
      %v4666 = vperm.slane %v4663, 1
      %v4669 = vmul.f32 %v4662, %v4665
      %v4670 = vmul.f32 %v4661, %v4666
      %4671 = vst [vmem:[#allocation2] sm:$0xff] %v4669
      %4672 = vst [vmem:[#allocation2 + $0x8] sm:$0xff] %v4670
      %4673 = vrot.lane.b32.xlu0 %v4655, 16
      %v4674 = vpop.permute.xlu0 %4673
      %4675 = vrot.lane.b32.xlu0 %v4656, 16
      %v4676 = vpop.permute.xlu0 %4675
      %v4677 = vsel %vm1102, %v4674, %v4676
      %v4678 = vsel %vm1102, %v4676, %v4674
      %v4679 = vld [vmem:[%s1105] ss:$8 sm:$0x3]
      %v4681 = vperm.slane %v4679, 0
      %v4682 = vperm.slane %v4679, 1
      %v4685 = vmul.f32 %v4678, %v4681
      %v4686 = vmul.f32 %v4677, %v4682
      %4687 = vst [vmem:[#allocation2 + $0x50] sm:$0xff] %v4685
      %4688 = vst [vmem:[#allocation2 + $0x58] sm:$0xff] %v4686
      %4689 = vrot.lane.b32.xlu0 %v4655, 15
      %v4690 = vpop.permute.xlu0 %4689
      %4691 = vrot.lane.b32.xlu0 %v4656, 15
      %v4692 = vpop.permute.xlu0 %4691
      %v4693 = vsel %vm1120, %v4690, %v4692
      %v4694 = vsel %vm1120, %v4692, %v4690
      %v4695 = vld [vmem:[%s1123] ss:$8 sm:$0x3]
      %v4697 = vperm.slane %v4695, 0
      %v4698 = vperm.slane %v4695, 1
      %v4701 = vmul.f32 %v4694, %v4697
      %v4702 = vmul.f32 %v4693, %v4698
      %4703 = vst [vmem:[#allocation2 + $0xa0] sm:$0xff] %v4701
      %4704 = vst [vmem:[#allocation2 + $0xa8] sm:$0xff] %v4702
      %4705 = vrot.lane.b32.xlu0 %v4655, 1
      %v4706 = vpop.permute.xlu0 %4705
      %4707 = vrot.lane.b32.xlu0 %v4656, 1
      %v4708 = vpop.permute.xlu0 %4707
      %v4709 = vsel %vm1138, %v4706, %v4708
      %v4710 = vsel %vm1138, %v4708, %v4706
      %v4711 = vld [vmem:[%s1141] ss:$8 sm:$0x3]
      %v4713 = vperm.slane %v4711, 0
      %v4714 = vperm.slane %v4711, 1
      %v4717 = vmul.f32 %v4710, %v4713
      %v4718 = vmul.f32 %v4709, %v4714
      %4719 = vst [vmem:[#allocation2 + $0xf0] sm:$0xff] %v4717
      %4720 = vst [vmem:[#allocation2 + $0xf8] sm:$0xff] %v4718
      %4721 = vst [vmem:[#allocation2 + $0x140] sm:$0xff] %v4655
      %4722 = vst [vmem:[#allocation2 + $0x148] sm:$0xff] %v4656
      %4723 = vrot.lane.b32.xlu0 %v4655, 127
      %v4724 = vpop.permute.xlu0 %4723
      %4725 = vrot.lane.b32.xlu0 %v4656, 127
      %v4726 = vpop.permute.xlu0 %4725
      %v4727 = vsel %vm1158, %v4724, %v4726
      %v4728 = vsel %vm1158, %v4726, %v4724
      %v4729 = vld [vmem:[%s1161] ss:$8 sm:$0x3]
      %v4731 = vperm.slane %v4729, 0
      %v4732 = vperm.slane %v4729, 1
      %v4735 = vmul.f32 %v4727, %v4731
      %v4736 = vmul.f32 %v4728, %v4732
      %4737 = vst [vmem:[#allocation2 + $0x190] sm:$0xff] %v4735
      %4738 = vst [vmem:[#allocation2 + $0x198] sm:$0xff] %v4736
      %4739 = vrot.lane.b32.xlu0 %v4655, 113
      %v4740 = vpop.permute.xlu0 %4739
      %4741 = vrot.lane.b32.xlu0 %v4656, 113
      %v4742 = vpop.permute.xlu0 %4741
      %v4743 = vsel %vm1176, %v4740, %v4742
      %v4744 = vsel %vm1176, %v4742, %v4740
      %v4745 = vld [vmem:[%s1179] ss:$8 sm:$0x3]
      %v4747 = vperm.slane %v4745, 0
      %v4748 = vperm.slane %v4745, 1
      %v4751 = vmul.f32 %v4743, %v4747
      %v4752 = vmul.f32 %v4744, %v4748
      %4753 = vst [vmem:[#allocation2 + $0x1e0] sm:$0xff] %v4751
      %4754 = vst [vmem:[#allocation2 + $0x1e8] sm:$0xff] %v4752
      %4755 = vrot.lane.b32.xlu0 %v4655, 112
      %v4756 = vpop.permute.xlu0 %4755
      %4757 = vrot.lane.b32.xlu0 %v4656, 112
      %v4758 = vpop.permute.xlu0 %4757
      %v4759 = vsel %vm1194, %v4756, %v4758
      %v4760 = vsel %vm1194, %v4758, %v4756
      %v4761 = vld [vmem:[%s1197] ss:$8 sm:$0x3]
      %v4763 = vperm.slane %v4761, 0
      %v4764 = vperm.slane %v4761, 1
      %v4767 = vmul.f32 %v4759, %v4763
      %v4768 = vmul.f32 %v4760, %v4764
      %4769 = vst [vmem:[#allocation2 + $0x230] sm:$0xff] %v4767
      %4770 = vst [vmem:[#allocation2 + $0x238] sm:$0xff] %v4768
      %4771 = vrot.lane.b32.xlu0 %v4655, 111
      %v4772 = vpop.permute.xlu0 %4771
      %4773 = vrot.lane.b32.xlu0 %v4656, 111
      %v4774 = vpop.permute.xlu0 %4773
      %v4775 = vsel %vm1212, %v4772, %v4774
      %v4776 = vsel %vm1212, %v4774, %v4772
      %v4777 = vld [vmem:[%s1215] ss:$8 sm:$0x3]
      %v4779 = vperm.slane %v4777, 0
      %v4780 = vperm.slane %v4777, 1
      %v4783 = vmul.f32 %v4775, %v4779
      %v4784 = vmul.f32 %v4776, %v4780
      %4785 = vst [vmem:[#allocation2 + $0x280] sm:$0xff] %v4783
      %4786 = vst [vmem:[#allocation2 + $0x288] sm:$0xff] %v4784
      %v4787 = vld [vmem:[%s45] sm:$0xff]
      %v4788 = vld [vmem:[%s45 + $0x8] sm:$0xff]
      %v4789 = vld [vmem:[%s45 + $0x10] sm:$0xff]
      %v4790 = vld [vmem:[#allocation2] sm:$0xff]
      %v4791 = vld [vmem:[#allocation2 + $0x8] sm:$0xff]
      %v4792 = vld [vmem:[#allocation2 + $0x10] sm:$0xff]
      %v4793 = vld [vmem:[#allocation2 + $0x18] sm:$0xff]
      %v4794 = vld [vmem:[#allocation2 + $0x20] sm:$0xff]
      %v4795 = vld [vmem:[#allocation2 + $0x28] sm:$0xff]
      %v4796 = vld [vmem:[#allocation2 + $0x30] sm:$0xff]
      %v4797 = vld [vmem:[#allocation2 + $0x38] sm:$0xff]
      %v4798 = vld [vmem:[#allocation2 + $0x40] sm:$0xff]
      %v4799 = vld [vmem:[#allocation2 + $0x48] sm:$0xff]
      %v4800 = vld [vmem:[#allocation2 + $0x50] sm:$0xff]
      %v4801 = vld [vmem:[#allocation2 + $0x58] sm:$0xff]
      %v4802 = vld [vmem:[#allocation2 + $0x60] sm:$0xff]
      %v4803 = vld [vmem:[#allocation2 + $0x68] sm:$0xff]
      %v4804 = vld [vmem:[#allocation2 + $0x70] sm:$0xff]
      %v4805 = vld [vmem:[#allocation2 + $0x78] sm:$0xff]
      %v4806 = vld [vmem:[#allocation2 + $0x80] sm:$0xff]
      %v4807 = vld [vmem:[#allocation2 + $0x88] sm:$0xff]
      %v4808 = vld [vmem:[#allocation2 + $0x90] sm:$0xff]
      %v4809 = vld [vmem:[#allocation2 + $0x98] sm:$0xff]
      %v4810 = vld [vmem:[#allocation2 + $0xa0] sm:$0xff]
      %v4811 = vld [vmem:[#allocation2 + $0xa8] sm:$0xff]
      %v4812 = vld [vmem:[#allocation2 + $0xb0] sm:$0xff]
      %v4813 = vld [vmem:[#allocation2 + $0xb8] sm:$0xff]
      %v4814 = vld [vmem:[#allocation2 + $0xc0] sm:$0xff]
      %v4815 = vld [vmem:[#allocation2 + $0xc8] sm:$0xff]
      %v4816 = vld [vmem:[#allocation2 + $0xd0] sm:$0xff]
      %v4817 = vld [vmem:[#allocation2 + $0xd8] sm:$0xff]
      %v4818 = vld [vmem:[#allocation2 + $0xe0] sm:$0xff]
      %v4819 = vld [vmem:[#allocation2 + $0xe8] sm:$0xff]
      %v4820 = vld [vmem:[#allocation2 + $0xf0] sm:$0xff]
      %v4821 = vld [vmem:[#allocation2 + $0xf8] sm:$0xff]
      %v4822 = vld [vmem:[#allocation2 + $0x100] sm:$0xff]
      %v4823 = vld [vmem:[#allocation2 + $0x108] sm:$0xff]
      %v4824 = vld [vmem:[#allocation2 + $0x110] sm:$0xff]
      %v4825 = vld [vmem:[#allocation2 + $0x118] sm:$0xff]
      %v4826 = vld [vmem:[#allocation2 + $0x120] sm:$0xff]
      %v4827 = vld [vmem:[#allocation2 + $0x128] sm:$0xff]
      %v4828 = vld [vmem:[#allocation2 + $0x130] sm:$0xff]
      %v4829 = vld [vmem:[#allocation2 + $0x138] sm:$0xff]
      %v4830 = vld [vmem:[#allocation2 + $0x140] sm:$0xff]
      %v4831 = vld [vmem:[#allocation2 + $0x148] sm:$0xff]
      %v4832 = vld [vmem:[#allocation2 + $0x150] sm:$0xff]
      %v4833 = vld [vmem:[#allocation2 + $0x158] sm:$0xff]
      %v4834 = vld [vmem:[#allocation2 + $0x160] sm:$0xff]
      %v4835 = vld [vmem:[#allocation2 + $0x168] sm:$0xff]
      %v4836 = vld [vmem:[#allocation2 + $0x170] sm:$0xff]
      %v4837 = vld [vmem:[#allocation2 + $0x178] sm:$0xff]
      %v4838 = vld [vmem:[#allocation2 + $0x180] sm:$0xff]
      %v4839 = vld [vmem:[#allocation2 + $0x188] sm:$0xff]
      %v4840 = vld [vmem:[#allocation2 + $0x190] sm:$0xff]
      %v4841 = vld [vmem:[#allocation2 + $0x198] sm:$0xff]
      %v4842 = vld [vmem:[#allocation2 + $0x1a0] sm:$0xff]
      %v4843 = vld [vmem:[#allocation2 + $0x1a8] sm:$0xff]
      %v4844 = vld [vmem:[#allocation2 + $0x1b0] sm:$0xff]
      %v4845 = vld [vmem:[#allocation2 + $0x1b8] sm:$0xff]
      %v4846 = vld [vmem:[#allocation2 + $0x1c0] sm:$0xff]
      %v4847 = vld [vmem:[#allocation2 + $0x1c8] sm:$0xff]
      %v4848 = vld [vmem:[#allocation2 + $0x1d0] sm:$0xff]
      %v4849 = vld [vmem:[#allocation2 + $0x1d8] sm:$0xff]
      %v4850 = vld [vmem:[#allocation2 + $0x1e0] sm:$0xff]
      %v4851 = vld [vmem:[#allocation2 + $0x1e8] sm:$0xff]
      %v4852 = vld [vmem:[#allocation2 + $0x1f0] sm:$0xff]
      %v4853 = vld [vmem:[#allocation2 + $0x1f8] sm:$0xff]
      %v4854 = vld [vmem:[#allocation2 + $0x200] sm:$0xff]
      %v4855 = vld [vmem:[#allocation2 + $0x208] sm:$0xff]
      %v4856 = vld [vmem:[#allocation2 + $0x210] sm:$0xff]
      %v4857 = vld [vmem:[#allocation2 + $0x218] sm:$0xff]
      %v4858 = vld [vmem:[#allocation2 + $0x220] sm:$0xff]
      %v4859 = vld [vmem:[#allocation2 + $0x228] sm:$0xff]
      %v4860 = vld [vmem:[#allocation2 + $0x230] sm:$0xff]
      %v4861 = vld [vmem:[#allocation2 + $0x238] sm:$0xff]
      %v4862 = vld [vmem:[#allocation2 + $0x240] sm:$0xff]
      %v4863 = vld [vmem:[#allocation2 + $0x248] sm:$0xff]
      %v4864 = vld [vmem:[#allocation2 + $0x250] sm:$0xff]
      %v4865 = vld [vmem:[#allocation2 + $0x258] sm:$0xff]
      %v4866 = vld [vmem:[#allocation2 + $0x260] sm:$0xff]
      %v4867 = vld [vmem:[#allocation2 + $0x268] sm:$0xff]
      %v4868 = vld [vmem:[#allocation2 + $0x270] sm:$0xff]
      %v4869 = vld [vmem:[#allocation2 + $0x278] sm:$0xff]
      %v4870 = vld [vmem:[#allocation2 + $0x280] sm:$0xff]
      %v4871 = vld [vmem:[#allocation2 + $0x288] sm:$0xff]
      %v4872 = vld [vmem:[#allocation2 + $0x290] sm:$0xff]
      %v4873 = vld [vmem:[#allocation2 + $0x298] sm:$0xff]
      %v4874 = vld [vmem:[#allocation2 + $0x2a0] sm:$0xff]
      %v4875 = vld [vmem:[#allocation2 + $0x2a8] sm:$0xff]
      %v4876 = vld [vmem:[#allocation2 + $0x2b0] sm:$0xff]
      %v4877 = vld [vmem:[#allocation2 + $0x2b8] sm:$0xff]
      %v4878 = vld [vmem:[#allocation2 + $0x2c0] sm:$0xff]
      %v4879 = vld [vmem:[#allocation2 + $0x2c8] sm:$0xff]
      %v4880 = vld [vmem:[%s47] sm:$0xff]
      %4882 = vset.pattern.permute.xlu0 0
      %4883 = vperm.xlu0 %4882, %v4880
      %v4884 = vpop.permute.xlu0 %4883
      %v4887 = vsel %vm1325, %v4789, 0
      %4889 = vmatpush.msra.mxu0 %v4820
      %4890 = vmatpush.msra.mxu0 %v4818
      %4891 = vmatpush.msra.mxu0 %v4816
      %4892 = vmatpush.msra.mxu0 %v4814
      %4893 = vmatpush.msra.mxu0 %v4812
      %4894 = vmatpush.msra.mxu0 %v4810
      %4895 = vmatpush.msra.mxu0 %v4808
      %4896 = vmatpush.msra.mxu0 %v4806
      %4897 = vmatpush.msra.mxu0 %v4804
      %4898 = vmatpush.msra.mxu0 %v4802
      %4899 = vmatpush.msra.mxu0 %v4800
      %4900 = vmatpush.msra.mxu0 %v4798
      %4901 = vmatpush.msra.mxu0 %v4796
      %4902 = vmatpush.msra.mxu0 %v4794
      %4903 = vmatpush.msra.mxu0 %v4792
      %4904 = vmatpush.msra.mxu0 %v4790
      %4905 = vmatmul.f32.gmra.mxu0 %v4787
      %v4906 = vpop.f32.mrf.mxu0
      %v4907 = vadd.f32 %v4884, %v4906
      %4908 = vdwg.mxu0
      %4909 = vmatpush.msra.mxu0 %v4852
      %4910 = vmatpush.msra.mxu0 %v4850
      %4911 = vmatpush.msra.mxu0 %v4848
      %4912 = vmatpush.msra.mxu0 %v4846
      %4913 = vmatpush.msra.mxu0 %v4844
      %4914 = vmatpush.msra.mxu0 %v4842
      %4915 = vmatpush.msra.mxu0 %v4840
      %4916 = vmatpush.msra.mxu0 %v4838
      %4917 = vmatpush.msra.mxu0 %v4836
      %4918 = vmatpush.msra.mxu0 %v4834
      %4919 = vmatpush.msra.mxu0 %v4832
      %4920 = vmatpush.msra.mxu0 %v4830
      %4921 = vmatpush.msra.mxu0 %v4828
      %4922 = vmatpush.msra.mxu0 %v4826
      %4923 = vmatpush.msra.mxu0 %v4824
      %4924 = vmatpush.msra.mxu0 %v4822
      %4925 = vmatmul.f32.gmra.mxu0 %v4788
      %v4926 = vpop.f32.mrf.mxu0
      %v4927 = vadd.f32 %v4907, %v4926
      %4928 = vdwg.mxu0
      %4929 = vmatpush.msra.mxu0 0.0
      %4930 = vmatpush.msra.mxu0 0.0
      %4931 = vmatpush.msra.mxu0 0.0
      %4932 = vmatpush.msra.mxu0 %v4878
      %4933 = vmatpush.msra.mxu0 %v4876
      %4934 = vmatpush.msra.mxu0 %v4874
      %4935 = vmatpush.msra.mxu0 %v4872
      %4936 = vmatpush.msra.mxu0 %v4870
      %4937 = vmatpush.msra.mxu0 %v4868
      %4938 = vmatpush.msra.mxu0 %v4866
      %4939 = vmatpush.msra.mxu0 %v4864
      %4940 = vmatpush.msra.mxu0 %v4862
      %4941 = vmatpush.msra.mxu0 %v4860
      %4942 = vmatpush.msra.mxu0 %v4858
      %4943 = vmatpush.msra.mxu0 %v4856
      %4944 = vmatpush.msra.mxu0 %v4854
      %4945 = vmatmul.f32.gmra.mxu0 %v4887
      %v4946 = vpop.f32.mrf.mxu0
      %v4947 = vadd.f32 %v4927, %v4946
      %4948 = vdwg.mxu0
      %4949 = vmatpush.msra.mxu0 %v4821
      %4950 = vmatpush.msra.mxu0 %v4819
      %4951 = vmatpush.msra.mxu0 %v4817
      %4952 = vmatpush.msra.mxu0 %v4815
      %4953 = vmatpush.msra.mxu0 %v4813
      %4954 = vmatpush.msra.mxu0 %v4811
      %4955 = vmatpush.msra.mxu0 %v4809
      %4956 = vmatpush.msra.mxu0 %v4807
      %4957 = vmatpush.msra.mxu0 %v4805
      %4958 = vmatpush.msra.mxu0 %v4803
      %4959 = vmatpush.msra.mxu0 %v4801
      %4960 = vmatpush.msra.mxu0 %v4799
      %4961 = vmatpush.msra.mxu0 %v4797
      %4962 = vmatpush.msra.mxu0 %v4795
      %4963 = vmatpush.msra.mxu0 %v4793
      %4964 = vmatpush.msra.mxu0 %v4791
      %4965 = vmatmul.f32.gmra.mxu0 %v4787
      %v4966 = vpop.f32.mrf.mxu0
      %v4967 = vadd.f32 %v4884, %v4966
      %4968 = vdwg.mxu0
      %4969 = vmatpush.msra.mxu0 %v4853
      %4970 = vmatpush.msra.mxu0 %v4851
      %4971 = vmatpush.msra.mxu0 %v4849
      %4972 = vmatpush.msra.mxu0 %v4847
      %4973 = vmatpush.msra.mxu0 %v4845
      %4974 = vmatpush.msra.mxu0 %v4843
      %4975 = vmatpush.msra.mxu0 %v4841
      %4976 = vmatpush.msra.mxu0 %v4839
      %4977 = vmatpush.msra.mxu0 %v4837
      %4978 = vmatpush.msra.mxu0 %v4835
      %4979 = vmatpush.msra.mxu0 %v4833
      %4980 = vmatpush.msra.mxu0 %v4831
      %4981 = vmatpush.msra.mxu0 %v4829
      %4982 = vmatpush.msra.mxu0 %v4827
      %4983 = vmatpush.msra.mxu0 %v4825
      %4984 = vmatpush.msra.mxu0 %v4823
      %4985 = vmatmul.f32.gmra.mxu0 %v4788
      %v4986 = vpop.f32.mrf.mxu0
      %v4987 = vadd.f32 %v4967, %v4986
      %4988 = vdwg.mxu0
      %4989 = vmatpush.msra.mxu0 0.0
      %4990 = vmatpush.msra.mxu0 0.0
      %4991 = vmatpush.msra.mxu0 0.0
      %4992 = vmatpush.msra.mxu0 %v4879
      %4993 = vmatpush.msra.mxu0 %v4877
      %4994 = vmatpush.msra.mxu0 %v4875
      %4995 = vmatpush.msra.mxu0 %v4873
      %4996 = vmatpush.msra.mxu0 %v4871
      %4997 = vmatpush.msra.mxu0 %v4869
      %4998 = vmatpush.msra.mxu0 %v4867
      %4999 = vmatpush.msra.mxu0 %v4865
      %5000 = vmatpush.msra.mxu0 %v4863
      %5001 = vmatpush.msra.mxu0 %v4861
      %5002 = vmatpush.msra.mxu0 %v4859
      %5003 = vmatpush.msra.mxu0 %v4857
      %5004 = vmatpush.msra.mxu0 %v4855
      %5005 = vmatmul.f32.gmra.mxu0 %v4887
      %v5006 = vpop.f32.mrf.mxu0
      %v5007 = vadd.f32 %v4987, %v5006
      %5008 = vdwg.mxu0
      %v5009 = vmul.f32 %v4947, 0.2
      %v5010 = vmul.f32 %v5007, 0.2
      %v5011 = vmax.f32 %v4947, %v5009
      %v5012 = vmax.f32 %v5007, %v5010
      %5013 = vrot.lane.b32.xlu0 %v5011, 17
      %v5014 = vpop.permute.xlu0 %5013
      %5015 = vrot.lane.b32.xlu0 %v5012, 17
      %v5016 = vpop.permute.xlu0 %5015
      %v5017 = vsel %vm1085, %v5014, %v5016
      %v5018 = vsel %vm1085, %v5016, %v5014
      %v5019 = vld [vmem:[%s3] ss:$8 sm:$0x3]
      %v5021 = vperm.slane %v5019, 0
      %v5022 = vperm.slane %v5019, 1
      %v5025 = vmul.f32 %v5018, %v5021
      %v5026 = vmul.f32 %v5017, %v5022
      %5027 = vst [vmem:[#allocation2 + $0x10] sm:$0xff] %v5025
      %5028 = vst [vmem:[#allocation2 + $0x18] sm:$0xff] %v5026
      %5029 = vrot.lane.b32.xlu0 %v5011, 16
      %v5030 = vpop.permute.xlu0 %5029
      %5031 = vrot.lane.b32.xlu0 %v5012, 16
      %v5032 = vpop.permute.xlu0 %5031
      %v5033 = vsel %vm1102, %v5030, %v5032
      %v5034 = vsel %vm1102, %v5032, %v5030
      %v5035 = vld [vmem:[%s1105] ss:$8 sm:$0x3]
      %v5037 = vperm.slane %v5035, 0
      %v5038 = vperm.slane %v5035, 1
      %v5041 = vmul.f32 %v5034, %v5037
      %v5042 = vmul.f32 %v5033, %v5038
      %5043 = vst [vmem:[#allocation2 + $0x60] sm:$0xff] %v5041
      %5044 = vst [vmem:[#allocation2 + $0x68] sm:$0xff] %v5042
      %5045 = vrot.lane.b32.xlu0 %v5011, 15
      %v5046 = vpop.permute.xlu0 %5045
      %5047 = vrot.lane.b32.xlu0 %v5012, 15
      %v5048 = vpop.permute.xlu0 %5047
      %v5049 = vsel %vm1120, %v5046, %v5048
      %v5050 = vsel %vm1120, %v5048, %v5046
      %v5051 = vld [vmem:[%s1123] ss:$8 sm:$0x3]
      %v5053 = vperm.slane %v5051, 0
      %v5054 = vperm.slane %v5051, 1
      %v5057 = vmul.f32 %v5050, %v5053
      %v5058 = vmul.f32 %v5049, %v5054
      %5059 = vst [vmem:[#allocation2 + $0xb0] sm:$0xff] %v5057
      %5060 = vst [vmem:[#allocation2 + $0xb8] sm:$0xff] %v5058
      %5061 = vrot.lane.b32.xlu0 %v5011, 1
      %v5062 = vpop.permute.xlu0 %5061
      %5063 = vrot.lane.b32.xlu0 %v5012, 1
      %v5064 = vpop.permute.xlu0 %5063
      %v5065 = vsel %vm1138, %v5062, %v5064
      %v5066 = vsel %vm1138, %v5064, %v5062
      %v5067 = vld [vmem:[%s1141] ss:$8 sm:$0x3]
      %v5069 = vperm.slane %v5067, 0
      %v5070 = vperm.slane %v5067, 1
      %v5073 = vmul.f32 %v5066, %v5069
      %v5074 = vmul.f32 %v5065, %v5070
      %5075 = vst [vmem:[#allocation2 + $0x100] sm:$0xff] %v5073
      %5076 = vst [vmem:[#allocation2 + $0x108] sm:$0xff] %v5074
      %5077 = vst [vmem:[#allocation2 + $0x150] sm:$0xff] %v5011
      %5078 = vst [vmem:[#allocation2 + $0x158] sm:$0xff] %v5012
      %5079 = vrot.lane.b32.xlu0 %v5011, 127
      %v5080 = vpop.permute.xlu0 %5079
      %5081 = vrot.lane.b32.xlu0 %v5012, 127
      %v5082 = vpop.permute.xlu0 %5081
      %v5083 = vsel %vm1158, %v5080, %v5082
      %v5084 = vsel %vm1158, %v5082, %v5080
      %v5085 = vld [vmem:[%s1161] ss:$8 sm:$0x3]
      %v5087 = vperm.slane %v5085, 0
      %v5088 = vperm.slane %v5085, 1
      %v5091 = vmul.f32 %v5083, %v5087
      %v5092 = vmul.f32 %v5084, %v5088
      %5093 = vst [vmem:[#allocation2 + $0x1a0] sm:$0xff] %v5091
      %5094 = vst [vmem:[#allocation2 + $0x1a8] sm:$0xff] %v5092
      %5095 = vrot.lane.b32.xlu0 %v5011, 113
      %v5096 = vpop.permute.xlu0 %5095
      %5097 = vrot.lane.b32.xlu0 %v5012, 113
      %v5098 = vpop.permute.xlu0 %5097
      %v5099 = vsel %vm1176, %v5096, %v5098
      %v5100 = vsel %vm1176, %v5098, %v5096
      %v5101 = vld [vmem:[%s1179] ss:$8 sm:$0x3]
      %v5103 = vperm.slane %v5101, 0
      %v5104 = vperm.slane %v5101, 1
      %v5107 = vmul.f32 %v5099, %v5103
      %v5108 = vmul.f32 %v5100, %v5104
      %5109 = vst [vmem:[#allocation2 + $0x1f0] sm:$0xff] %v5107
      %5110 = vst [vmem:[#allocation2 + $0x1f8] sm:$0xff] %v5108
      %5111 = vrot.lane.b32.xlu0 %v5011, 112
      %v5112 = vpop.permute.xlu0 %5111
      %5113 = vrot.lane.b32.xlu0 %v5012, 112
      %v5114 = vpop.permute.xlu0 %5113
      %v5115 = vsel %vm1194, %v5112, %v5114
      %v5116 = vsel %vm1194, %v5114, %v5112
      %v5117 = vld [vmem:[%s1197] ss:$8 sm:$0x3]
      %v5119 = vperm.slane %v5117, 0
      %v5120 = vperm.slane %v5117, 1
      %v5123 = vmul.f32 %v5115, %v5119
      %v5124 = vmul.f32 %v5116, %v5120
      %5125 = vst [vmem:[#allocation2 + $0x240] sm:$0xff] %v5123
      %5126 = vst [vmem:[#allocation2 + $0x248] sm:$0xff] %v5124
      %5127 = vrot.lane.b32.xlu0 %v5011, 111
      %v5128 = vpop.permute.xlu0 %5127
      %5129 = vrot.lane.b32.xlu0 %v5012, 111
      %v5130 = vpop.permute.xlu0 %5129
      %v5131 = vsel %vm1212, %v5128, %v5130
      %v5132 = vsel %vm1212, %v5130, %v5128
      %v5133 = vld [vmem:[%s1215] ss:$8 sm:$0x3]
      %v5135 = vperm.slane %v5133, 0
      %v5136 = vperm.slane %v5133, 1
      %v5139 = vmul.f32 %v5131, %v5135
      %v5140 = vmul.f32 %v5132, %v5136
      %5141 = vst [vmem:[#allocation2 + $0x290] sm:$0xff] %v5139
      %5142 = vst [vmem:[#allocation2 + $0x298] sm:$0xff] %v5140
      %v5143 = vld [vmem:[%s49] sm:$0xff]
      %v5144 = vld [vmem:[%s49 + $0x8] sm:$0xff]
      %v5145 = vld [vmem:[%s49 + $0x10] sm:$0xff]
      %v5146 = vld [vmem:[#allocation2] sm:$0xff]
      %v5147 = vld [vmem:[#allocation2 + $0x8] sm:$0xff]
      %v5148 = vld [vmem:[#allocation2 + $0x10] sm:$0xff]
      %v5149 = vld [vmem:[#allocation2 + $0x18] sm:$0xff]
      %v5150 = vld [vmem:[#allocation2 + $0x20] sm:$0xff]
      %v5151 = vld [vmem:[#allocation2 + $0x28] sm:$0xff]
      %v5152 = vld [vmem:[#allocation2 + $0x30] sm:$0xff]
      %v5153 = vld [vmem:[#allocation2 + $0x38] sm:$0xff]
      %v5154 = vld [vmem:[#allocation2 + $0x40] sm:$0xff]
      %v5155 = vld [vmem:[#allocation2 + $0x48] sm:$0xff]
      %v5156 = vld [vmem:[#allocation2 + $0x50] sm:$0xff]
      %v5157 = vld [vmem:[#allocation2 + $0x58] sm:$0xff]
      %v5158 = vld [vmem:[#allocation2 + $0x60] sm:$0xff]
      %v5159 = vld [vmem:[#allocation2 + $0x68] sm:$0xff]
      %v5160 = vld [vmem:[#allocation2 + $0x70] sm:$0xff]
      %v5161 = vld [vmem:[#allocation2 + $0x78] sm:$0xff]
      %v5162 = vld [vmem:[#allocation2 + $0x80] sm:$0xff]
      %v5163 = vld [vmem:[#allocation2 + $0x88] sm:$0xff]
      %v5164 = vld [vmem:[#allocation2 + $0x90] sm:$0xff]
      %v5165 = vld [vmem:[#allocation2 + $0x98] sm:$0xff]
      %v5166 = vld [vmem:[#allocation2 + $0xa0] sm:$0xff]
      %v5167 = vld [vmem:[#allocation2 + $0xa8] sm:$0xff]
      %v5168 = vld [vmem:[#allocation2 + $0xb0] sm:$0xff]
      %v5169 = vld [vmem:[#allocation2 + $0xb8] sm:$0xff]
      %v5170 = vld [vmem:[#allocation2 + $0xc0] sm:$0xff]
      %v5171 = vld [vmem:[#allocation2 + $0xc8] sm:$0xff]
      %v5172 = vld [vmem:[#allocation2 + $0xd0] sm:$0xff]
      %v5173 = vld [vmem:[#allocation2 + $0xd8] sm:$0xff]
      %v5174 = vld [vmem:[#allocation2 + $0xe0] sm:$0xff]
      %v5175 = vld [vmem:[#allocation2 + $0xe8] sm:$0xff]
      %v5176 = vld [vmem:[#allocation2 + $0xf0] sm:$0xff]
      %v5177 = vld [vmem:[#allocation2 + $0xf8] sm:$0xff]
      %v5178 = vld [vmem:[#allocation2 + $0x100] sm:$0xff]
      %v5179 = vld [vmem:[#allocation2 + $0x108] sm:$0xff]
      %v5180 = vld [vmem:[#allocation2 + $0x110] sm:$0xff]
      %v5181 = vld [vmem:[#allocation2 + $0x118] sm:$0xff]
      %v5182 = vld [vmem:[#allocation2 + $0x120] sm:$0xff]
      %v5183 = vld [vmem:[#allocation2 + $0x128] sm:$0xff]
      %v5184 = vld [vmem:[#allocation2 + $0x130] sm:$0xff]
      %v5185 = vld [vmem:[#allocation2 + $0x138] sm:$0xff]
      %v5186 = vld [vmem:[#allocation2 + $0x140] sm:$0xff]
      %v5187 = vld [vmem:[#allocation2 + $0x148] sm:$0xff]
      %v5188 = vld [vmem:[#allocation2 + $0x150] sm:$0xff]
      %v5189 = vld [vmem:[#allocation2 + $0x158] sm:$0xff]
      %v5190 = vld [vmem:[#allocation2 + $0x160] sm:$0xff]
      %v5191 = vld [vmem:[#allocation2 + $0x168] sm:$0xff]
      %v5192 = vld [vmem:[#allocation2 + $0x170] sm:$0xff]
      %v5193 = vld [vmem:[#allocation2 + $0x178] sm:$0xff]
      %v5194 = vld [vmem:[#allocation2 + $0x180] sm:$0xff]
      %v5195 = vld [vmem:[#allocation2 + $0x188] sm:$0xff]
      %v5196 = vld [vmem:[#allocation2 + $0x190] sm:$0xff]
      %v5197 = vld [vmem:[#allocation2 + $0x198] sm:$0xff]
      %v5198 = vld [vmem:[#allocation2 + $0x1a0] sm:$0xff]
      %v5199 = vld [vmem:[#allocation2 + $0x1a8] sm:$0xff]
      %v5200 = vld [vmem:[#allocation2 + $0x1b0] sm:$0xff]
      %v5201 = vld [vmem:[#allocation2 + $0x1b8] sm:$0xff]
      %v5202 = vld [vmem:[#allocation2 + $0x1c0] sm:$0xff]
      %v5203 = vld [vmem:[#allocation2 + $0x1c8] sm:$0xff]
      %v5204 = vld [vmem:[#allocation2 + $0x1d0] sm:$0xff]
      %v5205 = vld [vmem:[#allocation2 + $0x1d8] sm:$0xff]
      %v5206 = vld [vmem:[#allocation2 + $0x1e0] sm:$0xff]
      %v5207 = vld [vmem:[#allocation2 + $0x1e8] sm:$0xff]
      %v5208 = vld [vmem:[#allocation2 + $0x1f0] sm:$0xff]
      %v5209 = vld [vmem:[#allocation2 + $0x1f8] sm:$0xff]
      %v5210 = vld [vmem:[#allocation2 + $0x200] sm:$0xff]
      %v5211 = vld [vmem:[#allocation2 + $0x208] sm:$0xff]
      %v5212 = vld [vmem:[#allocation2 + $0x210] sm:$0xff]
      %v5213 = vld [vmem:[#allocation2 + $0x218] sm:$0xff]
      %v5214 = vld [vmem:[#allocation2 + $0x220] sm:$0xff]
      %v5215 = vld [vmem:[#allocation2 + $0x228] sm:$0xff]
      %v5216 = vld [vmem:[#allocation2 + $0x230] sm:$0xff]
      %v5217 = vld [vmem:[#allocation2 + $0x238] sm:$0xff]
      %v5218 = vld [vmem:[#allocation2 + $0x240] sm:$0xff]
      %v5219 = vld [vmem:[#allocation2 + $0x248] sm:$0xff]
      %v5220 = vld [vmem:[#allocation2 + $0x250] sm:$0xff]
      %v5221 = vld [vmem:[#allocation2 + $0x258] sm:$0xff]
      %v5222 = vld [vmem:[#allocation2 + $0x260] sm:$0xff]
      %v5223 = vld [vmem:[#allocation2 + $0x268] sm:$0xff]
      %v5224 = vld [vmem:[#allocation2 + $0x270] sm:$0xff]
      %v5225 = vld [vmem:[#allocation2 + $0x278] sm:$0xff]
      %v5226 = vld [vmem:[#allocation2 + $0x280] sm:$0xff]
      %v5227 = vld [vmem:[#allocation2 + $0x288] sm:$0xff]
      %v5228 = vld [vmem:[#allocation2 + $0x290] sm:$0xff]
      %v5229 = vld [vmem:[#allocation2 + $0x298] sm:$0xff]
      %v5230 = vld [vmem:[#allocation2 + $0x2a0] sm:$0xff]
      %v5231 = vld [vmem:[#allocation2 + $0x2a8] sm:$0xff]
      %v5232 = vld [vmem:[#allocation2 + $0x2b0] sm:$0xff]
      %v5233 = vld [vmem:[#allocation2 + $0x2b8] sm:$0xff]
      %v5234 = vld [vmem:[#allocation2 + $0x2c0] sm:$0xff]
      %v5235 = vld [vmem:[#allocation2 + $0x2c8] sm:$0xff]
      %v5236 = vld [vmem:[%s51] sm:$0xff]
      %5238 = vset.pattern.permute.xlu0 0
      %5239 = vperm.xlu0 %5238, %v5236
      %v5240 = vpop.permute.xlu0 %5239
      %v5243 = vsel %vm1325, %v5145, 0
      %5245 = vmatpush.msra.mxu0 %v5176
      %5246 = vmatpush.msra.mxu0 %v5174
      %5247 = vmatpush.msra.mxu0 %v5172
      %5248 = vmatpush.msra.mxu0 %v5170
      %5249 = vmatpush.msra.mxu0 %v5168
      %5250 = vmatpush.msra.mxu0 %v5166
      %5251 = vmatpush.msra.mxu0 %v5164
      %5252 = vmatpush.msra.mxu0 %v5162
      %5253 = vmatpush.msra.mxu0 %v5160
      %5254 = vmatpush.msra.mxu0 %v5158
      %5255 = vmatpush.msra.mxu0 %v5156
      %5256 = vmatpush.msra.mxu0 %v5154
      %5257 = vmatpush.msra.mxu0 %v5152
      %5258 = vmatpush.msra.mxu0 %v5150
      %5259 = vmatpush.msra.mxu0 %v5148
      %5260 = vmatpush.msra.mxu0 %v5146
      %5261 = vmatmul.f32.gmra.mxu0 %v5143
      %v5262 = vpop.f32.mrf.mxu0
      %v5263 = vadd.f32 %v5240, %v5262
      %5264 = vdwg.mxu0
      %5265 = vmatpush.msra.mxu0 %v5208
      %5266 = vmatpush.msra.mxu0 %v5206
      %5267 = vmatpush.msra.mxu0 %v5204
      %5268 = vmatpush.msra.mxu0 %v5202
      %5269 = vmatpush.msra.mxu0 %v5200
      %5270 = vmatpush.msra.mxu0 %v5198
      %5271 = vmatpush.msra.mxu0 %v5196
      %5272 = vmatpush.msra.mxu0 %v5194
      %5273 = vmatpush.msra.mxu0 %v5192
      %5274 = vmatpush.msra.mxu0 %v5190
      %5275 = vmatpush.msra.mxu0 %v5188
      %5276 = vmatpush.msra.mxu0 %v5186
      %5277 = vmatpush.msra.mxu0 %v5184
      %5278 = vmatpush.msra.mxu0 %v5182
      %5279 = vmatpush.msra.mxu0 %v5180
      %5280 = vmatpush.msra.mxu0 %v5178
      %5281 = vmatmul.f32.gmra.mxu0 %v5144
      %v5282 = vpop.f32.mrf.mxu0
      %v5283 = vadd.f32 %v5263, %v5282
      %5284 = vdwg.mxu0
      %5285 = vmatpush.msra.mxu0 0.0
      %5286 = vmatpush.msra.mxu0 0.0
      %5287 = vmatpush.msra.mxu0 0.0
      %5288 = vmatpush.msra.mxu0 %v5234
      %5289 = vmatpush.msra.mxu0 %v5232
      %5290 = vmatpush.msra.mxu0 %v5230
      %5291 = vmatpush.msra.mxu0 %v5228
      %5292 = vmatpush.msra.mxu0 %v5226
      %5293 = vmatpush.msra.mxu0 %v5224
      %5294 = vmatpush.msra.mxu0 %v5222
      %5295 = vmatpush.msra.mxu0 %v5220
      %5296 = vmatpush.msra.mxu0 %v5218
      %5297 = vmatpush.msra.mxu0 %v5216
      %5298 = vmatpush.msra.mxu0 %v5214
      %5299 = vmatpush.msra.mxu0 %v5212
      %5300 = vmatpush.msra.mxu0 %v5210
      %5301 = vmatmul.f32.gmra.mxu0 %v5243
      %v5302 = vpop.f32.mrf.mxu0
      %v5303 = vadd.f32 %v5283, %v5302
      %5304 = vdwg.mxu0
      %5305 = vmatpush.msra.mxu0 %v5177
      %5306 = vmatpush.msra.mxu0 %v5175
      %5307 = vmatpush.msra.mxu0 %v5173
      %5308 = vmatpush.msra.mxu0 %v5171
      %5309 = vmatpush.msra.mxu0 %v5169
      %5310 = vmatpush.msra.mxu0 %v5167
      %5311 = vmatpush.msra.mxu0 %v5165
      %5312 = vmatpush.msra.mxu0 %v5163
      %5313 = vmatpush.msra.mxu0 %v5161
      %5314 = vmatpush.msra.mxu0 %v5159
      %5315 = vmatpush.msra.mxu0 %v5157
      %5316 = vmatpush.msra.mxu0 %v5155
      %5317 = vmatpush.msra.mxu0 %v5153
      %5318 = vmatpush.msra.mxu0 %v5151
      %5319 = vmatpush.msra.mxu0 %v5149
      %5320 = vmatpush.msra.mxu0 %v5147
      %5321 = vmatmul.f32.gmra.mxu0 %v5143
      %v5322 = vpop.f32.mrf.mxu0
      %v5323 = vadd.f32 %v5240, %v5322
      %5324 = vdwg.mxu0
      %5325 = vmatpush.msra.mxu0 %v5209
      %5326 = vmatpush.msra.mxu0 %v5207
      %5327 = vmatpush.msra.mxu0 %v5205
      %5328 = vmatpush.msra.mxu0 %v5203
      %5329 = vmatpush.msra.mxu0 %v5201
      %5330 = vmatpush.msra.mxu0 %v5199
      %5331 = vmatpush.msra.mxu0 %v5197
      %5332 = vmatpush.msra.mxu0 %v5195
      %5333 = vmatpush.msra.mxu0 %v5193
      %5334 = vmatpush.msra.mxu0 %v5191
      %5335 = vmatpush.msra.mxu0 %v5189
      %5336 = vmatpush.msra.mxu0 %v5187
      %5337 = vmatpush.msra.mxu0 %v5185
      %5338 = vmatpush.msra.mxu0 %v5183
      %5339 = vmatpush.msra.mxu0 %v5181
      %5340 = vmatpush.msra.mxu0 %v5179
      %5341 = vmatmul.f32.gmra.mxu0 %v5144
      %v5342 = vpop.f32.mrf.mxu0
      %v5343 = vadd.f32 %v5323, %v5342
      %5344 = vdwg.mxu0
      %5345 = vmatpush.msra.mxu0 0.0
      %5346 = vmatpush.msra.mxu0 0.0
      %5347 = vmatpush.msra.mxu0 0.0
      %5348 = vmatpush.msra.mxu0 %v5235
      %5349 = vmatpush.msra.mxu0 %v5233
      %5350 = vmatpush.msra.mxu0 %v5231
      %5351 = vmatpush.msra.mxu0 %v5229
      %5352 = vmatpush.msra.mxu0 %v5227
      %5353 = vmatpush.msra.mxu0 %v5225
      %5354 = vmatpush.msra.mxu0 %v5223
      %5355 = vmatpush.msra.mxu0 %v5221
      %5356 = vmatpush.msra.mxu0 %v5219
      %5357 = vmatpush.msra.mxu0 %v5217
      %5358 = vmatpush.msra.mxu0 %v5215
      %5359 = vmatpush.msra.mxu0 %v5213
      %5360 = vmatpush.msra.mxu0 %v5211
      %5361 = vmatmul.f32.gmra.mxu0 %v5243
      %v5362 = vpop.f32.mrf.mxu0
      %v5363 = vadd.f32 %v5343, %v5362
      %5364 = vdwg.mxu0
      %v5365 = vmul.f32 %v5303, 0.2
      %v5366 = vmul.f32 %v5363, 0.2
      %v5367 = vmax.f32 %v5303, %v5365
      %v5368 = vmax.f32 %v5363, %v5366
      %5369 = vrot.lane.b32.xlu0 %v5367, 17
      %v5370 = vpop.permute.xlu0 %5369
      %5371 = vrot.lane.b32.xlu0 %v5368, 17
      %v5372 = vpop.permute.xlu0 %5371
      %v5373 = vsel %vm1085, %v5370, %v5372
      %v5374 = vsel %vm1085, %v5372, %v5370
      %v5375 = vld [vmem:[%s3] ss:$8 sm:$0x3]
      %v5377 = vperm.slane %v5375, 0
      %v5378 = vperm.slane %v5375, 1
      %v5381 = vmul.f32 %v5374, %v5377
      %v5382 = vmul.f32 %v5373, %v5378
      %5383 = vst [vmem:[#allocation2 + $0x20] sm:$0xff] %v5381
      %5384 = vst [vmem:[#allocation2 + $0x28] sm:$0xff] %v5382
      %5385 = vrot.lane.b32.xlu0 %v5367, 16
      %v5386 = vpop.permute.xlu0 %5385
      %5387 = vrot.lane.b32.xlu0 %v5368, 16
      %v5388 = vpop.permute.xlu0 %5387
      %v5389 = vsel %vm1102, %v5386, %v5388
      %v5390 = vsel %vm1102, %v5388, %v5386
      %v5391 = vld [vmem:[%s1105] ss:$8 sm:$0x3]
      %v5393 = vperm.slane %v5391, 0
      %v5394 = vperm.slane %v5391, 1
      %v5397 = vmul.f32 %v5390, %v5393
      %v5398 = vmul.f32 %v5389, %v5394
      %5399 = vst [vmem:[#allocation2 + $0x70] sm:$0xff] %v5397
      %5400 = vst [vmem:[#allocation2 + $0x78] sm:$0xff] %v5398
      %5401 = vrot.lane.b32.xlu0 %v5367, 15
      %v5402 = vpop.permute.xlu0 %5401
      %5403 = vrot.lane.b32.xlu0 %v5368, 15
      %v5404 = vpop.permute.xlu0 %5403
      %v5405 = vsel %vm1120, %v5402, %v5404
      %v5406 = vsel %vm1120, %v5404, %v5402
      %v5407 = vld [vmem:[%s1123] ss:$8 sm:$0x3]
      %v5409 = vperm.slane %v5407, 0
      %v5410 = vperm.slane %v5407, 1
      %v5413 = vmul.f32 %v5406, %v5409
      %v5414 = vmul.f32 %v5405, %v5410
      %5415 = vst [vmem:[#allocation2 + $0xc0] sm:$0xff] %v5413
      %5416 = vst [vmem:[#allocation2 + $0xc8] sm:$0xff] %v5414
      %5417 = vrot.lane.b32.xlu0 %v5367, 1
      %v5418 = vpop.permute.xlu0 %5417
      %5419 = vrot.lane.b32.xlu0 %v5368, 1
      %v5420 = vpop.permute.xlu0 %5419
      %v5421 = vsel %vm1138, %v5418, %v5420
      %v5422 = vsel %vm1138, %v5420, %v5418
      %v5423 = vld [vmem:[%s1141] ss:$8 sm:$0x3]
      %v5425 = vperm.slane %v5423, 0
      %v5426 = vperm.slane %v5423, 1
      %v5429 = vmul.f32 %v5422, %v5425
      %v5430 = vmul.f32 %v5421, %v5426
      %5431 = vst [vmem:[#allocation2 + $0x110] sm:$0xff] %v5429
      %5432 = vst [vmem:[#allocation2 + $0x118] sm:$0xff] %v5430
      %5433 = vst [vmem:[#allocation2 + $0x160] sm:$0xff] %v5367
      %5434 = vst [vmem:[#allocation2 + $0x168] sm:$0xff] %v5368
      %5435 = vrot.lane.b32.xlu0 %v5367, 127
      %v5436 = vpop.permute.xlu0 %5435
      %5437 = vrot.lane.b32.xlu0 %v5368, 127
      %v5438 = vpop.permute.xlu0 %5437
      %v5439 = vsel %vm1158, %v5436, %v5438
      %v5440 = vsel %vm1158, %v5438, %v5436
      %v5441 = vld [vmem:[%s1161] ss:$8 sm:$0x3]
      %v5443 = vperm.slane %v5441, 0
      %v5444 = vperm.slane %v5441, 1
      %v5447 = vmul.f32 %v5439, %v5443
      %v5448 = vmul.f32 %v5440, %v5444
      %5449 = vst [vmem:[#allocation2 + $0x1b0] sm:$0xff] %v5447
      %5450 = vst [vmem:[#allocation2 + $0x1b8] sm:$0xff] %v5448
      %5451 = vrot.lane.b32.xlu0 %v5367, 113
      %v5452 = vpop.permute.xlu0 %5451
      %5453 = vrot.lane.b32.xlu0 %v5368, 113
      %v5454 = vpop.permute.xlu0 %5453
      %v5455 = vsel %vm1176, %v5452, %v5454
      %v5456 = vsel %vm1176, %v5454, %v5452
      %v5457 = vld [vmem:[%s1179] ss:$8 sm:$0x3]
      %v5459 = vperm.slane %v5457, 0
      %v5460 = vperm.slane %v5457, 1
      %v5463 = vmul.f32 %v5455, %v5459
      %v5464 = vmul.f32 %v5456, %v5460
      %5465 = vst [vmem:[#allocation2 + $0x200] sm:$0xff] %v5463
      %5466 = vst [vmem:[#allocation2 + $0x208] sm:$0xff] %v5464
      %5467 = vrot.lane.b32.xlu0 %v5367, 112
      %v5468 = vpop.permute.xlu0 %5467
      %5469 = vrot.lane.b32.xlu0 %v5368, 112
      %v5470 = vpop.permute.xlu0 %5469
      %v5471 = vsel %vm1194, %v5468, %v5470
      %v5472 = vsel %vm1194, %v5470, %v5468
      %v5473 = vld [vmem:[%s1197] ss:$8 sm:$0x3]
      %v5475 = vperm.slane %v5473, 0
      %v5476 = vperm.slane %v5473, 1
      %v5479 = vmul.f32 %v5471, %v5475
      %v5480 = vmul.f32 %v5472, %v5476
      %5481 = vst [vmem:[#allocation2 + $0x250] sm:$0xff] %v5479
      %5482 = vst [vmem:[#allocation2 + $0x258] sm:$0xff] %v5480
      %5483 = vrot.lane.b32.xlu0 %v5367, 111
      %v5484 = vpop.permute.xlu0 %5483
      %5485 = vrot.lane.b32.xlu0 %v5368, 111
      %v5486 = vpop.permute.xlu0 %5485
      %v5487 = vsel %vm1212, %v5484, %v5486
      %v5488 = vsel %vm1212, %v5486, %v5484
      %v5489 = vld [vmem:[%s1215] ss:$8 sm:$0x3]
      %v5491 = vperm.slane %v5489, 0
      %v5492 = vperm.slane %v5489, 1
      %v5495 = vmul.f32 %v5487, %v5491
      %v5496 = vmul.f32 %v5488, %v5492
      %5497 = vst [vmem:[#allocation2 + $0x2a0] sm:$0xff] %v5495
      %5498 = vst [vmem:[#allocation2 + $0x2a8] sm:$0xff] %v5496
      %v5499 = vld [vmem:[%s53] sm:$0xff]
      %v5500 = vld [vmem:[%s53 + $0x8] sm:$0xff]
      %v5501 = vld [vmem:[%s53 + $0x10] sm:$0xff]
      %v5502 = vld [vmem:[#allocation2] sm:$0xff]
      %v5503 = vld [vmem:[#allocation2 + $0x8] sm:$0xff]
      %v5504 = vld [vmem:[#allocation2 + $0x10] sm:$0xff]
      %v5505 = vld [vmem:[#allocation2 + $0x18] sm:$0xff]
      %v5506 = vld [vmem:[#allocation2 + $0x20] sm:$0xff]
      %v5507 = vld [vmem:[#allocation2 + $0x28] sm:$0xff]
      %v5508 = vld [vmem:[#allocation2 + $0x30] sm:$0xff]
      %v5509 = vld [vmem:[#allocation2 + $0x38] sm:$0xff]
      %v5510 = vld [vmem:[#allocation2 + $0x40] sm:$0xff]
      %v5511 = vld [vmem:[#allocation2 + $0x48] sm:$0xff]
      %v5512 = vld [vmem:[#allocation2 + $0x50] sm:$0xff]
      %v5513 = vld [vmem:[#allocation2 + $0x58] sm:$0xff]
      %v5514 = vld [vmem:[#allocation2 + $0x60] sm:$0xff]
      %v5515 = vld [vmem:[#allocation2 + $0x68] sm:$0xff]
      %v5516 = vld [vmem:[#allocation2 + $0x70] sm:$0xff]
      %v5517 = vld [vmem:[#allocation2 + $0x78] sm:$0xff]
      %v5518 = vld [vmem:[#allocation2 + $0x80] sm:$0xff]
      %v5519 = vld [vmem:[#allocation2 + $0x88] sm:$0xff]
      %v5520 = vld [vmem:[#allocation2 + $0x90] sm:$0xff]
      %v5521 = vld [vmem:[#allocation2 + $0x98] sm:$0xff]
      %v5522 = vld [vmem:[#allocation2 + $0xa0] sm:$0xff]
      %v5523 = vld [vmem:[#allocation2 + $0xa8] sm:$0xff]
      %v5524 = vld [vmem:[#allocation2 + $0xb0] sm:$0xff]
      %v5525 = vld [vmem:[#allocation2 + $0xb8] sm:$0xff]
      %v5526 = vld [vmem:[#allocation2 + $0xc0] sm:$0xff]
      %v5527 = vld [vmem:[#allocation2 + $0xc8] sm:$0xff]
      %v5528 = vld [vmem:[#allocation2 + $0xd0] sm:$0xff]
      %v5529 = vld [vmem:[#allocation2 + $0xd8] sm:$0xff]
      %v5530 = vld [vmem:[#allocation2 + $0xe0] sm:$0xff]
      %v5531 = vld [vmem:[#allocation2 + $0xe8] sm:$0xff]
      %v5532 = vld [vmem:[#allocation2 + $0xf0] sm:$0xff]
      %v5533 = vld [vmem:[#allocation2 + $0xf8] sm:$0xff]
      %v5534 = vld [vmem:[#allocation2 + $0x100] sm:$0xff]
      %v5535 = vld [vmem:[#allocation2 + $0x108] sm:$0xff]
      %v5536 = vld [vmem:[#allocation2 + $0x110] sm:$0xff]
      %v5537 = vld [vmem:[#allocation2 + $0x118] sm:$0xff]
      %v5538 = vld [vmem:[#allocation2 + $0x120] sm:$0xff]
      %v5539 = vld [vmem:[#allocation2 + $0x128] sm:$0xff]
      %v5540 = vld [vmem:[#allocation2 + $0x130] sm:$0xff]
      %v5541 = vld [vmem:[#allocation2 + $0x138] sm:$0xff]
      %v5542 = vld [vmem:[#allocation2 + $0x140] sm:$0xff]
      %v5543 = vld [vmem:[#allocation2 + $0x148] sm:$0xff]
      %v5544 = vld [vmem:[#allocation2 + $0x150] sm:$0xff]
      %v5545 = vld [vmem:[#allocation2 + $0x158] sm:$0xff]
      %v5546 = vld [vmem:[#allocation2 + $0x160] sm:$0xff]
      %v5547 = vld [vmem:[#allocation2 + $0x168] sm:$0xff]
      %v5548 = vld [vmem:[#allocation2 + $0x170] sm:$0xff]
      %v5549 = vld [vmem:[#allocation2 + $0x178] sm:$0xff]
      %v5550 = vld [vmem:[#allocation2 + $0x180] sm:$0xff]
      %v5551 = vld [vmem:[#allocation2 + $0x188] sm:$0xff]
      %v5552 = vld [vmem:[#allocation2 + $0x190] sm:$0xff]
      %v5553 = vld [vmem:[#allocation2 + $0x198] sm:$0xff]
      %v5554 = vld [vmem:[#allocation2 + $0x1a0] sm:$0xff]
      %v5555 = vld [vmem:[#allocation2 + $0x1a8] sm:$0xff]
      %v5556 = vld [vmem:[#allocation2 + $0x1b0] sm:$0xff]
      %v5557 = vld [vmem:[#allocation2 + $0x1b8] sm:$0xff]
      %v5558 = vld [vmem:[#allocation2 + $0x1c0] sm:$0xff]
      %v5559 = vld [vmem:[#allocation2 + $0x1c8] sm:$0xff]
      %v5560 = vld [vmem:[#allocation2 + $0x1d0] sm:$0xff]
      %v5561 = vld [vmem:[#allocation2 + $0x1d8] sm:$0xff]
      %v5562 = vld [vmem:[#allocation2 + $0x1e0] sm:$0xff]
      %v5563 = vld [vmem:[#allocation2 + $0x1e8] sm:$0xff]
      %v5564 = vld [vmem:[#allocation2 + $0x1f0] sm:$0xff]
      %v5565 = vld [vmem:[#allocation2 + $0x1f8] sm:$0xff]
      %v5566 = vld [vmem:[#allocation2 + $0x200] sm:$0xff]
      %v5567 = vld [vmem:[#allocation2 + $0x208] sm:$0xff]
      %v5568 = vld [vmem:[#allocation2 + $0x210] sm:$0xff]
      %v5569 = vld [vmem:[#allocation2 + $0x218] sm:$0xff]
      %v5570 = vld [vmem:[#allocation2 + $0x220] sm:$0xff]
      %v5571 = vld [vmem:[#allocation2 + $0x228] sm:$0xff]
      %v5572 = vld [vmem:[#allocation2 + $0x230] sm:$0xff]
      %v5573 = vld [vmem:[#allocation2 + $0x238] sm:$0xff]
      %v5574 = vld [vmem:[#allocation2 + $0x240] sm:$0xff]
      %v5575 = vld [vmem:[#allocation2 + $0x248] sm:$0xff]
      %v5576 = vld [vmem:[#allocation2 + $0x250] sm:$0xff]
      %v5577 = vld [vmem:[#allocation2 + $0x258] sm:$0xff]
      %v5578 = vld [vmem:[#allocation2 + $0x260] sm:$0xff]
      %v5579 = vld [vmem:[#allocation2 + $0x268] sm:$0xff]
      %v5580 = vld [vmem:[#allocation2 + $0x270] sm:$0xff]
      %v5581 = vld [vmem:[#allocation2 + $0x278] sm:$0xff]
      %v5582 = vld [vmem:[#allocation2 + $0x280] sm:$0xff]
      %v5583 = vld [vmem:[#allocation2 + $0x288] sm:$0xff]
      %v5584 = vld [vmem:[#allocation2 + $0x290] sm:$0xff]
      %v5585 = vld [vmem:[#allocation2 + $0x298] sm:$0xff]
      %v5586 = vld [vmem:[#allocation2 + $0x2a0] sm:$0xff]
      %v5587 = vld [vmem:[#allocation2 + $0x2a8] sm:$0xff]
      %v5588 = vld [vmem:[#allocation2 + $0x2b0] sm:$0xff]
      %v5589 = vld [vmem:[#allocation2 + $0x2b8] sm:$0xff]
      %v5590 = vld [vmem:[#allocation2 + $0x2c0] sm:$0xff]
      %v5591 = vld [vmem:[#allocation2 + $0x2c8] sm:$0xff]
      %v5592 = vld [vmem:[%s55] sm:$0xff]
      %5594 = vset.pattern.permute.xlu0 0
      %5595 = vperm.xlu0 %5594, %v5592
      %v5596 = vpop.permute.xlu0 %5595
      %v5599 = vsel %vm1325, %v5501, 0
      %5601 = vmatpush.msra.mxu0 %v5532
      %5602 = vmatpush.msra.mxu0 %v5530
      %5603 = vmatpush.msra.mxu0 %v5528
      %5604 = vmatpush.msra.mxu0 %v5526
      %5605 = vmatpush.msra.mxu0 %v5524
      %5606 = vmatpush.msra.mxu0 %v5522
      %5607 = vmatpush.msra.mxu0 %v5520
      %5608 = vmatpush.msra.mxu0 %v5518
      %5609 = vmatpush.msra.mxu0 %v5516
      %5610 = vmatpush.msra.mxu0 %v5514
      %5611 = vmatpush.msra.mxu0 %v5512
      %5612 = vmatpush.msra.mxu0 %v5510
      %5613 = vmatpush.msra.mxu0 %v5508
      %5614 = vmatpush.msra.mxu0 %v5506
      %5615 = vmatpush.msra.mxu0 %v5504
      %5616 = vmatpush.msra.mxu0 %v5502
      %5617 = vmatmul.f32.gmra.mxu0 %v5499
      %v5618 = vpop.f32.mrf.mxu0
      %v5619 = vadd.f32 %v5596, %v5618
      %5620 = vdwg.mxu0
      %5621 = vmatpush.msra.mxu0 %v5564
      %5622 = vmatpush.msra.mxu0 %v5562
      %5623 = vmatpush.msra.mxu0 %v5560
      %5624 = vmatpush.msra.mxu0 %v5558
      %5625 = vmatpush.msra.mxu0 %v5556
      %5626 = vmatpush.msra.mxu0 %v5554
      %5627 = vmatpush.msra.mxu0 %v5552
      %5628 = vmatpush.msra.mxu0 %v5550
      %5629 = vmatpush.msra.mxu0 %v5548
      %5630 = vmatpush.msra.mxu0 %v5546
      %5631 = vmatpush.msra.mxu0 %v5544
      %5632 = vmatpush.msra.mxu0 %v5542
      %5633 = vmatpush.msra.mxu0 %v5540
      %5634 = vmatpush.msra.mxu0 %v5538
      %5635 = vmatpush.msra.mxu0 %v5536
      %5636 = vmatpush.msra.mxu0 %v5534
      %5637 = vmatmul.f32.gmra.mxu0 %v5500
      %v5638 = vpop.f32.mrf.mxu0
      %v5639 = vadd.f32 %v5619, %v5638
      %5640 = vdwg.mxu0
      %5641 = vmatpush.msra.mxu0 0.0
      %5642 = vmatpush.msra.mxu0 0.0
      %5643 = vmatpush.msra.mxu0 0.0
      %5644 = vmatpush.msra.mxu0 %v5590
      %5645 = vmatpush.msra.mxu0 %v5588
      %5646 = vmatpush.msra.mxu0 %v5586
      %5647 = vmatpush.msra.mxu0 %v5584
      %5648 = vmatpush.msra.mxu0 %v5582
      %5649 = vmatpush.msra.mxu0 %v5580
      %5650 = vmatpush.msra.mxu0 %v5578
      %5651 = vmatpush.msra.mxu0 %v5576
      %5652 = vmatpush.msra.mxu0 %v5574
      %5653 = vmatpush.msra.mxu0 %v5572
      %5654 = vmatpush.msra.mxu0 %v5570
      %5655 = vmatpush.msra.mxu0 %v5568
      %5656 = vmatpush.msra.mxu0 %v5566
      %5657 = vmatmul.f32.gmra.mxu0 %v5599
      %v5658 = vpop.f32.mrf.mxu0
      %v5659 = vadd.f32 %v5639, %v5658
      %5660 = vdwg.mxu0
      %5661 = vmatpush.msra.mxu0 %v5533
      %5662 = vmatpush.msra.mxu0 %v5531
      %5663 = vmatpush.msra.mxu0 %v5529
      %5664 = vmatpush.msra.mxu0 %v5527
      %5665 = vmatpush.msra.mxu0 %v5525
      %5666 = vmatpush.msra.mxu0 %v5523
      %5667 = vmatpush.msra.mxu0 %v5521
      %5668 = vmatpush.msra.mxu0 %v5519
      %5669 = vmatpush.msra.mxu0 %v5517
      %5670 = vmatpush.msra.mxu0 %v5515
      %5671 = vmatpush.msra.mxu0 %v5513
      %5672 = vmatpush.msra.mxu0 %v5511
      %5673 = vmatpush.msra.mxu0 %v5509
      %5674 = vmatpush.msra.mxu0 %v5507
      %5675 = vmatpush.msra.mxu0 %v5505
      %5676 = vmatpush.msra.mxu0 %v5503
      %5677 = vmatmul.f32.gmra.mxu0 %v5499
      %v5678 = vpop.f32.mrf.mxu0
      %v5679 = vadd.f32 %v5596, %v5678
      %5680 = vdwg.mxu0
      %5681 = vmatpush.msra.mxu0 %v5565
      %5682 = vmatpush.msra.mxu0 %v5563
      %5683 = vmatpush.msra.mxu0 %v5561
      %5684 = vmatpush.msra.mxu0 %v5559
      %5685 = vmatpush.msra.mxu0 %v5557
      %5686 = vmatpush.msra.mxu0 %v5555
      %5687 = vmatpush.msra.mxu0 %v5553
      %5688 = vmatpush.msra.mxu0 %v5551
      %5689 = vmatpush.msra.mxu0 %v5549
      %5690 = vmatpush.msra.mxu0 %v5547
      %5691 = vmatpush.msra.mxu0 %v5545
      %5692 = vmatpush.msra.mxu0 %v5543
      %5693 = vmatpush.msra.mxu0 %v5541
      %5694 = vmatpush.msra.mxu0 %v5539
      %5695 = vmatpush.msra.mxu0 %v5537
      %5696 = vmatpush.msra.mxu0 %v5535
      %5697 = vmatmul.f32.gmra.mxu0 %v5500
      %v5698 = vpop.f32.mrf.mxu0
      %v5699 = vadd.f32 %v5679, %v5698
      %5700 = vdwg.mxu0
      %5701 = vmatpush.msra.mxu0 0.0
      %5702 = vmatpush.msra.mxu0 0.0
      %5703 = vmatpush.msra.mxu0 0.0
      %5704 = vmatpush.msra.mxu0 %v5591
      %5705 = vmatpush.msra.mxu0 %v5589
      %5706 = vmatpush.msra.mxu0 %v5587
      %5707 = vmatpush.msra.mxu0 %v5585
      %5708 = vmatpush.msra.mxu0 %v5583
      %5709 = vmatpush.msra.mxu0 %v5581
      %5710 = vmatpush.msra.mxu0 %v5579
      %5711 = vmatpush.msra.mxu0 %v5577
      %5712 = vmatpush.msra.mxu0 %v5575
      %5713 = vmatpush.msra.mxu0 %v5573
      %5714 = vmatpush.msra.mxu0 %v5571
      %5715 = vmatpush.msra.mxu0 %v5569
      %5716 = vmatpush.msra.mxu0 %v5567
      %5717 = vmatmul.f32.gmra.mxu0 %v5599
      %v5718 = vpop.f32.mrf.mxu0
      %v5719 = vadd.f32 %v5699, %v5718
      %5720 = vdwg.mxu0
      %v5721 = vmul.f32 %v5659, 0.2
      %v5722 = vmul.f32 %v5719, 0.2
      %v5723 = vmax.f32 %v5659, %v5721
      %v5724 = vmax.f32 %v5719, %v5722
      %5725 = vrot.lane.b32.xlu0 %v5723, 17
      %v5726 = vpop.permute.xlu0 %5725
      %5727 = vrot.lane.b32.xlu0 %v5724, 17
      %v5728 = vpop.permute.xlu0 %5727
      %v5729 = vsel %vm1085, %v5726, %v5728
      %v5730 = vsel %vm1085, %v5728, %v5726
      %v5731 = vld [vmem:[%s3] ss:$8 sm:$0x3]
      %v5733 = vperm.slane %v5731, 0
      %v5734 = vperm.slane %v5731, 1
      %v5737 = vmul.f32 %v5730, %v5733
      %v5738 = vmul.f32 %v5729, %v5734
      %5739 = vst [vmem:[#allocation2 + $0x30] sm:$0xff] %v5737
      %5740 = vst [vmem:[#allocation2 + $0x38] sm:$0xff] %v5738
      %5741 = vrot.lane.b32.xlu0 %v5723, 16
      %v5742 = vpop.permute.xlu0 %5741
      %5743 = vrot.lane.b32.xlu0 %v5724, 16
      %v5744 = vpop.permute.xlu0 %5743
      %v5745 = vsel %vm1102, %v5742, %v5744
      %v5746 = vsel %vm1102, %v5744, %v5742
      %v5747 = vld [vmem:[%s1105] ss:$8 sm:$0x3]
      %v5749 = vperm.slane %v5747, 0
      %v5750 = vperm.slane %v5747, 1
      %v5753 = vmul.f32 %v5746, %v5749
      %v5754 = vmul.f32 %v5745, %v5750
      %5755 = vst [vmem:[#allocation2 + $0x80] sm:$0xff] %v5753
      %5756 = vst [vmem:[#allocation2 + $0x88] sm:$0xff] %v5754
      %5757 = vrot.lane.b32.xlu0 %v5723, 15
      %v5758 = vpop.permute.xlu0 %5757
      %5759 = vrot.lane.b32.xlu0 %v5724, 15
      %v5760 = vpop.permute.xlu0 %5759
      %v5761 = vsel %vm1120, %v5758, %v5760
      %v5762 = vsel %vm1120, %v5760, %v5758
      %v5763 = vld [vmem:[%s1123] ss:$8 sm:$0x3]
      %v5765 = vperm.slane %v5763, 0
      %v5766 = vperm.slane %v5763, 1
      %v5769 = vmul.f32 %v5762, %v5765
      %v5770 = vmul.f32 %v5761, %v5766
      %5771 = vst [vmem:[#allocation2 + $0xd0] sm:$0xff] %v5769
      %5772 = vst [vmem:[#allocation2 + $0xd8] sm:$0xff] %v5770
      %5773 = vrot.lane.b32.xlu0 %v5723, 1
      %v5774 = vpop.permute.xlu0 %5773
      %5775 = vrot.lane.b32.xlu0 %v5724, 1
      %v5776 = vpop.permute.xlu0 %5775
      %v5777 = vsel %vm1138, %v5774, %v5776
      %v5778 = vsel %vm1138, %v5776, %v5774
      %v5779 = vld [vmem:[%s1141] ss:$8 sm:$0x3]
      %v5781 = vperm.slane %v5779, 0
      %v5782 = vperm.slane %v5779, 1
      %v5785 = vmul.f32 %v5778, %v5781
      %v5786 = vmul.f32 %v5777, %v5782
      %5787 = vst [vmem:[#allocation2 + $0x120] sm:$0xff] %v5785
      %5788 = vst [vmem:[#allocation2 + $0x128] sm:$0xff] %v5786
      %5789 = vst [vmem:[#allocation2 + $0x170] sm:$0xff] %v5723
      %5790 = vst [vmem:[#allocation2 + $0x178] sm:$0xff] %v5724
      %5791 = vrot.lane.b32.xlu0 %v5723, 127
      %v5792 = vpop.permute.xlu0 %5791
      %5793 = vrot.lane.b32.xlu0 %v5724, 127
      %v5794 = vpop.permute.xlu0 %5793
      %v5795 = vsel %vm1158, %v5792, %v5794
      %v5796 = vsel %vm1158, %v5794, %v5792
      %v5797 = vld [vmem:[%s1161] ss:$8 sm:$0x3]
      %v5799 = vperm.slane %v5797, 0
      %v5800 = vperm.slane %v5797, 1
      %v5803 = vmul.f32 %v5795, %v5799
      %v5804 = vmul.f32 %v5796, %v5800
      %5805 = vst [vmem:[#allocation2 + $0x1c0] sm:$0xff] %v5803
      %5806 = vst [vmem:[#allocation2 + $0x1c8] sm:$0xff] %v5804
      %5807 = vrot.lane.b32.xlu0 %v5723, 113
      %v5808 = vpop.permute.xlu0 %5807
      %5809 = vrot.lane.b32.xlu0 %v5724, 113
      %v5810 = vpop.permute.xlu0 %5809
      %v5811 = vsel %vm1176, %v5808, %v5810
      %v5812 = vsel %vm1176, %v5810, %v5808
      %v5813 = vld [vmem:[%s1179] ss:$8 sm:$0x3]
      %v5815 = vperm.slane %v5813, 0
      %v5816 = vperm.slane %v5813, 1
      %v5819 = vmul.f32 %v5811, %v5815
      %v5820 = vmul.f32 %v5812, %v5816
      %5821 = vst [vmem:[#allocation2 + $0x210] sm:$0xff] %v5819
      %5822 = vst [vmem:[#allocation2 + $0x218] sm:$0xff] %v5820
      %5823 = vrot.lane.b32.xlu0 %v5723, 112
      %v5824 = vpop.permute.xlu0 %5823
      %5825 = vrot.lane.b32.xlu0 %v5724, 112
      %v5826 = vpop.permute.xlu0 %5825
      %v5827 = vsel %vm1194, %v5824, %v5826
      %v5828 = vsel %vm1194, %v5826, %v5824
      %v5829 = vld [vmem:[%s1197] ss:$8 sm:$0x3]
      %v5831 = vperm.slane %v5829, 0
      %v5832 = vperm.slane %v5829, 1
      %v5835 = vmul.f32 %v5827, %v5831
      %v5836 = vmul.f32 %v5828, %v5832
      %5837 = vst [vmem:[#allocation2 + $0x260] sm:$0xff] %v5835
      %5838 = vst [vmem:[#allocation2 + $0x268] sm:$0xff] %v5836
      %5839 = vrot.lane.b32.xlu0 %v5723, 111
      %v5840 = vpop.permute.xlu0 %5839
      %5841 = vrot.lane.b32.xlu0 %v5724, 111
      %v5842 = vpop.permute.xlu0 %5841
      %v5843 = vsel %vm1212, %v5840, %v5842
      %v5844 = vsel %vm1212, %v5842, %v5840
      %v5845 = vld [vmem:[%s1215] ss:$8 sm:$0x3]
      %v5847 = vperm.slane %v5845, 0
      %v5848 = vperm.slane %v5845, 1
      %v5851 = vmul.f32 %v5843, %v5847
      %v5852 = vmul.f32 %v5844, %v5848
      %5853 = vst [vmem:[#allocation2 + $0x2b0] sm:$0xff] %v5851
      %5854 = vst [vmem:[#allocation2 + $0x2b8] sm:$0xff] %v5852
      %v5855 = vld [vmem:[%s57] sm:$0xff]
      %v5856 = vld [vmem:[%s57 + $0x8] sm:$0xff]
      %v5857 = vld [vmem:[%s57 + $0x10] sm:$0xff]
      %v5858 = vld [vmem:[#allocation2] sm:$0xff]
      %v5859 = vld [vmem:[#allocation2 + $0x8] sm:$0xff]
      %v5860 = vld [vmem:[#allocation2 + $0x10] sm:$0xff]
      %v5861 = vld [vmem:[#allocation2 + $0x18] sm:$0xff]
      %v5862 = vld [vmem:[#allocation2 + $0x20] sm:$0xff]
      %v5863 = vld [vmem:[#allocation2 + $0x28] sm:$0xff]
      %v5864 = vld [vmem:[#allocation2 + $0x30] sm:$0xff]
      %v5865 = vld [vmem:[#allocation2 + $0x38] sm:$0xff]
      %v5866 = vld [vmem:[#allocation2 + $0x40] sm:$0xff]
      %v5867 = vld [vmem:[#allocation2 + $0x48] sm:$0xff]
      %v5868 = vld [vmem:[#allocation2 + $0x50] sm:$0xff]
      %v5869 = vld [vmem:[#allocation2 + $0x58] sm:$0xff]
      %v5870 = vld [vmem:[#allocation2 + $0x60] sm:$0xff]
      %v5871 = vld [vmem:[#allocation2 + $0x68] sm:$0xff]
      %v5872 = vld [vmem:[#allocation2 + $0x70] sm:$0xff]
      %v5873 = vld [vmem:[#allocation2 + $0x78] sm:$0xff]
      %v5874 = vld [vmem:[#allocation2 + $0x80] sm:$0xff]
      %v5875 = vld [vmem:[#allocation2 + $0x88] sm:$0xff]
      %v5876 = vld [vmem:[#allocation2 + $0x90] sm:$0xff]
      %v5877 = vld [vmem:[#allocation2 + $0x98] sm:$0xff]
      %v5878 = vld [vmem:[#allocation2 + $0xa0] sm:$0xff]
      %v5879 = vld [vmem:[#allocation2 + $0xa8] sm:$0xff]
      %v5880 = vld [vmem:[#allocation2 + $0xb0] sm:$0xff]
      %v5881 = vld [vmem:[#allocation2 + $0xb8] sm:$0xff]
      %v5882 = vld [vmem:[#allocation2 + $0xc0] sm:$0xff]
      %v5883 = vld [vmem:[#allocation2 + $0xc8] sm:$0xff]
      %v5884 = vld [vmem:[#allocation2 + $0xd0] sm:$0xff]
      %v5885 = vld [vmem:[#allocation2 + $0xd8] sm:$0xff]
      %v5886 = vld [vmem:[#allocation2 + $0xe0] sm:$0xff]
      %v5887 = vld [vmem:[#allocation2 + $0xe8] sm:$0xff]
      %v5888 = vld [vmem:[#allocation2 + $0xf0] sm:$0xff]
      %v5889 = vld [vmem:[#allocation2 + $0xf8] sm:$0xff]
      %v5890 = vld [vmem:[#allocation2 + $0x100] sm:$0xff]
      %v5891 = vld [vmem:[#allocation2 + $0x108] sm:$0xff]
      %v5892 = vld [vmem:[#allocation2 + $0x110] sm:$0xff]
      %v5893 = vld [vmem:[#allocation2 + $0x118] sm:$0xff]
      %v5894 = vld [vmem:[#allocation2 + $0x120] sm:$0xff]
      %v5895 = vld [vmem:[#allocation2 + $0x128] sm:$0xff]
      %v5896 = vld [vmem:[#allocation2 + $0x130] sm:$0xff]
      %v5897 = vld [vmem:[#allocation2 + $0x138] sm:$0xff]
      %v5898 = vld [vmem:[#allocation2 + $0x140] sm:$0xff]
      %v5899 = vld [vmem:[#allocation2 + $0x148] sm:$0xff]
      %v5900 = vld [vmem:[#allocation2 + $0x150] sm:$0xff]
      %v5901 = vld [vmem:[#allocation2 + $0x158] sm:$0xff]
      %v5902 = vld [vmem:[#allocation2 + $0x160] sm:$0xff]
      %v5903 = vld [vmem:[#allocation2 + $0x168] sm:$0xff]
      %v5904 = vld [vmem:[#allocation2 + $0x170] sm:$0xff]
      %v5905 = vld [vmem:[#allocation2 + $0x178] sm:$0xff]
      %v5906 = vld [vmem:[#allocation2 + $0x180] sm:$0xff]
      %v5907 = vld [vmem:[#allocation2 + $0x188] sm:$0xff]
      %v5908 = vld [vmem:[#allocation2 + $0x190] sm:$0xff]
      %v5909 = vld [vmem:[#allocation2 + $0x198] sm:$0xff]
      %v5910 = vld [vmem:[#allocation2 + $0x1a0] sm:$0xff]
      %v5911 = vld [vmem:[#allocation2 + $0x1a8] sm:$0xff]
      %v5912 = vld [vmem:[#allocation2 + $0x1b0] sm:$0xff]
      %v5913 = vld [vmem:[#allocation2 + $0x1b8] sm:$0xff]
      %v5914 = vld [vmem:[#allocation2 + $0x1c0] sm:$0xff]
      %v5915 = vld [vmem:[#allocation2 + $0x1c8] sm:$0xff]
      %v5916 = vld [vmem:[#allocation2 + $0x1d0] sm:$0xff]
      %v5917 = vld [vmem:[#allocation2 + $0x1d8] sm:$0xff]
      %v5918 = vld [vmem:[#allocation2 + $0x1e0] sm:$0xff]
      %v5919 = vld [vmem:[#allocation2 + $0x1e8] sm:$0xff]
      %v5920 = vld [vmem:[#allocation2 + $0x1f0] sm:$0xff]
      %v5921 = vld [vmem:[#allocation2 + $0x1f8] sm:$0xff]
      %v5922 = vld [vmem:[#allocation2 + $0x200] sm:$0xff]
      %v5923 = vld [vmem:[#allocation2 + $0x208] sm:$0xff]
      %v5924 = vld [vmem:[#allocation2 + $0x210] sm:$0xff]
      %v5925 = vld [vmem:[#allocation2 + $0x218] sm:$0xff]
      %v5926 = vld [vmem:[#allocation2 + $0x220] sm:$0xff]
      %v5927 = vld [vmem:[#allocation2 + $0x228] sm:$0xff]
      %v5928 = vld [vmem:[#allocation2 + $0x230] sm:$0xff]
      %v5929 = vld [vmem:[#allocation2 + $0x238] sm:$0xff]
      %v5930 = vld [vmem:[#allocation2 + $0x240] sm:$0xff]
      %v5931 = vld [vmem:[#allocation2 + $0x248] sm:$0xff]
      %v5932 = vld [vmem:[#allocation2 + $0x250] sm:$0xff]
      %v5933 = vld [vmem:[#allocation2 + $0x258] sm:$0xff]
      %v5934 = vld [vmem:[#allocation2 + $0x260] sm:$0xff]
      %v5935 = vld [vmem:[#allocation2 + $0x268] sm:$0xff]
      %v5936 = vld [vmem:[#allocation2 + $0x270] sm:$0xff]
      %v5937 = vld [vmem:[#allocation2 + $0x278] sm:$0xff]
      %v5938 = vld [vmem:[#allocation2 + $0x280] sm:$0xff]
      %v5939 = vld [vmem:[#allocation2 + $0x288] sm:$0xff]
      %v5940 = vld [vmem:[#allocation2 + $0x290] sm:$0xff]
      %v5941 = vld [vmem:[#allocation2 + $0x298] sm:$0xff]
      %v5942 = vld [vmem:[#allocation2 + $0x2a0] sm:$0xff]
      %v5943 = vld [vmem:[#allocation2 + $0x2a8] sm:$0xff]
      %v5944 = vld [vmem:[#allocation2 + $0x2b0] sm:$0xff]
      %v5945 = vld [vmem:[#allocation2 + $0x2b8] sm:$0xff]
      %v5946 = vld [vmem:[#allocation2 + $0x2c0] sm:$0xff]
      %v5947 = vld [vmem:[#allocation2 + $0x2c8] sm:$0xff]
      %v5948 = vld [vmem:[%s59] sm:$0xff]
      %5950 = vset.pattern.permute.xlu0 0
      %5951 = vperm.xlu0 %5950, %v5948
      %v5952 = vpop.permute.xlu0 %5951
      %v5955 = vsel %vm1325, %v5857, 0
      %5957 = vmatpush.msra.mxu0 %v5888
      %5958 = vmatpush.msra.mxu0 %v5886
      %5959 = vmatpush.msra.mxu0 %v5884
      %5960 = vmatpush.msra.mxu0 %v5882
      %5961 = vmatpush.msra.mxu0 %v5880
      %5962 = vmatpush.msra.mxu0 %v5878
      %5963 = vmatpush.msra.mxu0 %v5876
      %5964 = vmatpush.msra.mxu0 %v5874
      %5965 = vmatpush.msra.mxu0 %v5872
      %5966 = vmatpush.msra.mxu0 %v5870
      %5967 = vmatpush.msra.mxu0 %v5868
      %5968 = vmatpush.msra.mxu0 %v5866
      %5969 = vmatpush.msra.mxu0 %v5864
      %5970 = vmatpush.msra.mxu0 %v5862
      %5971 = vmatpush.msra.mxu0 %v5860
      %5972 = vmatpush.msra.mxu0 %v5858
      %5973 = vmatmul.f32.gmra.mxu0 %v5855
      %v5974 = vpop.f32.mrf.mxu0
      %v5975 = vadd.f32 %v5952, %v5974
      %5976 = vdwg.mxu0
      %5977 = vmatpush.msra.mxu0 %v5920
      %5978 = vmatpush.msra.mxu0 %v5918
      %5979 = vmatpush.msra.mxu0 %v5916
      %5980 = vmatpush.msra.mxu0 %v5914
      %5981 = vmatpush.msra.mxu0 %v5912
      %5982 = vmatpush.msra.mxu0 %v5910
      %5983 = vmatpush.msra.mxu0 %v5908
      %5984 = vmatpush.msra.mxu0 %v5906
      %5985 = vmatpush.msra.mxu0 %v5904
      %5986 = vmatpush.msra.mxu0 %v5902
      %5987 = vmatpush.msra.mxu0 %v5900
      %5988 = vmatpush.msra.mxu0 %v5898
      %5989 = vmatpush.msra.mxu0 %v5896
      %5990 = vmatpush.msra.mxu0 %v5894
      %5991 = vmatpush.msra.mxu0 %v5892
      %5992 = vmatpush.msra.mxu0 %v5890
      %5993 = vmatmul.f32.gmra.mxu0 %v5856
      %v5994 = vpop.f32.mrf.mxu0
      %v5995 = vadd.f32 %v5975, %v5994
      %5996 = vdwg.mxu0
      %5997 = vmatpush.msra.mxu0 0.0
      %5998 = vmatpush.msra.mxu0 0.0
      %5999 = vmatpush.msra.mxu0 0.0
      %6000 = vmatpush.msra.mxu0 %v5946
      %6001 = vmatpush.msra.mxu0 %v5944
      %6002 = vmatpush.msra.mxu0 %v5942
      %6003 = vmatpush.msra.mxu0 %v5940
      %6004 = vmatpush.msra.mxu0 %v5938
      %6005 = vmatpush.msra.mxu0 %v5936
      %6006 = vmatpush.msra.mxu0 %v5934
      %6007 = vmatpush.msra.mxu0 %v5932
      %6008 = vmatpush.msra.mxu0 %v5930
      %6009 = vmatpush.msra.mxu0 %v5928
      %6010 = vmatpush.msra.mxu0 %v5926
      %6011 = vmatpush.msra.mxu0 %v5924
      %6012 = vmatpush.msra.mxu0 %v5922
      %6013 = vmatmul.f32.gmra.mxu0 %v5955
      %v6014 = vpop.f32.mrf.mxu0
      %v6015 = vadd.f32 %v5995, %v6014
      %6016 = vdwg.mxu0
      %6017 = vmatpush.msra.mxu0 %v5889
      %6018 = vmatpush.msra.mxu0 %v5887
      %6019 = vmatpush.msra.mxu0 %v5885
      %6020 = vmatpush.msra.mxu0 %v5883
      %6021 = vmatpush.msra.mxu0 %v5881
      %6022 = vmatpush.msra.mxu0 %v5879
      %6023 = vmatpush.msra.mxu0 %v5877
      %6024 = vmatpush.msra.mxu0 %v5875
      %6025 = vmatpush.msra.mxu0 %v5873
      %6026 = vmatpush.msra.mxu0 %v5871
      %6027 = vmatpush.msra.mxu0 %v5869
      %6028 = vmatpush.msra.mxu0 %v5867
      %6029 = vmatpush.msra.mxu0 %v5865
      %6030 = vmatpush.msra.mxu0 %v5863
      %6031 = vmatpush.msra.mxu0 %v5861
      %6032 = vmatpush.msra.mxu0 %v5859
      %6033 = vmatmul.f32.gmra.mxu0 %v5855
      %v6034 = vpop.f32.mrf.mxu0
      %v6035 = vadd.f32 %v5952, %v6034
      %6036 = vdwg.mxu0
      %6037 = vmatpush.msra.mxu0 %v5921
      %6038 = vmatpush.msra.mxu0 %v5919
      %6039 = vmatpush.msra.mxu0 %v5917
      %6040 = vmatpush.msra.mxu0 %v5915
      %6041 = vmatpush.msra.mxu0 %v5913
      %6042 = vmatpush.msra.mxu0 %v5911
      %6043 = vmatpush.msra.mxu0 %v5909
      %6044 = vmatpush.msra.mxu0 %v5907
      %6045 = vmatpush.msra.mxu0 %v5905
      %6046 = vmatpush.msra.mxu0 %v5903
      %6047 = vmatpush.msra.mxu0 %v5901
      %6048 = vmatpush.msra.mxu0 %v5899
      %6049 = vmatpush.msra.mxu0 %v5897
      %6050 = vmatpush.msra.mxu0 %v5895
      %6051 = vmatpush.msra.mxu0 %v5893
      %6052 = vmatpush.msra.mxu0 %v5891
      %6053 = vmatmul.f32.gmra.mxu0 %v5856
      %v6054 = vpop.f32.mrf.mxu0
      %v6055 = vadd.f32 %v6035, %v6054
      %6056 = vdwg.mxu0
      %6057 = vmatpush.msra.mxu0 0.0
      %6058 = vmatpush.msra.mxu0 0.0
      %6059 = vmatpush.msra.mxu0 0.0
      %6060 = vmatpush.msra.mxu0 %v5947
      %6061 = vmatpush.msra.mxu0 %v5945
      %6062 = vmatpush.msra.mxu0 %v5943
      %6063 = vmatpush.msra.mxu0 %v5941
      %6064 = vmatpush.msra.mxu0 %v5939
      %6065 = vmatpush.msra.mxu0 %v5937
      %6066 = vmatpush.msra.mxu0 %v5935
      %6067 = vmatpush.msra.mxu0 %v5933
      %6068 = vmatpush.msra.mxu0 %v5931
      %6069 = vmatpush.msra.mxu0 %v5929
      %6070 = vmatpush.msra.mxu0 %v5927
      %6071 = vmatpush.msra.mxu0 %v5925
      %6072 = vmatpush.msra.mxu0 %v5923
      %6073 = vmatmul.f32.gmra.mxu0 %v5955
      %v6074 = vpop.f32.mrf.mxu0
      %v6075 = vadd.f32 %v6055, %v6074
      %6076 = vdwg.mxu0
      %v6077 = vmul.f32 %v6015, 0.2
      %v6078 = vmul.f32 %v6075, 0.2
      %v6079 = vmax.f32 %v6015, %v6077
      %v6080 = vmax.f32 %v6075, %v6078
      %6081 = vrot.lane.b32.xlu0 %v6079, 17
      %v6082 = vpop.permute.xlu0 %6081
      %6083 = vrot.lane.b32.xlu0 %v6080, 17
      %v6084 = vpop.permute.xlu0 %6083
      %v6085 = vsel %vm1085, %v6082, %v6084
      %v6086 = vsel %vm1085, %v6084, %v6082
      %v6087 = vld [vmem:[%s3] ss:$8 sm:$0x3]
      %v6089 = vperm.slane %v6087, 0
      %v6090 = vperm.slane %v6087, 1
      %v6093 = vmul.f32 %v6086, %v6089
      %v6094 = vmul.f32 %v6085, %v6090
      %6095 = vst [vmem:[#allocation2 + $0x40] sm:$0xff] %v6093
      %6096 = vst [vmem:[#allocation2 + $0x48] sm:$0xff] %v6094
      %6097 = vrot.lane.b32.xlu0 %v6079, 16
      %v6098 = vpop.permute.xlu0 %6097
      %6099 = vrot.lane.b32.xlu0 %v6080, 16
      %v6100 = vpop.permute.xlu0 %6099
      %v6101 = vsel %vm1102, %v6098, %v6100
      %v6102 = vsel %vm1102, %v6100, %v6098
      %v6103 = vld [vmem:[%s1105] ss:$8 sm:$0x3]
      %v6105 = vperm.slane %v6103, 0
      %v6106 = vperm.slane %v6103, 1
      %v6109 = vmul.f32 %v6102, %v6105
      %v6110 = vmul.f32 %v6101, %v6106
      %6111 = vst [vmem:[#allocation2 + $0x90] sm:$0xff] %v6109
      %6112 = vst [vmem:[#allocation2 + $0x98] sm:$0xff] %v6110
      %6113 = vrot.lane.b32.xlu0 %v6079, 15
      %v6114 = vpop.permute.xlu0 %6113
      %6115 = vrot.lane.b32.xlu0 %v6080, 15
      %v6116 = vpop.permute.xlu0 %6115
      %v6117 = vsel %vm1120, %v6114, %v6116
      %v6118 = vsel %vm1120, %v6116, %v6114
      %v6119 = vld [vmem:[%s1123] ss:$8 sm:$0x3]
      %v6121 = vperm.slane %v6119, 0
      %v6122 = vperm.slane %v6119, 1
      %v6125 = vmul.f32 %v6118, %v6121
      %v6126 = vmul.f32 %v6117, %v6122
      %6127 = vst [vmem:[#allocation2 + $0xe0] sm:$0xff] %v6125
      %6128 = vst [vmem:[#allocation2 + $0xe8] sm:$0xff] %v6126
      %6129 = vrot.lane.b32.xlu0 %v6079, 1
      %v6130 = vpop.permute.xlu0 %6129
      %6131 = vrot.lane.b32.xlu0 %v6080, 1
      %v6132 = vpop.permute.xlu0 %6131
      %v6133 = vsel %vm1138, %v6130, %v6132
      %v6134 = vsel %vm1138, %v6132, %v6130
      %v6135 = vld [vmem:[%s1141] ss:$8 sm:$0x3]
      %v6137 = vperm.slane %v6135, 0
      %v6138 = vperm.slane %v6135, 1
      %v6141 = vmul.f32 %v6134, %v6137
      %v6142 = vmul.f32 %v6133, %v6138
      %6143 = vst [vmem:[#allocation2 + $0x130] sm:$0xff] %v6141
      %6144 = vst [vmem:[#allocation2 + $0x138] sm:$0xff] %v6142
      %6145 = vst [vmem:[#allocation2 + $0x180] sm:$0xff] %v6079
      %6146 = vst [vmem:[#allocation2 + $0x188] sm:$0xff] %v6080
      %6147 = vrot.lane.b32.xlu0 %v6079, 127
      %v6148 = vpop.permute.xlu0 %6147
      %6149 = vrot.lane.b32.xlu0 %v6080, 127
      %v6150 = vpop.permute.xlu0 %6149
      %v6151 = vsel %vm1158, %v6148, %v6150
      %v6152 = vsel %vm1158, %v6150, %v6148
      %v6153 = vld [vmem:[%s1161] ss:$8 sm:$0x3]
      %v6155 = vperm.slane %v6153, 0
      %v6156 = vperm.slane %v6153, 1
      %v6159 = vmul.f32 %v6151, %v6155
      %v6160 = vmul.f32 %v6152, %v6156
      %6161 = vst [vmem:[#allocation2 + $0x1d0] sm:$0xff] %v6159
      %6162 = vst [vmem:[#allocation2 + $0x1d8] sm:$0xff] %v6160
      %6163 = vrot.lane.b32.xlu0 %v6079, 113
      %v6164 = vpop.permute.xlu0 %6163
      %6165 = vrot.lane.b32.xlu0 %v6080, 113
      %v6166 = vpop.permute.xlu0 %6165
      %v6167 = vsel %vm1176, %v6164, %v6166
      %v6168 = vsel %vm1176, %v6166, %v6164
      %v6169 = vld [vmem:[%s1179] ss:$8 sm:$0x3]
      %v6171 = vperm.slane %v6169, 0
      %v6172 = vperm.slane %v6169, 1
      %v6175 = vmul.f32 %v6167, %v6171
      %v6176 = vmul.f32 %v6168, %v6172
      %6177 = vst [vmem:[#allocation2 + $0x220] sm:$0xff] %v6175
      %6178 = vst [vmem:[#allocation2 + $0x228] sm:$0xff] %v6176
      %6179 = vrot.lane.b32.xlu0 %v6079, 112
      %v6180 = vpop.permute.xlu0 %6179
      %6181 = vrot.lane.b32.xlu0 %v6080, 112
      %v6182 = vpop.permute.xlu0 %6181
      %v6183 = vsel %vm1194, %v6180, %v6182
      %v6184 = vsel %vm1194, %v6182, %v6180
      %v6185 = vld [vmem:[%s1197] ss:$8 sm:$0x3]
      %v6187 = vperm.slane %v6185, 0
      %v6188 = vperm.slane %v6185, 1
      %v6191 = vmul.f32 %v6183, %v6187
      %v6192 = vmul.f32 %v6184, %v6188
      %6193 = vst [vmem:[#allocation2 + $0x270] sm:$0xff] %v6191
      %6194 = vst [vmem:[#allocation2 + $0x278] sm:$0xff] %v6192
      %6195 = vrot.lane.b32.xlu0 %v6079, 111
      %v6196 = vpop.permute.xlu0 %6195
      %6197 = vrot.lane.b32.xlu0 %v6080, 111
      %v6198 = vpop.permute.xlu0 %6197
      %v6199 = vsel %vm1212, %v6196, %v6198
      %v6200 = vsel %vm1212, %v6198, %v6196
      %v6201 = vld [vmem:[%s1215] ss:$8 sm:$0x3]
      %v6203 = vperm.slane %v6201, 0
      %v6204 = vperm.slane %v6201, 1
      %v6207 = vmul.f32 %v6199, %v6203
      %v6208 = vmul.f32 %v6200, %v6204
      %6209 = vst [vmem:[#allocation2 + $0x2c0] sm:$0xff] %v6207
      %6210 = vst [vmem:[#allocation2 + $0x2c8] sm:$0xff] %v6208
      %v6211 = vld [vmem:[%s61] sm:$0xff]
      %v6212 = vld [vmem:[%s61 + $0x8] sm:$0xff]
      %v6213 = vld [vmem:[%s61 + $0x10] sm:$0xff]
      %v6214 = vld [vmem:[#allocation2] sm:$0xff]
      %v6215 = vld [vmem:[#allocation2 + $0x8] sm:$0xff]
      %v6216 = vld [vmem:[#allocation2 + $0x10] sm:$0xff]
      %v6217 = vld [vmem:[#allocation2 + $0x18] sm:$0xff]
      %v6218 = vld [vmem:[#allocation2 + $0x20] sm:$0xff]
      %v6219 = vld [vmem:[#allocation2 + $0x28] sm:$0xff]
      %v6220 = vld [vmem:[#allocation2 + $0x30] sm:$0xff]
      %v6221 = vld [vmem:[#allocation2 + $0x38] sm:$0xff]
      %v6222 = vld [vmem:[#allocation2 + $0x40] sm:$0xff]
      %v6223 = vld [vmem:[#allocation2 + $0x48] sm:$0xff]
      %v6224 = vld [vmem:[#allocation2 + $0x50] sm:$0xff]
      %v6225 = vld [vmem:[#allocation2 + $0x58] sm:$0xff]
      %v6226 = vld [vmem:[#allocation2 + $0x60] sm:$0xff]
      %v6227 = vld [vmem:[#allocation2 + $0x68] sm:$0xff]
      %v6228 = vld [vmem:[#allocation2 + $0x70] sm:$0xff]
      %v6229 = vld [vmem:[#allocation2 + $0x78] sm:$0xff]
      %v6230 = vld [vmem:[#allocation2 + $0x80] sm:$0xff]
      %v6231 = vld [vmem:[#allocation2 + $0x88] sm:$0xff]
      %v6232 = vld [vmem:[#allocation2 + $0x90] sm:$0xff]
      %v6233 = vld [vmem:[#allocation2 + $0x98] sm:$0xff]
      %v6234 = vld [vmem:[#allocation2 + $0xa0] sm:$0xff]
      %v6235 = vld [vmem:[#allocation2 + $0xa8] sm:$0xff]
      %v6236 = vld [vmem:[#allocation2 + $0xb0] sm:$0xff]
      %v6237 = vld [vmem:[#allocation2 + $0xb8] sm:$0xff]
      %v6238 = vld [vmem:[#allocation2 + $0xc0] sm:$0xff]
      %v6239 = vld [vmem:[#allocation2 + $0xc8] sm:$0xff]
      %v6240 = vld [vmem:[#allocation2 + $0xd0] sm:$0xff]
      %v6241 = vld [vmem:[#allocation2 + $0xd8] sm:$0xff]
      %v6242 = vld [vmem:[#allocation2 + $0xe0] sm:$0xff]
      %v6243 = vld [vmem:[#allocation2 + $0xe8] sm:$0xff]
      %v6244 = vld [vmem:[#allocation2 + $0xf0] sm:$0xff]
      %v6245 = vld [vmem:[#allocation2 + $0xf8] sm:$0xff]
      %v6246 = vld [vmem:[#allocation2 + $0x100] sm:$0xff]
      %v6247 = vld [vmem:[#allocation2 + $0x108] sm:$0xff]
      %v6248 = vld [vmem:[#allocation2 + $0x110] sm:$0xff]
      %v6249 = vld [vmem:[#allocation2 + $0x118] sm:$0xff]
      %v6250 = vld [vmem:[#allocation2 + $0x120] sm:$0xff]
      %v6251 = vld [vmem:[#allocation2 + $0x128] sm:$0xff]
      %v6252 = vld [vmem:[#allocation2 + $0x130] sm:$0xff]
      %v6253 = vld [vmem:[#allocation2 + $0x138] sm:$0xff]
      %v6254 = vld [vmem:[#allocation2 + $0x140] sm:$0xff]
      %v6255 = vld [vmem:[#allocation2 + $0x148] sm:$0xff]
      %v6256 = vld [vmem:[#allocation2 + $0x150] sm:$0xff]
      %v6257 = vld [vmem:[#allocation2 + $0x158] sm:$0xff]
      %v6258 = vld [vmem:[#allocation2 + $0x160] sm:$0xff]
      %v6259 = vld [vmem:[#allocation2 + $0x168] sm:$0xff]
      %v6260 = vld [vmem:[#allocation2 + $0x170] sm:$0xff]
      %v6261 = vld [vmem:[#allocation2 + $0x178] sm:$0xff]
      %v6262 = vld [vmem:[#allocation2 + $0x180] sm:$0xff]
      %v6263 = vld [vmem:[#allocation2 + $0x188] sm:$0xff]
      %v6264 = vld [vmem:[#allocation2 + $0x190] sm:$0xff]
      %v6265 = vld [vmem:[#allocation2 + $0x198] sm:$0xff]
      %v6266 = vld [vmem:[#allocation2 + $0x1a0] sm:$0xff]
      %v6267 = vld [vmem:[#allocation2 + $0x1a8] sm:$0xff]
      %v6268 = vld [vmem:[#allocation2 + $0x1b0] sm:$0xff]
      %v6269 = vld [vmem:[#allocation2 + $0x1b8] sm:$0xff]
      %v6270 = vld [vmem:[#allocation2 + $0x1c0] sm:$0xff]
      %v6271 = vld [vmem:[#allocation2 + $0x1c8] sm:$0xff]
      %v6272 = vld [vmem:[#allocation2 + $0x1d0] sm:$0xff]
      %v6273 = vld [vmem:[#allocation2 + $0x1d8] sm:$0xff]
      %v6274 = vld [vmem:[#allocation2 + $0x1e0] sm:$0xff]
      %v6275 = vld [vmem:[#allocation2 + $0x1e8] sm:$0xff]
      %v6276 = vld [vmem:[#allocation2 + $0x1f0] sm:$0xff]
      %v6277 = vld [vmem:[#allocation2 + $0x1f8] sm:$0xff]
      %v6278 = vld [vmem:[#allocation2 + $0x200] sm:$0xff]
      %v6279 = vld [vmem:[#allocation2 + $0x208] sm:$0xff]
      %v6280 = vld [vmem:[#allocation2 + $0x210] sm:$0xff]
      %v6281 = vld [vmem:[#allocation2 + $0x218] sm:$0xff]
      %v6282 = vld [vmem:[#allocation2 + $0x220] sm:$0xff]
      %v6283 = vld [vmem:[#allocation2 + $0x228] sm:$0xff]
      %v6284 = vld [vmem:[#allocation2 + $0x230] sm:$0xff]
      %v6285 = vld [vmem:[#allocation2 + $0x238] sm:$0xff]
      %v6286 = vld [vmem:[#allocation2 + $0x240] sm:$0xff]
      %v6287 = vld [vmem:[#allocation2 + $0x248] sm:$0xff]
      %v6288 = vld [vmem:[#allocation2 + $0x250] sm:$0xff]
      %v6289 = vld [vmem:[#allocation2 + $0x258] sm:$0xff]
      %v6290 = vld [vmem:[#allocation2 + $0x260] sm:$0xff]
      %v6291 = vld [vmem:[#allocation2 + $0x268] sm:$0xff]
      %v6292 = vld [vmem:[#allocation2 + $0x270] sm:$0xff]
      %v6293 = vld [vmem:[#allocation2 + $0x278] sm:$0xff]
      %v6294 = vld [vmem:[#allocation2 + $0x280] sm:$0xff]
      %v6295 = vld [vmem:[#allocation2 + $0x288] sm:$0xff]
      %v6296 = vld [vmem:[#allocation2 + $0x290] sm:$0xff]
      %v6297 = vld [vmem:[#allocation2 + $0x298] sm:$0xff]
      %v6298 = vld [vmem:[#allocation2 + $0x2a0] sm:$0xff]
      %v6299 = vld [vmem:[#allocation2 + $0x2a8] sm:$0xff]
      %v6300 = vld [vmem:[#allocation2 + $0x2b0] sm:$0xff]
      %v6301 = vld [vmem:[#allocation2 + $0x2b8] sm:$0xff]
      %v6302 = vld [vmem:[#allocation2 + $0x2c0] sm:$0xff]
      %v6303 = vld [vmem:[#allocation2 + $0x2c8] sm:$0xff]
      %v6304 = vld [vmem:[%s63] sm:$0xff]
      %6306 = vset.pattern.permute.xlu0 0
      %6307 = vperm.xlu0 %6306, %v6304
      %v6308 = vpop.permute.xlu0 %6307
      %v6311 = vsel %vm1325, %v6213, 0
      %6313 = vmatpush.msra.mxu0 %v6244
      %6314 = vmatpush.msra.mxu0 %v6242
      %6315 = vmatpush.msra.mxu0 %v6240
      %6316 = vmatpush.msra.mxu0 %v6238
      %6317 = vmatpush.msra.mxu0 %v6236
      %6318 = vmatpush.msra.mxu0 %v6234
      %6319 = vmatpush.msra.mxu0 %v6232
      %6320 = vmatpush.msra.mxu0 %v6230
      %6321 = vmatpush.msra.mxu0 %v6228
      %6322 = vmatpush.msra.mxu0 %v6226
      %6323 = vmatpush.msra.mxu0 %v6224
      %6324 = vmatpush.msra.mxu0 %v6222
      %6325 = vmatpush.msra.mxu0 %v6220
      %6326 = vmatpush.msra.mxu0 %v6218
      %6327 = vmatpush.msra.mxu0 %v6216
      %6328 = vmatpush.msra.mxu0 %v6214
      %6329 = vmatmul.f32.gmra.mxu0 %v6211
      %v6330 = vpop.f32.mrf.mxu0
      %v6331 = vadd.f32 %v6308, %v6330
      %6332 = vdwg.mxu0
      %6333 = vmatpush.msra.mxu0 %v6276
      %6334 = vmatpush.msra.mxu0 %v6274
      %6335 = vmatpush.msra.mxu0 %v6272
      %6336 = vmatpush.msra.mxu0 %v6270
      %6337 = vmatpush.msra.mxu0 %v6268
      %6338 = vmatpush.msra.mxu0 %v6266
      %6339 = vmatpush.msra.mxu0 %v6264
      %6340 = vmatpush.msra.mxu0 %v6262
      %6341 = vmatpush.msra.mxu0 %v6260
      %6342 = vmatpush.msra.mxu0 %v6258
      %6343 = vmatpush.msra.mxu0 %v6256
      %6344 = vmatpush.msra.mxu0 %v6254
      %6345 = vmatpush.msra.mxu0 %v6252
      %6346 = vmatpush.msra.mxu0 %v6250
      %6347 = vmatpush.msra.mxu0 %v6248
      %6348 = vmatpush.msra.mxu0 %v6246
      %6349 = vmatmul.f32.gmra.mxu0 %v6212
      %v6350 = vpop.f32.mrf.mxu0
      %v6351 = vadd.f32 %v6331, %v6350
      %6352 = vdwg.mxu0
      %6353 = vmatpush.msra.mxu0 0.0
      %6354 = vmatpush.msra.mxu0 0.0
      %6355 = vmatpush.msra.mxu0 0.0
      %6356 = vmatpush.msra.mxu0 %v6302
      %6357 = vmatpush.msra.mxu0 %v6300
      %6358 = vmatpush.msra.mxu0 %v6298
      %6359 = vmatpush.msra.mxu0 %v6296
      %6360 = vmatpush.msra.mxu0 %v6294
      %6361 = vmatpush.msra.mxu0 %v6292
      %6362 = vmatpush.msra.mxu0 %v6290
      %6363 = vmatpush.msra.mxu0 %v6288
      %6364 = vmatpush.msra.mxu0 %v6286
      %6365 = vmatpush.msra.mxu0 %v6284
      %6366 = vmatpush.msra.mxu0 %v6282
      %6367 = vmatpush.msra.mxu0 %v6280
      %6368 = vmatpush.msra.mxu0 %v6278
      %6369 = vmatmul.f32.gmra.mxu0 %v6311
      %v6370 = vpop.f32.mrf.mxu0
      %v6371 = vadd.f32 %v6351, %v6370
      %6372 = vdwg.mxu0
      %6373 = vmatpush.msra.mxu0 %v6245
      %6374 = vmatpush.msra.mxu0 %v6243
      %6375 = vmatpush.msra.mxu0 %v6241
      %6376 = vmatpush.msra.mxu0 %v6239
      %6377 = vmatpush.msra.mxu0 %v6237
      %6378 = vmatpush.msra.mxu0 %v6235
      %6379 = vmatpush.msra.mxu0 %v6233
      %6380 = vmatpush.msra.mxu0 %v6231
      %6381 = vmatpush.msra.mxu0 %v6229
      %6382 = vmatpush.msra.mxu0 %v6227
      %6383 = vmatpush.msra.mxu0 %v6225
      %6384 = vmatpush.msra.mxu0 %v6223
      %6385 = vmatpush.msra.mxu0 %v6221
      %6386 = vmatpush.msra.mxu0 %v6219
      %6387 = vmatpush.msra.mxu0 %v6217
      %6388 = vmatpush.msra.mxu0 %v6215
      %6389 = vmatmul.f32.gmra.mxu0 %v6211
      %v6390 = vpop.f32.mrf.mxu0
      %v6391 = vadd.f32 %v6308, %v6390
      %6392 = vdwg.mxu0
      %6393 = vmatpush.msra.mxu0 %v6277
      %6394 = vmatpush.msra.mxu0 %v6275
      %6395 = vmatpush.msra.mxu0 %v6273
      %6396 = vmatpush.msra.mxu0 %v6271
      %6397 = vmatpush.msra.mxu0 %v6269
      %6398 = vmatpush.msra.mxu0 %v6267
      %6399 = vmatpush.msra.mxu0 %v6265
      %6400 = vmatpush.msra.mxu0 %v6263
      %6401 = vmatpush.msra.mxu0 %v6261
      %6402 = vmatpush.msra.mxu0 %v6259
      %6403 = vmatpush.msra.mxu0 %v6257
      %6404 = vmatpush.msra.mxu0 %v6255
      %6405 = vmatpush.msra.mxu0 %v6253
      %6406 = vmatpush.msra.mxu0 %v6251
      %6407 = vmatpush.msra.mxu0 %v6249
      %6408 = vmatpush.msra.mxu0 %v6247
      %6409 = vmatmul.f32.gmra.mxu0 %v6212
      %v6410 = vpop.f32.mrf.mxu0
      %v6411 = vadd.f32 %v6391, %v6410
      %6412 = vdwg.mxu0
      %6413 = vmatpush.msra.mxu0 0.0
      %6414 = vmatpush.msra.mxu0 0.0
      %6415 = vmatpush.msra.mxu0 0.0
      %6416 = vmatpush.msra.mxu0 %v6303
      %6417 = vmatpush.msra.mxu0 %v6301
      %6418 = vmatpush.msra.mxu0 %v6299
      %6419 = vmatpush.msra.mxu0 %v6297
      %6420 = vmatpush.msra.mxu0 %v6295
      %6421 = vmatpush.msra.mxu0 %v6293
      %6422 = vmatpush.msra.mxu0 %v6291
      %6423 = vmatpush.msra.mxu0 %v6289
      %6424 = vmatpush.msra.mxu0 %v6287
      %6425 = vmatpush.msra.mxu0 %v6285
      %6426 = vmatpush.msra.mxu0 %v6283
      %6427 = vmatpush.msra.mxu0 %v6281
      %6428 = vmatpush.msra.mxu0 %v6279
      %6429 = vmatmul.f32.gmra.mxu0 %v6311
      %v6430 = vpop.f32.mrf.mxu0
      %v6431 = vadd.f32 %v6411, %v6430
      %6432 = vdwg.mxu0
      %v6433 = vmul.f32 %v6371, 0.2
      %v6434 = vmul.f32 %v6431, 0.2
      %v6435 = vadd.f32 %v6433, %v4655
      %v6436 = vadd.f32 %v6434, %v4656
      %v6437 = vmul.f32 %v6435, 0.2
      %v6438 = vmul.f32 %v6436, 0.2
      %v6439 = vadd.f32 %v6437, %v1077
      %v6440 = vadd.f32 %v6438, %v1078
      %6441 = vst [vmem:[%s986] sm:$0xff] %v6439
      %6442 = vst [vmem:[%s986 + $0x8] sm:$0xff] %v6440
      %p6443 = scmp.lt.s32.totalorder %s76, 1
      %s6444 = scalar_select %p6443, %s76, 1
      %s6445 = smul.addr %s6444, 2
      %s6446 = smul.addr %s6445, 8
      %s6447 = scalar_lea.vmem %s65, %s6446
      // Predicated region
      $region149: #{rrdb_forward.1} parent=147 // pred_check
        %p6448 = pneg %p771
      $region150: #{rrdb_forward.1} parent=147 // pred_check_branch
        %6450 = sbr.rel (%p6448) target = $region152
      $region151: #{rrdb_forward.1} parent=147 // pred_region
        _
      $region152: #{rrdb_forward.1} parent=147 // pred_fallthru
        _
    $region148: #{rrdb_forward.1} parent=5 // pred_fallthru
      _
    %p6451 = scmp.le.s32.totalorder 2, %s71
    // Predicated region
    $region153: #{rrdb_forward.1} parent=5 // pred_check
      %p6452 = pneg %p6451
    $region154: #{rrdb_forward.1} parent=5 // pred_check_branch
      %6454 = sbr.rel (%p6452) target = $region156
    $region155: #{rrdb_forward.1} parent=5 // pred_region
      %s6455 = ssub.s32 %s71, 2
      // Predicated region
      $region157: #{rrdb_forward.1} parent=155 // pred_check
        %p6456 = pneg %p777
      $region158: #{rrdb_forward.1} parent=155 // pred_check_branch
        %6458 = sbr.rel (%p6456) target = $region160
      $region159: #{rrdb_forward.1} parent=155 // pred_region
        %p6459 = scmp.lt.s32.totalorder %s77, 1
        %s6460 = scalar_select %p6459, %s77, 1
        %s6461 = smul.addr %s6460, 2
        %s6462 = smul.addr %s6461, 8
        %s6463 = scalar_lea.vmem %s65, %s6462
      $region160: #{rrdb_forward.1} parent=155 // pred_fallthru
        _
    $region156: #{rrdb_forward.1} parent=5 // pred_fallthru
      _
  $region6: #{rrdb_forward.1} parent=0 // loop_footer
    %s75 = sadd.s32 1, %s71
  $region7: #{rrdb_forward.1} parent=0 // loop_footer_branch
    %70 = sbr.rel target = $region3
  $region8: #{rrdb_forward.1} parent=0 // loop_exit
    _

</llo_original>
